<compile_context>
chip_gen: v7x
topology: tpu7x:2x2x1
jax: 0.10.0
libtpu: 0.0.40
codegen_flags: <defaults>
</compile_context>

<pallas_src>
import functools
import numpy as np
import jax
import jax.numpy as jnp
from jax.experimental import pallas as pl
from jax.experimental.pallas import tpu as pltpu

# ----------------------------------------------------------------------------
# Learner config (scaled-down Omniglot config from the repo: 4 convs + bn/relu,
# flatten, linear).  imgc=1, imgsz=28, n_way=5, 8 channels.
# ----------------------------------------------------------------------------
N_WAY = 5
CONFIG = [
    ('conv2d', [8, 1, 3, 3, 2, 0]),
    ('relu', [True]),
    ('bn', [8]),
    ('conv2d', [8, 8, 3, 3, 2, 0]),
    ('relu', [True]),
    ('bn', [8]),
    ('conv2d', [8, 8, 3, 3, 2, 0]),
    ('relu', [True]),
    ('bn', [8]),
    ('conv2d', [8, 8, 2, 2, 1, 0]),
    ('relu', [True]),
    ('bn', [8]),
    ('flatten', []),
    ('linear', [N_WAY, 8]),
]

UPDATE_LR = 0.4
UPDATE_STEP = 3

_LANE = 128


def _rup(x, m):
    return ((x + m - 1) // m) * m


def _pad_last2(x):
    """Zero-pad the last two dims of a (T, r, c) array to multiples of 128."""
    t, r, c = x.shape
    rp, cp = _rup(r, _LANE), _rup(c, _LANE)
    if rp == r and cp == c:
        return x
    return jnp.pad(x, ((0, 0), (0, rp - r), (0, cp - c)))


def _prep_bf16(x):
    return _pad_last2(x.astype(jnp.bfloat16))


# ----------------------------------------------------------------------------
# Task-batched Pallas matmul kernels (MXU, bf16 in / f32 accumulate).
# Each grid step handles one task; blocks cover the whole padded per-task
# operand so there is exactly one MXU call per task per matmul.
# ----------------------------------------------------------------------------
def _bmm_nn_kernel(a_ref, b_ref, o_ref):
    # (M, K) @ (K, N)
    o_ref[...] = jax.lax.dot_general(
        a_ref[...], b_ref[...], (((1,), (0,)), ((), ())),
        preferred_element_type=jnp.float32)


def _bmm_nt_kernel(a_ref, b_ref, o_ref):
    # (M, K) @ (N, K)^T  -- contraction on last dims (q@k.T style)
    o_ref[...] = jax.lax.dot_general(
        a_ref[...], b_ref[...], (((1,), (1,)), ((), ())),
        preferred_element_type=jnp.float32)


def _bmm_tn_kernel(a_ref, b_ref, o_ref):
    # (K, M)^T @ (K, N) -- transpose LHS in VMEM (f32), then standard MXU dot.
    a_t = jnp.transpose(a_ref[...], (1, 0)).astype(jnp.bfloat16)
    o_ref[...] = jax.lax.dot_general(
        a_t, b_ref[...], (((1,), (0,)), ((), ())),
        preferred_element_type=jnp.float32)


def _bmm_call(kernel, a_p, b_p, mp, np_):
    T = a_p.shape[0]
    return pl.pallas_call(
        kernel,
        out_shape=jax.ShapeDtypeStruct((T, mp, np_), jnp.float32),
        grid=(T,),
        in_specs=[pl.BlockSpec((None,) + a_p.shape[1:], lambda t: (t, 0, 0)),
                  pl.BlockSpec((None,) + b_p.shape[1:], lambda t: (t, 0, 0))],
        out_specs=pl.BlockSpec((None, mp, np_), lambda t: (t, 0, 0)),
        compiler_params=pltpu.CompilerParams(
            dimension_semantics=("parallel",)),
    )(a_p, b_p)


def bmm_nn_raw(a, b):
    # (T, M, K) @ (T, K, N) -> (T, M, N)
    _, M, _ = a.shape
    N = b.shape[2]
    ap, bp = _prep_bf16(a), _prep_bf16(b)
    out = _bmm_call(_bmm_nn_kernel, ap, bp, ap.shape[1], bp.shape[2])
    return out[:, :M, :N]


def bmm_nt_raw(a, b):
    # (T, M, K) @ (T, N, K)^T -> (T, M, N)
    _, M, _ = a.shape
    N = b.shape[1]
    ap, bp = _prep_bf16(a), _prep_bf16(b)
    out = _bmm_call(_bmm_nt_kernel, ap, bp, ap.shape[1], bp.shape[1])
    return out[:, :M, :N]


def bmm_tn_raw(a, b):
    # (T, K, M)^T @ (T, K, N) -> (T, M, N); LHS transposed inside the kernel.
    _, _, M = a.shape
    N = b.shape[2]
    ap = _pad_last2(a.astype(jnp.float32))
    bp = _prep_bf16(b)
    out = _bmm_call(_bmm_tn_kernel, ap, bp, ap.shape[2], bp.shape[2])
    return out[:, :M, :N]


# Custom VJPs so the MAML inner-loop gradients also run on the Pallas kernels,
# using the transposed-contraction variants (no HBM transposes).
@jax.custom_vjp
def bmm_nn(a, b):
    return bmm_nn_raw(a, b)


def _bmm_nn_fwd(a, b):
    return bmm_nn_raw(a, b), (a, b)


def _bmm_nn_bwd(res, g):
    a, b = res
    return bmm_nt_raw(g, b), bmm_tn_raw(a, g)


bmm_nn.defvjp(_bmm_nn_fwd, _bmm_nn_bwd)


@jax.custom_vjp
def bmm_nt(a, b):
    return bmm_nt_raw(a, b)


def _bmm_nt_fwd(a, b):
    return bmm_nt_raw(a, b), (a, b)


def _bmm_nt_bwd(res, g):
    a, b = res
    # C = a @ b^T  =>  dA = g @ b ; dB = g^T @ a
    return bmm_nn_raw(g, b), bmm_tn_raw(g, a)


bmm_nt.defvjp(_bmm_nt_fwd, _bmm_nt_bwd)


# ----------------------------------------------------------------------------
# Fused accuracy kernel: argmax(softmax(logits)) == label, counted per update
# step across all tasks in ONE pallas_call (softmax is monotone -> argmax of
# raw logits).  Labels are a (rows, 1) int32 column.
# ----------------------------------------------------------------------------
def _acc_kernel(num_steps, rows_per_step, logits_ref, labels_ref, o_ref):
    logits = logits_ref[...]                  # (S*Rp, Cp) f32
    labels = labels_ref[...]                  # (S*Rp, 1)  i32
    ncol = logits.shape[1]
    col = jax.lax.broadcasted_iota(jnp.int32, logits.shape, 1)
    maxv = jnp.max(logits, axis=1, keepdims=True)
    amax = jnp.min(jnp.where(logits == maxv, col, ncol), axis=1, keepdims=True)
    correct = (amax == labels).astype(jnp.int32)          # (S*Rp, 1)
    for s in range(num_steps):                            # static unroll, S=4
        o_ref[s] = jnp.sum(correct[s * rows_per_step:(s + 1) * rows_per_step, :])


def count_correct_all(logits_all, labels):
    """logits_all: (S, T, Q, C) f32 ; labels: (T, Q) int -> (S,) int32 counts."""
    S, T, Q, C = logits_all.shape
    R = T * Q
    Rp = _rup(R, 8)
    Cp = _rup(C, _LANE)
    lg = logits_all.reshape(S, R, C).astype(jnp.float32)
    lg = jnp.pad(lg, ((0, 0), (0, Rp - R), (0, Cp - C)),
                 constant_values=-1e30)
    lg = lg.reshape(S * Rp, Cp)
    lb = jnp.pad(labels.reshape(R).astype(jnp.int32), (0, Rp - R),
                 constant_values=-1)
    lb = jnp.tile(lb[:, None], (S, 1))                    # (S*Rp, 1)
    return pl.pallas_call(
        functools.partial(_acc_kernel, S, Rp),
        out_shape=jax.ShapeDtypeStruct((S,), jnp.int32),
        in_specs=[pl.BlockSpec(memory_space=pltpu.MemorySpace.VMEM),
                  pl.BlockSpec(memory_space=pltpu.MemorySpace.VMEM)],
        out_specs=pl.BlockSpec(memory_space=pltpu.MemorySpace.SMEM),
    )(lg, lb)


# ----------------------------------------------------------------------------
# Task-batched Learner forward (config interpreter), NHWC, built on the Pallas
# batched matmuls.  All weights carry a leading task dimension.
# ----------------------------------------------------------------------------
def conv2d_nhwc(x, w, b, stride, padding):
    # x: (T, B, H, W, C) ; w: (T, O, C, kh, kw) ; b: (T, O)
    T, B, H, W, C = x.shape
    O, _, kh, kw = w.shape[1:]
    if padding:
        x = jnp.pad(x, ((0, 0), (0, 0), (padding, padding),
                        (padding, padding), (0, 0)))
    Hp, Wp = x.shape[2], x.shape[3]
    oh = (Hp - kh) // stride + 1
    ow = (Wp - kw) // stride + 1
    cols = []
    for i in range(kh):
        for j in range(kw):
            cols.append(x[:, :, i:i + stride * oh:stride,
                          j:j + stride * ow:stride, :])
    patches = jnp.concatenate(cols, axis=-1)              # (T,B,oh,ow,kh*kw*C)
    a = patches.reshape(T, B * oh * ow, kh * kw * C)      # lane-dense patch axis
    w2 = jnp.transpose(w, (0, 3, 4, 2, 1)).reshape(T, kh * kw * C, O)
    out = bmm_nn(a, w2)                                   # Pallas MXU, grid=(T,)
    return out.reshape(T, B, oh, ow, O) + b[:, None, None, None, :]


def batch_norm_train(x, w, b, eps=1e-5):
    # per-task batch statistics (training mode), NHWC
    mean = jnp.mean(x, axis=(1, 2, 3), keepdims=True)
    var = jnp.mean((x - mean) ** 2, axis=(1, 2, 3), keepdims=True)
    xn = (x - mean) * jax.lax.rsqrt(var + eps)
    return xn * w[:, None, None, None, :] + b[:, None, None, None, :]


def learner_forward(vars_list, x):
    """vars_list: list of (T, ...) per-task weights ; x: (T, B, H, W, C) NHWC."""
    idx = 0
    for name, param in CONFIG:
        if name == 'conv2d':
            w, b = vars_list[idx], vars_list[idx + 1]
            x = conv2d_nhwc(x, w, b, stride=param[4], padding=param[5])
            idx += 2
        elif name == 'linear':
            w, b = vars_list[idx], vars_list[idx + 1]
            x = bmm_nt(x, w) + b[:, None, :]              # x @ w^T, Pallas MXU
            idx += 2
        elif name == 'bn':
            w, b = vars_list[idx], vars_list[idx + 1]
            x = batch_norm_train(x, w, b)
            idx += 2
        elif name == 'relu':
            x = jnp.maximum(x, 0.0)
        elif name == 'leakyrelu':
            x = jnp.where(x >= 0, x, param[0] * x)
        elif name == 'tanh':
            x = jnp.tanh(x)
        elif name == 'sigmoid':
            x = jax.nn.sigmoid(x)
        elif name == 'flatten':
            Tn, Bn = x.shape[0], x.shape[1]
            # match torch's NCHW flatten ordering (free here: spatial is 1x1)
            x = jnp.transpose(x, (0, 1, 4, 2, 3)).reshape(Tn, Bn, -1)
        elif name == 'max_pool2d':
            k, s, p = param
            if p:
                x = jnp.pad(x, ((0, 0), (0, 0), (p, p), (p, p), (0, 0)),
                            constant_values=-jnp.inf)
            x = jax.lax.reduce_window(x, -jnp.inf, jax.lax.max,
                                      (1, 1, k, k, 1), (1, 1, s, s, 1), 'VALID')
        elif name == 'avg_pool2d':
            k, s, p = param
            if p:
                x = jnp.pad(x, ((0, 0), (0, 0), (p, p), (p, p), (0, 0)))
            x = jax.lax.reduce_window(x, 0.0, jax.lax.add,
                                      (1, 1, k, k, 1), (1, 1, s, s, 1),
                                      'VALID') / (k * k)
        else:
            # TODO(synk): convt2d / upsample / reshape not needed for this config.
            raise NotImplementedError(name)
    assert idx == len(vars_list)
    return x


def inner_loss(task_params, x, y):
    """Sum over tasks of per-task mean cross-entropy -> per-task grads."""
    logits = learner_forward(task_params, x)              # (T, B, n_way)
    logp = jax.nn.log_softmax(logits, axis=-1)
    nll = -jnp.take_along_axis(logp, y[..., None], axis=-1)[..., 0]
    return jnp.sum(jnp.mean(nll, axis=1))


def init_params(key):
    """Deterministic kaiming-normal init matching Learner.__init__ (unbatched)."""
    params = []
    for name, param in CONFIG:
        if name == 'conv2d':
            O, C, kh, kw = param[:4]
            key, sk = jax.random.split(key)
            fan_in = C * kh * kw
            w = jax.random.normal(sk, (O, C, kh, kw), jnp.float32) * np.sqrt(2.0 / fan_in)
            params += [w, jnp.zeros((O,), jnp.float32)]
        elif name == 'linear':
            out_f, in_f = param
            key, sk = jax.random.split(key)
            w = jax.random.normal(sk, (out_f, in_f), jnp.float32) * np.sqrt(2.0 / in_f)
            params += [w, jnp.zeros((out_f,), jnp.float32)]
        elif name == 'bn':
            c = param[0]
            params += [jnp.ones((c,), jnp.float32), jnp.zeros((c,), jnp.float32)]
    return params


# ----------------------------------------------------------------------------
# Meta.forward: all tasks' MAML inner loops in one jitted program.
# ----------------------------------------------------------------------------
@jax.jit
def meta_counts(params, x_spt, y_spt, x_qry, y_qry):
    T = x_spt.shape[0]
    xs = jnp.transpose(x_spt, (0, 1, 3, 4, 2))            # NCHW -> NHWC once
    xq = jnp.transpose(x_qry, (0, 1, 3, 4, 2))
    theta = [jnp.broadcast_to(p, (T,) + p.shape) for p in params]

    grad_fn = jax.grad(inner_loss)

    step_logits = [learner_forward(theta, xq)]            # step 0 (initial params)
    grads = grad_fn(theta, xs, y_spt)
    fast = [p - UPDATE_LR * g for p, g in zip(theta, grads)]
    step_logits.append(learner_forward(fast, xq))         # step 1
    for _ in range(1, UPDATE_STEP):
        grads = grad_fn(fast, xs, y_spt)
        fast = [p - UPDATE_LR * g for p, g in zip(fast, grads)]
        step_logits.append(learner_forward(fast, xq))

    logits_all = jnp.stack(step_logits, axis=0)           # (S, T, Q, n_way)
    return count_correct_all(logits_all, y_qry)           # fused accuracy kernel


def meta_forward(params, x_spt, y_spt, x_qry, y_qry):
    task_num = x_spt.shape[0]
    querysz = x_qry.shape[1]
    counts = jax.block_until_ready(
        meta_counts(params, x_spt, y_spt, x_qry, y_qry))
    # TODO(synk): the Adam meta-update (loss_q.backward + meta_optim.step) only
    # mutates optimizer/parameter state and does not affect the returned accs.
    return np.asarray(jax.device_get(counts), dtype=np.float64) / (querysz * task_num)


if __name__ == "__main__":
    key = jax.random.PRNGKey(0)
    k1, k2, k3, k4, k5 = jax.random.split(key, 5)

    task_num, k_spt, k_qry, imgc, imgsz = 2, 1, 2, 1, 28
    setsz = N_WAY * k_spt      # 5
    querysz = N_WAY * k_qry    # 10

    params = init_params(k1)
    x_spt = jax.random.normal(k2, (task_num, setsz, imgc, imgsz, imgsz), jnp.float32)
    x_qry = jax.random.normal(k3, (task_num, querysz, imgc, imgsz, imgsz), jnp.float32)
    y_spt = jax.random.randint(k4, (task_num, setsz), 0, N_WAY, jnp.int32)
    y_qry = jax.random.randint(k5, (task_num, querysz), 0, N_WAY, jnp.int32)

    accs = meta_forward(params, x_spt, y_spt, x_qry, y_qry)
    jax.block_until_ready(jnp.asarray(accs))
    assert accs.shape == (UPDATE_STEP + 1,)
    print("KERNEL_OK")
</pallas_src>

<mosaic_0001>
module attributes {stable_mosaic.version = 11 : i64} {
  func.func @_bmm_nn_kernel(%arg0: i32, %arg1: memref<1x1792x128xbf16, #tpu.memory_space<vmem>>, %arg2: memref<1x128x128xbf16, #tpu.memory_space<vmem>>, %arg3: memref<1x1792x128xf32, #tpu.memory_space<vmem>>) attributes {dimension_semantics = [#tpu.dimension_semantics<parallel>], iteration_bounds = array<i64: 2>, scalar_prefetch = 0 : i64, scratch_operands = 0 : i64, tpu.core_type = #tpu.core_type<tc>, window_params = [{transform_indices = @transform_0, window_bounds = array<i64: 1, 1792, 128>}, {transform_indices = @transform_1, window_bounds = array<i64: 1, 128, 128>}, {transform_indices = @transform_2, window_bounds = array<i64: 1, 1792, 128>}]} {
    %c0 = arith.constant 0 : index
    %c0_0 = arith.constant 0 : index
    %c0_1 = arith.constant 0 : index
    %0 = vector.load %arg1[%c0, %c0_0, %c0_1] : memref<1x1792x128xbf16, #tpu.memory_space<vmem>>, vector<1x1792x128xbf16>
    %1 = vector.shape_cast %0 : vector<1x1792x128xbf16> to vector<1792x128xbf16>
    %c0_2 = arith.constant 0 : index
    %c0_3 = arith.constant 0 : index
    %c0_4 = arith.constant 0 : index
    %2 = vector.load %arg2[%c0_2, %c0_3, %c0_4] : memref<1x128x128xbf16, #tpu.memory_space<vmem>>, vector<1x128x128xbf16>
    %3 = vector.shape_cast %2 : vector<1x128x128xbf16> to vector<128x128xbf16>
    %cst = arith.constant dense<0.000000e+00> : vector<1792x128xf32>
    %4 = tpu.matmul %1, %3, %cst {dimension_numbers = #tpu.dot_dimension_numbers<[1], [0], [0], [1], [0, 0, 1, 1], [], []>} : vector<1792x128xbf16>, vector<128x128xbf16>, vector<1792x128xf32> -> vector<1792x128xf32>
    %c0_5 = arith.constant 0 : index
    %c0_6 = arith.constant 0 : index
    %c0_7 = arith.constant 0 : index
    %5 = vector.load %arg3[%c0_5, %c0_6, %c0_7] : memref<1x1792x128xf32, #tpu.memory_space<vmem>>, vector<1x1792x128xf32>
    %6 = vector.shape_cast %5 : vector<1x1792x128xf32> to vector<1792x128xf32>
    %7 = vector.shape_cast %4 : vector<1792x128xf32> to vector<1x1792x128xf32>
    tpu.vector_store %arg3[%c0_5, %c0_6, %c0_7], %7 {strides = array<i32>} : memref<1x1792x128xf32, #tpu.memory_space<vmem>>, vector<1x1792x128xf32>,
    return
  }
  func.func @transform_0(%arg0: i32) -> (i32, i32, i32) {
    %c0_i32 = arith.constant 0 : i32
    %c0_i32_0 = arith.constant 0 : i32
    %c0_i32_1 = arith.constant 0 : i32
    return %arg0, %c0_i32, %c0_i32_0 : i32, i32, i32
  }
  func.func @transform_1(%arg0: i32) -> (i32, i32, i32) {
    %c0_i32 = arith.constant 0 : i32
    %c0_i32_0 = arith.constant 0 : i32
    %c0_i32_1 = arith.constant 0 : i32
    return %arg0, %c0_i32, %c0_i32_0 : i32, i32, i32
  }
  func.func @transform_2(%arg0: i32) -> (i32, i32, i32) {
    %c0_i32 = arith.constant 0 : i32
    %c0_i32_0 = arith.constant 0 : i32
    %c0_i32_1 = arith.constant 0 : i32
    return %arg0, %c0_i32, %c0_i32_0 : i32, i32, i32
  }
}

module attributes {stable_mosaic.version = 11 : i64} {
  func.func @_bmm_nn_kernel(%arg0: i32, %arg1: memref<1x384x128xbf16, #tpu.memory_space<vmem>>, %arg2: memref<1x128x128xbf16, #tpu.memory_space<vmem>>, %arg3: memref<1x384x128xf32, #tpu.memory_space<vmem>>) attributes {dimension_semantics = [#tpu.dimension_semantics<parallel>], iteration_bounds = array<i64: 2>, scalar_prefetch = 0 : i64, scratch_operands = 0 : i64, tpu.core_type = #tpu.core_type<tc>, window_params = [{transform_indices = @transform_0, window_bounds = array<i64: 1, 384, 128>}, {transform_indices = @transform_1, window_bounds = array<i64: 1, 128, 128>}, {transform_indices = @transform_2, window_bounds = array<i64: 1, 384, 128>}]} {
    %c0 = arith.constant 0 : index
    %c0_0 = arith.constant 0 : index
    %c0_1 = arith.constant 0 : index
    %0 = vector.load %arg1[%c0, %c0_0, %c0_1] : memref<1x384x128xbf16, #tpu.memory_space<vmem>>, vector<1x384x128xbf16>
    %1 = vector.shape_cast %0 : vector<1x384x128xbf16> to vector<384x128xbf16>
    %c0_2 = arith.constant 0 : index
    %c0_3 = arith.constant 0 : index
    %c0_4 = arith.constant 0 : index
    %2 = vector.load %arg2[%c0_2, %c0_3, %c0_4] : memref<1x128x128xbf16, #tpu.memory_space<vmem>>, vector<1x128x128xbf16>
    %3 = vector.shape_cast %2 : vector<1x128x128xbf16> to vector<128x128xbf16>
    %cst = arith.constant dense<0.000000e+00> : vector<384x128xf32>
    %4 = tpu.matmul %1, %3, %cst {dimension_numbers = #tpu.dot_dimension_numbers<[1], [0], [0], [1], [0, 0, 1, 1], [], []>} : vector<384x128xbf16>, vector<128x128xbf16>, vector<384x128xf32> -> vector<384x128xf32>
    %c0_5 = arith.constant 0 : index
    %c0_6 = arith.constant 0 : index
    %c0_7 = arith.constant 0 : index
    %5 = vector.load %arg3[%c0_5, %c0_6, %c0_7] : memref<1x384x128xf32, #tpu.memory_space<vmem>>, vector<1x384x128xf32>
    %6 = vector.shape_cast %5 : vector<1x384x128xf32> to vector<384x128xf32>
    %7 = vector.shape_cast %4 : vector<384x128xf32> to vector<1x384x128xf32>
    tpu.vector_store %arg3[%c0_5, %c0_6, %c0_7], %7 {strides = array<i32>} : memref<1x384x128xf32, #tpu.memory_space<vmem>>, vector<1x384x128xf32>,
    return
  }
  func.func @transform_0(%arg0: i32) -> (i32, i32, i32) {
    %c0_i32 = arith.constant 0 : i32
    %c0_i32_0 = arith.constant 0 : i32
    %c0_i32_1 = arith.constant 0 : i32
    return %arg0, %c0_i32, %c0_i32_0 : i32, i32, i32
  }
  func.func @transform_1(%arg0: i32) -> (i32, i32, i32) {
    %c0_i32 = arith.constant 0 : i32
    %c0_i32_0 = arith.constant 0 : i32
    %c0_i32_1 = arith.constant 0 : i32
    return %arg0, %c0_i32, %c0_i32_0 : i32, i32, i32
  }
  func.func @transform_2(%arg0: i32) -> (i32, i32, i32) {
    %c0_i32 = arith.constant 0 : i32
    %c0_i32_0 = arith.constant 0 : i32
    %c0_i32_1 = arith.constant 0 : i32
    return %arg0, %c0_i32, %c0_i32_0 : i32, i32, i32
  }
}

module attributes {stable_mosaic.version = 11 : i64} {
  func.func @_bmm_nn_kernel(%arg0: i32, %arg1: memref<1x128x128xbf16, #tpu.memory_space<vmem>>, %arg2: memref<1x128x128xbf16, #tpu.memory_space<vmem>>, %arg3: memref<1x128x128xf32, #tpu.memory_space<vmem>>) attributes {dimension_semantics = [#tpu.dimension_semantics<parallel>], iteration_bounds = array<i64: 2>, scalar_prefetch = 0 : i64, scratch_operands = 0 : i64, tpu.core_type = #tpu.core_type<tc>, window_params = [{transform_indices = @transform_0, window_bounds = array<i64: 1, 128, 128>}, {transform_indices = @transform_1, window_bounds = array<i64: 1, 128, 128>}, {transform_indices = @transform_2, window_bounds = array<i64: 1, 128, 128>}]} {
    %c0 = arith.constant 0 : index
    %c0_0 = arith.constant 0 : index
    %c0_1 = arith.constant 0 : index
    %0 = vector.load %arg1[%c0, %c0_0, %c0_1] : memref<1x128x128xbf16, #tpu.memory_space<vmem>>, vector<1x128x128xbf16>
    %1 = vector.shape_cast %0 : vector<1x128x128xbf16> to vector<128x128xbf16>
    %c0_2 = arith.constant 0 : index
    %c0_3 = arith.constant 0 : index
    %c0_4 = arith.constant 0 : index
    %2 = vector.load %arg2[%c0_2, %c0_3, %c0_4] : memref<1x128x128xbf16, #tpu.memory_space<vmem>>, vector<1x128x128xbf16>
    %3 = vector.shape_cast %2 : vector<1x128x128xbf16> to vector<128x128xbf16>
    %cst = arith.constant dense<0.000000e+00> : vector<128x128xf32>
    %4 = tpu.matmul %1, %3, %cst {dimension_numbers = #tpu.dot_dimension_numbers<[1], [0], [0], [1], [0, 0, 1, 1], [], []>} : vector<128x128xbf16>, vector<128x128xbf16>, vector<128x128xf32> -> vector<128x128xf32>
    %c0_5 = arith.constant 0 : index
    %c0_6 = arith.constant 0 : index
    %c0_7 = arith.constant 0 : index
    %5 = vector.load %arg3[%c0_5, %c0_6, %c0_7] : memref<1x128x128xf32, #tpu.memory_space<vmem>>, vector<1x128x128xf32>
    %6 = vector.shape_cast %5 : vector<1x128x128xf32> to vector<128x128xf32>
    %7 = vector.shape_cast %4 : vector<128x128xf32> to vector<1x128x128xf32>
    tpu.vector_store %arg3[%c0_5, %c0_6, %c0_7], %7 {strides = array<i32>} : memref<1x128x128xf32, #tpu.memory_space<vmem>>, vector<1x128x128xf32>,
    return
  }
  func.func @transform_0(%arg0: i32) -> (i32, i32, i32) {
    %c0_i32 = arith.constant 0 : i32
    %c0_i32_0 = arith.constant 0 : i32
    %c0_i32_1 = arith.constant 0 : i32
    return %arg0, %c0_i32, %c0_i32_0 : i32, i32, i32
  }
  func.func @transform_1(%arg0: i32) -> (i32, i32, i32) {
    %c0_i32 = arith.constant 0 : i32
    %c0_i32_0 = arith.constant 0 : i32
    %c0_i32_1 = arith.constant 0 : i32
    return %arg0, %c0_i32, %c0_i32_0 : i32, i32, i32
  }
  func.func @transform_2(%arg0: i32) -> (i32, i32, i32) {
    %c0_i32 = arith.constant 0 : i32
    %c0_i32_0 = arith.constant 0 : i32
    %c0_i32_1 = arith.constant 0 : i32
    return %arg0, %c0_i32, %c0_i32_0 : i32, i32, i32
  }
}

module attributes {stable_mosaic.version = 11 : i64} {
  func.func @_bmm_nt_kernel(%arg0: i32, %arg1: memref<1x128x128xbf16, #tpu.memory_space<vmem>>, %arg2: memref<1x128x128xbf16, #tpu.memory_space<vmem>>, %arg3: memref<1x128x128xf32, #tpu.memory_space<vmem>>) attributes {dimension_semantics = [#tpu.dimension_semantics<parallel>], iteration_bounds = array<i64: 2>, scalar_prefetch = 0 : i64, scratch_operands = 0 : i64, tpu.core_type = #tpu.core_type<tc>, window_params = [{transform_indices = @transform_0, window_bounds = array<i64: 1, 128, 128>}, {transform_indices = @transform_1, window_bounds = array<i64: 1, 128, 128>}, {transform_indices = @transform_2, window_bounds = array<i64: 1, 128, 128>}]} {
    %c0 = arith.constant 0 : index
    %c0_0 = arith.constant 0 : index
    %c0_1 = arith.constant 0 : index
    %0 = vector.load %arg1[%c0, %c0_0, %c0_1] : memref<1x128x128xbf16, #tpu.memory_space<vmem>>, vector<1x128x128xbf16>
    %1 = vector.shape_cast %0 : vector<1x128x128xbf16> to vector<128x128xbf16>
    %c0_2 = arith.constant 0 : index
    %c0_3 = arith.constant 0 : index
    %c0_4 = arith.constant 0 : index
    %2 = vector.load %arg2[%c0_2, %c0_3, %c0_4] : memref<1x128x128xbf16, #tpu.memory_space<vmem>>, vector<1x128x128xbf16>
    %3 = vector.shape_cast %2 : vector<1x128x128xbf16> to vector<128x128xbf16>
    %cst = arith.constant dense<0.000000e+00> : vector<128x128xf32>
    %4 = tpu.matmul %1, %3, %cst {dimension_numbers = #tpu.dot_dimension_numbers<[1], [1], [0], [0], [0, 0, 1, 0], [], []>} : vector<128x128xbf16>, vector<128x128xbf16>, vector<128x128xf32> -> vector<128x128xf32>
    %c0_5 = arith.constant 0 : index
    %c0_6 = arith.constant 0 : index
    %c0_7 = arith.constant 0 : index
    %5 = vector.load %arg3[%c0_5, %c0_6, %c0_7] : memref<1x128x128xf32, #tpu.memory_space<vmem>>, vector<1x128x128xf32>
    %6 = vector.shape_cast %5 : vector<1x128x128xf32> to vector<128x128xf32>
    %7 = vector.shape_cast %4 : vector<128x128xf32> to vector<1x128x128xf32>
    tpu.vector_store %arg3[%c0_5, %c0_6, %c0_7], %7 {strides = array<i32>} : memref<1x128x128xf32, #tpu.memory_space<vmem>>, vector<1x128x128xf32>,
    return
  }
  func.func @transform_0(%arg0: i32) -> (i32, i32, i32) {
    %c0_i32 = arith.constant 0 : i32
    %c0_i32_0 = arith.constant 0 : i32
    %c0_i32_1 = arith.constant 0 : i32
    return %arg0, %c0_i32, %c0_i32_0 : i32, i32, i32
  }
  func.func @transform_1(%arg0: i32) -> (i32, i32, i32) {
    %c0_i32 = arith.constant 0 : i32
    %c0_i32_0 = arith.constant 0 : i32
    %c0_i32_1 = arith.constant 0 : i32
    return %arg0, %c0_i32, %c0_i32_0 : i32, i32, i32
  }
  func.func @transform_2(%arg0: i32) -> (i32, i32, i32) {
    %c0_i32 = arith.constant 0 : i32
    %c0_i32_0 = arith.constant 0 : i32
    %c0_i32_1 = arith.constant 0 : i32
    return %arg0, %c0_i32, %c0_i32_0 : i32, i32, i32
  }
}

module attributes {stable_mosaic.version = 11 : i64} {
  func.func @_bmm_nn_kernel(%arg0: i32, %arg1: memref<1x896x128xbf16, #tpu.memory_space<vmem>>, %arg2: memref<1x128x128xbf16, #tpu.memory_space<vmem>>, %arg3: memref<1x896x128xf32, #tpu.memory_space<vmem>>) attributes {dimension_semantics = [#tpu.dimension_semantics<parallel>], iteration_bounds = array<i64: 2>, scalar_prefetch = 0 : i64, scratch_operands = 0 : i64, tpu.core_type = #tpu.core_type<tc>, window_params = [{transform_indices = @transform_0, window_bounds = array<i64: 1, 896, 128>}, {transform_indices = @transform_1, window_bounds = array<i64: 1, 128, 128>}, {transform_indices = @transform_2, window_bounds = array<i64: 1, 896, 128>}]} {
    %c0 = arith.constant 0 : index
    %c0_0 = arith.constant 0 : index
    %c0_1 = arith.constant 0 : index
    %0 = vector.load %arg1[%c0, %c0_0, %c0_1] : memref<1x896x128xbf16, #tpu.memory_space<vmem>>, vector<1x896x128xbf16>
    %1 = vector.shape_cast %0 : vector<1x896x128xbf16> to vector<896x128xbf16>
    %c0_2 = arith.constant 0 : index
    %c0_3 = arith.constant 0 : index
    %c0_4 = arith.constant 0 : index
    %2 = vector.load %arg2[%c0_2, %c0_3, %c0_4] : memref<1x128x128xbf16, #tpu.memory_space<vmem>>, vector<1x128x128xbf16>
    %3 = vector.shape_cast %2 : vector<1x128x128xbf16> to vector<128x128xbf16>
    %cst = arith.constant dense<0.000000e+00> : vector<896x128xf32>
    %4 = tpu.matmul %1, %3, %cst {dimension_numbers = #tpu.dot_dimension_numbers<[1], [0], [0], [1], [0, 0, 1, 1], [], []>} : vector<896x128xbf16>, vector<128x128xbf16>, vector<896x128xf32> -> vector<896x128xf32>
    %c0_5 = arith.constant 0 : index
    %c0_6 = arith.constant 0 : index
    %c0_7 = arith.constant 0 : index
    %5 = vector.load %arg3[%c0_5, %c0_6, %c0_7] : memref<1x896x128xf32, #tpu.memory_space<vmem>>, vector<1x896x128xf32>
    %6 = vector.shape_cast %5 : vector<1x896x128xf32> to vector<896x128xf32>
    %7 = vector.shape_cast %4 : vector<896x128xf32> to vector<1x896x128xf32>
    tpu.vector_store %arg3[%c0_5, %c0_6, %c0_7], %7 {strides = array<i32>} : memref<1x896x128xf32, #tpu.memory_space<vmem>>, vector<1x896x128xf32>,
    return
  }
  func.func @transform_0(%arg0: i32) -> (i32, i32, i32) {
    %c0_i32 = arith.constant 0 : i32
    %c0_i32_0 = arith.constant 0 : i32
    %c0_i32_1 = arith.constant 0 : i32
    return %arg0, %c0_i32, %c0_i32_0 : i32, i32, i32
  }
  func.func @transform_1(%arg0: i32) -> (i32, i32, i32) {
    %c0_i32 = arith.constant 0 : i32
    %c0_i32_0 = arith.constant 0 : i32
    %c0_i32_1 = arith.constant 0 : i32
    return %arg0, %c0_i32, %c0_i32_0 : i32, i32, i32
  }
  func.func @transform_2(%arg0: i32) -> (i32, i32, i32) {
    %c0_i32 = arith.constant 0 : i32
    %c0_i32_0 = arith.constant 0 : i32
    %c0_i32_1 = arith.constant 0 : i32
    return %arg0, %c0_i32, %c0_i32_0 : i32, i32, i32
  }
}

module attributes {stable_mosaic.version = 11 : i64} {
  func.func @_bmm_nn_kernel(%arg0: i32, %arg1: memref<1x256x128xbf16, #tpu.memory_space<vmem>>, %arg2: memref<1x128x128xbf16, #tpu.memory_space<vmem>>, %arg3: memref<1x256x128xf32, #tpu.memory_space<vmem>>) attributes {dimension_semantics = [#tpu.dimension_semantics<parallel>], iteration_bounds = array<i64: 2>, scalar_prefetch = 0 : i64, scratch_operands = 0 : i64, tpu.core_type = #tpu.core_type<tc>, window_params = [{transform_indices = @transform_0, window_bounds = array<i64: 1, 256, 128>}, {transform_indices = @transform_1, window_bounds = array<i64: 1, 128, 128>}, {transform_indices = @transform_2, window_bounds = array<i64: 1, 256, 128>}]} {
    %c0 = arith.constant 0 : index
    %c0_0 = arith.constant 0 : index
    %c0_1 = arith.constant 0 : index
    %0 = vector.load %arg1[%c0, %c0_0, %c0_1] : memref<1x256x128xbf16, #tpu.memory_space<vmem>>, vector<1x256x128xbf16>
    %1 = vector.shape_cast %0 : vector<1x256x128xbf16> to vector<256x128xbf16>
    %c0_2 = arith.constant 0 : index
    %c0_3 = arith.constant 0 : index
    %c0_4 = arith.constant 0 : index
    %2 = vector.load %arg2[%c0_2, %c0_3, %c0_4] : memref<1x128x128xbf16, #tpu.memory_space<vmem>>, vector<1x128x128xbf16>
    %3 = vector.shape_cast %2 : vector<1x128x128xbf16> to vector<128x128xbf16>
    %cst = arith.constant dense<0.000000e+00> : vector<256x128xf32>
    %4 = tpu.matmul %1, %3, %cst {dimension_numbers = #tpu.dot_dimension_numbers<[1], [0], [0], [1], [0, 0, 1, 1], [], []>} : vector<256x128xbf16>, vector<128x128xbf16>, vector<256x128xf32> -> vector<256x128xf32>
    %c0_5 = arith.constant 0 : index
    %c0_6 = arith.constant 0 : index
    %c0_7 = arith.constant 0 : index
    %5 = vector.load %arg3[%c0_5, %c0_6, %c0_7] : memref<1x256x128xf32, #tpu.memory_space<vmem>>, vector<1x256x128xf32>
    %6 = vector.shape_cast %5 : vector<1x256x128xf32> to vector<256x128xf32>
    %7 = vector.shape_cast %4 : vector<256x128xf32> to vector<1x256x128xf32>
    tpu.vector_store %arg3[%c0_5, %c0_6, %c0_7], %7 {strides = array<i32>} : memref<1x256x128xf32, #tpu.memory_space<vmem>>, vector<1x256x128xf32>,
    return
  }
  func.func @transform_0(%arg0: i32) -> (i32, i32, i32) {
    %c0_i32 = arith.constant 0 : i32
    %c0_i32_0 = arith.constant 0 : i32
    %c0_i32_1 = arith.constant 0 : i32
    return %arg0, %c0_i32, %c0_i32_0 : i32, i32, i32
  }
  func.func @transform_1(%arg0: i32) -> (i32, i32, i32) {
    %c0_i32 = arith.constant 0 : i32
    %c0_i32_0 = arith.constant 0 : i32
    %c0_i32_1 = arith.constant 0 : i32
    return %arg0, %c0_i32, %c0_i32_0 : i32, i32, i32
  }
  func.func @transform_2(%arg0: i32) -> (i32, i32, i32) {
    %c0_i32 = arith.constant 0 : i32
    %c0_i32_0 = arith.constant 0 : i32
    %c0_i32_1 = arith.constant 0 : i32
    return %arg0, %c0_i32, %c0_i32_0 : i32, i32, i32
  }
}

module attributes {stable_mosaic.version = 11 : i64} {
  func.func @_bmm_nn_kernel(%arg0: i32, %arg1: memref<1x128x128xbf16, #tpu.memory_space<vmem>>, %arg2: memref<1x128x128xbf16, #tpu.memory_space<vmem>>, %arg3: memref<1x128x128xf32, #tpu.memory_space<vmem>>) attributes {dimension_semantics = [#tpu.dimension_semantics<parallel>], iteration_bounds = array<i64: 2>, scalar_prefetch = 0 : i64, scratch_operands = 0 : i64, tpu.core_type = #tpu.core_type<tc>, window_params = [{transform_indices = @transform_0, window_bounds = array<i64: 1, 128, 128>}, {transform_indices = @transform_1, window_bounds = array<i64: 1, 128, 128>}, {transform_indices = @transform_2, window_bounds = array<i64: 1, 128, 128>}]} {
    %c0 = arith.constant 0 : index
    %c0_0 = arith.constant 0 : index
    %c0_1 = arith.constant 0 : index
    %0 = vector.load %arg1[%c0, %c0_0, %c0_1] : memref<1x128x128xbf16, #tpu.memory_space<vmem>>, vector<1x128x128xbf16>
    %1 = vector.shape_cast %0 : vector<1x128x128xbf16> to vector<128x128xbf16>
    %c0_2 = arith.constant 0 : index
    %c0_3 = arith.constant 0 : index
    %c0_4 = arith.constant 0 : index
    %2 = vector.load %arg2[%c0_2, %c0_3, %c0_4] : memref<1x128x128xbf16, #tpu.memory_space<vmem>>, vector<1x128x128xbf16>
    %3 = vector.shape_cast %2 : vector<1x128x128xbf16> to vector<128x128xbf16>
    %cst = arith.constant dense<0.000000e+00> : vector<128x128xf32>
    %4 = tpu.matmul %1, %3, %cst {dimension_numbers = #tpu.dot_dimension_numbers<[1], [0], [0], [1], [0, 0, 1, 1], [], []>} : vector<128x128xbf16>, vector<128x128xbf16>, vector<128x128xf32> -> vector<128x128xf32>
    %c0_5 = arith.constant 0 : index
    %c0_6 = arith.constant 0 : index
    %c0_7 = arith.constant 0 : index
    %5 = vector.load %arg3[%c0_5, %c0_6, %c0_7] : memref<1x128x128xf32, #tpu.memory_space<vmem>>, vector<1x128x128xf32>
    %6 = vector.shape_cast %5 : vector<1x128x128xf32> to vector<128x128xf32>
    %7 = vector.shape_cast %4 : vector<128x128xf32> to vector<1x128x128xf32>
    tpu.vector_store %arg3[%c0_5, %c0_6, %c0_7], %7 {strides = array<i32>} : memref<1x128x128xf32, #tpu.memory_space<vmem>>, vector<1x128x128xf32>,
    return
  }
  func.func @transform_0(%arg0: i32) -> (i32, i32, i32) {
    %c0_i32 = arith.constant 0 : i32
    %c0_i32_0 = arith.constant 0 : i32
    %c0_i32_1 = arith.constant 0 : i32
    return %arg0, %c0_i32, %c0_i32_0 : i32, i32, i32
  }
  func.func @transform_1(%arg0: i32) -> (i32, i32, i32) {
    %c0_i32 = arith.constant 0 : i32
    %c0_i32_0 = arith.constant 0 : i32
    %c0_i32_1 = arith.constant 0 : i32
    return %arg0, %c0_i32, %c0_i32_0 : i32, i32, i32
  }
  func.func @transform_2(%arg0: i32) -> (i32, i32, i32) {
    %c0_i32 = arith.constant 0 : i32
    %c0_i32_0 = arith.constant 0 : i32
    %c0_i32_1 = arith.constant 0 : i32
    return %arg0, %c0_i32, %c0_i32_0 : i32, i32, i32
  }
}

module attributes {stable_mosaic.version = 11 : i64} {
  func.func @_bmm_nt_kernel(%arg0: i32, %arg1: memref<1x128x128xbf16, #tpu.memory_space<vmem>>, %arg2: memref<1x128x128xbf16, #tpu.memory_space<vmem>>, %arg3: memref<1x128x128xf32, #tpu.memory_space<vmem>>) attributes {dimension_semantics = [#tpu.dimension_semantics<parallel>], iteration_bounds = array<i64: 2>, scalar_prefetch = 0 : i64, scratch_operands = 0 : i64, tpu.core_type = #tpu.core_type<tc>, window_params = [{transform_indices = @transform_0, window_bounds = array<i64: 1, 128, 128>}, {transform_indices = @transform_1, window_bounds = array<i64: 1, 128, 128>}, {transform_indices = @transform_2, window_bounds = array<i64: 1, 128, 128>}]} {
    %c0 = arith.constant 0 : index
    %c0_0 = arith.constant 0 : index
    %c0_1 = arith.constant 0 : index
    %0 = vector.load %arg1[%c0, %c0_0, %c0_1] : memref<1x128x128xbf16, #tpu.memory_space<vmem>>, vector<1x128x128xbf16>
    %1 = vector.shape_cast %0 : vector<1x128x128xbf16> to vector<128x128xbf16>
    %c0_2 = arith.constant 0 : index
    %c0_3 = arith.constant 0 : index
    %c0_4 = arith.constant 0 : index
    %2 = vector.load %arg2[%c0_2, %c0_3, %c0_4] : memref<1x128x128xbf16, #tpu.memory_space<vmem>>, vector<1x128x128xbf16>
    %3 = vector.shape_cast %2 : vector<1x128x128xbf16> to vector<128x128xbf16>
    %cst = arith.constant dense<0.000000e+00> : vector<128x128xf32>
    %4 = tpu.matmul %1, %3, %cst {dimension_numbers = #tpu.dot_dimension_numbers<[1], [1], [0], [0], [0, 0, 1, 0], [], []>} : vector<128x128xbf16>, vector<128x128xbf16>, vector<128x128xf32> -> vector<128x128xf32>
    %c0_5 = arith.constant 0 : index
    %c0_6 = arith.constant 0 : index
    %c0_7 = arith.constant 0 : index
    %5 = vector.load %arg3[%c0_5, %c0_6, %c0_7] : memref<1x128x128xf32, #tpu.memory_space<vmem>>, vector<1x128x128xf32>
    %6 = vector.shape_cast %5 : vector<1x128x128xf32> to vector<128x128xf32>
    %7 = vector.shape_cast %4 : vector<128x128xf32> to vector<1x128x128xf32>
    tpu.vector_store %arg3[%c0_5, %c0_6, %c0_7], %7 {strides = array<i32>} : memref<1x128x128xf32, #tpu.memory_space<vmem>>, vector<1x128x128xf32>,
    return
  }
  func.func @transform_0(%arg0: i32) -> (i32, i32, i32) {
    %c0_i32 = arith.constant 0 : i32
    %c0_i32_0 = arith.constant 0 : i32
    %c0_i32_1 = arith.constant 0 : i32
    return %arg0, %c0_i32, %c0_i32_0 : i32, i32, i32
  }
  func.func @transform_1(%arg0: i32) -> (i32, i32, i32) {
    %c0_i32 = arith.constant 0 : i32
    %c0_i32_0 = arith.constant 0 : i32
    %c0_i32_1 = arith.constant 0 : i32
    return %arg0, %c0_i32, %c0_i32_0 : i32, i32, i32
  }
  func.func @transform_2(%arg0: i32) -> (i32, i32, i32) {
    %c0_i32 = arith.constant 0 : i32
    %c0_i32_0 = arith.constant 0 : i32
    %c0_i32_1 = arith.constant 0 : i32
    return %arg0, %c0_i32, %c0_i32_0 : i32, i32, i32
  }
}

module attributes {stable_mosaic.version = 11 : i64} {
  func.func @_bmm_nt_kernel(%arg0: i32, %arg1: memref<1x256x128xbf16, #tpu.memory_space<vmem>>, %arg2: memref<1x128x128xbf16, #tpu.memory_space<vmem>>, %arg3: memref<1x256x128xf32, #tpu.memory_space<vmem>>) attributes {dimension_semantics = [#tpu.dimension_semantics<parallel>], iteration_bounds = array<i64: 2>, scalar_prefetch = 0 : i64, scratch_operands = 0 : i64, tpu.core_type = #tpu.core_type<tc>, window_params = [{transform_indices = @transform_0, window_bounds = array<i64: 1, 256, 128>}, {transform_indices = @transform_1, window_bounds = array<i64: 1, 128, 128>}, {transform_indices = @transform_2, window_bounds = array<i64: 1, 256, 128>}]} {
    %c0 = arith.constant 0 : index
    %c0_0 = arith.constant 0 : index
    %c0_1 = arith.constant 0 : index
    %0 = vector.load %arg1[%c0, %c0_0, %c0_1] : memref<1x256x128xbf16, #tpu.memory_space<vmem>>, vector<1x256x128xbf16>
    %1 = vector.shape_cast %0 : vector<1x256x128xbf16> to vector<256x128xbf16>
    %c0_2 = arith.constant 0 : index
    %c0_3 = arith.constant 0 : index
    %c0_4 = arith.constant 0 : index
    %2 = vector.load %arg2[%c0_2, %c0_3, %c0_4] : memref<1x128x128xbf16, #tpu.memory_space<vmem>>, vector<1x128x128xbf16>
    %3 = vector.shape_cast %2 : vector<1x128x128xbf16> to vector<128x128xbf16>
    %cst = arith.constant dense<0.000000e+00> : vector<256x128xf32>
    %4 = tpu.matmul %1, %3, %cst {dimension_numbers = #tpu.dot_dimension_numbers<[1], [1], [0], [0], [0, 0, 1, 0], [], []>} : vector<256x128xbf16>, vector<128x128xbf16>, vector<256x128xf32> -> vector<256x128xf32>
    %c0_5 = arith.constant 0 : index
    %c0_6 = arith.constant 0 : index
    %c0_7 = arith.constant 0 : index
    %5 = vector.load %arg3[%c0_5, %c0_6, %c0_7] : memref<1x256x128xf32, #tpu.memory_space<vmem>>, vector<1x256x128xf32>
    %6 = vector.shape_cast %5 : vector<1x256x128xf32> to vector<256x128xf32>
    %7 = vector.shape_cast %4 : vector<256x128xf32> to vector<1x256x128xf32>
    tpu.vector_store %arg3[%c0_5, %c0_6, %c0_7], %7 {strides = array<i32>} : memref<1x256x128xf32, #tpu.memory_space<vmem>>, vector<1x256x128xf32>,
    return
  }
  func.func @transform_0(%arg0: i32) -> (i32, i32, i32) {
    %c0_i32 = arith.constant 0 : i32
    %c0_i32_0 = arith.constant 0 : i32
    %c0_i32_1 = arith.constant 0 : i32
    return %arg0, %c0_i32, %c0_i32_0 : i32, i32, i32
  }
  func.func @transform_1(%arg0: i32) -> (i32, i32, i32) {
    %c0_i32 = arith.constant 0 : i32
    %c0_i32_0 = arith.constant 0 : i32
    %c0_i32_1 = arith.constant 0 : i32
    return %arg0, %c0_i32, %c0_i32_0 : i32, i32, i32
  }
  func.func @transform_2(%arg0: i32) -> (i32, i32, i32) {
    %c0_i32 = arith.constant 0 : i32
    %c0_i32_0 = arith.constant 0 : i32
    %c0_i32_1 = arith.constant 0 : i32
    return %arg0, %c0_i32, %c0_i32_0 : i32, i32, i32
  }
}

module attributes {stable_mosaic.version = 11 : i64} {
  func.func @_bmm_tn_kernel(%arg0: i32, %arg1: memref<1x896x128xf32, #tpu.memory_space<vmem>>, %arg2: memref<1x896x128xbf16, #tpu.memory_space<vmem>>, %arg3: memref<1x128x128xf32, #tpu.memory_space<vmem>>) attributes {dimension_semantics = [#tpu.dimension_semantics<parallel>], iteration_bounds = array<i64: 2>, scalar_prefetch = 0 : i64, scratch_operands = 0 : i64, tpu.core_type = #tpu.core_type<tc>, window_params = [{transform_indices = @transform_0, window_bounds = array<i64: 1, 896, 128>}, {transform_indices = @transform_1, window_bounds = array<i64: 1, 896, 128>}, {transform_indices = @transform_2, window_bounds = array<i64: 1, 128, 128>}]} {
    %c0 = arith.constant 0 : index
    %c0_0 = arith.constant 0 : index
    %c0_1 = arith.constant 0 : index
    %0 = vector.load %arg1[%c0, %c0_0, %c0_1] : memref<1x896x128xf32, #tpu.memory_space<vmem>>, vector<1x896x128xf32>
    %1 = vector.shape_cast %0 : vector<1x896x128xf32> to vector<896x128xf32>
    %2 = tpu.transpose %1, [1, 0] : vector<896x128xf32> -> vector<128x896xf32>
    %3 = arith.truncf %2 : vector<128x896xf32> to vector<128x896xbf16>
    %c0_2 = arith.constant 0 : index
    %c0_3 = arith.constant 0 : index
    %c0_4 = arith.constant 0 : index
    %4 = vector.load %arg2[%c0_2, %c0_3, %c0_4] : memref<1x896x128xbf16, #tpu.memory_space<vmem>>, vector<1x896x128xbf16>
    %5 = vector.shape_cast %4 : vector<1x896x128xbf16> to vector<896x128xbf16>
    %cst = arith.constant dense<0.000000e+00> : vector<128x128xf32>
    %6 = tpu.matmul %3, %5, %cst {dimension_numbers = #tpu.dot_dimension_numbers<[1], [0], [0], [1], [0, 0, 1, 1], [], []>} : vector<128x896xbf16>, vector<896x128xbf16>, vector<128x128xf32> -> vector<128x128xf32>
    %c0_5 = arith.constant 0 : index
    %c0_6 = arith.constant 0 : index
    %c0_7 = arith.constant 0 : index
    %7 = vector.load %arg3[%c0_5, %c0_6, %c0_7] : memref<1x128x128xf32, #tpu.memory_space<vmem>>, vector<1x128x128xf32>
    %8 = vector.shape_cast %7 : vector<1x128x128xf32> to vector<128x128xf32>
    %9 = vector.shape_cast %6 : vector<128x128xf32> to vector<1x128x128xf32>
    tpu.vector_store %arg3[%c0_5, %c0_6, %c0_7], %9 {strides = array<i32>} : memref<1x128x128xf32, #tpu.memory_space<vmem>>, vector<1x128x128xf32>,
    return
  }
  func.func @transform_0(%arg0: i32) -> (i32, i32, i32) {
    %c0_i32 = arith.constant 0 : i32
    %c0_i32_0 = arith.constant 0 : i32
    %c0_i32_1 = arith.constant 0 : i32
    return %arg0, %c0_i32, %c0_i32_0 : i32, i32, i32
  }
  func.func @transform_1(%arg0: i32) -> (i32, i32, i32) {
    %c0_i32 = arith.constant 0 : i32
    %c0_i32_0 = arith.constant 0 : i32
    %c0_i32_1 = arith.constant 0 : i32
    return %arg0, %c0_i32, %c0_i32_0 : i32, i32, i32
  }
  func.func @transform_2(%arg0: i32) -> (i32, i32, i32) {
    %c0_i32 = arith.constant 0 : i32
    %c0_i32_0 = arith.constant 0 : i32
    %c0_i32_1 = arith.constant 0 : i32
    return %arg0, %c0_i32, %c0_i32_0 : i32, i32, i32
  }
}

module attributes {stable_mosaic.version = 11 : i64} {
  func.func @_bmm_tn_kernel(%arg0: i32, %arg1: memref<1x256x128xf32, #tpu.memory_space<vmem>>, %arg2: memref<1x256x128xbf16, #tpu.memory_space<vmem>>, %arg3: memref<1x128x128xf32, #tpu.memory_space<vmem>>) attributes {dimension_semantics = [#tpu.dimension_semantics<parallel>], iteration_bounds = array<i64: 2>, scalar_prefetch = 0 : i64, scratch_operands = 0 : i64, tpu.core_type = #tpu.core_type<tc>, window_params = [{transform_indices = @transform_0, window_bounds = array<i64: 1, 256, 128>}, {transform_indices = @transform_1, window_bounds = array<i64: 1, 256, 128>}, {transform_indices = @transform_2, window_bounds = array<i64: 1, 128, 128>}]} {
    %c0 = arith.constant 0 : index
    %c0_0 = arith.constant 0 : index
    %c0_1 = arith.constant 0 : index
    %0 = vector.load %arg1[%c0, %c0_0, %c0_1] : memref<1x256x128xf32, #tpu.memory_space<vmem>>, vector<1x256x128xf32>
    %1 = vector.shape_cast %0 : vector<1x256x128xf32> to vector<256x128xf32>
    %2 = tpu.transpose %1, [1, 0] : vector<256x128xf32> -> vector<128x256xf32>
    %3 = arith.truncf %2 : vector<128x256xf32> to vector<128x256xbf16>
    %c0_2 = arith.constant 0 : index
    %c0_3 = arith.constant 0 : index
    %c0_4 = arith.constant 0 : index
    %4 = vector.load %arg2[%c0_2, %c0_3, %c0_4] : memref<1x256x128xbf16, #tpu.memory_space<vmem>>, vector<1x256x128xbf16>
    %5 = vector.shape_cast %4 : vector<1x256x128xbf16> to vector<256x128xbf16>
    %cst = arith.constant dense<0.000000e+00> : vector<128x128xf32>
    %6 = tpu.matmul %3, %5, %cst {dimension_numbers = #tpu.dot_dimension_numbers<[1], [0], [0], [1], [0, 0, 1, 1], [], []>} : vector<128x256xbf16>, vector<256x128xbf16>, vector<128x128xf32> -> vector<128x128xf32>
    %c0_5 = arith.constant 0 : index
    %c0_6 = arith.constant 0 : index
    %c0_7 = arith.constant 0 : index
    %7 = vector.load %arg3[%c0_5, %c0_6, %c0_7] : memref<1x128x128xf32, #tpu.memory_space<vmem>>, vector<1x128x128xf32>
    %8 = vector.shape_cast %7 : vector<1x128x128xf32> to vector<128x128xf32>
    %9 = vector.shape_cast %6 : vector<128x128xf32> to vector<1x128x128xf32>
    tpu.vector_store %arg3[%c0_5, %c0_6, %c0_7], %9 {strides = array<i32>} : memref<1x128x128xf32, #tpu.memory_space<vmem>>, vector<1x128x128xf32>,
    return
  }
  func.func @transform_0(%arg0: i32) -> (i32, i32, i32) {
    %c0_i32 = arith.constant 0 : i32
    %c0_i32_0 = arith.constant 0 : i32
    %c0_i32_1 = arith.constant 0 : i32
    return %arg0, %c0_i32, %c0_i32_0 : i32, i32, i32
  }
  func.func @transform_1(%arg0: i32) -> (i32, i32, i32) {
    %c0_i32 = arith.constant 0 : i32
    %c0_i32_0 = arith.constant 0 : i32
    %c0_i32_1 = arith.constant 0 : i32
    return %arg0, %c0_i32, %c0_i32_0 : i32, i32, i32
  }
  func.func @transform_2(%arg0: i32) -> (i32, i32, i32) {
    %c0_i32 = arith.constant 0 : i32
    %c0_i32_0 = arith.constant 0 : i32
    %c0_i32_1 = arith.constant 0 : i32
    return %arg0, %c0_i32, %c0_i32_0 : i32, i32, i32
  }
}

module attributes {stable_mosaic.version = 11 : i64} {
  func.func @_bmm_tn_kernel(%arg0: i32, %arg1: memref<1x128x128xf32, #tpu.memory_space<vmem>>, %arg2: memref<1x128x128xbf16, #tpu.memory_space<vmem>>, %arg3: memref<1x128x128xf32, #tpu.memory_space<vmem>>) attributes {dimension_semantics = [#tpu.dimension_semantics<parallel>], iteration_bounds = array<i64: 2>, scalar_prefetch = 0 : i64, scratch_operands = 0 : i64, tpu.core_type = #tpu.core_type<tc>, window_params = [{transform_indices = @transform_0, window_bounds = array<i64: 1, 128, 128>}, {transform_indices = @transform_1, window_bounds = array<i64: 1, 128, 128>}, {transform_indices = @transform_2, window_bounds = array<i64: 1, 128, 128>}]} {
    %c0 = arith.constant 0 : index
    %c0_0 = arith.constant 0 : index
    %c0_1 = arith.constant 0 : index
    %0 = vector.load %arg1[%c0, %c0_0, %c0_1] : memref<1x128x128xf32, #tpu.memory_space<vmem>>, vector<1x128x128xf32>
    %1 = vector.shape_cast %0 : vector<1x128x128xf32> to vector<128x128xf32>
    %2 = tpu.transpose %1, [1, 0] : vector<128x128xf32> -> vector<128x128xf32>
    %3 = arith.truncf %2 : vector<128x128xf32> to vector<128x128xbf16>
    %c0_2 = arith.constant 0 : index
    %c0_3 = arith.constant 0 : index
    %c0_4 = arith.constant 0 : index
    %4 = vector.load %arg2[%c0_2, %c0_3, %c0_4] : memref<1x128x128xbf16, #tpu.memory_space<vmem>>, vector<1x128x128xbf16>
    %5 = vector.shape_cast %4 : vector<1x128x128xbf16> to vector<128x128xbf16>
    %cst = arith.constant dense<0.000000e+00> : vector<128x128xf32>
    %6 = tpu.matmul %3, %5, %cst {dimension_numbers = #tpu.dot_dimension_numbers<[1], [0], [0], [1], [0, 0, 1, 1], [], []>} : vector<128x128xbf16>, vector<128x128xbf16>, vector<128x128xf32> -> vector<128x128xf32>
    %c0_5 = arith.constant 0 : index
    %c0_6 = arith.constant 0 : index
    %c0_7 = arith.constant 0 : index
    %7 = vector.load %arg3[%c0_5, %c0_6, %c0_7] : memref<1x128x128xf32, #tpu.memory_space<vmem>>, vector<1x128x128xf32>
    %8 = vector.shape_cast %7 : vector<1x128x128xf32> to vector<128x128xf32>
    %9 = vector.shape_cast %6 : vector<128x128xf32> to vector<1x128x128xf32>
    tpu.vector_store %arg3[%c0_5, %c0_6, %c0_7], %9 {strides = array<i32>} : memref<1x128x128xf32, #tpu.memory_space<vmem>>, vector<1x128x128xf32>,
    return
  }
  func.func @transform_0(%arg0: i32) -> (i32, i32, i32) {
    %c0_i32 = arith.constant 0 : i32
    %c0_i32_0 = arith.constant 0 : i32
    %c0_i32_1 = arith.constant 0 : i32
    return %arg0, %c0_i32, %c0_i32_0 : i32, i32, i32
  }
  func.func @transform_1(%arg0: i32) -> (i32, i32, i32) {
    %c0_i32 = arith.constant 0 : i32
    %c0_i32_0 = arith.constant 0 : i32
    %c0_i32_1 = arith.constant 0 : i32
    return %arg0, %c0_i32, %c0_i32_0 : i32, i32, i32
  }
  func.func @transform_2(%arg0: i32) -> (i32, i32, i32) {
    %c0_i32 = arith.constant 0 : i32
    %c0_i32_0 = arith.constant 0 : i32
    %c0_i32_1 = arith.constant 0 : i32
    return %arg0, %c0_i32, %c0_i32_0 : i32, i32, i32
  }
}

module attributes {stable_mosaic.version = 11 : i64} {
  func.func @_bmm_tn_kernel(%arg0: i32, %arg1: memref<1x128x128xf32, #tpu.memory_space<vmem>>, %arg2: memref<1x128x128xbf16, #tpu.memory_space<vmem>>, %arg3: memref<1x128x128xf32, #tpu.memory_space<vmem>>) attributes {dimension_semantics = [#tpu.dimension_semantics<parallel>], iteration_bounds = array<i64: 2>, scalar_prefetch = 0 : i64, scratch_operands = 0 : i64, tpu.core_type = #tpu.core_type<tc>, window_params = [{transform_indices = @transform_0, window_bounds = array<i64: 1, 128, 128>}, {transform_indices = @transform_1, window_bounds = array<i64: 1, 128, 128>}, {transform_indices = @transform_2, window_bounds = array<i64: 1, 128, 128>}]} {
    %c0 = arith.constant 0 : index
    %c0_0 = arith.constant 0 : index
    %c0_1 = arith.constant 0 : index
    %0 = vector.load %arg1[%c0, %c0_0, %c0_1] : memref<1x128x128xf32, #tpu.memory_space<vmem>>, vector<1x128x128xf32>
    %1 = vector.shape_cast %0 : vector<1x128x128xf32> to vector<128x128xf32>
    %2 = tpu.transpose %1, [1, 0] : vector<128x128xf32> -> vector<128x128xf32>
    %3 = arith.truncf %2 : vector<128x128xf32> to vector<128x128xbf16>
    %c0_2 = arith.constant 0 : index
    %c0_3 = arith.constant 0 : index
    %c0_4 = arith.constant 0 : index
    %4 = vector.load %arg2[%c0_2, %c0_3, %c0_4] : memref<1x128x128xbf16, #tpu.memory_space<vmem>>, vector<1x128x128xbf16>
    %5 = vector.shape_cast %4 : vector<1x128x128xbf16> to vector<128x128xbf16>
    %cst = arith.constant dense<0.000000e+00> : vector<128x128xf32>
    %6 = tpu.matmul %3, %5, %cst {dimension_numbers = #tpu.dot_dimension_numbers<[1], [0], [0], [1], [0, 0, 1, 1], [], []>} : vector<128x128xbf16>, vector<128x128xbf16>, vector<128x128xf32> -> vector<128x128xf32>
    %c0_5 = arith.constant 0 : index
    %c0_6 = arith.constant 0 : index
    %c0_7 = arith.constant 0 : index
    %7 = vector.load %arg3[%c0_5, %c0_6, %c0_7] : memref<1x128x128xf32, #tpu.memory_space<vmem>>, vector<1x128x128xf32>
    %8 = vector.shape_cast %7 : vector<1x128x128xf32> to vector<128x128xf32>
    %9 = vector.shape_cast %6 : vector<128x128xf32> to vector<1x128x128xf32>
    tpu.vector_store %arg3[%c0_5, %c0_6, %c0_7], %9 {strides = array<i32>} : memref<1x128x128xf32, #tpu.memory_space<vmem>>, vector<1x128x128xf32>,
    return
  }
  func.func @transform_0(%arg0: i32) -> (i32, i32, i32) {
    %c0_i32 = arith.constant 0 : i32
    %c0_i32_0 = arith.constant 0 : i32
    %c0_i32_1 = arith.constant 0 : i32
    return %arg0, %c0_i32, %c0_i32_0 : i32, i32, i32
  }
  func.func @transform_1(%arg0: i32) -> (i32, i32, i32) {
    %c0_i32 = arith.constant 0 : i32
    %c0_i32_0 = arith.constant 0 : i32
    %c0_i32_1 = arith.constant 0 : i32
    return %arg0, %c0_i32, %c0_i32_0 : i32, i32, i32
  }
  func.func @transform_2(%arg0: i32) -> (i32, i32, i32) {
    %c0_i32 = arith.constant 0 : i32
    %c0_i32_0 = arith.constant 0 : i32
    %c0_i32_1 = arith.constant 0 : i32
    return %arg0, %c0_i32, %c0_i32_0 : i32, i32, i32
  }
}

module attributes {stable_mosaic.version = 11 : i64} {
  func.func @_bmm_nn_kernel(%arg0: i32, %arg1: memref<1x128x128xbf16, #tpu.memory_space<vmem>>, %arg2: memref<1x128x128xbf16, #tpu.memory_space<vmem>>, %arg3: memref<1x128x128xf32, #tpu.memory_space<vmem>>) attributes {dimension_semantics = [#tpu.dimension_semantics<parallel>], iteration_bounds = array<i64: 2>, scalar_prefetch = 0 : i64, scratch_operands = 0 : i64, tpu.core_type = #tpu.core_type<tc>, window_params = [{transform_indices = @transform_0, window_bounds = array<i64: 1, 128, 128>}, {transform_indices = @transform_1, window_bounds = array<i64: 1, 128, 128>}, {transform_indices = @transform_2, window_bounds = array<i64: 1, 128, 128>}]} {
    %c0 = arith.constant 0 : index
    %c0_0 = arith.constant 0 : index
    %c0_1 = arith.constant 0 : index
    %0 = vector.load %arg1[%c0, %c0_0, %c0_1] : memref<1x128x128xbf16, #tpu.memory_space<vmem>>, vector<1x128x128xbf16>
    %1 = vector.shape_cast %0 : vector<1x128x128xbf16> to vector<128x128xbf16>
    %c0_2 = arith.constant 0 : index
    %c0_3 = arith.constant 0 : index
    %c0_4 = arith.constant 0 : index
    %2 = vector.load %arg2[%c0_2, %c0_3, %c0_4] : memref<1x128x128xbf16, #tpu.memory_space<vmem>>, vector<1x128x128xbf16>
    %3 = vector.shape_cast %2 : vector<1x128x128xbf16> to vector<128x128xbf16>
    %cst = arith.constant dense<0.000000e+00> : vector<128x128xf32>
    %4 = tpu.matmul %1, %3, %cst {dimension_numbers = #tpu.dot_dimension_numbers<[1], [0], [0], [1], [0, 0, 1, 1], [], []>} : vector<128x128xbf16>, vector<128x128xbf16>, vector<128x128xf32> -> vector<128x128xf32>
    %c0_5 = arith.constant 0 : index
    %c0_6 = arith.constant 0 : index
    %c0_7 = arith.constant 0 : index
    %5 = vector.load %arg3[%c0_5, %c0_6, %c0_7] : memref<1x128x128xf32, #tpu.memory_space<vmem>>, vector<1x128x128xf32>
    %6 = vector.shape_cast %5 : vector<1x128x128xf32> to vector<128x128xf32>
    %7 = vector.shape_cast %4 : vector<128x128xf32> to vector<1x128x128xf32>
    tpu.vector_store %arg3[%c0_5, %c0_6, %c0_7], %7 {strides = array<i32>} : memref<1x128x128xf32, #tpu.memory_space<vmem>>, vector<1x128x128xf32>,
    return
  }
  func.func @transform_0(%arg0: i32) -> (i32, i32, i32) {
    %c0_i32 = arith.constant 0 : i32
    %c0_i32_0 = arith.constant 0 : i32
    %c0_i32_1 = arith.constant 0 : i32
    return %arg0, %c0_i32, %c0_i32_0 : i32, i32, i32
  }
  func.func @transform_1(%arg0: i32) -> (i32, i32, i32) {
    %c0_i32 = arith.constant 0 : i32
    %c0_i32_0 = arith.constant 0 : i32
    %c0_i32_1 = arith.constant 0 : i32
    return %arg0, %c0_i32, %c0_i32_0 : i32, i32, i32
  }
  func.func @transform_2(%arg0: i32) -> (i32, i32, i32) {
    %c0_i32 = arith.constant 0 : i32
    %c0_i32_0 = arith.constant 0 : i32
    %c0_i32_1 = arith.constant 0 : i32
    return %arg0, %c0_i32, %c0_i32_0 : i32, i32, i32
  }
}

module attributes {stable_mosaic.version = 11 : i64} {
  func.func @_bmm_nt_kernel(%arg0: i32, %arg1: memref<1x128x128xbf16, #tpu.memory_space<vmem>>, %arg2: memref<1x128x128xbf16, #tpu.memory_space<vmem>>, %arg3: memref<1x128x128xf32, #tpu.memory_space<vmem>>) attributes {dimension_semantics = [#tpu.dimension_semantics<parallel>], iteration_bounds = array<i64: 2>, scalar_prefetch = 0 : i64, scratch_operands = 0 : i64, tpu.core_type = #tpu.core_type<tc>, window_params = [{transform_indices = @transform_0, window_bounds = array<i64: 1, 128, 128>}, {transform_indices = @transform_1, window_bounds = array<i64: 1, 128, 128>}, {transform_indices = @transform_2, window_bounds = array<i64: 1, 128, 128>}]} {
    %c0 = arith.constant 0 : index
    %c0_0 = arith.constant 0 : index
    %c0_1 = arith.constant 0 : index
    %0 = vector.load %arg1[%c0, %c0_0, %c0_1] : memref<1x128x128xbf16, #tpu.memory_space<vmem>>, vector<1x128x128xbf16>
    %1 = vector.shape_cast %0 : vector<1x128x128xbf16> to vector<128x128xbf16>
    %c0_2 = arith.constant 0 : index
    %c0_3 = arith.constant 0 : index
    %c0_4 = arith.constant 0 : index
    %2 = vector.load %arg2[%c0_2, %c0_3, %c0_4] : memref<1x128x128xbf16, #tpu.memory_space<vmem>>, vector<1x128x128xbf16>
    %3 = vector.shape_cast %2 : vector<1x128x128xbf16> to vector<128x128xbf16>
    %cst = arith.constant dense<0.000000e+00> : vector<128x128xf32>
    %4 = tpu.matmul %1, %3, %cst {dimension_numbers = #tpu.dot_dimension_numbers<[1], [1], [0], [0], [0, 0, 1, 0], [], []>} : vector<128x128xbf16>, vector<128x128xbf16>, vector<128x128xf32> -> vector<128x128xf32>
    %c0_5 = arith.constant 0 : index
    %c0_6 = arith.constant 0 : index
    %c0_7 = arith.constant 0 : index
    %5 = vector.load %arg3[%c0_5, %c0_6, %c0_7] : memref<1x128x128xf32, #tpu.memory_space<vmem>>, vector<1x128x128xf32>
    %6 = vector.shape_cast %5 : vector<1x128x128xf32> to vector<128x128xf32>
    %7 = vector.shape_cast %4 : vector<128x128xf32> to vector<1x128x128xf32>
    tpu.vector_store %arg3[%c0_5, %c0_6, %c0_7], %7 {strides = array<i32>} : memref<1x128x128xf32, #tpu.memory_space<vmem>>, vector<1x128x128xf32>,
    return
  }
  func.func @transform_0(%arg0: i32) -> (i32, i32, i32) {
    %c0_i32 = arith.constant 0 : i32
    %c0_i32_0 = arith.constant 0 : i32
    %c0_i32_1 = arith.constant 0 : i32
    return %arg0, %c0_i32, %c0_i32_0 : i32, i32, i32
  }
  func.func @transform_1(%arg0: i32) -> (i32, i32, i32) {
    %c0_i32 = arith.constant 0 : i32
    %c0_i32_0 = arith.constant 0 : i32
    %c0_i32_1 = arith.constant 0 : i32
    return %arg0, %c0_i32, %c0_i32_0 : i32, i32, i32
  }
  func.func @transform_2(%arg0: i32) -> (i32, i32, i32) {
    %c0_i32 = arith.constant 0 : i32
    %c0_i32_0 = arith.constant 0 : i32
    %c0_i32_1 = arith.constant 0 : i32
    return %arg0, %c0_i32, %c0_i32_0 : i32, i32, i32
  }
}

module attributes {stable_mosaic.version = 11 : i64} {
  func.func @_bmm_nt_kernel(%arg0: i32, %arg1: memref<1x256x128xbf16, #tpu.memory_space<vmem>>, %arg2: memref<1x128x128xbf16, #tpu.memory_space<vmem>>, %arg3: memref<1x256x128xf32, #tpu.memory_space<vmem>>) attributes {dimension_semantics = [#tpu.dimension_semantics<parallel>], iteration_bounds = array<i64: 2>, scalar_prefetch = 0 : i64, scratch_operands = 0 : i64, tpu.core_type = #tpu.core_type<tc>, window_params = [{transform_indices = @transform_0, window_bounds = array<i64: 1, 256, 128>}, {transform_indices = @transform_1, window_bounds = array<i64: 1, 128, 128>}, {transform_indices = @transform_2, window_bounds = array<i64: 1, 256, 128>}]} {
    %c0 = arith.constant 0 : index
    %c0_0 = arith.constant 0 : index
    %c0_1 = arith.constant 0 : index
    %0 = vector.load %arg1[%c0, %c0_0, %c0_1] : memref<1x256x128xbf16, #tpu.memory_space<vmem>>, vector<1x256x128xbf16>
    %1 = vector.shape_cast %0 : vector<1x256x128xbf16> to vector<256x128xbf16>
    %c0_2 = arith.constant 0 : index
    %c0_3 = arith.constant 0 : index
    %c0_4 = arith.constant 0 : index
    %2 = vector.load %arg2[%c0_2, %c0_3, %c0_4] : memref<1x128x128xbf16, #tpu.memory_space<vmem>>, vector<1x128x128xbf16>
    %3 = vector.shape_cast %2 : vector<1x128x128xbf16> to vector<128x128xbf16>
    %cst = arith.constant dense<0.000000e+00> : vector<256x128xf32>
    %4 = tpu.matmul %1, %3, %cst {dimension_numbers = #tpu.dot_dimension_numbers<[1], [1], [0], [0], [0, 0, 1, 0], [], []>} : vector<256x128xbf16>, vector<128x128xbf16>, vector<256x128xf32> -> vector<256x128xf32>
    %c0_5 = arith.constant 0 : index
    %c0_6 = arith.constant 0 : index
    %c0_7 = arith.constant 0 : index
    %5 = vector.load %arg3[%c0_5, %c0_6, %c0_7] : memref<1x256x128xf32, #tpu.memory_space<vmem>>, vector<1x256x128xf32>
    %6 = vector.shape_cast %5 : vector<1x256x128xf32> to vector<256x128xf32>
    %7 = vector.shape_cast %4 : vector<256x128xf32> to vector<1x256x128xf32>
    tpu.vector_store %arg3[%c0_5, %c0_6, %c0_7], %7 {strides = array<i32>} : memref<1x256x128xf32, #tpu.memory_space<vmem>>, vector<1x256x128xf32>,
    return
  }
  func.func @transform_0(%arg0: i32) -> (i32, i32, i32) {
    %c0_i32 = arith.constant 0 : i32
    %c0_i32_0 = arith.constant 0 : i32
    %c0_i32_1 = arith.constant 0 : i32
    return %arg0, %c0_i32, %c0_i32_0 : i32, i32, i32
  }
  func.func @transform_1(%arg0: i32) -> (i32, i32, i32) {
    %c0_i32 = arith.constant 0 : i32
    %c0_i32_0 = arith.constant 0 : i32
    %c0_i32_1 = arith.constant 0 : i32
    return %arg0, %c0_i32, %c0_i32_0 : i32, i32, i32
  }
  func.func @transform_2(%arg0: i32) -> (i32, i32, i32) {
    %c0_i32 = arith.constant 0 : i32
    %c0_i32_0 = arith.constant 0 : i32
    %c0_i32_1 = arith.constant 0 : i32
    return %arg0, %c0_i32, %c0_i32_0 : i32, i32, i32
  }
}

module attributes {stable_mosaic.version = 11 : i64} {
  func.func @_bmm_tn_kernel(%arg0: i32, %arg1: memref<1x896x128xf32, #tpu.memory_space<vmem>>, %arg2: memref<1x896x128xbf16, #tpu.memory_space<vmem>>, %arg3: memref<1x128x128xf32, #tpu.memory_space<vmem>>) attributes {dimension_semantics = [#tpu.dimension_semantics<parallel>], iteration_bounds = array<i64: 2>, scalar_prefetch = 0 : i64, scratch_operands = 0 : i64, tpu.core_type = #tpu.core_type<tc>, window_params = [{transform_indices = @transform_0, window_bounds = array<i64: 1, 896, 128>}, {transform_indices = @transform_1, window_bounds = array<i64: 1, 896, 128>}, {transform_indices = @transform_2, window_bounds = array<i64: 1, 128, 128>}]} {
    %c0 = arith.constant 0 : index
    %c0_0 = arith.constant 0 : index
    %c0_1 = arith.constant 0 : index
    %0 = vector.load %arg1[%c0, %c0_0, %c0_1] : memref<1x896x128xf32, #tpu.memory_space<vmem>>, vector<1x896x128xf32>
    %1 = vector.shape_cast %0 : vector<1x896x128xf32> to vector<896x128xf32>
    %2 = tpu.transpose %1, [1, 0] : vector<896x128xf32> -> vector<128x896xf32>
    %3 = arith.truncf %2 : vector<128x896xf32> to vector<128x896xbf16>
    %c0_2 = arith.constant 0 : index
    %c0_3 = arith.constant 0 : index
    %c0_4 = arith.constant 0 : index
    %4 = vector.load %arg2[%c0_2, %c0_3, %c0_4] : memref<1x896x128xbf16, #tpu.memory_space<vmem>>, vector<1x896x128xbf16>
    %5 = vector.shape_cast %4 : vector<1x896x128xbf16> to vector<896x128xbf16>
    %cst = arith.constant dense<0.000000e+00> : vector<128x128xf32>
    %6 = tpu.matmul %3, %5, %cst {dimension_numbers = #tpu.dot_dimension_numbers<[1], [0], [0], [1], [0, 0, 1, 1], [], []>} : vector<128x896xbf16>, vector<896x128xbf16>, vector<128x128xf32> -> vector<128x128xf32>
    %c0_5 = arith.constant 0 : index
    %c0_6 = arith.constant 0 : index
    %c0_7 = arith.constant 0 : index
    %7 = vector.load %arg3[%c0_5, %c0_6, %c0_7] : memref<1x128x128xf32, #tpu.memory_space<vmem>>, vector<1x128x128xf32>
    %8 = vector.shape_cast %7 : vector<1x128x128xf32> to vector<128x128xf32>
    %9 = vector.shape_cast %6 : vector<128x128xf32> to vector<1x128x128xf32>
    tpu.vector_store %arg3[%c0_5, %c0_6, %c0_7], %9 {strides = array<i32>} : memref<1x128x128xf32, #tpu.memory_space<vmem>>, vector<1x128x128xf32>,
    return
  }
  func.func @transform_0(%arg0: i32) -> (i32, i32, i32) {
    %c0_i32 = arith.constant 0 : i32
    %c0_i32_0 = arith.constant 0 : i32
    %c0_i32_1 = arith.constant 0 : i32
    return %arg0, %c0_i32, %c0_i32_0 : i32, i32, i32
  }
  func.func @transform_1(%arg0: i32) -> (i32, i32, i32) {
    %c0_i32 = arith.constant 0 : i32
    %c0_i32_0 = arith.constant 0 : i32
    %c0_i32_1 = arith.constant 0 : i32
    return %arg0, %c0_i32, %c0_i32_0 : i32, i32, i32
  }
  func.func @transform_2(%arg0: i32) -> (i32, i32, i32) {
    %c0_i32 = arith.constant 0 : i32
    %c0_i32_0 = arith.constant 0 : i32
    %c0_i32_1 = arith.constant 0 : i32
    return %arg0, %c0_i32, %c0_i32_0 : i32, i32, i32
  }
}

module attributes {stable_mosaic.version = 11 : i64} {
  func.func @_bmm_tn_kernel(%arg0: i32, %arg1: memref<1x256x128xf32, #tpu.memory_space<vmem>>, %arg2: memref<1x256x128xbf16, #tpu.memory_space<vmem>>, %arg3: memref<1x128x128xf32, #tpu.memory_space<vmem>>) attributes {dimension_semantics = [#tpu.dimension_semantics<parallel>], iteration_bounds = array<i64: 2>, scalar_prefetch = 0 : i64, scratch_operands = 0 : i64, tpu.core_type = #tpu.core_type<tc>, window_params = [{transform_indices = @transform_0, window_bounds = array<i64: 1, 256, 128>}, {transform_indices = @transform_1, window_bounds = array<i64: 1, 256, 128>}, {transform_indices = @transform_2, window_bounds = array<i64: 1, 128, 128>}]} {
    %c0 = arith.constant 0 : index
    %c0_0 = arith.constant 0 : index
    %c0_1 = arith.constant 0 : index
    %0 = vector.load %arg1[%c0, %c0_0, %c0_1] : memref<1x256x128xf32, #tpu.memory_space<vmem>>, vector<1x256x128xf32>
    %1 = vector.shape_cast %0 : vector<1x256x128xf32> to vector<256x128xf32>
    %2 = tpu.transpose %1, [1, 0] : vector<256x128xf32> -> vector<128x256xf32>
    %3 = arith.truncf %2 : vector<128x256xf32> to vector<128x256xbf16>
    %c0_2 = arith.constant 0 : index
    %c0_3 = arith.constant 0 : index
    %c0_4 = arith.constant 0 : index
    %4 = vector.load %arg2[%c0_2, %c0_3, %c0_4] : memref<1x256x128xbf16, #tpu.memory_space<vmem>>, vector<1x256x128xbf16>
    %5 = vector.shape_cast %4 : vector<1x256x128xbf16> to vector<256x128xbf16>
    %cst = arith.constant dense<0.000000e+00> : vector<128x128xf32>
    %6 = tpu.matmul %3, %5, %cst {dimension_numbers = #tpu.dot_dimension_numbers<[1], [0], [0], [1], [0, 0, 1, 1], [], []>} : vector<128x256xbf16>, vector<256x128xbf16>, vector<128x128xf32> -> vector<128x128xf32>
    %c0_5 = arith.constant 0 : index
    %c0_6 = arith.constant 0 : index
    %c0_7 = arith.constant 0 : index
    %7 = vector.load %arg3[%c0_5, %c0_6, %c0_7] : memref<1x128x128xf32, #tpu.memory_space<vmem>>, vector<1x128x128xf32>
    %8 = vector.shape_cast %7 : vector<1x128x128xf32> to vector<128x128xf32>
    %9 = vector.shape_cast %6 : vector<128x128xf32> to vector<1x128x128xf32>
    tpu.vector_store %arg3[%c0_5, %c0_6, %c0_7], %9 {strides = array<i32>} : memref<1x128x128xf32, #tpu.memory_space<vmem>>, vector<1x128x128xf32>,
    return
  }
  func.func @transform_0(%arg0: i32) -> (i32, i32, i32) {
    %c0_i32 = arith.constant 0 : i32
    %c0_i32_0 = arith.constant 0 : i32
    %c0_i32_1 = arith.constant 0 : i32
    return %arg0, %c0_i32, %c0_i32_0 : i32, i32, i32
  }
  func.func @transform_1(%arg0: i32) -> (i32, i32, i32) {
    %c0_i32 = arith.constant 0 : i32
    %c0_i32_0 = arith.constant 0 : i32
    %c0_i32_1 = arith.constant 0 : i32
    return %arg0, %c0_i32, %c0_i32_0 : i32, i32, i32
  }
  func.func @transform_2(%arg0: i32) -> (i32, i32, i32) {
    %c0_i32 = arith.constant 0 : i32
    %c0_i32_0 = arith.constant 0 : i32
    %c0_i32_1 = arith.constant 0 : i32
    return %arg0, %c0_i32, %c0_i32_0 : i32, i32, i32
  }
}

module attributes {stable_mosaic.version = 11 : i64} {
  func.func @_bmm_tn_kernel(%arg0: i32, %arg1: memref<1x128x128xf32, #tpu.memory_space<vmem>>, %arg2: memref<1x128x128xbf16, #tpu.memory_space<vmem>>, %arg3: memref<1x128x128xf32, #tpu.memory_space<vmem>>) attributes {dimension_semantics = [#tpu.dimension_semantics<parallel>], iteration_bounds = array<i64: 2>, scalar_prefetch = 0 : i64, scratch_operands = 0 : i64, tpu.core_type = #tpu.core_type<tc>, window_params = [{transform_indices = @transform_0, window_bounds = array<i64: 1, 128, 128>}, {transform_indices = @transform_1, window_bounds = array<i64: 1, 128, 128>}, {transform_indices = @transform_2, window_bounds = array<i64: 1, 128, 128>}]} {
    %c0 = arith.constant 0 : index
    %c0_0 = arith.constant 0 : index
    %c0_1 = arith.constant 0 : index
    %0 = vector.load %arg1[%c0, %c0_0, %c0_1] : memref<1x128x128xf32, #tpu.memory_space<vmem>>, vector<1x128x128xf32>
    %1 = vector.shape_cast %0 : vector<1x128x128xf32> to vector<128x128xf32>
    %2 = tpu.transpose %1, [1, 0] : vector<128x128xf32> -> vector<128x128xf32>
    %3 = arith.truncf %2 : vector<128x128xf32> to vector<128x128xbf16>
    %c0_2 = arith.constant 0 : index
    %c0_3 = arith.constant 0 : index
    %c0_4 = arith.constant 0 : index
    %4 = vector.load %arg2[%c0_2, %c0_3, %c0_4] : memref<1x128x128xbf16, #tpu.memory_space<vmem>>, vector<1x128x128xbf16>
    %5 = vector.shape_cast %4 : vector<1x128x128xbf16> to vector<128x128xbf16>
    %cst = arith.constant dense<0.000000e+00> : vector<128x128xf32>
    %6 = tpu.matmul %3, %5, %cst {dimension_numbers = #tpu.dot_dimension_numbers<[1], [0], [0], [1], [0, 0, 1, 1], [], []>} : vector<128x128xbf16>, vector<128x128xbf16>, vector<128x128xf32> -> vector<128x128xf32>
    %c0_5 = arith.constant 0 : index
    %c0_6 = arith.constant 0 : index
    %c0_7 = arith.constant 0 : index
    %7 = vector.load %arg3[%c0_5, %c0_6, %c0_7] : memref<1x128x128xf32, #tpu.memory_space<vmem>>, vector<1x128x128xf32>
    %8 = vector.shape_cast %7 : vector<1x128x128xf32> to vector<128x128xf32>
    %9 = vector.shape_cast %6 : vector<128x128xf32> to vector<1x128x128xf32>
    tpu.vector_store %arg3[%c0_5, %c0_6, %c0_7], %9 {strides = array<i32>} : memref<1x128x128xf32, #tpu.memory_space<vmem>>, vector<1x128x128xf32>,
    return
  }
  func.func @transform_0(%arg0: i32) -> (i32, i32, i32) {
    %c0_i32 = arith.constant 0 : i32
    %c0_i32_0 = arith.constant 0 : i32
    %c0_i32_1 = arith.constant 0 : i32
    return %arg0, %c0_i32, %c0_i32_0 : i32, i32, i32
  }
  func.func @transform_1(%arg0: i32) -> (i32, i32, i32) {
    %c0_i32 = arith.constant 0 : i32
    %c0_i32_0 = arith.constant 0 : i32
    %c0_i32_1 = arith.constant 0 : i32
    return %arg0, %c0_i32, %c0_i32_0 : i32, i32, i32
  }
  func.func @transform_2(%arg0: i32) -> (i32, i32, i32) {
    %c0_i32 = arith.constant 0 : i32
    %c0_i32_0 = arith.constant 0 : i32
    %c0_i32_1 = arith.constant 0 : i32
    return %arg0, %c0_i32, %c0_i32_0 : i32, i32, i32
  }
}

module attributes {stable_mosaic.version = 11 : i64} {
  func.func @_bmm_tn_kernel(%arg0: i32, %arg1: memref<1x128x128xf32, #tpu.memory_space<vmem>>, %arg2: memref<1x128x128xbf16, #tpu.memory_space<vmem>>, %arg3: memref<1x128x128xf32, #tpu.memory_space<vmem>>) attributes {dimension_semantics = [#tpu.dimension_semantics<parallel>], iteration_bounds = array<i64: 2>, scalar_prefetch = 0 : i64, scratch_operands = 0 : i64, tpu.core_type = #tpu.core_type<tc>, window_params = [{transform_indices = @transform_0, window_bounds = array<i64: 1, 128, 128>}, {transform_indices = @transform_1, window_bounds = array<i64: 1, 128, 128>}, {transform_indices = @transform_2, window_bounds = array<i64: 1, 128, 128>}]} {
    %c0 = arith.constant 0 : index
    %c0_0 = arith.constant 0 : index
    %c0_1 = arith.constant 0 : index
    %0 = vector.load %arg1[%c0, %c0_0, %c0_1] : memref<1x128x128xf32, #tpu.memory_space<vmem>>, vector<1x128x128xf32>
    %1 = vector.shape_cast %0 : vector<1x128x128xf32> to vector<128x128xf32>
    %2 = tpu.transpose %1, [1, 0] : vector<128x128xf32> -> vector<128x128xf32>
    %3 = arith.truncf %2 : vector<128x128xf32> to vector<128x128xbf16>
    %c0_2 = arith.constant 0 : index
    %c0_3 = arith.constant 0 : index
    %c0_4 = arith.constant 0 : index
    %4 = vector.load %arg2[%c0_2, %c0_3, %c0_4] : memref<1x128x128xbf16, #tpu.memory_space<vmem>>, vector<1x128x128xbf16>
    %5 = vector.shape_cast %4 : vector<1x128x128xbf16> to vector<128x128xbf16>
    %cst = arith.constant dense<0.000000e+00> : vector<128x128xf32>
    %6 = tpu.matmul %3, %5, %cst {dimension_numbers = #tpu.dot_dimension_numbers<[1], [0], [0], [1], [0, 0, 1, 1], [], []>} : vector<128x128xbf16>, vector<128x128xbf16>, vector<128x128xf32> -> vector<128x128xf32>
    %c0_5 = arith.constant 0 : index
    %c0_6 = arith.constant 0 : index
    %c0_7 = arith.constant 0 : index
    %7 = vector.load %arg3[%c0_5, %c0_6, %c0_7] : memref<1x128x128xf32, #tpu.memory_space<vmem>>, vector<1x128x128xf32>
    %8 = vector.shape_cast %7 : vector<1x128x128xf32> to vector<128x128xf32>
    %9 = vector.shape_cast %6 : vector<128x128xf32> to vector<1x128x128xf32>
    tpu.vector_store %arg3[%c0_5, %c0_6, %c0_7], %9 {strides = array<i32>} : memref<1x128x128xf32, #tpu.memory_space<vmem>>, vector<1x128x128xf32>,
    return
  }
  func.func @transform_0(%arg0: i32) -> (i32, i32, i32) {
    %c0_i32 = arith.constant 0 : i32
    %c0_i32_0 = arith.constant 0 : i32
    %c0_i32_1 = arith.constant 0 : i32
    return %arg0, %c0_i32, %c0_i32_0 : i32, i32, i32
  }
  func.func @transform_1(%arg0: i32) -> (i32, i32, i32) {
    %c0_i32 = arith.constant 0 : i32
    %c0_i32_0 = arith.constant 0 : i32
    %c0_i32_1 = arith.constant 0 : i32
    return %arg0, %c0_i32, %c0_i32_0 : i32, i32, i32
  }
  func.func @transform_2(%arg0: i32) -> (i32, i32, i32) {
    %c0_i32 = arith.constant 0 : i32
    %c0_i32_0 = arith.constant 0 : i32
    %c0_i32_1 = arith.constant 0 : i32
    return %arg0, %c0_i32, %c0_i32_0 : i32, i32, i32
  }
}

module attributes {stable_mosaic.version = 11 : i64} {
  func.func @_acc_kernel(%arg0: memref<96x128xf32, #tpu.memory_space<vmem>>, %arg1: memref<96x1xi32, #tpu.memory_space<vmem>>, %arg2: memref<4xi32, #tpu.memory_space<smem>>) attributes {dimension_semantics = [], scalar_prefetch = 0 : i64, scratch_operands = 0 : i64, tpu.core_type = #tpu.core_type<tc>} {
    %c0 = arith.constant 0 : index
    %c0_0 = arith.constant 0 : index
    %0 = vector.load %arg0[%c0, %c0_0] : memref<96x128xf32, #tpu.memory_space<vmem>>, vector<96x128xf32>
    %c0_1 = arith.constant 0 : index
    %c0_2 = arith.constant 0 : index
    %1 = vector.load %arg1[%c0_1, %c0_2] : memref<96x1xi32, #tpu.memory_space<vmem>>, vector<96x1xi32>
    %2 = tpu.iota {dimensions = array<i32: 1>} : vector<96x128xi32>
    %cst = arith.constant dense<0xFF800000> : vector<96xf32>
    %3 = vector.multi_reduction <maximumf>, %0, %cst [1] : vector<96x128xf32> to vector<96xf32>
    %4 = vector.shape_cast %3 : vector<96xf32> to vector<96x1xf32>
    %5 = vector.broadcast %4 : vector<96x1xf32> to vector<96x128xf32>
    %6 = arith.cmpf oeq, %0, %5 : vector<96x128xf32>
    %c128_i32 = arith.constant 128 : i32
    %7 = vector.broadcast %c128_i32 : i32 to vector<96x128xi32>
    %8 = arith.select %6, %2, %7 : vector<96x128xi1>, vector<96x128xi32>
    %cst_3 = arith.constant dense<2147483647> : vector<96xi32>
    %9 = vector.multi_reduction <minsi>, %8, %cst_3 [1] : vector<96x128xi32> to vector<96xi32>
    %10 = vector.shape_cast %9 : vector<96xi32> to vector<96x1xi32>
    %11 = arith.cmpi eq, %10, %1 : vector<96x1xi32>
    %12 = arith.extui %11 : vector<96x1xi1> to vector<96x1xi32>
    %13 = vector.extract_strided_slice %12 {offsets = [0, 0], sizes = [24, 1], strides = [1, 1]} : vector<96x1xi32> to vector<24x1xi32>
    %14 = vector.shape_cast %13 : vector<24x1xi32> to vector<1x24x1xi32>
    %cst_4 = arith.constant dense<0> : vector<1xi32>
    %15 = vector.multi_reduction <add>, %14, %cst_4 [1, 2] : vector<1x24x1xi32> to vector<1xi32>
    %16 = vector.shape_cast %15 : vector<1xi32> to vector<1x1x1xi32>
    %17 = vector.extract %16[0, 0, 0] : i32 from vector<1x1x1xi32>
    %c0_5 = arith.constant 0 : index
    %18 = memref.load %arg2[%c0_5] : memref<4xi32, #tpu.memory_space<smem>>
    memref.store %17, %arg2[%c0_5] : memref<4xi32, #tpu.memory_space<smem>>
    %19 = vector.extract_strided_slice %12 {offsets = [24, 0], sizes = [24, 1], strides = [1, 1]} : vector<96x1xi32> to vector<24x1xi32>
    %20 = vector.shape_cast %19 : vector<24x1xi32> to vector<1x24x1xi32>
    %cst_6 = arith.constant dense<0> : vector<1xi32>
    %21 = vector.multi_reduction <add>, %20, %cst_6 [1, 2] : vector<1x24x1xi32> to vector<1xi32>
    %22 = vector.shape_cast %21 : vector<1xi32> to vector<1x1x1xi32>
    %23 = vector.extract %22[0, 0, 0] : i32 from vector<1x1x1xi32>
    %c1 = arith.constant 1 : index
    %24 = memref.load %arg2[%c1] : memref<4xi32, #tpu.memory_space<smem>>
    memref.store %23, %arg2[%c1] : memref<4xi32, #tpu.memory_space<smem>>
    %25 = vector.extract_strided_slice %12 {offsets = [48, 0], sizes = [24, 1], strides = [1, 1]} : vector<96x1xi32> to vector<24x1xi32>
    %26 = vector.shape_cast %25 : vector<24x1xi32> to vector<1x24x1xi32>
    %cst_7 = arith.constant dense<0> : vector<1xi32>
    %27 = vector.multi_reduction <add>, %26, %cst_7 [1, 2] : vector<1x24x1xi32> to vector<1xi32>
    %28 = vector.shape_cast %27 : vector<1xi32> to vector<1x1x1xi32>
    %29 = vector.extract %28[0, 0, 0] : i32 from vector<1x1x1xi32>
    %c2 = arith.constant 2 : index
    %30 = memref.load %arg2[%c2] : memref<4xi32, #tpu.memory_space<smem>>
    memref.store %29, %arg2[%c2] : memref<4xi32, #tpu.memory_space<smem>>
    %31 = vector.extract_strided_slice %12 {offsets = [72, 0], sizes = [24, 1], strides = [1, 1]} : vector<96x1xi32> to vector<24x1xi32>
    %32 = vector.shape_cast %31 : vector<24x1xi32> to vector<1x24x1xi32>
    %cst_8 = arith.constant dense<0> : vector<1xi32>
    %33 = vector.multi_reduction <add>, %32, %cst_8 [1, 2] : vector<1x24x1xi32> to vector<1xi32>
    %34 = vector.shape_cast %33 : vector<1xi32> to vector<1x1x1xi32>
    %35 = vector.extract %34[0, 0, 0] : i32 from vector<1x1x1xi32>
    %c3 = arith.constant 3 : index
    %36 = memref.load %arg2[%c3] : memref<4xi32, #tpu.memory_space<smem>>
    memref.store %35, %arg2[%c3] : memref<4xi32, #tpu.memory_space<smem>>
    return
  }
}

</mosaic_0001>

<llo_original>
// kernel: meta_counts.21
$region0: #{meta_counts.21}
  #allocation0 [shape = 'u32[]', space=smem, size = 0x4, offset = 0x4, fixed_abs, tag = 'smem constant byte address 0x4 - core index']
  #allocation1 [shape = 'u32[144,128]{1,0:T(1,128)}', space=vmem, size = 0x12000, scoped, tag = 'internal scratch']
  %s0 = inlined_call_operand.vmem [shape: bf16[2,1792,128], index: 0, kind: input, shape index: {}]
  %s1 = inlined_call_operand.vmem [shape: bf16[2,128,128], index: 1, kind: input, shape index: {}]
  %s2 = inlined_call_operand.vmem [shape: f32[2,1792,128], index: 2, kind: output, shape index: {}]
  %s3 = sld [smem:[#allocation0]]
  $region41: #{meta_counts.21} parent=0
    _
  %s5 = ssub.s32 1, %s3
  %s6 = scalar_select 0, %s5, %s3
  loop: start=0, step=1, limit=4
  $region2: #{meta_counts.21} parent=0 // loop_pre_header
    _
  $region3: #{meta_counts.21} parent=0 // loop_header
    %s8 = sphi 0, %s12
    %p9 = scmp.ge.s32.totalorder %s8, 4
    %s18 = sphi 0, %s20
    %s21 = sphi 0, %s18
    %s22 = sphi 0, %s21
    %s38 = sphi 0, %s22
    %s44 = sphi 0, %s46
    %s47 = sphi 0, %s44
    %s48 = sphi 0, %s47
    %s64 = sphi 0, %s48
    %s70 = sphi 0, %s72
    %s73 = sphi 0, %s70
    %s74 = sphi 0, %s73
    %s90 = sphi 0, %s74
  $region4: #{meta_counts.21} parent=0 // loop_header_branch
    %11 = sbr.rel (%p9) target = $region8
  $region5: #{meta_counts.21} parent=0 // loop_body
    %s13 = ssub.s32 %s8, 1
    %s14 = ssub.s32 %s8, 2
    %s15 = sadd.s32 %s8, 1
    %s16 = ssub.s32 %s8, %s15
    %p17 = scmp.eq.s32.totalorder %s16, 0
    %s19 = sadd.s32 %s18, 1
    %s20 = scalar_select %p17, %s18, %s19
    %p23 = pneg %p17
    %p24 = scmp.eq.s32.totalorder %s8, 1
    %p25 = por %p23, %p24
    %p26 = scmp.ne.s32.totalorder %s18, %s21
    %p27 = scmp.eq.s32.totalorder %s8, 0
    %p28 = por %p26, %p27
    %p29 = scmp.ne.s32.totalorder %s18, %s21
    %p30 = scmp.eq.s32.totalorder %s13, 1
    %p31 = por %p29, %p30
    %p32 = scmp.ne.s32.totalorder %s21, %s22
    %p33 = scmp.eq.s32.totalorder %s13, 0
    %p34 = por %p32, %p33
    %p35 = scmp.ne.s32.totalorder %s21, %s22
    %p36 = scmp.eq.s32.totalorder %s14, 1
    %p37 = por %p35, %p36
    %p39 = scmp.ne.s32.totalorder %s22, %s38
    %p40 = scmp.eq.s32.totalorder %s14, 0
    %p41 = por %p39, %p40
    %s42 = ssub.s32 %s8, %s15
    %p43 = scmp.eq.s32.totalorder %s42, 0
    %s45 = sadd.s32 %s44, 1
    %s46 = scalar_select %p43, %s44, %s45
    %p49 = pneg %p43
    %p50 = scmp.eq.s32.totalorder %s8, 1
    %p51 = por %p49, %p50
    %p52 = scmp.ne.s32.totalorder %s44, %s47
    %p53 = scmp.eq.s32.totalorder %s8, 0
    %p54 = por %p52, %p53
    %p55 = scmp.ne.s32.totalorder %s44, %s47
    %p56 = scmp.eq.s32.totalorder %s13, 1
    %p57 = por %p55, %p56
    %p58 = scmp.ne.s32.totalorder %s47, %s48
    %p59 = scmp.eq.s32.totalorder %s13, 0
    %p60 = por %p58, %p59
    %p61 = scmp.ne.s32.totalorder %s47, %s48
    %p62 = scmp.eq.s32.totalorder %s14, 1
    %p63 = por %p61, %p62
    %p65 = scmp.ne.s32.totalorder %s48, %s64
    %p66 = scmp.eq.s32.totalorder %s14, 0
    %p67 = por %p65, %p66
    %s68 = ssub.s32 %s8, %s15
    %p69 = scmp.eq.s32.totalorder %s68, 0
    %s71 = sadd.s32 %s70, 1
    %s72 = scalar_select %p69, %s70, %s71
    %p75 = pneg %p69
    %p76 = scmp.eq.s32.totalorder %s8, 1
    %p77 = por %p75, %p76
    %p78 = scmp.ne.s32.totalorder %s70, %s73
    %p79 = scmp.eq.s32.totalorder %s8, 0
    %p80 = por %p78, %p79
    %p81 = scmp.ne.s32.totalorder %s70, %s73
    %p82 = scmp.eq.s32.totalorder %s13, 1
    %p83 = por %p81, %p82
    %p84 = scmp.ne.s32.totalorder %s73, %s74
    %p85 = scmp.eq.s32.totalorder %s13, 0
    %p86 = por %p84, %p85
    %p87 = scmp.ne.s32.totalorder %s73, %s74
    %p88 = scmp.eq.s32.totalorder %s14, 1
    %p89 = por %p87, %p88
    %p91 = scmp.ne.s32.totalorder %s74, %s90
    %p92 = scmp.eq.s32.totalorder %s14, 0
    %p93 = por %p91, %p92
    %p94 = scmp.le.s32.totalorder 1, %s8
    %p95 = scmp.lt.s32.totalorder %s8, 3
    %p96 = pnand %p94, %p95
    %p97 = pneg %p96
    // Predicated region
    $region9: #{meta_counts.21} parent=5 // pred_check
      _
    $region10: #{meta_counts.21} parent=5 // pred_check_branch
      %99 = sbr.rel (%p96) target = $region12
    $region11: #{meta_counts.21} parent=5 // pred_region
      %s100 = ssub.s32 %s8, 1
    $region12: #{meta_counts.21} parent=5 // pred_fallthru
      _
    %p101 = scmp.lt.s32.totalorder %s8, 2
    // Predicated region
    $region13: #{meta_counts.21} parent=5 // pred_check
      %p102 = pneg %p101
    $region14: #{meta_counts.21} parent=5 // pred_check_branch
      %104 = sbr.rel (%p102) target = $region16
    $region15: #{meta_counts.21} parent=5 // pred_region
      // Predicated region
      $region17: #{meta_counts.21} parent=15 // pred_check
        %p105 = pneg %p28
      $region18: #{meta_counts.21} parent=15 // pred_check_branch
        %107 = sbr.rel (%p105) target = $region20
      $region19: #{meta_counts.21} parent=15 // pred_region
        %p108 = scmp.lt.s32.totalorder %s8, 1
        %s109 = scalar_select %p108, %s8, 1
        %s110 = smul.addr %s109, 224
        %s111 = smul.addr %s110, 4
        %s112 = scalar_lea.vmem %s0, %s111
      $region20: #{meta_counts.21} parent=15 // pred_fallthru
        _
      // Predicated region
      $region21: #{meta_counts.21} parent=15 // pred_check
        %p113 = pneg %p54
      $region22: #{meta_counts.21} parent=15 // pred_check_branch
        %115 = sbr.rel (%p113) target = $region24
      $region23: #{meta_counts.21} parent=15 // pred_region
        %p116 = scmp.lt.s32.totalorder %s8, 1
        %s117 = scalar_select %p116, %s8, 1
        %s118 = smul.addr %s117, 16
        %s119 = smul.addr %s118, 4
        %s120 = scalar_lea.vmem %s1, %s119
      $region24: #{meta_counts.21} parent=15 // pred_fallthru
        _
    $region16: #{meta_counts.21} parent=5 // pred_fallthru
      _
    %p121 = scmp.le.s32.totalorder 1, %s8
    %p122 = scmp.lt.s32.totalorder %s8, 3
    %p123 = pnand %p121, %p122
    %p124 = pneg %p123
    // Predicated region
    $region25: #{meta_counts.21} parent=5 // pred_check
      _
    $region26: #{meta_counts.21} parent=5 // pred_check_branch
      %126 = sbr.rel (%p123) target = $region28
    $region27: #{meta_counts.21} parent=5 // pred_region
      %s127 = ssub.s32 %s8, 1
      %p128 = scmp.lt.s32.totalorder %s13, 1
      %s129 = scalar_select %p128, %s13, 1
      %s130 = smul.addr %s129, 224
      %s131 = smul.addr %s130, 4
      %s132 = scalar_lea.vmem %s0, %s131
      %p133 = pneg %p34
      %p134 = pneg %p31
      %p135 = scmp.lt.s32.totalorder %s13, 1
      %s136 = scalar_select %p135, %s13, 1
      %s137 = smul.addr %s136, 16
      %s138 = smul.addr %s137, 4
      %s139 = scalar_lea.vmem %s1, %s138
      %p140 = pneg %p60
      %p141 = pneg %p57
      %p142 = pneg %p86
      %p143 = pneg %p83
      %p144 = scmp.lt.s32.totalorder %s13, 1
      %s145 = scalar_select %p144, %s13, 1
      %s146 = smul.addr %s145, 224
      %s147 = smul.addr %s146, 8
      %s148 = scalar_lea.vmem %s2, %s147
      %p149 = scmp.lt.s32.totalorder %s13, 1
      %s150 = scalar_select %p149, %s13, 1
      %s151 = smul.addr %s150, 224
      %s152 = smul.addr %s151, 4
      %s153 = scalar_lea.vmem %s0, %s152
      %p154 = scmp.lt.s32.totalorder %s13, 1
      %s155 = scalar_select %p154, %s13, 1
      %s156 = smul.addr %s155, 16
      %s157 = smul.addr %s156, 4
      %s158 = scalar_lea.vmem %s1, %s157
      %p159 = scmp.lt.s32.totalorder %s13, 1
      %s160 = scalar_select %p159, %s13, 1
      %s161 = smul.addr %s160, 224
      %s162 = smul.addr %s161, 8
      %s163 = scalar_lea.vmem %s2, %s162
      %v165 = vld [vmem:[%s153] sm:$0xf]
      %v166 = vld [vmem:[%s153 + $0x4] sm:$0xf]
      %v167 = vld [vmem:[%s153 + $0x8] sm:$0xf]
      %v168 = vld [vmem:[%s153 + $0xc] sm:$0xf]
      %v169 = vld [vmem:[%s153 + $0x10] sm:$0xf]
      %v170 = vld [vmem:[%s153 + $0x14] sm:$0xf]
      %v171 = vld [vmem:[%s153 + $0x18] sm:$0xf]
      %v172 = vld [vmem:[%s153 + $0x1c] sm:$0xf]
      %v173 = vld [vmem:[%s153 + $0x20] sm:$0xf]
      %v174 = vld [vmem:[%s153 + $0x24] sm:$0xf]
      %v175 = vld [vmem:[%s153 + $0x28] sm:$0xf]
      %v176 = vld [vmem:[%s153 + $0x2c] sm:$0xf]
      %v177 = vld [vmem:[%s153 + $0x30] sm:$0xf]
      %v178 = vld [vmem:[%s153 + $0x34] sm:$0xf]
      %v179 = vld [vmem:[%s153 + $0x38] sm:$0xf]
      %v180 = vld [vmem:[%s153 + $0x3c] sm:$0xf]
      %v181 = vld [vmem:[%s153 + $0x40] sm:$0xf]
      %v182 = vld [vmem:[%s153 + $0x44] sm:$0xf]
      %v183 = vld [vmem:[%s153 + $0x48] sm:$0xf]
      %v184 = vld [vmem:[%s153 + $0x4c] sm:$0xf]
      %v185 = vld [vmem:[%s153 + $0x50] sm:$0xf]
      %v186 = vld [vmem:[%s153 + $0x54] sm:$0xf]
      %v187 = vld [vmem:[%s153 + $0x58] sm:$0xf]
      %v188 = vld [vmem:[%s153 + $0x5c] sm:$0xf]
      %v189 = vld [vmem:[%s153 + $0x60] sm:$0xf]
      %v190 = vld [vmem:[%s153 + $0x64] sm:$0xf]
      %v191 = vld [vmem:[%s153 + $0x68] sm:$0xf]
      %v192 = vld [vmem:[%s153 + $0x6c] sm:$0xf]
      %v193 = vld [vmem:[%s153 + $0x70] sm:$0xf]
      %v194 = vld [vmem:[%s153 + $0x74] sm:$0xf]
      %v195 = vld [vmem:[%s153 + $0x78] sm:$0xf]
      %v196 = vld [vmem:[%s153 + $0x7c] sm:$0xf]
      %v197 = vld [vmem:[%s153 + $0x80] sm:$0xf]
      %v198 = vld [vmem:[%s153 + $0x84] sm:$0xf]
      %v199 = vld [vmem:[%s153 + $0x88] sm:$0xf]
      %v200 = vld [vmem:[%s153 + $0x8c] sm:$0xf]
      %v201 = vld [vmem:[%s153 + $0x90] sm:$0xf]
      %v202 = vld [vmem:[%s153 + $0x94] sm:$0xf]
      %v203 = vld [vmem:[%s153 + $0x98] sm:$0xf]
      %v204 = vld [vmem:[%s153 + $0x9c] sm:$0xf]
      %v205 = vld [vmem:[%s153 + $0xa0] sm:$0xf]
      %v206 = vld [vmem:[%s153 + $0xa4] sm:$0xf]
      %v207 = vld [vmem:[%s153 + $0xa8] sm:$0xf]
      %v208 = vld [vmem:[%s153 + $0xac] sm:$0xf]
      %v209 = vld [vmem:[%s153 + $0xb0] sm:$0xf]
      %v210 = vld [vmem:[%s153 + $0xb4] sm:$0xf]
      %v211 = vld [vmem:[%s153 + $0xb8] sm:$0xf]
      %v212 = vld [vmem:[%s153 + $0xbc] sm:$0xf]
      %v213 = vld [vmem:[%s153 + $0xc0] sm:$0xf]
      %v214 = vld [vmem:[%s153 + $0xc4] sm:$0xf]
      %v215 = vld [vmem:[%s153 + $0xc8] sm:$0xf]
      %v216 = vld [vmem:[%s153 + $0xcc] sm:$0xf]
      %v217 = vld [vmem:[%s153 + $0xd0] sm:$0xf]
      %v218 = vld [vmem:[%s153 + $0xd4] sm:$0xf]
      %v219 = vld [vmem:[%s153 + $0xd8] sm:$0xf]
      %v220 = vld [vmem:[%s153 + $0xdc] sm:$0xf]
      %v221 = vld [vmem:[%s153 + $0xe0] sm:$0xf]
      %v222 = vld [vmem:[%s153 + $0xe4] sm:$0xf]
      %v223 = vld [vmem:[%s153 + $0xe8] sm:$0xf]
      %v224 = vld [vmem:[%s153 + $0xec] sm:$0xf]
      %v225 = vld [vmem:[%s153 + $0xf0] sm:$0xf]
      %v226 = vld [vmem:[%s153 + $0xf4] sm:$0xf]
      %v227 = vld [vmem:[%s153 + $0xf8] sm:$0xf]
      %v228 = vld [vmem:[%s153 + $0xfc] sm:$0xf]
      %v229 = vld [vmem:[%s153 + $0x100] sm:$0xf]
      %v230 = vld [vmem:[%s153 + $0x104] sm:$0xf]
      %v231 = vld [vmem:[%s153 + $0x108] sm:$0xf]
      %v232 = vld [vmem:[%s153 + $0x10c] sm:$0xf]
      %v233 = vld [vmem:[%s153 + $0x110] sm:$0xf]
      %v234 = vld [vmem:[%s153 + $0x114] sm:$0xf]
      %v235 = vld [vmem:[%s153 + $0x118] sm:$0xf]
      %v236 = vld [vmem:[%s153 + $0x11c] sm:$0xf]
      %v237 = vld [vmem:[%s153 + $0x120] sm:$0xf]
      %v238 = vld [vmem:[%s153 + $0x124] sm:$0xf]
      %v239 = vld [vmem:[%s153 + $0x128] sm:$0xf]
      %v240 = vld [vmem:[%s153 + $0x12c] sm:$0xf]
      %v241 = vld [vmem:[%s153 + $0x130] sm:$0xf]
      %v242 = vld [vmem:[%s153 + $0x134] sm:$0xf]
      %v243 = vld [vmem:[%s153 + $0x138] sm:$0xf]
      %v244 = vld [vmem:[%s153 + $0x13c] sm:$0xf]
      %v245 = vld [vmem:[%s153 + $0x140] sm:$0xf]
      %v246 = vld [vmem:[%s153 + $0x144] sm:$0xf]
      %v247 = vld [vmem:[%s153 + $0x148] sm:$0xf]
      %v248 = vld [vmem:[%s153 + $0x14c] sm:$0xf]
      %v249 = vld [vmem:[%s153 + $0x150] sm:$0xf]
      %v250 = vld [vmem:[%s153 + $0x154] sm:$0xf]
      %v251 = vld [vmem:[%s153 + $0x158] sm:$0xf]
      %v252 = vld [vmem:[%s153 + $0x15c] sm:$0xf]
      %v253 = vld [vmem:[%s153 + $0x160] sm:$0xf]
      %v254 = vld [vmem:[%s153 + $0x164] sm:$0xf]
      %v255 = vld [vmem:[%s153 + $0x168] sm:$0xf]
      %v256 = vld [vmem:[%s153 + $0x16c] sm:$0xf]
      %v257 = vld [vmem:[%s153 + $0x170] sm:$0xf]
      %v258 = vld [vmem:[%s153 + $0x174] sm:$0xf]
      %v259 = vld [vmem:[%s153 + $0x178] sm:$0xf]
      %v260 = vld [vmem:[%s153 + $0x17c] sm:$0xf]
      %v261 = vld [vmem:[%s153 + $0x180] sm:$0xf]
      %v262 = vld [vmem:[%s153 + $0x184] sm:$0xf]
      %v263 = vld [vmem:[%s153 + $0x188] sm:$0xf]
      %v264 = vld [vmem:[%s153 + $0x18c] sm:$0xf]
      %v265 = vld [vmem:[%s153 + $0x190] sm:$0xf]
      %v266 = vld [vmem:[%s153 + $0x194] sm:$0xf]
      %v267 = vld [vmem:[%s153 + $0x198] sm:$0xf]
      %v268 = vld [vmem:[%s153 + $0x19c] sm:$0xf]
      %v269 = vld [vmem:[%s153 + $0x1a0] sm:$0xf]
      %v270 = vld [vmem:[%s153 + $0x1a4] sm:$0xf]
      %v271 = vld [vmem:[%s153 + $0x1a8] sm:$0xf]
      %v272 = vld [vmem:[%s153 + $0x1ac] sm:$0xf]
      %v273 = vld [vmem:[%s153 + $0x1b0] sm:$0xf]
      %v274 = vld [vmem:[%s153 + $0x1b4] sm:$0xf]
      %v275 = vld [vmem:[%s153 + $0x1b8] sm:$0xf]
      %v276 = vld [vmem:[%s153 + $0x1bc] sm:$0xf]
      %v277 = vld [vmem:[%s153 + $0x1c0] sm:$0xf]
      %v278 = vld [vmem:[%s153 + $0x1c4] sm:$0xf]
      %v279 = vld [vmem:[%s153 + $0x1c8] sm:$0xf]
      %v280 = vld [vmem:[%s153 + $0x1cc] sm:$0xf]
      %v281 = vld [vmem:[%s153 + $0x1d0] sm:$0xf]
      %v282 = vld [vmem:[%s153 + $0x1d4] sm:$0xf]
      %v283 = vld [vmem:[%s153 + $0x1d8] sm:$0xf]
      %v284 = vld [vmem:[%s153 + $0x1dc] sm:$0xf]
      %v285 = vld [vmem:[%s153 + $0x1e0] sm:$0xf]
      %v286 = vld [vmem:[%s153 + $0x1e4] sm:$0xf]
      %v287 = vld [vmem:[%s153 + $0x1e8] sm:$0xf]
      %v288 = vld [vmem:[%s153 + $0x1ec] sm:$0xf]
      %v289 = vld [vmem:[%s153 + $0x1f0] sm:$0xf]
      %v290 = vld [vmem:[%s153 + $0x1f4] sm:$0xf]
      %v291 = vld [vmem:[%s153 + $0x1f8] sm:$0xf]
      %v292 = vld [vmem:[%s153 + $0x1fc] sm:$0xf]
      %v293 = vld [vmem:[%s153 + $0x200] sm:$0xf]
      %v294 = vld [vmem:[%s153 + $0x204] sm:$0xf]
      %v295 = vld [vmem:[%s153 + $0x208] sm:$0xf]
      %v296 = vld [vmem:[%s153 + $0x20c] sm:$0xf]
      %v297 = vld [vmem:[%s153 + $0x210] sm:$0xf]
      %v298 = vld [vmem:[%s153 + $0x214] sm:$0xf]
      %v299 = vld [vmem:[%s153 + $0x218] sm:$0xf]
      %v300 = vld [vmem:[%s153 + $0x21c] sm:$0xf]
      %v301 = vld [vmem:[%s153 + $0x220] sm:$0xf]
      %v302 = vld [vmem:[%s153 + $0x224] sm:$0xf]
      %v303 = vld [vmem:[%s153 + $0x228] sm:$0xf]
      %v304 = vld [vmem:[%s153 + $0x22c] sm:$0xf]
      %v305 = vld [vmem:[%s153 + $0x230] sm:$0xf]
      %v306 = vld [vmem:[%s153 + $0x234] sm:$0xf]
      %v307 = vld [vmem:[%s153 + $0x238] sm:$0xf]
      %v308 = vld [vmem:[%s153 + $0x23c] sm:$0xf]
      %v309 = vld [vmem:[%s153 + $0x240] sm:$0xf]
      %v310 = vld [vmem:[%s153 + $0x244] sm:$0xf]
      %v311 = vld [vmem:[%s153 + $0x248] sm:$0xf]
      %v312 = vld [vmem:[%s153 + $0x24c] sm:$0xf]
      %v313 = vld [vmem:[%s153 + $0x250] sm:$0xf]
      %v314 = vld [vmem:[%s153 + $0x254] sm:$0xf]
      %v315 = vld [vmem:[%s153 + $0x258] sm:$0xf]
      %v316 = vld [vmem:[%s153 + $0x25c] sm:$0xf]
      %v317 = vld [vmem:[%s153 + $0x260] sm:$0xf]
      %v318 = vld [vmem:[%s153 + $0x264] sm:$0xf]
      %v319 = vld [vmem:[%s153 + $0x268] sm:$0xf]
      %v320 = vld [vmem:[%s153 + $0x26c] sm:$0xf]
      %v321 = vld [vmem:[%s153 + $0x270] sm:$0xf]
      %v322 = vld [vmem:[%s153 + $0x274] sm:$0xf]
      %v323 = vld [vmem:[%s153 + $0x278] sm:$0xf]
      %v324 = vld [vmem:[%s153 + $0x27c] sm:$0xf]
      %v325 = vld [vmem:[%s153 + $0x280] sm:$0xf]
      %v326 = vld [vmem:[%s153 + $0x284] sm:$0xf]
      %v327 = vld [vmem:[%s153 + $0x288] sm:$0xf]
      %v328 = vld [vmem:[%s153 + $0x28c] sm:$0xf]
      %v329 = vld [vmem:[%s153 + $0x290] sm:$0xf]
      %v330 = vld [vmem:[%s153 + $0x294] sm:$0xf]
      %v331 = vld [vmem:[%s153 + $0x298] sm:$0xf]
      %v332 = vld [vmem:[%s153 + $0x29c] sm:$0xf]
      %v333 = vld [vmem:[%s153 + $0x2a0] sm:$0xf]
      %v334 = vld [vmem:[%s153 + $0x2a4] sm:$0xf]
      %v335 = vld [vmem:[%s153 + $0x2a8] sm:$0xf]
      %v336 = vld [vmem:[%s153 + $0x2ac] sm:$0xf]
      %v337 = vld [vmem:[%s153 + $0x2b0] sm:$0xf]
      %v338 = vld [vmem:[%s153 + $0x2b4] sm:$0xf]
      %v339 = vld [vmem:[%s153 + $0x2b8] sm:$0xf]
      %v340 = vld [vmem:[%s153 + $0x2bc] sm:$0xf]
      %v341 = vld [vmem:[%s153 + $0x2c0] sm:$0xf]
      %v342 = vld [vmem:[%s153 + $0x2c4] sm:$0xf]
      %v343 = vld [vmem:[%s153 + $0x2c8] sm:$0xf]
      %v344 = vld [vmem:[%s153 + $0x2cc] sm:$0xf]
      %v345 = vld [vmem:[%s153 + $0x2d0] sm:$0xf]
      %v346 = vld [vmem:[%s153 + $0x2d4] sm:$0xf]
      %v347 = vld [vmem:[%s153 + $0x2d8] sm:$0xf]
      %v348 = vld [vmem:[%s153 + $0x2dc] sm:$0xf]
      %v349 = vld [vmem:[%s153 + $0x2e0] sm:$0xf]
      %v350 = vld [vmem:[%s153 + $0x2e4] sm:$0xf]
      %v351 = vld [vmem:[%s153 + $0x2e8] sm:$0xf]
      %v352 = vld [vmem:[%s153 + $0x2ec] sm:$0xf]
      %v353 = vld [vmem:[%s153 + $0x2f0] sm:$0xf]
      %v354 = vld [vmem:[%s153 + $0x2f4] sm:$0xf]
      %v355 = vld [vmem:[%s153 + $0x2f8] sm:$0xf]
      %v356 = vld [vmem:[%s153 + $0x2fc] sm:$0xf]
      %v357 = vld [vmem:[%s153 + $0x300] sm:$0xf]
      %v358 = vld [vmem:[%s153 + $0x304] sm:$0xf]
      %v359 = vld [vmem:[%s153 + $0x308] sm:$0xf]
      %v360 = vld [vmem:[%s153 + $0x30c] sm:$0xf]
      %v361 = vld [vmem:[%s153 + $0x310] sm:$0xf]
      %v362 = vld [vmem:[%s153 + $0x314] sm:$0xf]
      %v363 = vld [vmem:[%s153 + $0x318] sm:$0xf]
      %v364 = vld [vmem:[%s153 + $0x31c] sm:$0xf]
      %v365 = vld [vmem:[%s153 + $0x320] sm:$0xf]
      %v366 = vld [vmem:[%s153 + $0x324] sm:$0xf]
      %v367 = vld [vmem:[%s153 + $0x328] sm:$0xf]
      %v368 = vld [vmem:[%s153 + $0x32c] sm:$0xf]
      %v369 = vld [vmem:[%s153 + $0x330] sm:$0xf]
      %v370 = vld [vmem:[%s153 + $0x334] sm:$0xf]
      %v371 = vld [vmem:[%s153 + $0x338] sm:$0xf]
      %v372 = vld [vmem:[%s153 + $0x33c] sm:$0xf]
      %v373 = vld [vmem:[%s153 + $0x340] sm:$0xf]
      %v374 = vld [vmem:[%s153 + $0x344] sm:$0xf]
      %v375 = vld [vmem:[%s153 + $0x348] sm:$0xf]
      %v376 = vld [vmem:[%s153 + $0x34c] sm:$0xf]
      %v377 = vld [vmem:[%s153 + $0x350] sm:$0xf]
      %v378 = vld [vmem:[%s153 + $0x354] sm:$0xf]
      %v379 = vld [vmem:[%s153 + $0x358] sm:$0xf]
      %v380 = vld [vmem:[%s153 + $0x35c] sm:$0xf]
      %v381 = vld [vmem:[%s153 + $0x360] sm:$0xf]
      %v382 = vld [vmem:[%s153 + $0x364] sm:$0xf]
      %v383 = vld [vmem:[%s153 + $0x368] sm:$0xf]
      %v384 = vld [vmem:[%s153 + $0x36c] sm:$0xf]
      %v385 = vld [vmem:[%s153 + $0x370] sm:$0xf]
      %v386 = vld [vmem:[%s153 + $0x374] sm:$0xf]
      %v387 = vld [vmem:[%s153 + $0x378] sm:$0xf]
      %v388 = vld [vmem:[%s153 + $0x37c] sm:$0xf]
      %v389 = vld [vmem:[%s158] sm:$0xf]
      %v390 = vld [vmem:[%s158 + $0x4] sm:$0xf]
      %v391 = vld [vmem:[%s158 + $0x8] sm:$0xf]
      %v392 = vld [vmem:[%s158 + $0xc] sm:$0xf]
      %v393 = vld [vmem:[%s158 + $0x10] sm:$0xf]
      %v394 = vld [vmem:[%s158 + $0x14] sm:$0xf]
      %v395 = vld [vmem:[%s158 + $0x18] sm:$0xf]
      %v396 = vld [vmem:[%s158 + $0x1c] sm:$0xf]
      %v397 = vld [vmem:[%s158 + $0x20] sm:$0xf]
      %v398 = vld [vmem:[%s158 + $0x24] sm:$0xf]
      %v399 = vld [vmem:[%s158 + $0x28] sm:$0xf]
      %v400 = vld [vmem:[%s158 + $0x2c] sm:$0xf]
      %v401 = vld [vmem:[%s158 + $0x30] sm:$0xf]
      %v402 = vld [vmem:[%s158 + $0x34] sm:$0xf]
      %v403 = vld [vmem:[%s158 + $0x38] sm:$0xf]
      %v404 = vld [vmem:[%s158 + $0x3c] sm:$0xf]
      %v629 = vunpack.c.l.b16 %v165
      %v630 = vunpack.c.l.b16 %v166
      %v631 = vunpack.c.l.b16 %v167
      %v632 = vunpack.c.l.b16 %v168
      %v633 = vunpack.c.l.b16 %v169
      %v634 = vunpack.c.l.b16 %v170
      %v635 = vunpack.c.l.b16 %v171
      %v636 = vunpack.c.l.b16 %v172
      %v637 = vunpack.c.l.b16 %v173
      %v638 = vunpack.c.l.b16 %v174
      %v639 = vunpack.c.l.b16 %v175
      %v640 = vunpack.c.l.b16 %v176
      %v641 = vunpack.c.l.b16 %v177
      %v642 = vunpack.c.l.b16 %v178
      %v643 = vunpack.c.l.b16 %v179
      %v644 = vunpack.c.l.b16 %v180
      %v645 = vunpack.c.l.b16 %v181
      %v646 = vunpack.c.l.b16 %v182
      %v647 = vunpack.c.l.b16 %v183
      %v648 = vunpack.c.l.b16 %v184
      %v649 = vunpack.c.l.b16 %v185
      %v650 = vunpack.c.l.b16 %v186
      %v651 = vunpack.c.l.b16 %v187
      %v652 = vunpack.c.l.b16 %v188
      %v653 = vunpack.c.l.b16 %v189
      %v654 = vunpack.c.l.b16 %v190
      %v655 = vunpack.c.l.b16 %v191
      %v656 = vunpack.c.l.b16 %v192
      %v657 = vunpack.c.l.b16 %v193
      %v658 = vunpack.c.l.b16 %v194
      %v659 = vunpack.c.l.b16 %v195
      %v660 = vunpack.c.l.b16 %v196
      %v661 = vunpack.c.l.b16 %v197
      %v662 = vunpack.c.l.b16 %v198
      %v663 = vunpack.c.l.b16 %v199
      %v664 = vunpack.c.l.b16 %v200
      %v665 = vunpack.c.l.b16 %v201
      %v666 = vunpack.c.l.b16 %v202
      %v667 = vunpack.c.l.b16 %v203
      %v668 = vunpack.c.l.b16 %v204
      %v669 = vunpack.c.l.b16 %v205
      %v670 = vunpack.c.l.b16 %v206
      %v671 = vunpack.c.l.b16 %v207
      %v672 = vunpack.c.l.b16 %v208
      %v673 = vunpack.c.l.b16 %v209
      %v674 = vunpack.c.l.b16 %v210
      %v675 = vunpack.c.l.b16 %v211
      %v676 = vunpack.c.l.b16 %v212
      %v677 = vunpack.c.l.b16 %v213
      %v678 = vunpack.c.l.b16 %v214
      %v679 = vunpack.c.l.b16 %v215
      %v680 = vunpack.c.l.b16 %v216
      %v681 = vunpack.c.l.b16 %v217
      %v682 = vunpack.c.l.b16 %v218
      %v683 = vunpack.c.l.b16 %v219
      %v684 = vunpack.c.l.b16 %v220
      %v685 = vunpack.c.l.b16 %v221
      %v686 = vunpack.c.l.b16 %v222
      %v687 = vunpack.c.l.b16 %v223
      %v688 = vunpack.c.l.b16 %v224
      %v689 = vunpack.c.l.b16 %v225
      %v690 = vunpack.c.l.b16 %v226
      %v691 = vunpack.c.l.b16 %v227
      %v692 = vunpack.c.l.b16 %v228
      %v693 = vunpack.c.l.b16 %v229
      %v694 = vunpack.c.l.b16 %v230
      %v695 = vunpack.c.l.b16 %v231
      %v696 = vunpack.c.l.b16 %v232
      %v697 = vunpack.c.l.b16 %v233
      %v698 = vunpack.c.l.b16 %v234
      %v699 = vunpack.c.l.b16 %v235
      %v700 = vunpack.c.l.b16 %v236
      %v701 = vunpack.c.l.b16 %v237
      %v702 = vunpack.c.l.b16 %v238
      %v703 = vunpack.c.l.b16 %v239
      %v704 = vunpack.c.l.b16 %v240
      %v705 = vunpack.c.l.b16 %v241
      %v706 = vunpack.c.l.b16 %v242
      %v707 = vunpack.c.l.b16 %v243
      %v708 = vunpack.c.l.b16 %v244
      %v709 = vunpack.c.l.b16 %v245
      %v710 = vunpack.c.l.b16 %v246
      %v711 = vunpack.c.l.b16 %v247
      %v712 = vunpack.c.l.b16 %v248
      %v713 = vunpack.c.l.b16 %v249
      %v714 = vunpack.c.l.b16 %v250
      %v715 = vunpack.c.l.b16 %v251
      %v716 = vunpack.c.l.b16 %v252
      %v717 = vunpack.c.l.b16 %v253
      %v718 = vunpack.c.l.b16 %v254
      %v719 = vunpack.c.l.b16 %v255
      %v720 = vunpack.c.l.b16 %v256
      %v721 = vunpack.c.l.b16 %v257
      %v722 = vunpack.c.l.b16 %v258
      %v723 = vunpack.c.l.b16 %v259
      %v724 = vunpack.c.l.b16 %v260
      %v725 = vunpack.c.l.b16 %v261
      %v726 = vunpack.c.l.b16 %v262
      %v727 = vunpack.c.l.b16 %v263
      %v728 = vunpack.c.l.b16 %v264
      %v729 = vunpack.c.l.b16 %v265
      %v730 = vunpack.c.l.b16 %v266
      %v731 = vunpack.c.l.b16 %v267
      %v732 = vunpack.c.l.b16 %v268
      %v733 = vunpack.c.l.b16 %v269
      %v734 = vunpack.c.l.b16 %v270
      %v735 = vunpack.c.l.b16 %v271
      %v736 = vunpack.c.l.b16 %v272
      %v737 = vunpack.c.l.b16 %v273
      %v738 = vunpack.c.l.b16 %v274
      %v739 = vunpack.c.l.b16 %v275
      %v740 = vunpack.c.l.b16 %v276
      %v741 = vunpack.c.l.b16 %v277
      %v742 = vunpack.c.l.b16 %v278
      %v743 = vunpack.c.l.b16 %v279
      %v744 = vunpack.c.l.b16 %v280
      %v745 = vunpack.c.l.b16 %v281
      %v746 = vunpack.c.l.b16 %v282
      %v747 = vunpack.c.l.b16 %v283
      %v748 = vunpack.c.l.b16 %v284
      %v749 = vunpack.c.l.b16 %v285
      %v750 = vunpack.c.l.b16 %v286
      %v751 = vunpack.c.l.b16 %v287
      %v752 = vunpack.c.l.b16 %v288
      %v753 = vunpack.c.l.b16 %v289
      %v754 = vunpack.c.l.b16 %v290
      %v755 = vunpack.c.l.b16 %v291
      %v756 = vunpack.c.l.b16 %v292
      %v757 = vunpack.c.l.b16 %v293
      %v758 = vunpack.c.l.b16 %v294
      %v759 = vunpack.c.l.b16 %v295
      %v760 = vunpack.c.l.b16 %v296
      %v761 = vunpack.c.l.b16 %v297
      %v762 = vunpack.c.l.b16 %v298
      %v763 = vunpack.c.l.b16 %v299
      %v764 = vunpack.c.l.b16 %v300
      %v765 = vunpack.c.l.b16 %v301
      %v766 = vunpack.c.l.b16 %v302
      %v767 = vunpack.c.l.b16 %v303
      %v768 = vunpack.c.l.b16 %v304
      %v769 = vunpack.c.l.b16 %v305
      %v770 = vunpack.c.l.b16 %v306
      %v771 = vunpack.c.l.b16 %v307
      %v772 = vunpack.c.l.b16 %v308
      %v773 = vunpack.c.l.b16 %v309
      %v774 = vunpack.c.l.b16 %v310
      %v775 = vunpack.c.l.b16 %v311
      %v776 = vunpack.c.l.b16 %v312
      %v777 = vunpack.c.l.b16 %v313
      %v778 = vunpack.c.l.b16 %v314
      %v779 = vunpack.c.l.b16 %v315
      %v780 = vunpack.c.l.b16 %v316
      %v781 = vunpack.c.l.b16 %v317
      %v782 = vunpack.c.l.b16 %v318
      %v783 = vunpack.c.l.b16 %v319
      %v784 = vunpack.c.l.b16 %v320
      %v785 = vunpack.c.l.b16 %v321
      %v786 = vunpack.c.l.b16 %v322
      %v787 = vunpack.c.l.b16 %v323
      %v788 = vunpack.c.l.b16 %v324
      %v789 = vunpack.c.l.b16 %v325
      %v790 = vunpack.c.l.b16 %v326
      %v791 = vunpack.c.l.b16 %v327
      %v792 = vunpack.c.l.b16 %v328
      %v793 = vunpack.c.l.b16 %v329
      %v794 = vunpack.c.l.b16 %v330
      %v795 = vunpack.c.l.b16 %v331
      %v796 = vunpack.c.l.b16 %v332
      %v797 = vunpack.c.l.b16 %v333
      %v798 = vunpack.c.l.b16 %v334
      %v799 = vunpack.c.l.b16 %v335
      %v800 = vunpack.c.l.b16 %v336
      %v801 = vunpack.c.l.b16 %v337
      %v802 = vunpack.c.l.b16 %v338
      %v803 = vunpack.c.l.b16 %v339
      %v804 = vunpack.c.l.b16 %v340
      %v805 = vunpack.c.l.b16 %v341
      %v806 = vunpack.c.l.b16 %v342
      %v807 = vunpack.c.l.b16 %v343
      %v808 = vunpack.c.l.b16 %v344
      %v809 = vunpack.c.l.b16 %v345
      %v810 = vunpack.c.l.b16 %v346
      %v811 = vunpack.c.l.b16 %v347
      %v812 = vunpack.c.l.b16 %v348
      %v813 = vunpack.c.l.b16 %v349
      %v814 = vunpack.c.l.b16 %v350
      %v815 = vunpack.c.l.b16 %v351
      %v816 = vunpack.c.l.b16 %v352
      %v817 = vunpack.c.l.b16 %v353
      %v818 = vunpack.c.l.b16 %v354
      %v819 = vunpack.c.l.b16 %v355
      %v820 = vunpack.c.l.b16 %v356
      %v821 = vunpack.c.l.b16 %v357
      %v822 = vunpack.c.l.b16 %v358
      %v823 = vunpack.c.l.b16 %v359
      %v824 = vunpack.c.l.b16 %v360
      %v825 = vunpack.c.l.b16 %v361
      %v826 = vunpack.c.l.b16 %v362
      %v827 = vunpack.c.l.b16 %v363
      %v828 = vunpack.c.l.b16 %v364
      %v829 = vunpack.c.l.b16 %v365
      %v830 = vunpack.c.l.b16 %v366
      %v831 = vunpack.c.l.b16 %v367
      %v832 = vunpack.c.l.b16 %v368
      %v833 = vunpack.c.l.b16 %v369
      %v834 = vunpack.c.l.b16 %v370
      %v835 = vunpack.c.l.b16 %v371
      %v836 = vunpack.c.l.b16 %v372
      %v837 = vunpack.c.l.b16 %v373
      %v838 = vunpack.c.l.b16 %v374
      %v839 = vunpack.c.l.b16 %v375
      %v840 = vunpack.c.l.b16 %v376
      %v841 = vunpack.c.l.b16 %v377
      %v842 = vunpack.c.l.b16 %v378
      %v843 = vunpack.c.l.b16 %v379
      %v844 = vunpack.c.l.b16 %v380
      %v845 = vunpack.c.l.b16 %v381
      %v846 = vunpack.c.l.b16 %v382
      %v847 = vunpack.c.l.b16 %v383
      %v848 = vunpack.c.l.b16 %v384
      %v849 = vunpack.c.l.b16 %v385
      %v850 = vunpack.c.l.b16 %v386
      %v851 = vunpack.c.l.b16 %v387
      %v852 = vunpack.c.l.b16 %v388
      %v853 = vpack.c.b16 %v630, %v629
      %v854 = vpack.c.b16 %v632, %v631
      %v855 = vpack.c.b16 %v634, %v633
      %v856 = vpack.c.b16 %v636, %v635
      %v857 = vpack.c.b16 %v638, %v637
      %v858 = vpack.c.b16 %v640, %v639
      %v859 = vpack.c.b16 %v642, %v641
      %v860 = vpack.c.b16 %v644, %v643
      %v861 = vpack.c.b16 %v646, %v645
      %v862 = vpack.c.b16 %v648, %v647
      %v863 = vpack.c.b16 %v650, %v649
      %v864 = vpack.c.b16 %v652, %v651
      %v865 = vpack.c.b16 %v654, %v653
      %v866 = vpack.c.b16 %v656, %v655
      %v867 = vpack.c.b16 %v658, %v657
      %v868 = vpack.c.b16 %v660, %v659
      %v869 = vpack.c.b16 %v662, %v661
      %v870 = vpack.c.b16 %v664, %v663
      %v871 = vpack.c.b16 %v666, %v665
      %v872 = vpack.c.b16 %v668, %v667
      %v873 = vpack.c.b16 %v670, %v669
      %v874 = vpack.c.b16 %v672, %v671
      %v875 = vpack.c.b16 %v674, %v673
      %v876 = vpack.c.b16 %v676, %v675
      %v877 = vpack.c.b16 %v678, %v677
      %v878 = vpack.c.b16 %v680, %v679
      %v879 = vpack.c.b16 %v682, %v681
      %v880 = vpack.c.b16 %v684, %v683
      %v881 = vpack.c.b16 %v686, %v685
      %v882 = vpack.c.b16 %v688, %v687
      %v883 = vpack.c.b16 %v690, %v689
      %v884 = vpack.c.b16 %v692, %v691
      %v885 = vpack.c.b16 %v694, %v693
      %v886 = vpack.c.b16 %v696, %v695
      %v887 = vpack.c.b16 %v698, %v697
      %v888 = vpack.c.b16 %v700, %v699
      %v889 = vpack.c.b16 %v702, %v701
      %v890 = vpack.c.b16 %v704, %v703
      %v891 = vpack.c.b16 %v706, %v705
      %v892 = vpack.c.b16 %v708, %v707
      %v893 = vpack.c.b16 %v710, %v709
      %v894 = vpack.c.b16 %v712, %v711
      %v895 = vpack.c.b16 %v714, %v713
      %v896 = vpack.c.b16 %v716, %v715
      %v897 = vpack.c.b16 %v718, %v717
      %v898 = vpack.c.b16 %v720, %v719
      %v899 = vpack.c.b16 %v722, %v721
      %v900 = vpack.c.b16 %v724, %v723
      %v901 = vpack.c.b16 %v726, %v725
      %v902 = vpack.c.b16 %v728, %v727
      %v903 = vpack.c.b16 %v730, %v729
      %v904 = vpack.c.b16 %v732, %v731
      %v905 = vpack.c.b16 %v734, %v733
      %v906 = vpack.c.b16 %v736, %v735
      %v907 = vpack.c.b16 %v738, %v737
      %v908 = vpack.c.b16 %v740, %v739
      %v909 = vpack.c.b16 %v742, %v741
      %v910 = vpack.c.b16 %v744, %v743
      %v911 = vpack.c.b16 %v746, %v745
      %v912 = vpack.c.b16 %v748, %v747
      %v913 = vpack.c.b16 %v750, %v749
      %v914 = vpack.c.b16 %v752, %v751
      %v915 = vpack.c.b16 %v754, %v753
      %v916 = vpack.c.b16 %v756, %v755
      %v917 = vpack.c.b16 %v758, %v757
      %v918 = vpack.c.b16 %v760, %v759
      %v919 = vpack.c.b16 %v762, %v761
      %v920 = vpack.c.b16 %v764, %v763
      %v921 = vpack.c.b16 %v766, %v765
      %v922 = vpack.c.b16 %v768, %v767
      %v923 = vpack.c.b16 %v770, %v769
      %v924 = vpack.c.b16 %v772, %v771
      %v925 = vpack.c.b16 %v774, %v773
      %v926 = vpack.c.b16 %v776, %v775
      %v927 = vpack.c.b16 %v778, %v777
      %v928 = vpack.c.b16 %v780, %v779
      %v929 = vpack.c.b16 %v782, %v781
      %v930 = vpack.c.b16 %v784, %v783
      %v931 = vpack.c.b16 %v786, %v785
      %v932 = vpack.c.b16 %v788, %v787
      %v933 = vpack.c.b16 %v790, %v789
      %v934 = vpack.c.b16 %v792, %v791
      %v935 = vpack.c.b16 %v794, %v793
      %v936 = vpack.c.b16 %v796, %v795
      %v937 = vpack.c.b16 %v798, %v797
      %v938 = vpack.c.b16 %v800, %v799
      %v939 = vpack.c.b16 %v802, %v801
      %v940 = vpack.c.b16 %v804, %v803
      %v941 = vpack.c.b16 %v806, %v805
      %v942 = vpack.c.b16 %v808, %v807
      %v943 = vpack.c.b16 %v810, %v809
      %v944 = vpack.c.b16 %v812, %v811
      %v945 = vpack.c.b16 %v814, %v813
      %v946 = vpack.c.b16 %v816, %v815
      %v947 = vpack.c.b16 %v818, %v817
      %v948 = vpack.c.b16 %v820, %v819
      %v949 = vpack.c.b16 %v822, %v821
      %v950 = vpack.c.b16 %v824, %v823
      %v951 = vpack.c.b16 %v826, %v825
      %v952 = vpack.c.b16 %v828, %v827
      %v953 = vpack.c.b16 %v830, %v829
      %v954 = vpack.c.b16 %v832, %v831
      %v955 = vpack.c.b16 %v834, %v833
      %v956 = vpack.c.b16 %v836, %v835
      %v957 = vpack.c.b16 %v838, %v837
      %v958 = vpack.c.b16 %v840, %v839
      %v959 = vpack.c.b16 %v842, %v841
      %v960 = vpack.c.b16 %v844, %v843
      %v961 = vpack.c.b16 %v846, %v845
      %v962 = vpack.c.b16 %v848, %v847
      %v963 = vpack.c.b16 %v850, %v849
      %v964 = vpack.c.b16 %v852, %v851
      %v1093 = vunpack.c.l.b16 %v389
      %v1094 = vunpack.c.l.b16 %v390
      %v1095 = vunpack.c.l.b16 %v391
      %v1096 = vunpack.c.l.b16 %v392
      %v1097 = vunpack.c.l.b16 %v393
      %v1098 = vunpack.c.l.b16 %v394
      %v1099 = vunpack.c.l.b16 %v395
      %v1100 = vunpack.c.l.b16 %v396
      %v1101 = vunpack.c.l.b16 %v397
      %v1102 = vunpack.c.l.b16 %v398
      %v1103 = vunpack.c.l.b16 %v399
      %v1104 = vunpack.c.l.b16 %v400
      %v1105 = vunpack.c.l.b16 %v401
      %v1106 = vunpack.c.l.b16 %v402
      %v1107 = vunpack.c.l.b16 %v403
      %v1108 = vunpack.c.l.b16 %v404
      %v1109 = vpack.c.b16 %v1094, %v1093
      %v1110 = vpack.c.b16 %v1096, %v1095
      %v1111 = vpack.c.b16 %v1098, %v1097
      %v1112 = vpack.c.b16 %v1100, %v1099
      %v1113 = vpack.c.b16 %v1102, %v1101
      %v1114 = vpack.c.b16 %v1104, %v1103
      %v1115 = vpack.c.b16 %v1106, %v1105
      %v1116 = vpack.c.b16 %v1108, %v1107
      %1125 = vmatprep.subr.bf16.mxu0 0
      %1126 = vmatpush1.bf16.msra.mxu0 %v1109
      %1127 = vmatprep.subr.bf16.mxu0 0
      %1128 = vmatpush1.bf16.msra.mxu0 %v1110
      %1129 = vmatprep.subr.bf16.mxu0 0
      %1130 = vmatpush1.bf16.msra.mxu0 %v1111
      %1131 = vmatprep.subr.bf16.mxu0 0
      %1132 = vmatpush1.bf16.msra.mxu0 %v1112
      %1133 = vmatprep.subr.bf16.mxu0 0
      %1134 = vmatpush1.bf16.msra.mxu0 %v1113
      %1135 = vmatprep.subr.bf16.mxu0 0
      %1136 = vmatpush1.bf16.msra.mxu0 %v1114
      %1137 = vmatprep.subr.bf16.mxu0 0
      %1138 = vmatpush1.bf16.msra.mxu0 %v1115
      %1139 = vmatprep.subr.bf16.mxu0 0
      %1140 = vmatpush1.bf16.msra.mxu0 %v1116
      %1141 = vmatprep.subr.bf16.mxu0 0
      %1142 = vmatpush1.bf16.msra.mxu0 0
      %1143 = vmatprep.subr.bf16.mxu0 0
      %1144 = vmatpush1.bf16.msra.mxu0 0
      %1145 = vmatprep.subr.bf16.mxu0 0
      %1146 = vmatpush1.bf16.msra.mxu0 0
      %1147 = vmatprep.subr.bf16.mxu0 0
      %1148 = vmatpush1.bf16.msra.mxu0 0
      %1149 = vmatprep.subr.bf16.mxu0 0
      %1150 = vmatpush1.bf16.msra.mxu0 0
      %1151 = vmatprep.subr.bf16.mxu0 0
      %1152 = vmatpush1.bf16.msra.mxu0 0
      %1153 = vmatprep.subr.bf16.mxu0 0
      %1154 = vmatpush1.bf16.msra.mxu0 0
      %1155 = vmatprep.subr.bf16.mxu0 0
      %1156 = vmatpush1.bf16.msra.mxu0 0
      %1157 = vmatprep.mubr.bf16.mxu0 0
      %1158 = vmatmul.mubr.bf16.gmra.mrb[0].mxu0 %v853
      %v1159 = vpop.f32.mrb[0].mxu0
      %v1160 = vadd.f32 0.0, %v1159
      %v1161 = vpop.f32.mrb[0].mxu0
      %v1162 = vpop.f32.mrb[0].mxu0
      %v1163 = vadd.f32 0.0, %v1162
      %v1164 = vpop.f32.mrb[0].mxu0
      %1165 = vmatprep.mubr.bf16.mxu0 0
      %1166 = vmatmul.mubr.bf16.gmra.mrb[0].mxu0 %v854
      %v1167 = vpop.f32.mrb[0].mxu0
      %v1168 = vadd.f32 0.0, %v1167
      %v1169 = vpop.f32.mrb[0].mxu0
      %v1170 = vpop.f32.mrb[0].mxu0
      %v1171 = vadd.f32 0.0, %v1170
      %v1172 = vpop.f32.mrb[0].mxu0
      %1173 = vmatprep.mubr.bf16.mxu0 0
      %1174 = vmatmul.mubr.bf16.gmra.mrb[0].mxu0 %v855
      %v1175 = vpop.f32.mrb[0].mxu0
      %v1176 = vadd.f32 0.0, %v1175
      %v1177 = vpop.f32.mrb[0].mxu0
      %v1178 = vpop.f32.mrb[0].mxu0
      %v1179 = vadd.f32 0.0, %v1178
      %v1180 = vpop.f32.mrb[0].mxu0
      %1181 = vmatprep.mubr.bf16.mxu0 0
      %1182 = vmatmul.mubr.bf16.gmra.mrb[0].mxu0 %v856
      %v1183 = vpop.f32.mrb[0].mxu0
      %v1184 = vadd.f32 0.0, %v1183
      %v1185 = vpop.f32.mrb[0].mxu0
      %v1186 = vpop.f32.mrb[0].mxu0
      %v1187 = vadd.f32 0.0, %v1186
      %v1188 = vpop.f32.mrb[0].mxu0
      %1189 = vmatprep.mubr.bf16.mxu0 0
      %1190 = vmatmul.mubr.bf16.gmra.mrb[0].mxu0 %v857
      %v1191 = vpop.f32.mrb[0].mxu0
      %v1192 = vadd.f32 0.0, %v1191
      %v1193 = vpop.f32.mrb[0].mxu0
      %v1194 = vpop.f32.mrb[0].mxu0
      %v1195 = vadd.f32 0.0, %v1194
      %v1196 = vpop.f32.mrb[0].mxu0
      %1197 = vmatprep.mubr.bf16.mxu0 0
      %1198 = vmatmul.mubr.bf16.gmra.mrb[0].mxu0 %v858
      %v1199 = vpop.f32.mrb[0].mxu0
      %v1200 = vadd.f32 0.0, %v1199
      %v1201 = vpop.f32.mrb[0].mxu0
      %v1202 = vpop.f32.mrb[0].mxu0
      %v1203 = vadd.f32 0.0, %v1202
      %v1204 = vpop.f32.mrb[0].mxu0
      %1205 = vmatprep.mubr.bf16.mxu0 0
      %1206 = vmatmul.mubr.bf16.gmra.mrb[0].mxu0 %v859
      %v1207 = vpop.f32.mrb[0].mxu0
      %v1208 = vadd.f32 0.0, %v1207
      %v1209 = vpop.f32.mrb[0].mxu0
      %v1210 = vpop.f32.mrb[0].mxu0
      %v1211 = vadd.f32 0.0, %v1210
      %v1212 = vpop.f32.mrb[0].mxu0
      %1213 = vmatprep.mubr.bf16.mxu0 0
      %1214 = vmatmul.mubr.bf16.gmra.mrb[0].mxu0 %v860
      %v1215 = vpop.f32.mrb[0].mxu0
      %v1216 = vadd.f32 0.0, %v1215
      %v1217 = vpop.f32.mrb[0].mxu0
      %v1218 = vpop.f32.mrb[0].mxu0
      %v1219 = vadd.f32 0.0, %v1218
      %v1220 = vpop.f32.mrb[0].mxu0
      %1221 = vmatprep.mubr.bf16.mxu0 0
      %1222 = vmatmul.mubr.bf16.gmra.mrb[0].mxu0 %v861
      %v1223 = vpop.f32.mrb[0].mxu0
      %v1224 = vadd.f32 0.0, %v1223
      %v1225 = vpop.f32.mrb[0].mxu0
      %v1226 = vpop.f32.mrb[0].mxu0
      %v1227 = vadd.f32 0.0, %v1226
      %v1228 = vpop.f32.mrb[0].mxu0
      %1229 = vmatprep.mubr.bf16.mxu0 0
      %1230 = vmatmul.mubr.bf16.gmra.mrb[0].mxu0 %v862
      %v1231 = vpop.f32.mrb[0].mxu0
      %v1232 = vadd.f32 0.0, %v1231
      %v1233 = vpop.f32.mrb[0].mxu0
      %v1234 = vpop.f32.mrb[0].mxu0
      %v1235 = vadd.f32 0.0, %v1234
      %v1236 = vpop.f32.mrb[0].mxu0
      %1237 = vmatprep.mubr.bf16.mxu0 0
      %1238 = vmatmul.mubr.bf16.gmra.mrb[0].mxu0 %v863
      %v1239 = vpop.f32.mrb[0].mxu0
      %v1240 = vadd.f32 0.0, %v1239
      %v1241 = vpop.f32.mrb[0].mxu0
      %v1242 = vpop.f32.mrb[0].mxu0
      %v1243 = vadd.f32 0.0, %v1242
      %v1244 = vpop.f32.mrb[0].mxu0
      %1245 = vmatprep.mubr.bf16.mxu0 0
      %1246 = vmatmul.mubr.bf16.gmra.mrb[0].mxu0 %v864
      %v1247 = vpop.f32.mrb[0].mxu0
      %v1248 = vadd.f32 0.0, %v1247
      %v1249 = vpop.f32.mrb[0].mxu0
      %v1250 = vpop.f32.mrb[0].mxu0
      %v1251 = vadd.f32 0.0, %v1250
      %v1252 = vpop.f32.mrb[0].mxu0
      %1253 = vmatprep.mubr.bf16.mxu0 0
      %1254 = vmatmul.mubr.bf16.gmra.mrb[0].mxu0 %v865
      %v1255 = vpop.f32.mrb[0].mxu0
      %v1256 = vadd.f32 0.0, %v1255
      %v1257 = vpop.f32.mrb[0].mxu0
      %v1258 = vpop.f32.mrb[0].mxu0
      %v1259 = vadd.f32 0.0, %v1258
      %v1260 = vpop.f32.mrb[0].mxu0
      %1261 = vmatprep.mubr.bf16.mxu0 0
      %1262 = vmatmul.mubr.bf16.gmra.mrb[0].mxu0 %v866
      %v1263 = vpop.f32.mrb[0].mxu0
      %v1264 = vadd.f32 0.0, %v1263
      %v1265 = vpop.f32.mrb[0].mxu0
      %v1266 = vpop.f32.mrb[0].mxu0
      %v1267 = vadd.f32 0.0, %v1266
      %v1268 = vpop.f32.mrb[0].mxu0
      %1269 = vmatprep.mubr.bf16.mxu0 0
      %1270 = vmatmul.mubr.bf16.gmra.mrb[0].mxu0 %v867
      %v1271 = vpop.f32.mrb[0].mxu0
      %v1272 = vadd.f32 0.0, %v1271
      %v1273 = vpop.f32.mrb[0].mxu0
      %v1274 = vpop.f32.mrb[0].mxu0
      %v1275 = vadd.f32 0.0, %v1274
      %v1276 = vpop.f32.mrb[0].mxu0
      %1277 = vmatprep.mubr.bf16.mxu0 0
      %1278 = vmatmul.mubr.bf16.gmra.mrb[0].mxu0 %v868
      %v1279 = vpop.f32.mrb[0].mxu0
      %v1280 = vadd.f32 0.0, %v1279
      %v1281 = vpop.f32.mrb[0].mxu0
      %v1282 = vpop.f32.mrb[0].mxu0
      %v1283 = vadd.f32 0.0, %v1282
      %v1284 = vpop.f32.mrb[0].mxu0
      %1285 = vmatprep.mubr.bf16.mxu0 0
      %1286 = vmatmul.mubr.bf16.gmra.mrb[0].mxu0 %v869
      %v1287 = vpop.f32.mrb[0].mxu0
      %v1288 = vadd.f32 0.0, %v1287
      %v1289 = vpop.f32.mrb[0].mxu0
      %v1290 = vpop.f32.mrb[0].mxu0
      %v1291 = vadd.f32 0.0, %v1290
      %v1292 = vpop.f32.mrb[0].mxu0
      %1293 = vmatprep.mubr.bf16.mxu0 0
      %1294 = vmatmul.mubr.bf16.gmra.mrb[0].mxu0 %v870
      %v1295 = vpop.f32.mrb[0].mxu0
      %v1296 = vadd.f32 0.0, %v1295
      %v1297 = vpop.f32.mrb[0].mxu0
      %v1298 = vpop.f32.mrb[0].mxu0
      %v1299 = vadd.f32 0.0, %v1298
      %v1300 = vpop.f32.mrb[0].mxu0
      %1301 = vmatprep.mubr.bf16.mxu0 0
      %1302 = vmatmul.mubr.bf16.gmra.mrb[0].mxu0 %v871
      %v1303 = vpop.f32.mrb[0].mxu0
      %v1304 = vadd.f32 0.0, %v1303
      %v1305 = vpop.f32.mrb[0].mxu0
      %v1306 = vpop.f32.mrb[0].mxu0
      %v1307 = vadd.f32 0.0, %v1306
      %v1308 = vpop.f32.mrb[0].mxu0
      %1309 = vmatprep.mubr.bf16.mxu0 0
      %1310 = vmatmul.mubr.bf16.gmra.mrb[0].mxu0 %v872
      %v1311 = vpop.f32.mrb[0].mxu0
      %v1312 = vadd.f32 0.0, %v1311
      %v1313 = vpop.f32.mrb[0].mxu0
      %v1314 = vpop.f32.mrb[0].mxu0
      %v1315 = vadd.f32 0.0, %v1314
      %v1316 = vpop.f32.mrb[0].mxu0
      %1317 = vmatprep.mubr.bf16.mxu0 0
      %1318 = vmatmul.mubr.bf16.gmra.mrb[0].mxu0 %v873
      %v1319 = vpop.f32.mrb[0].mxu0
      %v1320 = vadd.f32 0.0, %v1319
      %v1321 = vpop.f32.mrb[0].mxu0
      %v1322 = vpop.f32.mrb[0].mxu0
      %v1323 = vadd.f32 0.0, %v1322
      %v1324 = vpop.f32.mrb[0].mxu0
      %1325 = vmatprep.mubr.bf16.mxu0 0
      %1326 = vmatmul.mubr.bf16.gmra.mrb[0].mxu0 %v874
      %v1327 = vpop.f32.mrb[0].mxu0
      %v1328 = vadd.f32 0.0, %v1327
      %v1329 = vpop.f32.mrb[0].mxu0
      %v1330 = vpop.f32.mrb[0].mxu0
      %v1331 = vadd.f32 0.0, %v1330
      %v1332 = vpop.f32.mrb[0].mxu0
      %1333 = vmatprep.mubr.bf16.mxu0 0
      %1334 = vmatmul.mubr.bf16.gmra.mrb[0].mxu0 %v875
      %v1335 = vpop.f32.mrb[0].mxu0
      %v1336 = vadd.f32 0.0, %v1335
      %v1337 = vpop.f32.mrb[0].mxu0
      %v1338 = vpop.f32.mrb[0].mxu0
      %v1339 = vadd.f32 0.0, %v1338
      %v1340 = vpop.f32.mrb[0].mxu0
      %1341 = vmatprep.mubr.bf16.mxu0 0
      %1342 = vmatmul.mubr.bf16.gmra.mrb[0].mxu0 %v876
      %v1343 = vpop.f32.mrb[0].mxu0
      %v1344 = vadd.f32 0.0, %v1343
      %v1345 = vpop.f32.mrb[0].mxu0
      %v1346 = vpop.f32.mrb[0].mxu0
      %v1347 = vadd.f32 0.0, %v1346
      %v1348 = vpop.f32.mrb[0].mxu0
      %1349 = vmatprep.mubr.bf16.mxu0 0
      %1350 = vmatmul.mubr.bf16.gmra.mrb[0].mxu0 %v877
      %v1351 = vpop.f32.mrb[0].mxu0
      %v1352 = vadd.f32 0.0, %v1351
      %v1353 = vpop.f32.mrb[0].mxu0
      %v1354 = vpop.f32.mrb[0].mxu0
      %v1355 = vadd.f32 0.0, %v1354
      %v1356 = vpop.f32.mrb[0].mxu0
      %1357 = vmatprep.mubr.bf16.mxu0 0
      %1358 = vmatmul.mubr.bf16.gmra.mrb[0].mxu0 %v878
      %v1359 = vpop.f32.mrb[0].mxu0
      %v1360 = vadd.f32 0.0, %v1359
      %v1361 = vpop.f32.mrb[0].mxu0
      %v1362 = vpop.f32.mrb[0].mxu0
      %v1363 = vadd.f32 0.0, %v1362
      %v1364 = vpop.f32.mrb[0].mxu0
      %1365 = vmatprep.mubr.bf16.mxu0 0
      %1366 = vmatmul.mubr.bf16.gmra.mrb[0].mxu0 %v879
      %v1367 = vpop.f32.mrb[0].mxu0
      %v1368 = vadd.f32 0.0, %v1367
      %v1369 = vpop.f32.mrb[0].mxu0
      %v1370 = vpop.f32.mrb[0].mxu0
      %v1371 = vadd.f32 0.0, %v1370
      %v1372 = vpop.f32.mrb[0].mxu0
      %1373 = vmatprep.mubr.bf16.mxu0 0
      %1374 = vmatmul.mubr.bf16.gmra.mrb[0].mxu0 %v880
      %v1375 = vpop.f32.mrb[0].mxu0
      %v1376 = vadd.f32 0.0, %v1375
      %v1377 = vpop.f32.mrb[0].mxu0
      %v1378 = vpop.f32.mrb[0].mxu0
      %v1379 = vadd.f32 0.0, %v1378
      %v1380 = vpop.f32.mrb[0].mxu0
      %1381 = vmatprep.mubr.bf16.mxu0 0
      %1382 = vmatmul.mubr.bf16.gmra.mrb[0].mxu0 %v881
      %v1383 = vpop.f32.mrb[0].mxu0
      %v1384 = vadd.f32 0.0, %v1383
      %v1385 = vpop.f32.mrb[0].mxu0
      %v1386 = vpop.f32.mrb[0].mxu0
      %v1387 = vadd.f32 0.0, %v1386
      %v1388 = vpop.f32.mrb[0].mxu0
      %1389 = vmatprep.mubr.bf16.mxu0 0
      %1390 = vmatmul.mubr.bf16.gmra.mrb[0].mxu0 %v882
      %v1391 = vpop.f32.mrb[0].mxu0
      %v1392 = vadd.f32 0.0, %v1391
      %v1393 = vpop.f32.mrb[0].mxu0
      %v1394 = vpop.f32.mrb[0].mxu0
      %v1395 = vadd.f32 0.0, %v1394
      %v1396 = vpop.f32.mrb[0].mxu0
      %1397 = vmatprep.mubr.bf16.mxu0 0
      %1398 = vmatmul.mubr.bf16.gmra.mrb[0].mxu0 %v883
      %v1399 = vpop.f32.mrb[0].mxu0
      %v1400 = vadd.f32 0.0, %v1399
      %v1401 = vpop.f32.mrb[0].mxu0
      %v1402 = vpop.f32.mrb[0].mxu0
      %v1403 = vadd.f32 0.0, %v1402
      %v1404 = vpop.f32.mrb[0].mxu0
      %1405 = vmatprep.mubr.bf16.mxu0 0
      %1406 = vmatmul.mubr.bf16.gmra.mrb[0].mxu0 %v884
      %v1407 = vpop.f32.mrb[0].mxu0
      %v1408 = vadd.f32 0.0, %v1407
      %v1409 = vpop.f32.mrb[0].mxu0
      %v1410 = vpop.f32.mrb[0].mxu0
      %v1411 = vadd.f32 0.0, %v1410
      %v1412 = vpop.f32.mrb[0].mxu0
      %1413 = vmatprep.mubr.bf16.mxu0 0
      %1414 = vmatmul.mubr.bf16.gmra.mrb[0].mxu0 %v885
      %v1415 = vpop.f32.mrb[0].mxu0
      %v1416 = vadd.f32 0.0, %v1415
      %v1417 = vpop.f32.mrb[0].mxu0
      %v1418 = vpop.f32.mrb[0].mxu0
      %v1419 = vadd.f32 0.0, %v1418
      %v1420 = vpop.f32.mrb[0].mxu0
      %1421 = vmatprep.mubr.bf16.mxu0 0
      %1422 = vmatmul.mubr.bf16.gmra.mrb[0].mxu0 %v886
      %v1423 = vpop.f32.mrb[0].mxu0
      %v1424 = vadd.f32 0.0, %v1423
      %v1425 = vpop.f32.mrb[0].mxu0
      %v1426 = vpop.f32.mrb[0].mxu0
      %v1427 = vadd.f32 0.0, %v1426
      %v1428 = vpop.f32.mrb[0].mxu0
      %1429 = vmatprep.mubr.bf16.mxu0 0
      %1430 = vmatmul.mubr.bf16.gmra.mrb[0].mxu0 %v887
      %v1431 = vpop.f32.mrb[0].mxu0
      %v1432 = vadd.f32 0.0, %v1431
      %v1433 = vpop.f32.mrb[0].mxu0
      %v1434 = vpop.f32.mrb[0].mxu0
      %v1435 = vadd.f32 0.0, %v1434
      %v1436 = vpop.f32.mrb[0].mxu0
      %1437 = vmatprep.mubr.bf16.mxu0 0
      %1438 = vmatmul.mubr.bf16.gmra.mrb[0].mxu0 %v888
      %v1439 = vpop.f32.mrb[0].mxu0
      %v1440 = vadd.f32 0.0, %v1439
      %v1441 = vpop.f32.mrb[0].mxu0
      %v1442 = vpop.f32.mrb[0].mxu0
      %v1443 = vadd.f32 0.0, %v1442
      %v1444 = vpop.f32.mrb[0].mxu0
      %1445 = vmatprep.mubr.bf16.mxu0 0
      %1446 = vmatmul.mubr.bf16.gmra.mrb[0].mxu0 %v889
      %v1447 = vpop.f32.mrb[0].mxu0
      %v1448 = vadd.f32 0.0, %v1447
      %v1449 = vpop.f32.mrb[0].mxu0
      %v1450 = vpop.f32.mrb[0].mxu0
      %v1451 = vadd.f32 0.0, %v1450
      %v1452 = vpop.f32.mrb[0].mxu0
      %1453 = vmatprep.mubr.bf16.mxu0 0
      %1454 = vmatmul.mubr.bf16.gmra.mrb[0].mxu0 %v890
      %v1455 = vpop.f32.mrb[0].mxu0
      %v1456 = vadd.f32 0.0, %v1455
      %v1457 = vpop.f32.mrb[0].mxu0
      %v1458 = vpop.f32.mrb[0].mxu0
      %v1459 = vadd.f32 0.0, %v1458
      %v1460 = vpop.f32.mrb[0].mxu0
      %1461 = vmatprep.mubr.bf16.mxu0 0
      %1462 = vmatmul.mubr.bf16.gmra.mrb[0].mxu0 %v891
      %v1463 = vpop.f32.mrb[0].mxu0
      %v1464 = vadd.f32 0.0, %v1463
      %v1465 = vpop.f32.mrb[0].mxu0
      %v1466 = vpop.f32.mrb[0].mxu0
      %v1467 = vadd.f32 0.0, %v1466
      %v1468 = vpop.f32.mrb[0].mxu0
      %1469 = vmatprep.mubr.bf16.mxu0 0
      %1470 = vmatmul.mubr.bf16.gmra.mrb[0].mxu0 %v892
      %v1471 = vpop.f32.mrb[0].mxu0
      %v1472 = vadd.f32 0.0, %v1471
      %v1473 = vpop.f32.mrb[0].mxu0
      %v1474 = vpop.f32.mrb[0].mxu0
      %v1475 = vadd.f32 0.0, %v1474
      %v1476 = vpop.f32.mrb[0].mxu0
      %1477 = vmatprep.mubr.bf16.mxu0 0
      %1478 = vmatmul.mubr.bf16.gmra.mrb[0].mxu0 %v893
      %v1479 = vpop.f32.mrb[0].mxu0
      %v1480 = vadd.f32 0.0, %v1479
      %v1481 = vpop.f32.mrb[0].mxu0
      %v1482 = vpop.f32.mrb[0].mxu0
      %v1483 = vadd.f32 0.0, %v1482
      %v1484 = vpop.f32.mrb[0].mxu0
      %1485 = vmatprep.mubr.bf16.mxu0 0
      %1486 = vmatmul.mubr.bf16.gmra.mrb[0].mxu0 %v894
      %v1487 = vpop.f32.mrb[0].mxu0
      %v1488 = vadd.f32 0.0, %v1487
      %v1489 = vpop.f32.mrb[0].mxu0
      %v1490 = vpop.f32.mrb[0].mxu0
      %v1491 = vadd.f32 0.0, %v1490
      %v1492 = vpop.f32.mrb[0].mxu0
      %1493 = vmatprep.mubr.bf16.mxu0 0
      %1494 = vmatmul.mubr.bf16.gmra.mrb[0].mxu0 %v895
      %v1495 = vpop.f32.mrb[0].mxu0
      %v1496 = vadd.f32 0.0, %v1495
      %v1497 = vpop.f32.mrb[0].mxu0
      %v1498 = vpop.f32.mrb[0].mxu0
      %v1499 = vadd.f32 0.0, %v1498
      %v1500 = vpop.f32.mrb[0].mxu0
      %1501 = vmatprep.mubr.bf16.mxu0 0
      %1502 = vmatmul.mubr.bf16.gmra.mrb[0].mxu0 %v896
      %v1503 = vpop.f32.mrb[0].mxu0
      %v1504 = vadd.f32 0.0, %v1503
      %v1505 = vpop.f32.mrb[0].mxu0
      %v1506 = vpop.f32.mrb[0].mxu0
      %v1507 = vadd.f32 0.0, %v1506
      %v1508 = vpop.f32.mrb[0].mxu0
      %1509 = vmatprep.mubr.bf16.mxu0 0
      %1510 = vmatmul.mubr.bf16.gmra.mrb[0].mxu0 %v897
      %v1511 = vpop.f32.mrb[0].mxu0
      %v1512 = vadd.f32 0.0, %v1511
      %v1513 = vpop.f32.mrb[0].mxu0
      %v1514 = vpop.f32.mrb[0].mxu0
      %v1515 = vadd.f32 0.0, %v1514
      %v1516 = vpop.f32.mrb[0].mxu0
      %1517 = vmatprep.mubr.bf16.mxu0 0
      %1518 = vmatmul.mubr.bf16.gmra.mrb[0].mxu0 %v898
      %v1519 = vpop.f32.mrb[0].mxu0
      %v1520 = vadd.f32 0.0, %v1519
      %v1521 = vpop.f32.mrb[0].mxu0
      %v1522 = vpop.f32.mrb[0].mxu0
      %v1523 = vadd.f32 0.0, %v1522
      %v1524 = vpop.f32.mrb[0].mxu0
      %1525 = vmatprep.mubr.bf16.mxu0 0
      %1526 = vmatmul.mubr.bf16.gmra.mrb[0].mxu0 %v899
      %v1527 = vpop.f32.mrb[0].mxu0
      %v1528 = vadd.f32 0.0, %v1527
      %v1529 = vpop.f32.mrb[0].mxu0
      %v1530 = vpop.f32.mrb[0].mxu0
      %v1531 = vadd.f32 0.0, %v1530
      %v1532 = vpop.f32.mrb[0].mxu0
      %1533 = vmatprep.mubr.bf16.mxu0 0
      %1534 = vmatmul.mubr.bf16.gmra.mrb[0].mxu0 %v900
      %v1535 = vpop.f32.mrb[0].mxu0
      %v1536 = vadd.f32 0.0, %v1535
      %v1537 = vpop.f32.mrb[0].mxu0
      %v1538 = vpop.f32.mrb[0].mxu0
      %v1539 = vadd.f32 0.0, %v1538
      %v1540 = vpop.f32.mrb[0].mxu0
      %1541 = vmatprep.mubr.bf16.mxu0 0
      %1542 = vmatmul.mubr.bf16.gmra.mrb[0].mxu0 %v901
      %v1543 = vpop.f32.mrb[0].mxu0
      %v1544 = vadd.f32 0.0, %v1543
      %v1545 = vpop.f32.mrb[0].mxu0
      %v1546 = vpop.f32.mrb[0].mxu0
      %v1547 = vadd.f32 0.0, %v1546
      %v1548 = vpop.f32.mrb[0].mxu0
      %1549 = vmatprep.mubr.bf16.mxu0 0
      %1550 = vmatmul.mubr.bf16.gmra.mrb[0].mxu0 %v902
      %v1551 = vpop.f32.mrb[0].mxu0
      %v1552 = vadd.f32 0.0, %v1551
      %v1553 = vpop.f32.mrb[0].mxu0
      %v1554 = vpop.f32.mrb[0].mxu0
      %v1555 = vadd.f32 0.0, %v1554
      %v1556 = vpop.f32.mrb[0].mxu0
      %1557 = vmatprep.mubr.bf16.mxu0 0
      %1558 = vmatmul.mubr.bf16.gmra.mrb[0].mxu0 %v903
      %v1559 = vpop.f32.mrb[0].mxu0
      %v1560 = vadd.f32 0.0, %v1559
      %v1561 = vpop.f32.mrb[0].mxu0
      %v1562 = vpop.f32.mrb[0].mxu0
      %v1563 = vadd.f32 0.0, %v1562
      %v1564 = vpop.f32.mrb[0].mxu0
      %1565 = vmatprep.mubr.bf16.mxu0 0
      %1566 = vmatmul.mubr.bf16.gmra.mrb[0].mxu0 %v904
      %v1567 = vpop.f32.mrb[0].mxu0
      %v1568 = vadd.f32 0.0, %v1567
      %v1569 = vpop.f32.mrb[0].mxu0
      %v1570 = vpop.f32.mrb[0].mxu0
      %v1571 = vadd.f32 0.0, %v1570
      %v1572 = vpop.f32.mrb[0].mxu0
      %1573 = vmatprep.mubr.bf16.mxu0 0
      %1574 = vmatmul.mubr.bf16.gmra.mrb[0].mxu0 %v905
      %v1575 = vpop.f32.mrb[0].mxu0
      %v1576 = vadd.f32 0.0, %v1575
      %v1577 = vpop.f32.mrb[0].mxu0
      %v1578 = vpop.f32.mrb[0].mxu0
      %v1579 = vadd.f32 0.0, %v1578
      %v1580 = vpop.f32.mrb[0].mxu0
      %1581 = vmatprep.mubr.bf16.mxu0 0
      %1582 = vmatmul.mubr.bf16.gmra.mrb[0].mxu0 %v906
      %v1583 = vpop.f32.mrb[0].mxu0
      %v1584 = vadd.f32 0.0, %v1583
      %v1585 = vpop.f32.mrb[0].mxu0
      %v1586 = vpop.f32.mrb[0].mxu0
      %v1587 = vadd.f32 0.0, %v1586
      %v1588 = vpop.f32.mrb[0].mxu0
      %1589 = vmatprep.mubr.bf16.mxu0 0
      %1590 = vmatmul.mubr.bf16.gmra.mrb[0].mxu0 %v907
      %v1591 = vpop.f32.mrb[0].mxu0
      %v1592 = vadd.f32 0.0, %v1591
      %v1593 = vpop.f32.mrb[0].mxu0
      %v1594 = vpop.f32.mrb[0].mxu0
      %v1595 = vadd.f32 0.0, %v1594
      %v1596 = vpop.f32.mrb[0].mxu0
      %1597 = vmatprep.mubr.bf16.mxu0 0
      %1598 = vmatmul.mubr.bf16.gmra.mrb[0].mxu0 %v908
      %v1599 = vpop.f32.mrb[0].mxu0
      %v1600 = vadd.f32 0.0, %v1599
      %v1601 = vpop.f32.mrb[0].mxu0
      %v1602 = vpop.f32.mrb[0].mxu0
      %v1603 = vadd.f32 0.0, %v1602
      %v1604 = vpop.f32.mrb[0].mxu0
      %1605 = vmatprep.mubr.bf16.mxu0 0
      %1606 = vmatmul.mubr.bf16.gmra.mrb[0].mxu0 %v909
      %v1607 = vpop.f32.mrb[0].mxu0
      %v1608 = vadd.f32 0.0, %v1607
      %v1609 = vpop.f32.mrb[0].mxu0
      %v1610 = vpop.f32.mrb[0].mxu0
      %v1611 = vadd.f32 0.0, %v1610
      %v1612 = vpop.f32.mrb[0].mxu0
      %1613 = vmatprep.mubr.bf16.mxu0 0
      %1614 = vmatmul.mubr.bf16.gmra.mrb[0].mxu0 %v910
      %v1615 = vpop.f32.mrb[0].mxu0
      %v1616 = vadd.f32 0.0, %v1615
      %v1617 = vpop.f32.mrb[0].mxu0
      %v1618 = vpop.f32.mrb[0].mxu0
      %v1619 = vadd.f32 0.0, %v1618
      %v1620 = vpop.f32.mrb[0].mxu0
      %1621 = vmatprep.mubr.bf16.mxu0 0
      %1622 = vmatmul.mubr.bf16.gmra.mrb[0].mxu0 %v911
      %v1623 = vpop.f32.mrb[0].mxu0
      %v1624 = vadd.f32 0.0, %v1623
      %v1625 = vpop.f32.mrb[0].mxu0
      %v1626 = vpop.f32.mrb[0].mxu0
      %v1627 = vadd.f32 0.0, %v1626
      %v1628 = vpop.f32.mrb[0].mxu0
      %1629 = vmatprep.mubr.bf16.mxu0 0
      %1630 = vmatmul.mubr.bf16.gmra.mrb[0].mxu0 %v912
      %v1631 = vpop.f32.mrb[0].mxu0
      %v1632 = vadd.f32 0.0, %v1631
      %v1633 = vpop.f32.mrb[0].mxu0
      %v1634 = vpop.f32.mrb[0].mxu0
      %v1635 = vadd.f32 0.0, %v1634
      %v1636 = vpop.f32.mrb[0].mxu0
      %1637 = vmatprep.mubr.bf16.mxu0 0
      %1638 = vmatmul.mubr.bf16.gmra.mrb[0].mxu0 %v913
      %v1639 = vpop.f32.mrb[0].mxu0
      %v1640 = vadd.f32 0.0, %v1639
      %v1641 = vpop.f32.mrb[0].mxu0
      %v1642 = vpop.f32.mrb[0].mxu0
      %v1643 = vadd.f32 0.0, %v1642
      %v1644 = vpop.f32.mrb[0].mxu0
      %1645 = vmatprep.mubr.bf16.mxu0 0
      %1646 = vmatmul.mubr.bf16.gmra.mrb[0].mxu0 %v914
      %v1647 = vpop.f32.mrb[0].mxu0
      %v1648 = vadd.f32 0.0, %v1647
      %v1649 = vpop.f32.mrb[0].mxu0
      %v1650 = vpop.f32.mrb[0].mxu0
      %v1651 = vadd.f32 0.0, %v1650
      %v1652 = vpop.f32.mrb[0].mxu0
      %1653 = vmatprep.mubr.bf16.mxu0 0
      %1654 = vmatmul.mubr.bf16.gmra.mrb[0].mxu0 %v915
      %v1655 = vpop.f32.mrb[0].mxu0
      %v1656 = vadd.f32 0.0, %v1655
      %v1657 = vpop.f32.mrb[0].mxu0
      %v1658 = vpop.f32.mrb[0].mxu0
      %v1659 = vadd.f32 0.0, %v1658
      %v1660 = vpop.f32.mrb[0].mxu0
      %1661 = vmatprep.mubr.bf16.mxu0 0
      %1662 = vmatmul.mubr.bf16.gmra.mrb[0].mxu0 %v916
      %v1663 = vpop.f32.mrb[0].mxu0
      %v1664 = vadd.f32 0.0, %v1663
      %v1665 = vpop.f32.mrb[0].mxu0
      %v1666 = vpop.f32.mrb[0].mxu0
      %v1667 = vadd.f32 0.0, %v1666
      %v1668 = vpop.f32.mrb[0].mxu0
      %1669 = vmatprep.mubr.bf16.mxu0 0
      %1670 = vmatmul.mubr.bf16.gmra.mrb[0].mxu0 %v917
      %v1671 = vpop.f32.mrb[0].mxu0
      %v1672 = vadd.f32 0.0, %v1671
      %v1673 = vpop.f32.mrb[0].mxu0
      %v1674 = vpop.f32.mrb[0].mxu0
      %v1675 = vadd.f32 0.0, %v1674
      %v1676 = vpop.f32.mrb[0].mxu0
      %1677 = vmatprep.mubr.bf16.mxu0 0
      %1678 = vmatmul.mubr.bf16.gmra.mrb[0].mxu0 %v918
      %v1679 = vpop.f32.mrb[0].mxu0
      %v1680 = vadd.f32 0.0, %v1679
      %v1681 = vpop.f32.mrb[0].mxu0
      %v1682 = vpop.f32.mrb[0].mxu0
      %v1683 = vadd.f32 0.0, %v1682
      %v1684 = vpop.f32.mrb[0].mxu0
      %1685 = vmatprep.mubr.bf16.mxu0 0
      %1686 = vmatmul.mubr.bf16.gmra.mrb[0].mxu0 %v919
      %v1687 = vpop.f32.mrb[0].mxu0
      %v1688 = vadd.f32 0.0, %v1687
      %v1689 = vpop.f32.mrb[0].mxu0
      %v1690 = vpop.f32.mrb[0].mxu0
      %v1691 = vadd.f32 0.0, %v1690
      %v1692 = vpop.f32.mrb[0].mxu0
      %1693 = vmatprep.mubr.bf16.mxu0 0
      %1694 = vmatmul.mubr.bf16.gmra.mrb[0].mxu0 %v920
      %v1695 = vpop.f32.mrb[0].mxu0
      %v1696 = vadd.f32 0.0, %v1695
      %v1697 = vpop.f32.mrb[0].mxu0
      %v1698 = vpop.f32.mrb[0].mxu0
      %v1699 = vadd.f32 0.0, %v1698
      %v1700 = vpop.f32.mrb[0].mxu0
      %1701 = vmatprep.mubr.bf16.mxu0 0
      %1702 = vmatmul.mubr.bf16.gmra.mrb[0].mxu0 %v921
      %v1703 = vpop.f32.mrb[0].mxu0
      %v1704 = vadd.f32 0.0, %v1703
      %v1705 = vpop.f32.mrb[0].mxu0
      %v1706 = vpop.f32.mrb[0].mxu0
      %v1707 = vadd.f32 0.0, %v1706
      %v1708 = vpop.f32.mrb[0].mxu0
      %1709 = vmatprep.mubr.bf16.mxu0 0
      %1710 = vmatmul.mubr.bf16.gmra.mrb[0].mxu0 %v922
      %v1711 = vpop.f32.mrb[0].mxu0
      %v1712 = vadd.f32 0.0, %v1711
      %v1713 = vpop.f32.mrb[0].mxu0
      %v1714 = vpop.f32.mrb[0].mxu0
      %v1715 = vadd.f32 0.0, %v1714
      %v1716 = vpop.f32.mrb[0].mxu0
      %1717 = vmatprep.mubr.bf16.mxu0 0
      %1718 = vmatmul.mubr.bf16.gmra.mrb[0].mxu0 %v923
      %v1719 = vpop.f32.mrb[0].mxu0
      %v1720 = vadd.f32 0.0, %v1719
      %v1721 = vpop.f32.mrb[0].mxu0
      %v1722 = vpop.f32.mrb[0].mxu0
      %v1723 = vadd.f32 0.0, %v1722
      %v1724 = vpop.f32.mrb[0].mxu0
      %1725 = vmatprep.mubr.bf16.mxu0 0
      %1726 = vmatmul.mubr.bf16.gmra.mrb[0].mxu0 %v924
      %v1727 = vpop.f32.mrb[0].mxu0
      %v1728 = vadd.f32 0.0, %v1727
      %v1729 = vpop.f32.mrb[0].mxu0
      %v1730 = vpop.f32.mrb[0].mxu0
      %v1731 = vadd.f32 0.0, %v1730
      %v1732 = vpop.f32.mrb[0].mxu0
      %1733 = vmatprep.mubr.bf16.mxu0 0
      %1734 = vmatmul.mubr.bf16.gmra.mrb[0].mxu0 %v925
      %v1735 = vpop.f32.mrb[0].mxu0
      %v1736 = vadd.f32 0.0, %v1735
      %v1737 = vpop.f32.mrb[0].mxu0
      %v1738 = vpop.f32.mrb[0].mxu0
      %v1739 = vadd.f32 0.0, %v1738
      %v1740 = vpop.f32.mrb[0].mxu0
      %1741 = vmatprep.mubr.bf16.mxu0 0
      %1742 = vmatmul.mubr.bf16.gmra.mrb[0].mxu0 %v926
      %v1743 = vpop.f32.mrb[0].mxu0
      %v1744 = vadd.f32 0.0, %v1743
      %v1745 = vpop.f32.mrb[0].mxu0
      %v1746 = vpop.f32.mrb[0].mxu0
      %v1747 = vadd.f32 0.0, %v1746
      %v1748 = vpop.f32.mrb[0].mxu0
      %1749 = vmatprep.mubr.bf16.mxu0 0
      %1750 = vmatmul.mubr.bf16.gmra.mrb[0].mxu0 %v927
      %v1751 = vpop.f32.mrb[0].mxu0
      %v1752 = vadd.f32 0.0, %v1751
      %v1753 = vpop.f32.mrb[0].mxu0
      %v1754 = vpop.f32.mrb[0].mxu0
      %v1755 = vadd.f32 0.0, %v1754
      %v1756 = vpop.f32.mrb[0].mxu0
      %1757 = vmatprep.mubr.bf16.mxu0 0
      %1758 = vmatmul.mubr.bf16.gmra.mrb[0].mxu0 %v928
      %v1759 = vpop.f32.mrb[0].mxu0
      %v1760 = vadd.f32 0.0, %v1759
      %v1761 = vpop.f32.mrb[0].mxu0
      %v1762 = vpop.f32.mrb[0].mxu0
      %v1763 = vadd.f32 0.0, %v1762
      %v1764 = vpop.f32.mrb[0].mxu0
      %1765 = vmatprep.mubr.bf16.mxu0 0
      %1766 = vmatmul.mubr.bf16.gmra.mrb[0].mxu0 %v929
      %v1767 = vpop.f32.mrb[0].mxu0
      %v1768 = vadd.f32 0.0, %v1767
      %v1769 = vpop.f32.mrb[0].mxu0
      %v1770 = vpop.f32.mrb[0].mxu0
      %v1771 = vadd.f32 0.0, %v1770
      %v1772 = vpop.f32.mrb[0].mxu0
      %1773 = vmatprep.mubr.bf16.mxu0 0
      %1774 = vmatmul.mubr.bf16.gmra.mrb[0].mxu0 %v930
      %v1775 = vpop.f32.mrb[0].mxu0
      %v1776 = vadd.f32 0.0, %v1775
      %v1777 = vpop.f32.mrb[0].mxu0
      %v1778 = vpop.f32.mrb[0].mxu0
      %v1779 = vadd.f32 0.0, %v1778
      %v1780 = vpop.f32.mrb[0].mxu0
      %1781 = vmatprep.mubr.bf16.mxu0 0
      %1782 = vmatmul.mubr.bf16.gmra.mrb[0].mxu0 %v931
      %v1783 = vpop.f32.mrb[0].mxu0
      %v1784 = vadd.f32 0.0, %v1783
      %v1785 = vpop.f32.mrb[0].mxu0
      %v1786 = vpop.f32.mrb[0].mxu0
      %v1787 = vadd.f32 0.0, %v1786
      %v1788 = vpop.f32.mrb[0].mxu0
      %1789 = vmatprep.mubr.bf16.mxu0 0
      %1790 = vmatmul.mubr.bf16.gmra.mrb[0].mxu0 %v932
      %v1791 = vpop.f32.mrb[0].mxu0
      %v1792 = vadd.f32 0.0, %v1791
      %v1793 = vpop.f32.mrb[0].mxu0
      %v1794 = vpop.f32.mrb[0].mxu0
      %v1795 = vadd.f32 0.0, %v1794
      %v1796 = vpop.f32.mrb[0].mxu0
      %1797 = vmatprep.mubr.bf16.mxu0 0
      %1798 = vmatmul.mubr.bf16.gmra.mrb[0].mxu0 %v933
      %v1799 = vpop.f32.mrb[0].mxu0
      %v1800 = vadd.f32 0.0, %v1799
      %v1801 = vpop.f32.mrb[0].mxu0
      %v1802 = vpop.f32.mrb[0].mxu0
      %v1803 = vadd.f32 0.0, %v1802
      %v1804 = vpop.f32.mrb[0].mxu0
      %1805 = vmatprep.mubr.bf16.mxu0 0
      %1806 = vmatmul.mubr.bf16.gmra.mrb[0].mxu0 %v934
      %v1807 = vpop.f32.mrb[0].mxu0
      %v1808 = vadd.f32 0.0, %v1807
      %v1809 = vpop.f32.mrb[0].mxu0
      %v1810 = vpop.f32.mrb[0].mxu0
      %v1811 = vadd.f32 0.0, %v1810
      %v1812 = vpop.f32.mrb[0].mxu0
      %1813 = vmatprep.mubr.bf16.mxu0 0
      %1814 = vmatmul.mubr.bf16.gmra.mrb[0].mxu0 %v935
      %v1815 = vpop.f32.mrb[0].mxu0
      %v1816 = vadd.f32 0.0, %v1815
      %v1817 = vpop.f32.mrb[0].mxu0
      %v1818 = vpop.f32.mrb[0].mxu0
      %v1819 = vadd.f32 0.0, %v1818
      %v1820 = vpop.f32.mrb[0].mxu0
      %1821 = vmatprep.mubr.bf16.mxu0 0
      %1822 = vmatmul.mubr.bf16.gmra.mrb[0].mxu0 %v936
      %v1823 = vpop.f32.mrb[0].mxu0
      %v1824 = vadd.f32 0.0, %v1823
      %v1825 = vpop.f32.mrb[0].mxu0
      %v1826 = vpop.f32.mrb[0].mxu0
      %v1827 = vadd.f32 0.0, %v1826
      %v1828 = vpop.f32.mrb[0].mxu0
      %1829 = vmatprep.mubr.bf16.mxu0 0
      %1830 = vmatmul.mubr.bf16.gmra.mrb[0].mxu0 %v937
      %v1831 = vpop.f32.mrb[0].mxu0
      %v1832 = vadd.f32 0.0, %v1831
      %v1833 = vpop.f32.mrb[0].mxu0
      %v1834 = vpop.f32.mrb[0].mxu0
      %v1835 = vadd.f32 0.0, %v1834
      %v1836 = vpop.f32.mrb[0].mxu0
      %1837 = vmatprep.mubr.bf16.mxu0 0
      %1838 = vmatmul.mubr.bf16.gmra.mrb[0].mxu0 %v938
      %v1839 = vpop.f32.mrb[0].mxu0
      %v1840 = vadd.f32 0.0, %v1839
      %v1841 = vpop.f32.mrb[0].mxu0
      %v1842 = vpop.f32.mrb[0].mxu0
      %v1843 = vadd.f32 0.0, %v1842
      %v1844 = vpop.f32.mrb[0].mxu0
      %1845 = vmatprep.mubr.bf16.mxu0 0
      %1846 = vmatmul.mubr.bf16.gmra.mrb[0].mxu0 %v939
      %v1847 = vpop.f32.mrb[0].mxu0
      %v1848 = vadd.f32 0.0, %v1847
      %v1849 = vpop.f32.mrb[0].mxu0
      %v1850 = vpop.f32.mrb[0].mxu0
      %v1851 = vadd.f32 0.0, %v1850
      %v1852 = vpop.f32.mrb[0].mxu0
      %1853 = vmatprep.mubr.bf16.mxu0 0
      %1854 = vmatmul.mubr.bf16.gmra.mrb[0].mxu0 %v940
      %v1855 = vpop.f32.mrb[0].mxu0
      %v1856 = vadd.f32 0.0, %v1855
      %v1857 = vpop.f32.mrb[0].mxu0
      %v1858 = vpop.f32.mrb[0].mxu0
      %v1859 = vadd.f32 0.0, %v1858
      %v1860 = vpop.f32.mrb[0].mxu0
      %1861 = vmatprep.mubr.bf16.mxu0 0
      %1862 = vmatmul.mubr.bf16.gmra.mrb[0].mxu0 %v941
      %v1863 = vpop.f32.mrb[0].mxu0
      %v1864 = vadd.f32 0.0, %v1863
      %v1865 = vpop.f32.mrb[0].mxu0
      %v1866 = vpop.f32.mrb[0].mxu0
      %v1867 = vadd.f32 0.0, %v1866
      %v1868 = vpop.f32.mrb[0].mxu0
      %1869 = vmatprep.mubr.bf16.mxu0 0
      %1870 = vmatmul.mubr.bf16.gmra.mrb[0].mxu0 %v942
      %v1871 = vpop.f32.mrb[0].mxu0
      %v1872 = vadd.f32 0.0, %v1871
      %v1873 = vpop.f32.mrb[0].mxu0
      %v1874 = vpop.f32.mrb[0].mxu0
      %v1875 = vadd.f32 0.0, %v1874
      %v1876 = vpop.f32.mrb[0].mxu0
      %1877 = vmatprep.mubr.bf16.mxu0 0
      %1878 = vmatmul.mubr.bf16.gmra.mrb[0].mxu0 %v943
      %v1879 = vpop.f32.mrb[0].mxu0
      %v1880 = vadd.f32 0.0, %v1879
      %v1881 = vpop.f32.mrb[0].mxu0
      %v1882 = vpop.f32.mrb[0].mxu0
      %v1883 = vadd.f32 0.0, %v1882
      %v1884 = vpop.f32.mrb[0].mxu0
      %1885 = vmatprep.mubr.bf16.mxu0 0
      %1886 = vmatmul.mubr.bf16.gmra.mrb[0].mxu0 %v944
      %v1887 = vpop.f32.mrb[0].mxu0
      %v1888 = vadd.f32 0.0, %v1887
      %v1889 = vpop.f32.mrb[0].mxu0
      %v1890 = vpop.f32.mrb[0].mxu0
      %v1891 = vadd.f32 0.0, %v1890
      %v1892 = vpop.f32.mrb[0].mxu0
      %1893 = vmatprep.mubr.bf16.mxu0 0
      %1894 = vmatmul.mubr.bf16.gmra.mrb[0].mxu0 %v945
      %v1895 = vpop.f32.mrb[0].mxu0
      %v1896 = vadd.f32 0.0, %v1895
      %v1897 = vpop.f32.mrb[0].mxu0
      %v1898 = vpop.f32.mrb[0].mxu0
      %v1899 = vadd.f32 0.0, %v1898
      %v1900 = vpop.f32.mrb[0].mxu0
      %1901 = vmatprep.mubr.bf16.mxu0 0
      %1902 = vmatmul.mubr.bf16.gmra.mrb[0].mxu0 %v946
      %v1903 = vpop.f32.mrb[0].mxu0
      %v1904 = vadd.f32 0.0, %v1903
      %v1905 = vpop.f32.mrb[0].mxu0
      %v1906 = vpop.f32.mrb[0].mxu0
      %v1907 = vadd.f32 0.0, %v1906
      %v1908 = vpop.f32.mrb[0].mxu0
      %1909 = vmatprep.mubr.bf16.mxu0 0
      %1910 = vmatmul.mubr.bf16.gmra.mrb[0].mxu0 %v947
      %v1911 = vpop.f32.mrb[0].mxu0
      %v1912 = vadd.f32 0.0, %v1911
      %v1913 = vpop.f32.mrb[0].mxu0
      %v1914 = vpop.f32.mrb[0].mxu0
      %v1915 = vadd.f32 0.0, %v1914
      %v1916 = vpop.f32.mrb[0].mxu0
      %1917 = vmatprep.mubr.bf16.mxu0 0
      %1918 = vmatmul.mubr.bf16.gmra.mrb[0].mxu0 %v948
      %v1919 = vpop.f32.mrb[0].mxu0
      %v1920 = vadd.f32 0.0, %v1919
      %v1921 = vpop.f32.mrb[0].mxu0
      %v1922 = vpop.f32.mrb[0].mxu0
      %v1923 = vadd.f32 0.0, %v1922
      %v1924 = vpop.f32.mrb[0].mxu0
      %1925 = vmatprep.mubr.bf16.mxu0 0
      %1926 = vmatmul.mubr.bf16.gmra.mrb[0].mxu0 %v949
      %v1927 = vpop.f32.mrb[0].mxu0
      %v1928 = vadd.f32 0.0, %v1927
      %v1929 = vpop.f32.mrb[0].mxu0
      %v1930 = vpop.f32.mrb[0].mxu0
      %v1931 = vadd.f32 0.0, %v1930
      %v1932 = vpop.f32.mrb[0].mxu0
      %1933 = vmatprep.mubr.bf16.mxu0 0
      %1934 = vmatmul.mubr.bf16.gmra.mrb[0].mxu0 %v950
      %v1935 = vpop.f32.mrb[0].mxu0
      %v1936 = vadd.f32 0.0, %v1935
      %v1937 = vpop.f32.mrb[0].mxu0
      %v1938 = vpop.f32.mrb[0].mxu0
      %v1939 = vadd.f32 0.0, %v1938
      %v1940 = vpop.f32.mrb[0].mxu0
      %1941 = vmatprep.mubr.bf16.mxu0 0
      %1942 = vmatmul.mubr.bf16.gmra.mrb[0].mxu0 %v951
      %v1943 = vpop.f32.mrb[0].mxu0
      %v1944 = vadd.f32 0.0, %v1943
      %v1945 = vpop.f32.mrb[0].mxu0
      %v1946 = vpop.f32.mrb[0].mxu0
      %v1947 = vadd.f32 0.0, %v1946
      %v1948 = vpop.f32.mrb[0].mxu0
      %1949 = vmatprep.mubr.bf16.mxu0 0
      %1950 = vmatmul.mubr.bf16.gmra.mrb[0].mxu0 %v952
      %v1951 = vpop.f32.mrb[0].mxu0
      %v1952 = vadd.f32 0.0, %v1951
      %v1953 = vpop.f32.mrb[0].mxu0
      %v1954 = vpop.f32.mrb[0].mxu0
      %v1955 = vadd.f32 0.0, %v1954
      %v1956 = vpop.f32.mrb[0].mxu0
      %1957 = vmatprep.mubr.bf16.mxu0 0
      %1958 = vmatmul.mubr.bf16.gmra.mrb[0].mxu0 %v953
      %v1959 = vpop.f32.mrb[0].mxu0
      %v1960 = vadd.f32 0.0, %v1959
      %v1961 = vpop.f32.mrb[0].mxu0
      %v1962 = vpop.f32.mrb[0].mxu0
      %v1963 = vadd.f32 0.0, %v1962
      %v1964 = vpop.f32.mrb[0].mxu0
      %1965 = vmatprep.mubr.bf16.mxu0 0
      %1966 = vmatmul.mubr.bf16.gmra.mrb[0].mxu0 %v954
      %v1967 = vpop.f32.mrb[0].mxu0
      %v1968 = vadd.f32 0.0, %v1967
      %v1969 = vpop.f32.mrb[0].mxu0
      %v1970 = vpop.f32.mrb[0].mxu0
      %v1971 = vadd.f32 0.0, %v1970
      %v1972 = vpop.f32.mrb[0].mxu0
      %1973 = vmatprep.mubr.bf16.mxu0 0
      %1974 = vmatmul.mubr.bf16.gmra.mrb[0].mxu0 %v955
      %v1975 = vpop.f32.mrb[0].mxu0
      %v1976 = vadd.f32 0.0, %v1975
      %v1977 = vpop.f32.mrb[0].mxu0
      %v1978 = vpop.f32.mrb[0].mxu0
      %v1979 = vadd.f32 0.0, %v1978
      %v1980 = vpop.f32.mrb[0].mxu0
      %1981 = vmatprep.mubr.bf16.mxu0 0
      %1982 = vmatmul.mubr.bf16.gmra.mrb[0].mxu0 %v956
      %v1983 = vpop.f32.mrb[0].mxu0
      %v1984 = vadd.f32 0.0, %v1983
      %v1985 = vpop.f32.mrb[0].mxu0
      %v1986 = vpop.f32.mrb[0].mxu0
      %v1987 = vadd.f32 0.0, %v1986
      %v1988 = vpop.f32.mrb[0].mxu0
      %1989 = vmatprep.mubr.bf16.mxu0 0
      %1990 = vmatmul.mubr.bf16.gmra.mrb[0].mxu0 %v957
      %v1991 = vpop.f32.mrb[0].mxu0
      %v1992 = vadd.f32 0.0, %v1991
      %v1993 = vpop.f32.mrb[0].mxu0
      %v1994 = vpop.f32.mrb[0].mxu0
      %v1995 = vadd.f32 0.0, %v1994
      %v1996 = vpop.f32.mrb[0].mxu0
      %1997 = vmatprep.mubr.bf16.mxu0 0
      %1998 = vmatmul.mubr.bf16.gmra.mrb[0].mxu0 %v958
      %v1999 = vpop.f32.mrb[0].mxu0
      %v2000 = vadd.f32 0.0, %v1999
      %v2001 = vpop.f32.mrb[0].mxu0
      %v2002 = vpop.f32.mrb[0].mxu0
      %v2003 = vadd.f32 0.0, %v2002
      %v2004 = vpop.f32.mrb[0].mxu0
      %2005 = vmatprep.mubr.bf16.mxu0 0
      %2006 = vmatmul.mubr.bf16.gmra.mrb[0].mxu0 %v959
      %v2007 = vpop.f32.mrb[0].mxu0
      %v2008 = vadd.f32 0.0, %v2007
      %v2009 = vpop.f32.mrb[0].mxu0
      %v2010 = vpop.f32.mrb[0].mxu0
      %v2011 = vadd.f32 0.0, %v2010
      %v2012 = vpop.f32.mrb[0].mxu0
      %2013 = vmatprep.mubr.bf16.mxu0 0
      %2014 = vmatmul.mubr.bf16.gmra.mrb[0].mxu0 %v960
      %v2015 = vpop.f32.mrb[0].mxu0
      %v2016 = vadd.f32 0.0, %v2015
      %v2017 = vpop.f32.mrb[0].mxu0
      %v2018 = vpop.f32.mrb[0].mxu0
      %v2019 = vadd.f32 0.0, %v2018
      %v2020 = vpop.f32.mrb[0].mxu0
      %2021 = vmatprep.mubr.bf16.mxu0 0
      %2022 = vmatmul.mubr.bf16.gmra.mrb[0].mxu0 %v961
      %v2023 = vpop.f32.mrb[0].mxu0
      %v2024 = vadd.f32 0.0, %v2023
      %v2025 = vpop.f32.mrb[0].mxu0
      %v2026 = vpop.f32.mrb[0].mxu0
      %v2027 = vadd.f32 0.0, %v2026
      %v2028 = vpop.f32.mrb[0].mxu0
      %2029 = vmatprep.mubr.bf16.mxu0 0
      %2030 = vmatmul.mubr.bf16.gmra.mrb[0].mxu0 %v962
      %v2031 = vpop.f32.mrb[0].mxu0
      %v2032 = vadd.f32 0.0, %v2031
      %v2033 = vpop.f32.mrb[0].mxu0
      %v2034 = vpop.f32.mrb[0].mxu0
      %v2035 = vadd.f32 0.0, %v2034
      %v2036 = vpop.f32.mrb[0].mxu0
      %2037 = vmatprep.mubr.bf16.mxu0 0
      %2038 = vmatmul.mubr.bf16.gmra.mrb[0].mxu0 %v963
      %v2039 = vpop.f32.mrb[0].mxu0
      %v2040 = vadd.f32 0.0, %v2039
      %v2041 = vpop.f32.mrb[0].mxu0
      %v2042 = vpop.f32.mrb[0].mxu0
      %v2043 = vadd.f32 0.0, %v2042
      %v2044 = vpop.f32.mrb[0].mxu0
      %2045 = vmatprep.mubr.bf16.mxu0 0
      %2046 = vmatmul.mubr.bf16.gmra.mrb[0].mxu0 %v964
      %v2047 = vpop.f32.mrb[0].mxu0
      %v2048 = vadd.f32 0.0, %v2047
      %v2049 = vpop.f32.mrb[0].mxu0
      %v2050 = vpop.f32.mrb[0].mxu0
      %v2051 = vadd.f32 0.0, %v2050
      %v2052 = vpop.f32.mrb[0].mxu0
      %2053 = vdwg.mxu0
      %2054 = vst [vmem:[%s163] sm:$0xff] %v1160
      %2055 = vst [vmem:[%s163 + $0x8] sm:$0xff] %v1163
      %2056 = vst [vmem:[%s163 + $0x10] sm:$0xff] %v1168
      %2057 = vst [vmem:[%s163 + $0x18] sm:$0xff] %v1171
      %2058 = vst [vmem:[%s163 + $0x20] sm:$0xff] %v1176
      %2059 = vst [vmem:[%s163 + $0x28] sm:$0xff] %v1179
      %2060 = vst [vmem:[%s163 + $0x30] sm:$0xff] %v1184
      %2061 = vst [vmem:[%s163 + $0x38] sm:$0xff] %v1187
      %2062 = vst [vmem:[%s163 + $0x40] sm:$0xff] %v1192
      %2063 = vst [vmem:[%s163 + $0x48] sm:$0xff] %v1195
      %2064 = vst [vmem:[%s163 + $0x50] sm:$0xff] %v1200
      %2065 = vst [vmem:[%s163 + $0x58] sm:$0xff] %v1203
      %2066 = vst [vmem:[%s163 + $0x60] sm:$0xff] %v1208
      %2067 = vst [vmem:[%s163 + $0x68] sm:$0xff] %v1211
      %2068 = vst [vmem:[%s163 + $0x70] sm:$0xff] %v1216
      %2069 = vst [vmem:[%s163 + $0x78] sm:$0xff] %v1219
      %2070 = vst [vmem:[%s163 + $0x80] sm:$0xff] %v1224
      %2071 = vst [vmem:[%s163 + $0x88] sm:$0xff] %v1227
      %2072 = vst [vmem:[%s163 + $0x90] sm:$0xff] %v1232
      %2073 = vst [vmem:[%s163 + $0x98] sm:$0xff] %v1235
      %2074 = vst [vmem:[%s163 + $0xa0] sm:$0xff] %v1240
      %2075 = vst [vmem:[%s163 + $0xa8] sm:$0xff] %v1243
      %2076 = vst [vmem:[%s163 + $0xb0] sm:$0xff] %v1248
      %2077 = vst [vmem:[%s163 + $0xb8] sm:$0xff] %v1251
      %2078 = vst [vmem:[%s163 + $0xc0] sm:$0xff] %v1256
      %2079 = vst [vmem:[%s163 + $0xc8] sm:$0xff] %v1259
      %2080 = vst [vmem:[%s163 + $0xd0] sm:$0xff] %v1264
      %2081 = vst [vmem:[%s163 + $0xd8] sm:$0xff] %v1267
      %2082 = vst [vmem:[%s163 + $0xe0] sm:$0xff] %v1272
      %2083 = vst [vmem:[%s163 + $0xe8] sm:$0xff] %v1275
      %2084 = vst [vmem:[%s163 + $0xf0] sm:$0xff] %v1280
      %2085 = vst [vmem:[%s163 + $0xf8] sm:$0xff] %v1283
      %2086 = vst [vmem:[%s163 + $0x100] sm:$0xff] %v1288
      %2087 = vst [vmem:[%s163 + $0x108] sm:$0xff] %v1291
      %2088 = vst [vmem:[%s163 + $0x110] sm:$0xff] %v1296
      %2089 = vst [vmem:[%s163 + $0x118] sm:$0xff] %v1299
      %2090 = vst [vmem:[%s163 + $0x120] sm:$0xff] %v1304
      %2091 = vst [vmem:[%s163 + $0x128] sm:$0xff] %v1307
      %2092 = vst [vmem:[%s163 + $0x130] sm:$0xff] %v1312
      %2093 = vst [vmem:[%s163 + $0x138] sm:$0xff] %v1315
      %2094 = vst [vmem:[%s163 + $0x140] sm:$0xff] %v1320
      %2095 = vst [vmem:[%s163 + $0x148] sm:$0xff] %v1323
      %2096 = vst [vmem:[%s163 + $0x150] sm:$0xff] %v1328
      %2097 = vst [vmem:[%s163 + $0x158] sm:$0xff] %v1331
      %2098 = vst [vmem:[%s163 + $0x160] sm:$0xff] %v1336
      %2099 = vst [vmem:[%s163 + $0x168] sm:$0xff] %v1339
      %2100 = vst [vmem:[%s163 + $0x170] sm:$0xff] %v1344
      %2101 = vst [vmem:[%s163 + $0x178] sm:$0xff] %v1347
      %2102 = vst [vmem:[%s163 + $0x180] sm:$0xff] %v1352
      %2103 = vst [vmem:[%s163 + $0x188] sm:$0xff] %v1355
      %2104 = vst [vmem:[%s163 + $0x190] sm:$0xff] %v1360
      %2105 = vst [vmem:[%s163 + $0x198] sm:$0xff] %v1363
      %2106 = vst [vmem:[%s163 + $0x1a0] sm:$0xff] %v1368
      %2107 = vst [vmem:[%s163 + $0x1a8] sm:$0xff] %v1371
      %2108 = vst [vmem:[%s163 + $0x1b0] sm:$0xff] %v1376
      %2109 = vst [vmem:[%s163 + $0x1b8] sm:$0xff] %v1379
      %2110 = vst [vmem:[%s163 + $0x1c0] sm:$0xff] %v1384
      %2111 = vst [vmem:[%s163 + $0x1c8] sm:$0xff] %v1387
      %2112 = vst [vmem:[%s163 + $0x1d0] sm:$0xff] %v1392
      %2113 = vst [vmem:[%s163 + $0x1d8] sm:$0xff] %v1395
      %2114 = vst [vmem:[%s163 + $0x1e0] sm:$0xff] %v1400
      %2115 = vst [vmem:[%s163 + $0x1e8] sm:$0xff] %v1403
      %2116 = vst [vmem:[%s163 + $0x1f0] sm:$0xff] %v1408
      %2117 = vst [vmem:[%s163 + $0x1f8] sm:$0xff] %v1411
      %2118 = vst [vmem:[%s163 + $0x200] sm:$0xff] %v1416
      %2119 = vst [vmem:[%s163 + $0x208] sm:$0xff] %v1419
      %2120 = vst [vmem:[%s163 + $0x210] sm:$0xff] %v1424
      %2121 = vst [vmem:[%s163 + $0x218] sm:$0xff] %v1427
      %2122 = vst [vmem:[%s163 + $0x220] sm:$0xff] %v1432
      %2123 = vst [vmem:[%s163 + $0x228] sm:$0xff] %v1435
      %2124 = vst [vmem:[%s163 + $0x230] sm:$0xff] %v1440
      %2125 = vst [vmem:[%s163 + $0x238] sm:$0xff] %v1443
      %2126 = vst [vmem:[%s163 + $0x240] sm:$0xff] %v1448
      %2127 = vst [vmem:[%s163 + $0x248] sm:$0xff] %v1451
      %2128 = vst [vmem:[%s163 + $0x250] sm:$0xff] %v1456
      %2129 = vst [vmem:[%s163 + $0x258] sm:$0xff] %v1459
      %2130 = vst [vmem:[%s163 + $0x260] sm:$0xff] %v1464
      %2131 = vst [vmem:[%s163 + $0x268] sm:$0xff] %v1467
      %2132 = vst [vmem:[%s163 + $0x270] sm:$0xff] %v1472
      %2133 = vst [vmem:[%s163 + $0x278] sm:$0xff] %v1475
      %2134 = vst [vmem:[%s163 + $0x280] sm:$0xff] %v1480
      %2135 = vst [vmem:[%s163 + $0x288] sm:$0xff] %v1483
      %2136 = vst [vmem:[%s163 + $0x290] sm:$0xff] %v1488
      %2137 = vst [vmem:[%s163 + $0x298] sm:$0xff] %v1491
      %2138 = vst [vmem:[%s163 + $0x2a0] sm:$0xff] %v1496
      %2139 = vst [vmem:[%s163 + $0x2a8] sm:$0xff] %v1499
      %2140 = vst [vmem:[%s163 + $0x2b0] sm:$0xff] %v1504
      %2141 = vst [vmem:[%s163 + $0x2b8] sm:$0xff] %v1507
      %2142 = vst [vmem:[%s163 + $0x2c0] sm:$0xff] %v1512
      %2143 = vst [vmem:[%s163 + $0x2c8] sm:$0xff] %v1515
      %2144 = vst [vmem:[%s163 + $0x2d0] sm:$0xff] %v1520
      %2145 = vst [vmem:[%s163 + $0x2d8] sm:$0xff] %v1523
      %2146 = vst [vmem:[%s163 + $0x2e0] sm:$0xff] %v1528
      %2147 = vst [vmem:[%s163 + $0x2e8] sm:$0xff] %v1531
      %2148 = vst [vmem:[%s163 + $0x2f0] sm:$0xff] %v1536
      %2149 = vst [vmem:[%s163 + $0x2f8] sm:$0xff] %v1539
      %2150 = vst [vmem:[%s163 + $0x300] sm:$0xff] %v1544
      %2151 = vst [vmem:[%s163 + $0x308] sm:$0xff] %v1547
      %2152 = vst [vmem:[%s163 + $0x310] sm:$0xff] %v1552
      %2153 = vst [vmem:[%s163 + $0x318] sm:$0xff] %v1555
      %2154 = vst [vmem:[%s163 + $0x320] sm:$0xff] %v1560
      %2155 = vst [vmem:[%s163 + $0x328] sm:$0xff] %v1563
      %2156 = vst [vmem:[%s163 + $0x330] sm:$0xff] %v1568
      %2157 = vst [vmem:[%s163 + $0x338] sm:$0xff] %v1571
      %2158 = vst [vmem:[%s163 + $0x340] sm:$0xff] %v1576
      %2159 = vst [vmem:[%s163 + $0x348] sm:$0xff] %v1579
      %2160 = vst [vmem:[%s163 + $0x350] sm:$0xff] %v1584
      %2161 = vst [vmem:[%s163 + $0x358] sm:$0xff] %v1587
      %2162 = vst [vmem:[%s163 + $0x360] sm:$0xff] %v1592
      %2163 = vst [vmem:[%s163 + $0x368] sm:$0xff] %v1595
      %2164 = vst [vmem:[%s163 + $0x370] sm:$0xff] %v1600
      %2165 = vst [vmem:[%s163 + $0x378] sm:$0xff] %v1603
      %2166 = vst [vmem:[%s163 + $0x380] sm:$0xff] %v1608
      %2167 = vst [vmem:[%s163 + $0x388] sm:$0xff] %v1611
      %2168 = vst [vmem:[%s163 + $0x390] sm:$0xff] %v1616
      %2169 = vst [vmem:[%s163 + $0x398] sm:$0xff] %v1619
      %2170 = vst [vmem:[%s163 + $0x3a0] sm:$0xff] %v1624
      %2171 = vst [vmem:[%s163 + $0x3a8] sm:$0xff] %v1627
      %2172 = vst [vmem:[%s163 + $0x3b0] sm:$0xff] %v1632
      %2173 = vst [vmem:[%s163 + $0x3b8] sm:$0xff] %v1635
      %2174 = vst [vmem:[%s163 + $0x3c0] sm:$0xff] %v1640
      %2175 = vst [vmem:[%s163 + $0x3c8] sm:$0xff] %v1643
      %2176 = vst [vmem:[%s163 + $0x3d0] sm:$0xff] %v1648
      %2177 = vst [vmem:[%s163 + $0x3d8] sm:$0xff] %v1651
      %2178 = vst [vmem:[%s163 + $0x3e0] sm:$0xff] %v1656
      %2179 = vst [vmem:[%s163 + $0x3e8] sm:$0xff] %v1659
      %2180 = vst [vmem:[%s163 + $0x3f0] sm:$0xff] %v1664
      %2181 = vst [vmem:[%s163 + $0x3f8] sm:$0xff] %v1667
      %2182 = vst [vmem:[%s163 + $0x400] sm:$0xff] %v1672
      %2183 = vst [vmem:[%s163 + $0x408] sm:$0xff] %v1675
      %2184 = vst [vmem:[%s163 + $0x410] sm:$0xff] %v1680
      %2185 = vst [vmem:[%s163 + $0x418] sm:$0xff] %v1683
      %2186 = vst [vmem:[%s163 + $0x420] sm:$0xff] %v1688
      %2187 = vst [vmem:[%s163 + $0x428] sm:$0xff] %v1691
      %2188 = vst [vmem:[%s163 + $0x430] sm:$0xff] %v1696
      %2189 = vst [vmem:[%s163 + $0x438] sm:$0xff] %v1699
      %2190 = vst [vmem:[%s163 + $0x440] sm:$0xff] %v1704
      %2191 = vst [vmem:[%s163 + $0x448] sm:$0xff] %v1707
      %2192 = vst [vmem:[%s163 + $0x450] sm:$0xff] %v1712
      %2193 = vst [vmem:[%s163 + $0x458] sm:$0xff] %v1715
      %2194 = vst [vmem:[%s163 + $0x460] sm:$0xff] %v1720
      %2195 = vst [vmem:[%s163 + $0x468] sm:$0xff] %v1723
      %2196 = vst [vmem:[%s163 + $0x470] sm:$0xff] %v1728
      %2197 = vst [vmem:[%s163 + $0x478] sm:$0xff] %v1731
      %2198 = vst [vmem:[%s163 + $0x480] sm:$0xff] %v1736
      %2199 = vst [vmem:[%s163 + $0x488] sm:$0xff] %v1739
      %2200 = vst [vmem:[%s163 + $0x490] sm:$0xff] %v1744
      %2201 = vst [vmem:[%s163 + $0x498] sm:$0xff] %v1747
      %2202 = vst [vmem:[%s163 + $0x4a0] sm:$0xff] %v1752
      %2203 = vst [vmem:[%s163 + $0x4a8] sm:$0xff] %v1755
      %2204 = vst [vmem:[%s163 + $0x4b0] sm:$0xff] %v1760
      %2205 = vst [vmem:[%s163 + $0x4b8] sm:$0xff] %v1763
      %2206 = vst [vmem:[%s163 + $0x4c0] sm:$0xff] %v1768
      %2207 = vst [vmem:[%s163 + $0x4c8] sm:$0xff] %v1771
      %2208 = vst [vmem:[%s163 + $0x4d0] sm:$0xff] %v1776
      %2209 = vst [vmem:[%s163 + $0x4d8] sm:$0xff] %v1779
      %2210 = vst [vmem:[%s163 + $0x4e0] sm:$0xff] %v1784
      %2211 = vst [vmem:[%s163 + $0x4e8] sm:$0xff] %v1787
      %2212 = vst [vmem:[%s163 + $0x4f0] sm:$0xff] %v1792
      %2213 = vst [vmem:[%s163 + $0x4f8] sm:$0xff] %v1795
      %2214 = vst [vmem:[%s163 + $0x500] sm:$0xff] %v1800
      %2215 = vst [vmem:[%s163 + $0x508] sm:$0xff] %v1803
      %2216 = vst [vmem:[%s163 + $0x510] sm:$0xff] %v1808
      %2217 = vst [vmem:[%s163 + $0x518] sm:$0xff] %v1811
      %2218 = vst [vmem:[%s163 + $0x520] sm:$0xff] %v1816
      %2219 = vst [vmem:[%s163 + $0x528] sm:$0xff] %v1819
      %2220 = vst [vmem:[%s163 + $0x530] sm:$0xff] %v1824
      %2221 = vst [vmem:[%s163 + $0x538] sm:$0xff] %v1827
      %2222 = vst [vmem:[%s163 + $0x540] sm:$0xff] %v1832
      %2223 = vst [vmem:[%s163 + $0x548] sm:$0xff] %v1835
      %2224 = vst [vmem:[%s163 + $0x550] sm:$0xff] %v1840
      %2225 = vst [vmem:[%s163 + $0x558] sm:$0xff] %v1843
      %2226 = vst [vmem:[%s163 + $0x560] sm:$0xff] %v1848
      %2227 = vst [vmem:[%s163 + $0x568] sm:$0xff] %v1851
      %2228 = vst [vmem:[%s163 + $0x570] sm:$0xff] %v1856
      %2229 = vst [vmem:[%s163 + $0x578] sm:$0xff] %v1859
      %2230 = vst [vmem:[%s163 + $0x580] sm:$0xff] %v1864
      %2231 = vst [vmem:[%s163 + $0x588] sm:$0xff] %v1867
      %2232 = vst [vmem:[%s163 + $0x590] sm:$0xff] %v1872
      %2233 = vst [vmem:[%s163 + $0x598] sm:$0xff] %v1875
      %2234 = vst [vmem:[%s163 + $0x5a0] sm:$0xff] %v1880
      %2235 = vst [vmem:[%s163 + $0x5a8] sm:$0xff] %v1883
      %2236 = vst [vmem:[%s163 + $0x5b0] sm:$0xff] %v1888
      %2237 = vst [vmem:[%s163 + $0x5b8] sm:$0xff] %v1891
      %2238 = vst [vmem:[%s163 + $0x5c0] sm:$0xff] %v1896
      %2239 = vst [vmem:[%s163 + $0x5c8] sm:$0xff] %v1899
      %2240 = vst [vmem:[%s163 + $0x5d0] sm:$0xff] %v1904
      %2241 = vst [vmem:[%s163 + $0x5d8] sm:$0xff] %v1907
      %2242 = vst [vmem:[%s163 + $0x5e0] sm:$0xff] %v1912
      %2243 = vst [vmem:[%s163 + $0x5e8] sm:$0xff] %v1915
      %2244 = vst [vmem:[%s163 + $0x5f0] sm:$0xff] %v1920
      %2245 = vst [vmem:[%s163 + $0x5f8] sm:$0xff] %v1923
      %2246 = vst [vmem:[%s163 + $0x600] sm:$0xff] %v1928
      %2247 = vst [vmem:[%s163 + $0x608] sm:$0xff] %v1931
      %2248 = vst [vmem:[%s163 + $0x610] sm:$0xff] %v1936
      %2249 = vst [vmem:[%s163 + $0x618] sm:$0xff] %v1939
      %2250 = vst [vmem:[%s163 + $0x620] sm:$0xff] %v1944
      %2251 = vst [vmem:[%s163 + $0x628] sm:$0xff] %v1947
      %2252 = vst [vmem:[%s163 + $0x630] sm:$0xff] %v1952
      %2253 = vst [vmem:[%s163 + $0x638] sm:$0xff] %v1955
      %2254 = vst [vmem:[%s163 + $0x640] sm:$0xff] %v1960
      %2255 = vst [vmem:[%s163 + $0x648] sm:$0xff] %v1963
      %2256 = vst [vmem:[%s163 + $0x650] sm:$0xff] %v1968
      %2257 = vst [vmem:[%s163 + $0x658] sm:$0xff] %v1971
      %2258 = vst [vmem:[%s163 + $0x660] sm:$0xff] %v1976
      %2259 = vst [vmem:[%s163 + $0x668] sm:$0xff] %v1979
      %2260 = vst [vmem:[%s163 + $0x670] sm:$0xff] %v1984
      %2261 = vst [vmem:[%s163 + $0x678] sm:$0xff] %v1987
      %2262 = vst [vmem:[%s163 + $0x680] sm:$0xff] %v1992
      %2263 = vst [vmem:[%s163 + $0x688] sm:$0xff] %v1995
      %2264 = vst [vmem:[%s163 + $0x690] sm:$0xff] %v2000
      %2265 = vst [vmem:[%s163 + $0x698] sm:$0xff] %v2003
      %2266 = vst [vmem:[%s163 + $0x6a0] sm:$0xff] %v2008
      %2267 = vst [vmem:[%s163 + $0x6a8] sm:$0xff] %v2011
      %2268 = vst [vmem:[%s163 + $0x6b0] sm:$0xff] %v2016
      %2269 = vst [vmem:[%s163 + $0x6b8] sm:$0xff] %v2019
      %2270 = vst [vmem:[%s163 + $0x6c0] sm:$0xff] %v2024
      %2271 = vst [vmem:[%s163 + $0x6c8] sm:$0xff] %v2027
      %2272 = vst [vmem:[%s163 + $0x6d0] sm:$0xff] %v2032
      %2273 = vst [vmem:[%s163 + $0x6d8] sm:$0xff] %v2035
      %2274 = vst [vmem:[%s163 + $0x6e0] sm:$0xff] %v2040
      %2275 = vst [vmem:[%s163 + $0x6e8] sm:$0xff] %v2043
      %2276 = vst [vmem:[%s163 + $0x6f0] sm:$0xff] %v2048
      %2277 = vst [vmem:[%s163 + $0x6f8] sm:$0xff] %v2051
      %p2278 = scmp.lt.s32.totalorder %s13, 1
      %s2279 = scalar_select %p2278, %s13, 1
      %s2280 = smul.addr %s2279, 224
      %s2281 = smul.addr %s2280, 8
      %s2282 = scalar_lea.vmem %s2, %s2281
      // Predicated region
      $region29: #{meta_counts.21} parent=27 // pred_check
        %p2283 = pneg %p83
      $region30: #{meta_counts.21} parent=27 // pred_check_branch
        %2285 = sbr.rel (%p2283) target = $region32
      $region31: #{meta_counts.21} parent=27 // pred_region
        _
      $region32: #{meta_counts.21} parent=27 // pred_fallthru
        _
    $region28: #{meta_counts.21} parent=5 // pred_fallthru
      _
    %p2286 = scmp.le.s32.totalorder 2, %s8
    // Predicated region
    $region33: #{meta_counts.21} parent=5 // pred_check
      %p2287 = pneg %p2286
    $region34: #{meta_counts.21} parent=5 // pred_check_branch
      %2289 = sbr.rel (%p2287) target = $region36
    $region35: #{meta_counts.21} parent=5 // pred_region
      %s2290 = ssub.s32 %s8, 2
      // Predicated region
      $region37: #{meta_counts.21} parent=35 // pred_check
        %p2291 = pneg %p89
      $region38: #{meta_counts.21} parent=35 // pred_check_branch
        %2293 = sbr.rel (%p2291) target = $region40
      $region39: #{meta_counts.21} parent=35 // pred_region
        %p2294 = scmp.lt.s32.totalorder %s14, 1
        %s2295 = scalar_select %p2294, %s14, 1
        %s2296 = smul.addr %s2295, 224
        %s2297 = smul.addr %s2296, 8
        %s2298 = scalar_lea.vmem %s2, %s2297
      $region40: #{meta_counts.21} parent=35 // pred_fallthru
        _
    $region36: #{meta_counts.21} parent=5 // pred_fallthru
      _
  $region6: #{meta_counts.21} parent=0 // loop_footer
    %s12 = sadd.s32 1, %s8
  $region7: #{meta_counts.21} parent=0 // loop_footer_branch
    %7 = sbr.rel target = $region3
  $region8: #{meta_counts.21} parent=0 // loop_exit
    _

// kernel: meta_counts.22
$region0: #{meta_counts.22}
  #allocation0 [shape = 'u32[]', space=smem, size = 0x4, offset = 0x4, fixed_abs, tag = 'smem constant byte address 0x4 - core index']
  #allocation1 [shape = 'u32[144,128]{1,0:T(1,128)}', space=vmem, size = 0x12000, scoped, tag = 'internal scratch']
  %s0 = inlined_call_operand.vmem [shape: bf16[2,384,128], index: 0, kind: input, shape index: {}]
  %s1 = inlined_call_operand.vmem [shape: bf16[2,128,128], index: 1, kind: input, shape index: {}]
  %s2 = inlined_call_operand.vmem [shape: f32[2,384,128], index: 2, kind: output, shape index: {}]
  %s3 = sld [smem:[#allocation0]]
  $region41: #{meta_counts.22} parent=0
    _
  %s5 = ssub.s32 1, %s3
  %s6 = scalar_select 0, %s5, %s3
  loop: start=0, step=1, limit=4
  $region2: #{meta_counts.22} parent=0 // loop_pre_header
    _
  $region3: #{meta_counts.22} parent=0 // loop_header
    %s8 = sphi 0, %s12
    %p9 = scmp.ge.s32.totalorder %s8, 4
    %s18 = sphi 0, %s20
    %s21 = sphi 0, %s18
    %s22 = sphi 0, %s21
    %s38 = sphi 0, %s22
    %s44 = sphi 0, %s46
    %s47 = sphi 0, %s44
    %s48 = sphi 0, %s47
    %s64 = sphi 0, %s48
    %s70 = sphi 0, %s72
    %s73 = sphi 0, %s70
    %s74 = sphi 0, %s73
    %s90 = sphi 0, %s74
  $region4: #{meta_counts.22} parent=0 // loop_header_branch
    %11 = sbr.rel (%p9) target = $region8
  $region5: #{meta_counts.22} parent=0 // loop_body
    %s13 = ssub.s32 %s8, 1
    %s14 = ssub.s32 %s8, 2
    %s15 = sadd.s32 %s8, 1
    %s16 = ssub.s32 %s8, %s15
    %p17 = scmp.eq.s32.totalorder %s16, 0
    %s19 = sadd.s32 %s18, 1
    %s20 = scalar_select %p17, %s18, %s19
    %p23 = pneg %p17
    %p24 = scmp.eq.s32.totalorder %s8, 1
    %p25 = por %p23, %p24
    %p26 = scmp.ne.s32.totalorder %s18, %s21
    %p27 = scmp.eq.s32.totalorder %s8, 0
    %p28 = por %p26, %p27
    %p29 = scmp.ne.s32.totalorder %s18, %s21
    %p30 = scmp.eq.s32.totalorder %s13, 1
    %p31 = por %p29, %p30
    %p32 = scmp.ne.s32.totalorder %s21, %s22
    %p33 = scmp.eq.s32.totalorder %s13, 0
    %p34 = por %p32, %p33
    %p35 = scmp.ne.s32.totalorder %s21, %s22
    %p36 = scmp.eq.s32.totalorder %s14, 1
    %p37 = por %p35, %p36
    %p39 = scmp.ne.s32.totalorder %s22, %s38
    %p40 = scmp.eq.s32.totalorder %s14, 0
    %p41 = por %p39, %p40
    %s42 = ssub.s32 %s8, %s15
    %p43 = scmp.eq.s32.totalorder %s42, 0
    %s45 = sadd.s32 %s44, 1
    %s46 = scalar_select %p43, %s44, %s45
    %p49 = pneg %p43
    %p50 = scmp.eq.s32.totalorder %s8, 1
    %p51 = por %p49, %p50
    %p52 = scmp.ne.s32.totalorder %s44, %s47
    %p53 = scmp.eq.s32.totalorder %s8, 0
    %p54 = por %p52, %p53
    %p55 = scmp.ne.s32.totalorder %s44, %s47
    %p56 = scmp.eq.s32.totalorder %s13, 1
    %p57 = por %p55, %p56
    %p58 = scmp.ne.s32.totalorder %s47, %s48
    %p59 = scmp.eq.s32.totalorder %s13, 0
    %p60 = por %p58, %p59
    %p61 = scmp.ne.s32.totalorder %s47, %s48
    %p62 = scmp.eq.s32.totalorder %s14, 1
    %p63 = por %p61, %p62
    %p65 = scmp.ne.s32.totalorder %s48, %s64
    %p66 = scmp.eq.s32.totalorder %s14, 0
    %p67 = por %p65, %p66
    %s68 = ssub.s32 %s8, %s15
    %p69 = scmp.eq.s32.totalorder %s68, 0
    %s71 = sadd.s32 %s70, 1
    %s72 = scalar_select %p69, %s70, %s71
    %p75 = pneg %p69
    %p76 = scmp.eq.s32.totalorder %s8, 1
    %p77 = por %p75, %p76
    %p78 = scmp.ne.s32.totalorder %s70, %s73
    %p79 = scmp.eq.s32.totalorder %s8, 0
    %p80 = por %p78, %p79
    %p81 = scmp.ne.s32.totalorder %s70, %s73
    %p82 = scmp.eq.s32.totalorder %s13, 1
    %p83 = por %p81, %p82
    %p84 = scmp.ne.s32.totalorder %s73, %s74
    %p85 = scmp.eq.s32.totalorder %s13, 0
    %p86 = por %p84, %p85
    %p87 = scmp.ne.s32.totalorder %s73, %s74
    %p88 = scmp.eq.s32.totalorder %s14, 1
    %p89 = por %p87, %p88
    %p91 = scmp.ne.s32.totalorder %s74, %s90
    %p92 = scmp.eq.s32.totalorder %s14, 0
    %p93 = por %p91, %p92
    %p94 = scmp.le.s32.totalorder 1, %s8
    %p95 = scmp.lt.s32.totalorder %s8, 3
    %p96 = pnand %p94, %p95
    %p97 = pneg %p96
    // Predicated region
    $region9: #{meta_counts.22} parent=5 // pred_check
      _
    $region10: #{meta_counts.22} parent=5 // pred_check_branch
      %99 = sbr.rel (%p96) target = $region12
    $region11: #{meta_counts.22} parent=5 // pred_region
      %s100 = ssub.s32 %s8, 1
    $region12: #{meta_counts.22} parent=5 // pred_fallthru
      _
    %p101 = scmp.lt.s32.totalorder %s8, 2
    // Predicated region
    $region13: #{meta_counts.22} parent=5 // pred_check
      %p102 = pneg %p101
    $region14: #{meta_counts.22} parent=5 // pred_check_branch
      %104 = sbr.rel (%p102) target = $region16
    $region15: #{meta_counts.22} parent=5 // pred_region
      // Predicated region
      $region17: #{meta_counts.22} parent=15 // pred_check
        %p105 = pneg %p28
      $region18: #{meta_counts.22} parent=15 // pred_check_branch
        %107 = sbr.rel (%p105) target = $region20
      $region19: #{meta_counts.22} parent=15 // pred_region
        %p108 = scmp.lt.s32.totalorder %s8, 1
        %s109 = scalar_select %p108, %s8, 1
        %s110 = smul.addr %s109, 48
        %s111 = smul.addr %s110, 4
        %s112 = scalar_lea.vmem %s0, %s111
      $region20: #{meta_counts.22} parent=15 // pred_fallthru
        _
      // Predicated region
      $region21: #{meta_counts.22} parent=15 // pred_check
        %p113 = pneg %p54
      $region22: #{meta_counts.22} parent=15 // pred_check_branch
        %115 = sbr.rel (%p113) target = $region24
      $region23: #{meta_counts.22} parent=15 // pred_region
        %p116 = scmp.lt.s32.totalorder %s8, 1
        %s117 = scalar_select %p116, %s8, 1
        %s118 = smul.addr %s117, 16
        %s119 = smul.addr %s118, 4
        %s120 = scalar_lea.vmem %s1, %s119
      $region24: #{meta_counts.22} parent=15 // pred_fallthru
        _
    $region16: #{meta_counts.22} parent=5 // pred_fallthru
      _
    %p121 = scmp.le.s32.totalorder 1, %s8
    %p122 = scmp.lt.s32.totalorder %s8, 3
    %p123 = pnand %p121, %p122
    %p124 = pneg %p123
    // Predicated region
    $region25: #{meta_counts.22} parent=5 // pred_check
      _
    $region26: #{meta_counts.22} parent=5 // pred_check_branch
      %126 = sbr.rel (%p123) target = $region28
    $region27: #{meta_counts.22} parent=5 // pred_region
      %s127 = ssub.s32 %s8, 1
      %p128 = scmp.lt.s32.totalorder %s13, 1
      %s129 = scalar_select %p128, %s13, 1
      %s130 = smul.addr %s129, 48
      %s131 = smul.addr %s130, 4
      %s132 = scalar_lea.vmem %s0, %s131
      %p133 = pneg %p34
      %p134 = pneg %p31
      %p135 = scmp.lt.s32.totalorder %s13, 1
      %s136 = scalar_select %p135, %s13, 1
      %s137 = smul.addr %s136, 16
      %s138 = smul.addr %s137, 4
      %s139 = scalar_lea.vmem %s1, %s138
      %p140 = pneg %p60
      %p141 = pneg %p57
      %p142 = pneg %p86
      %p143 = pneg %p83
      %p144 = scmp.lt.s32.totalorder %s13, 1
      %s145 = scalar_select %p144, %s13, 1
      %s146 = smul.addr %s145, 48
      %s147 = smul.addr %s146, 8
      %s148 = scalar_lea.vmem %s2, %s147
      %p149 = scmp.lt.s32.totalorder %s13, 1
      %s150 = scalar_select %p149, %s13, 1
      %s151 = smul.addr %s150, 48
      %s152 = smul.addr %s151, 4
      %s153 = scalar_lea.vmem %s0, %s152
      %p154 = scmp.lt.s32.totalorder %s13, 1
      %s155 = scalar_select %p154, %s13, 1
      %s156 = smul.addr %s155, 16
      %s157 = smul.addr %s156, 4
      %s158 = scalar_lea.vmem %s1, %s157
      %p159 = scmp.lt.s32.totalorder %s13, 1
      %s160 = scalar_select %p159, %s13, 1
      %s161 = smul.addr %s160, 48
      %s162 = smul.addr %s161, 8
      %s163 = scalar_lea.vmem %s2, %s162
      %v165 = vld [vmem:[%s153] sm:$0xf]
      %v166 = vld [vmem:[%s153 + $0x4] sm:$0xf]
      %v167 = vld [vmem:[%s153 + $0x8] sm:$0xf]
      %v168 = vld [vmem:[%s153 + $0xc] sm:$0xf]
      %v169 = vld [vmem:[%s153 + $0x10] sm:$0xf]
      %v170 = vld [vmem:[%s153 + $0x14] sm:$0xf]
      %v171 = vld [vmem:[%s153 + $0x18] sm:$0xf]
      %v172 = vld [vmem:[%s153 + $0x1c] sm:$0xf]
      %v173 = vld [vmem:[%s153 + $0x20] sm:$0xf]
      %v174 = vld [vmem:[%s153 + $0x24] sm:$0xf]
      %v175 = vld [vmem:[%s153 + $0x28] sm:$0xf]
      %v176 = vld [vmem:[%s153 + $0x2c] sm:$0xf]
      %v177 = vld [vmem:[%s153 + $0x30] sm:$0xf]
      %v178 = vld [vmem:[%s153 + $0x34] sm:$0xf]
      %v179 = vld [vmem:[%s153 + $0x38] sm:$0xf]
      %v180 = vld [vmem:[%s153 + $0x3c] sm:$0xf]
      %v181 = vld [vmem:[%s153 + $0x40] sm:$0xf]
      %v182 = vld [vmem:[%s153 + $0x44] sm:$0xf]
      %v183 = vld [vmem:[%s153 + $0x48] sm:$0xf]
      %v184 = vld [vmem:[%s153 + $0x4c] sm:$0xf]
      %v185 = vld [vmem:[%s153 + $0x50] sm:$0xf]
      %v186 = vld [vmem:[%s153 + $0x54] sm:$0xf]
      %v187 = vld [vmem:[%s153 + $0x58] sm:$0xf]
      %v188 = vld [vmem:[%s153 + $0x5c] sm:$0xf]
      %v189 = vld [vmem:[%s153 + $0x60] sm:$0xf]
      %v190 = vld [vmem:[%s153 + $0x64] sm:$0xf]
      %v191 = vld [vmem:[%s153 + $0x68] sm:$0xf]
      %v192 = vld [vmem:[%s153 + $0x6c] sm:$0xf]
      %v193 = vld [vmem:[%s153 + $0x70] sm:$0xf]
      %v194 = vld [vmem:[%s153 + $0x74] sm:$0xf]
      %v195 = vld [vmem:[%s153 + $0x78] sm:$0xf]
      %v196 = vld [vmem:[%s153 + $0x7c] sm:$0xf]
      %v197 = vld [vmem:[%s153 + $0x80] sm:$0xf]
      %v198 = vld [vmem:[%s153 + $0x84] sm:$0xf]
      %v199 = vld [vmem:[%s153 + $0x88] sm:$0xf]
      %v200 = vld [vmem:[%s153 + $0x8c] sm:$0xf]
      %v201 = vld [vmem:[%s153 + $0x90] sm:$0xf]
      %v202 = vld [vmem:[%s153 + $0x94] sm:$0xf]
      %v203 = vld [vmem:[%s153 + $0x98] sm:$0xf]
      %v204 = vld [vmem:[%s153 + $0x9c] sm:$0xf]
      %v205 = vld [vmem:[%s153 + $0xa0] sm:$0xf]
      %v206 = vld [vmem:[%s153 + $0xa4] sm:$0xf]
      %v207 = vld [vmem:[%s153 + $0xa8] sm:$0xf]
      %v208 = vld [vmem:[%s153 + $0xac] sm:$0xf]
      %v209 = vld [vmem:[%s153 + $0xb0] sm:$0xf]
      %v210 = vld [vmem:[%s153 + $0xb4] sm:$0xf]
      %v211 = vld [vmem:[%s153 + $0xb8] sm:$0xf]
      %v212 = vld [vmem:[%s153 + $0xbc] sm:$0xf]
      %v213 = vld [vmem:[%s158] sm:$0xf]
      %v214 = vld [vmem:[%s158 + $0x4] sm:$0xf]
      %v215 = vld [vmem:[%s158 + $0x8] sm:$0xf]
      %v216 = vld [vmem:[%s158 + $0xc] sm:$0xf]
      %v217 = vld [vmem:[%s158 + $0x10] sm:$0xf]
      %v218 = vld [vmem:[%s158 + $0x14] sm:$0xf]
      %v219 = vld [vmem:[%s158 + $0x18] sm:$0xf]
      %v220 = vld [vmem:[%s158 + $0x1c] sm:$0xf]
      %v221 = vld [vmem:[%s158 + $0x20] sm:$0xf]
      %v222 = vld [vmem:[%s158 + $0x24] sm:$0xf]
      %v223 = vld [vmem:[%s158 + $0x28] sm:$0xf]
      %v224 = vld [vmem:[%s158 + $0x2c] sm:$0xf]
      %v225 = vld [vmem:[%s158 + $0x30] sm:$0xf]
      %v226 = vld [vmem:[%s158 + $0x34] sm:$0xf]
      %v227 = vld [vmem:[%s158 + $0x38] sm:$0xf]
      %v228 = vld [vmem:[%s158 + $0x3c] sm:$0xf]
      %v277 = vunpack.c.l.b16 %v165
      %v278 = vunpack.c.l.b16 %v166
      %v279 = vunpack.c.l.b16 %v167
      %v280 = vunpack.c.l.b16 %v168
      %v281 = vunpack.c.l.b16 %v169
      %v282 = vunpack.c.l.b16 %v170
      %v283 = vunpack.c.l.b16 %v171
      %v284 = vunpack.c.l.b16 %v172
      %v285 = vunpack.c.l.b16 %v173
      %v286 = vunpack.c.l.b16 %v174
      %v287 = vunpack.c.l.b16 %v175
      %v288 = vunpack.c.l.b16 %v176
      %v289 = vunpack.c.l.b16 %v177
      %v290 = vunpack.c.l.b16 %v178
      %v291 = vunpack.c.l.b16 %v179
      %v292 = vunpack.c.l.b16 %v180
      %v293 = vunpack.c.l.b16 %v181
      %v294 = vunpack.c.l.b16 %v182
      %v295 = vunpack.c.l.b16 %v183
      %v296 = vunpack.c.l.b16 %v184
      %v297 = vunpack.c.l.b16 %v185
      %v298 = vunpack.c.l.b16 %v186
      %v299 = vunpack.c.l.b16 %v187
      %v300 = vunpack.c.l.b16 %v188
      %v301 = vunpack.c.l.b16 %v189
      %v302 = vunpack.c.l.b16 %v190
      %v303 = vunpack.c.l.b16 %v191
      %v304 = vunpack.c.l.b16 %v192
      %v305 = vunpack.c.l.b16 %v193
      %v306 = vunpack.c.l.b16 %v194
      %v307 = vunpack.c.l.b16 %v195
      %v308 = vunpack.c.l.b16 %v196
      %v309 = vunpack.c.l.b16 %v197
      %v310 = vunpack.c.l.b16 %v198
      %v311 = vunpack.c.l.b16 %v199
      %v312 = vunpack.c.l.b16 %v200
      %v313 = vunpack.c.l.b16 %v201
      %v314 = vunpack.c.l.b16 %v202
      %v315 = vunpack.c.l.b16 %v203
      %v316 = vunpack.c.l.b16 %v204
      %v317 = vunpack.c.l.b16 %v205
      %v318 = vunpack.c.l.b16 %v206
      %v319 = vunpack.c.l.b16 %v207
      %v320 = vunpack.c.l.b16 %v208
      %v321 = vunpack.c.l.b16 %v209
      %v322 = vunpack.c.l.b16 %v210
      %v323 = vunpack.c.l.b16 %v211
      %v324 = vunpack.c.l.b16 %v212
      %v325 = vpack.c.b16 %v278, %v277
      %v326 = vpack.c.b16 %v280, %v279
      %v327 = vpack.c.b16 %v282, %v281
      %v328 = vpack.c.b16 %v284, %v283
      %v329 = vpack.c.b16 %v286, %v285
      %v330 = vpack.c.b16 %v288, %v287
      %v331 = vpack.c.b16 %v290, %v289
      %v332 = vpack.c.b16 %v292, %v291
      %v333 = vpack.c.b16 %v294, %v293
      %v334 = vpack.c.b16 %v296, %v295
      %v335 = vpack.c.b16 %v298, %v297
      %v336 = vpack.c.b16 %v300, %v299
      %v337 = vpack.c.b16 %v302, %v301
      %v338 = vpack.c.b16 %v304, %v303
      %v339 = vpack.c.b16 %v306, %v305
      %v340 = vpack.c.b16 %v308, %v307
      %v341 = vpack.c.b16 %v310, %v309
      %v342 = vpack.c.b16 %v312, %v311
      %v343 = vpack.c.b16 %v314, %v313
      %v344 = vpack.c.b16 %v316, %v315
      %v345 = vpack.c.b16 %v318, %v317
      %v346 = vpack.c.b16 %v320, %v319
      %v347 = vpack.c.b16 %v322, %v321
      %v348 = vpack.c.b16 %v324, %v323
      %v389 = vunpack.c.l.b16 %v213
      %v390 = vunpack.c.l.b16 %v214
      %v391 = vunpack.c.l.b16 %v215
      %v392 = vunpack.c.l.b16 %v216
      %v393 = vunpack.c.l.b16 %v217
      %v394 = vunpack.c.l.b16 %v218
      %v395 = vunpack.c.l.b16 %v219
      %v396 = vunpack.c.l.b16 %v220
      %v397 = vunpack.c.l.b16 %v221
      %v398 = vunpack.c.l.b16 %v222
      %v399 = vunpack.c.l.b16 %v223
      %v400 = vunpack.c.l.b16 %v224
      %v401 = vunpack.c.l.b16 %v225
      %v402 = vunpack.c.l.b16 %v226
      %v403 = vunpack.c.l.b16 %v227
      %v404 = vunpack.c.l.b16 %v228
      %v405 = vpack.c.b16 %v390, %v389
      %v406 = vpack.c.b16 %v392, %v391
      %v407 = vpack.c.b16 %v394, %v393
      %v408 = vpack.c.b16 %v396, %v395
      %v409 = vpack.c.b16 %v398, %v397
      %v410 = vpack.c.b16 %v400, %v399
      %v411 = vpack.c.b16 %v402, %v401
      %v412 = vpack.c.b16 %v404, %v403
      %421 = vmatprep.subr.bf16.mxu0 0
      %422 = vmatpush1.bf16.msra.mxu0 %v405
      %423 = vmatprep.subr.bf16.mxu0 0
      %424 = vmatpush1.bf16.msra.mxu0 %v406
      %425 = vmatprep.subr.bf16.mxu0 0
      %426 = vmatpush1.bf16.msra.mxu0 %v407
      %427 = vmatprep.subr.bf16.mxu0 0
      %428 = vmatpush1.bf16.msra.mxu0 %v408
      %429 = vmatprep.subr.bf16.mxu0 0
      %430 = vmatpush1.bf16.msra.mxu0 %v409
      %431 = vmatprep.subr.bf16.mxu0 0
      %432 = vmatpush1.bf16.msra.mxu0 %v410
      %433 = vmatprep.subr.bf16.mxu0 0
      %434 = vmatpush1.bf16.msra.mxu0 %v411
      %435 = vmatprep.subr.bf16.mxu0 0
      %436 = vmatpush1.bf16.msra.mxu0 %v412
      %437 = vmatprep.subr.bf16.mxu0 0
      %438 = vmatpush1.bf16.msra.mxu0 0
      %439 = vmatprep.subr.bf16.mxu0 0
      %440 = vmatpush1.bf16.msra.mxu0 0
      %441 = vmatprep.subr.bf16.mxu0 0
      %442 = vmatpush1.bf16.msra.mxu0 0
      %443 = vmatprep.subr.bf16.mxu0 0
      %444 = vmatpush1.bf16.msra.mxu0 0
      %445 = vmatprep.subr.bf16.mxu0 0
      %446 = vmatpush1.bf16.msra.mxu0 0
      %447 = vmatprep.subr.bf16.mxu0 0
      %448 = vmatpush1.bf16.msra.mxu0 0
      %449 = vmatprep.subr.bf16.mxu0 0
      %450 = vmatpush1.bf16.msra.mxu0 0
      %451 = vmatprep.subr.bf16.mxu0 0
      %452 = vmatpush1.bf16.msra.mxu0 0
      %453 = vmatprep.mubr.bf16.mxu0 0
      %454 = vmatmul.mubr.bf16.gmra.mrb[0].mxu0 %v325
      %v455 = vpop.f32.mrb[0].mxu0
      %v456 = vadd.f32 0.0, %v455
      %v457 = vpop.f32.mrb[0].mxu0
      %v458 = vpop.f32.mrb[0].mxu0
      %v459 = vadd.f32 0.0, %v458
      %v460 = vpop.f32.mrb[0].mxu0
      %461 = vmatprep.mubr.bf16.mxu0 0
      %462 = vmatmul.mubr.bf16.gmra.mrb[0].mxu0 %v326
      %v463 = vpop.f32.mrb[0].mxu0
      %v464 = vadd.f32 0.0, %v463
      %v465 = vpop.f32.mrb[0].mxu0
      %v466 = vpop.f32.mrb[0].mxu0
      %v467 = vadd.f32 0.0, %v466
      %v468 = vpop.f32.mrb[0].mxu0
      %469 = vmatprep.mubr.bf16.mxu0 0
      %470 = vmatmul.mubr.bf16.gmra.mrb[0].mxu0 %v327
      %v471 = vpop.f32.mrb[0].mxu0
      %v472 = vadd.f32 0.0, %v471
      %v473 = vpop.f32.mrb[0].mxu0
      %v474 = vpop.f32.mrb[0].mxu0
      %v475 = vadd.f32 0.0, %v474
      %v476 = vpop.f32.mrb[0].mxu0
      %477 = vmatprep.mubr.bf16.mxu0 0
      %478 = vmatmul.mubr.bf16.gmra.mrb[0].mxu0 %v328
      %v479 = vpop.f32.mrb[0].mxu0
      %v480 = vadd.f32 0.0, %v479
      %v481 = vpop.f32.mrb[0].mxu0
      %v482 = vpop.f32.mrb[0].mxu0
      %v483 = vadd.f32 0.0, %v482
      %v484 = vpop.f32.mrb[0].mxu0
      %485 = vmatprep.mubr.bf16.mxu0 0
      %486 = vmatmul.mubr.bf16.gmra.mrb[0].mxu0 %v329
      %v487 = vpop.f32.mrb[0].mxu0
      %v488 = vadd.f32 0.0, %v487
      %v489 = vpop.f32.mrb[0].mxu0
      %v490 = vpop.f32.mrb[0].mxu0
      %v491 = vadd.f32 0.0, %v490
      %v492 = vpop.f32.mrb[0].mxu0
      %493 = vmatprep.mubr.bf16.mxu0 0
      %494 = vmatmul.mubr.bf16.gmra.mrb[0].mxu0 %v330
      %v495 = vpop.f32.mrb[0].mxu0
      %v496 = vadd.f32 0.0, %v495
      %v497 = vpop.f32.mrb[0].mxu0
      %v498 = vpop.f32.mrb[0].mxu0
      %v499 = vadd.f32 0.0, %v498
      %v500 = vpop.f32.mrb[0].mxu0
      %501 = vmatprep.mubr.bf16.mxu0 0
      %502 = vmatmul.mubr.bf16.gmra.mrb[0].mxu0 %v331
      %v503 = vpop.f32.mrb[0].mxu0
      %v504 = vadd.f32 0.0, %v503
      %v505 = vpop.f32.mrb[0].mxu0
      %v506 = vpop.f32.mrb[0].mxu0
      %v507 = vadd.f32 0.0, %v506
      %v508 = vpop.f32.mrb[0].mxu0
      %509 = vmatprep.mubr.bf16.mxu0 0
      %510 = vmatmul.mubr.bf16.gmra.mrb[0].mxu0 %v332
      %v511 = vpop.f32.mrb[0].mxu0
      %v512 = vadd.f32 0.0, %v511
      %v513 = vpop.f32.mrb[0].mxu0
      %v514 = vpop.f32.mrb[0].mxu0
      %v515 = vadd.f32 0.0, %v514
      %v516 = vpop.f32.mrb[0].mxu0
      %517 = vmatprep.mubr.bf16.mxu0 0
      %518 = vmatmul.mubr.bf16.gmra.mrb[0].mxu0 %v333
      %v519 = vpop.f32.mrb[0].mxu0
      %v520 = vadd.f32 0.0, %v519
      %v521 = vpop.f32.mrb[0].mxu0
      %v522 = vpop.f32.mrb[0].mxu0
      %v523 = vadd.f32 0.0, %v522
      %v524 = vpop.f32.mrb[0].mxu0
      %525 = vmatprep.mubr.bf16.mxu0 0
      %526 = vmatmul.mubr.bf16.gmra.mrb[0].mxu0 %v334
      %v527 = vpop.f32.mrb[0].mxu0
      %v528 = vadd.f32 0.0, %v527
      %v529 = vpop.f32.mrb[0].mxu0
      %v530 = vpop.f32.mrb[0].mxu0
      %v531 = vadd.f32 0.0, %v530
      %v532 = vpop.f32.mrb[0].mxu0
      %533 = vmatprep.mubr.bf16.mxu0 0
      %534 = vmatmul.mubr.bf16.gmra.mrb[0].mxu0 %v335
      %v535 = vpop.f32.mrb[0].mxu0
      %v536 = vadd.f32 0.0, %v535
      %v537 = vpop.f32.mrb[0].mxu0
      %v538 = vpop.f32.mrb[0].mxu0
      %v539 = vadd.f32 0.0, %v538
      %v540 = vpop.f32.mrb[0].mxu0
      %541 = vmatprep.mubr.bf16.mxu0 0
      %542 = vmatmul.mubr.bf16.gmra.mrb[0].mxu0 %v336
      %v543 = vpop.f32.mrb[0].mxu0
      %v544 = vadd.f32 0.0, %v543
      %v545 = vpop.f32.mrb[0].mxu0
      %v546 = vpop.f32.mrb[0].mxu0
      %v547 = vadd.f32 0.0, %v546
      %v548 = vpop.f32.mrb[0].mxu0
      %549 = vmatprep.mubr.bf16.mxu0 0
      %550 = vmatmul.mubr.bf16.gmra.mrb[0].mxu0 %v337
      %v551 = vpop.f32.mrb[0].mxu0
      %v552 = vadd.f32 0.0, %v551
      %v553 = vpop.f32.mrb[0].mxu0
      %v554 = vpop.f32.mrb[0].mxu0
      %v555 = vadd.f32 0.0, %v554
      %v556 = vpop.f32.mrb[0].mxu0
      %557 = vmatprep.mubr.bf16.mxu0 0
      %558 = vmatmul.mubr.bf16.gmra.mrb[0].mxu0 %v338
      %v559 = vpop.f32.mrb[0].mxu0
      %v560 = vadd.f32 0.0, %v559
      %v561 = vpop.f32.mrb[0].mxu0
      %v562 = vpop.f32.mrb[0].mxu0
      %v563 = vadd.f32 0.0, %v562
      %v564 = vpop.f32.mrb[0].mxu0
      %565 = vmatprep.mubr.bf16.mxu0 0
      %566 = vmatmul.mubr.bf16.gmra.mrb[0].mxu0 %v339
      %v567 = vpop.f32.mrb[0].mxu0
      %v568 = vadd.f32 0.0, %v567
      %v569 = vpop.f32.mrb[0].mxu0
      %v570 = vpop.f32.mrb[0].mxu0
      %v571 = vadd.f32 0.0, %v570
      %v572 = vpop.f32.mrb[0].mxu0
      %573 = vmatprep.mubr.bf16.mxu0 0
      %574 = vmatmul.mubr.bf16.gmra.mrb[0].mxu0 %v340
      %v575 = vpop.f32.mrb[0].mxu0
      %v576 = vadd.f32 0.0, %v575
      %v577 = vpop.f32.mrb[0].mxu0
      %v578 = vpop.f32.mrb[0].mxu0
      %v579 = vadd.f32 0.0, %v578
      %v580 = vpop.f32.mrb[0].mxu0
      %581 = vmatprep.mubr.bf16.mxu0 0
      %582 = vmatmul.mubr.bf16.gmra.mrb[0].mxu0 %v341
      %v583 = vpop.f32.mrb[0].mxu0
      %v584 = vadd.f32 0.0, %v583
      %v585 = vpop.f32.mrb[0].mxu0
      %v586 = vpop.f32.mrb[0].mxu0
      %v587 = vadd.f32 0.0, %v586
      %v588 = vpop.f32.mrb[0].mxu0
      %589 = vmatprep.mubr.bf16.mxu0 0
      %590 = vmatmul.mubr.bf16.gmra.mrb[0].mxu0 %v342
      %v591 = vpop.f32.mrb[0].mxu0
      %v592 = vadd.f32 0.0, %v591
      %v593 = vpop.f32.mrb[0].mxu0
      %v594 = vpop.f32.mrb[0].mxu0
      %v595 = vadd.f32 0.0, %v594
      %v596 = vpop.f32.mrb[0].mxu0
      %597 = vmatprep.mubr.bf16.mxu0 0
      %598 = vmatmul.mubr.bf16.gmra.mrb[0].mxu0 %v343
      %v599 = vpop.f32.mrb[0].mxu0
      %v600 = vadd.f32 0.0, %v599
      %v601 = vpop.f32.mrb[0].mxu0
      %v602 = vpop.f32.mrb[0].mxu0
      %v603 = vadd.f32 0.0, %v602
      %v604 = vpop.f32.mrb[0].mxu0
      %605 = vmatprep.mubr.bf16.mxu0 0
      %606 = vmatmul.mubr.bf16.gmra.mrb[0].mxu0 %v344
      %v607 = vpop.f32.mrb[0].mxu0
      %v608 = vadd.f32 0.0, %v607
      %v609 = vpop.f32.mrb[0].mxu0
      %v610 = vpop.f32.mrb[0].mxu0
      %v611 = vadd.f32 0.0, %v610
      %v612 = vpop.f32.mrb[0].mxu0
      %613 = vmatprep.mubr.bf16.mxu0 0
      %614 = vmatmul.mubr.bf16.gmra.mrb[0].mxu0 %v345
      %v615 = vpop.f32.mrb[0].mxu0
      %v616 = vadd.f32 0.0, %v615
      %v617 = vpop.f32.mrb[0].mxu0
      %v618 = vpop.f32.mrb[0].mxu0
      %v619 = vadd.f32 0.0, %v618
      %v620 = vpop.f32.mrb[0].mxu0
      %621 = vmatprep.mubr.bf16.mxu0 0
      %622 = vmatmul.mubr.bf16.gmra.mrb[0].mxu0 %v346
      %v623 = vpop.f32.mrb[0].mxu0
      %v624 = vadd.f32 0.0, %v623
      %v625 = vpop.f32.mrb[0].mxu0
      %v626 = vpop.f32.mrb[0].mxu0
      %v627 = vadd.f32 0.0, %v626
      %v628 = vpop.f32.mrb[0].mxu0
      %629 = vmatprep.mubr.bf16.mxu0 0
      %630 = vmatmul.mubr.bf16.gmra.mrb[0].mxu0 %v347
      %v631 = vpop.f32.mrb[0].mxu0
      %v632 = vadd.f32 0.0, %v631
      %v633 = vpop.f32.mrb[0].mxu0
      %v634 = vpop.f32.mrb[0].mxu0
      %v635 = vadd.f32 0.0, %v634
      %v636 = vpop.f32.mrb[0].mxu0
      %637 = vmatprep.mubr.bf16.mxu0 0
      %638 = vmatmul.mubr.bf16.gmra.mrb[0].mxu0 %v348
      %v639 = vpop.f32.mrb[0].mxu0
      %v640 = vadd.f32 0.0, %v639
      %v641 = vpop.f32.mrb[0].mxu0
      %v642 = vpop.f32.mrb[0].mxu0
      %v643 = vadd.f32 0.0, %v642
      %v644 = vpop.f32.mrb[0].mxu0
      %645 = vdwg.mxu0
      %646 = vst [vmem:[%s163] sm:$0xff] %v456
      %647 = vst [vmem:[%s163 + $0x8] sm:$0xff] %v459
      %648 = vst [vmem:[%s163 + $0x10] sm:$0xff] %v464
      %649 = vst [vmem:[%s163 + $0x18] sm:$0xff] %v467
      %650 = vst [vmem:[%s163 + $0x20] sm:$0xff] %v472
      %651 = vst [vmem:[%s163 + $0x28] sm:$0xff] %v475
      %652 = vst [vmem:[%s163 + $0x30] sm:$0xff] %v480
      %653 = vst [vmem:[%s163 + $0x38] sm:$0xff] %v483
      %654 = vst [vmem:[%s163 + $0x40] sm:$0xff] %v488
      %655 = vst [vmem:[%s163 + $0x48] sm:$0xff] %v491
      %656 = vst [vmem:[%s163 + $0x50] sm:$0xff] %v496
      %657 = vst [vmem:[%s163 + $0x58] sm:$0xff] %v499
      %658 = vst [vmem:[%s163 + $0x60] sm:$0xff] %v504
      %659 = vst [vmem:[%s163 + $0x68] sm:$0xff] %v507
      %660 = vst [vmem:[%s163 + $0x70] sm:$0xff] %v512
      %661 = vst [vmem:[%s163 + $0x78] sm:$0xff] %v515
      %662 = vst [vmem:[%s163 + $0x80] sm:$0xff] %v520
      %663 = vst [vmem:[%s163 + $0x88] sm:$0xff] %v523
      %664 = vst [vmem:[%s163 + $0x90] sm:$0xff] %v528
      %665 = vst [vmem:[%s163 + $0x98] sm:$0xff] %v531
      %666 = vst [vmem:[%s163 + $0xa0] sm:$0xff] %v536
      %667 = vst [vmem:[%s163 + $0xa8] sm:$0xff] %v539
      %668 = vst [vmem:[%s163 + $0xb0] sm:$0xff] %v544
      %669 = vst [vmem:[%s163 + $0xb8] sm:$0xff] %v547
      %670 = vst [vmem:[%s163 + $0xc0] sm:$0xff] %v552
      %671 = vst [vmem:[%s163 + $0xc8] sm:$0xff] %v555
      %672 = vst [vmem:[%s163 + $0xd0] sm:$0xff] %v560
      %673 = vst [vmem:[%s163 + $0xd8] sm:$0xff] %v563
      %674 = vst [vmem:[%s163 + $0xe0] sm:$0xff] %v568
      %675 = vst [vmem:[%s163 + $0xe8] sm:$0xff] %v571
      %676 = vst [vmem:[%s163 + $0xf0] sm:$0xff] %v576
      %677 = vst [vmem:[%s163 + $0xf8] sm:$0xff] %v579
      %678 = vst [vmem:[%s163 + $0x100] sm:$0xff] %v584
      %679 = vst [vmem:[%s163 + $0x108] sm:$0xff] %v587
      %680 = vst [vmem:[%s163 + $0x110] sm:$0xff] %v592
      %681 = vst [vmem:[%s163 + $0x118] sm:$0xff] %v595
      %682 = vst [vmem:[%s163 + $0x120] sm:$0xff] %v600
      %683 = vst [vmem:[%s163 + $0x128] sm:$0xff] %v603
      %684 = vst [vmem:[%s163 + $0x130] sm:$0xff] %v608
      %685 = vst [vmem:[%s163 + $0x138] sm:$0xff] %v611
      %686 = vst [vmem:[%s163 + $0x140] sm:$0xff] %v616
      %687 = vst [vmem:[%s163 + $0x148] sm:$0xff] %v619
      %688 = vst [vmem:[%s163 + $0x150] sm:$0xff] %v624
      %689 = vst [vmem:[%s163 + $0x158] sm:$0xff] %v627
      %690 = vst [vmem:[%s163 + $0x160] sm:$0xff] %v632
      %691 = vst [vmem:[%s163 + $0x168] sm:$0xff] %v635
      %692 = vst [vmem:[%s163 + $0x170] sm:$0xff] %v640
      %693 = vst [vmem:[%s163 + $0x178] sm:$0xff] %v643
      %p694 = scmp.lt.s32.totalorder %s13, 1
      %s695 = scalar_select %p694, %s13, 1
      %s696 = smul.addr %s695, 48
      %s697 = smul.addr %s696, 8
      %s698 = scalar_lea.vmem %s2, %s697
      // Predicated region
      $region29: #{meta_counts.22} parent=27 // pred_check
        %p699 = pneg %p83
      $region30: #{meta_counts.22} parent=27 // pred_check_branch
        %701 = sbr.rel (%p699) target = $region32
      $region31: #{meta_counts.22} parent=27 // pred_region
        _
      $region32: #{meta_counts.22} parent=27 // pred_fallthru
        _
    $region28: #{meta_counts.22} parent=5 // pred_fallthru
      _
    %p702 = scmp.le.s32.totalorder 2, %s8
    // Predicated region
    $region33: #{meta_counts.22} parent=5 // pred_check
      %p703 = pneg %p702
    $region34: #{meta_counts.22} parent=5 // pred_check_branch
      %705 = sbr.rel (%p703) target = $region36
    $region35: #{meta_counts.22} parent=5 // pred_region
      %s706 = ssub.s32 %s8, 2
      // Predicated region
      $region37: #{meta_counts.22} parent=35 // pred_check
        %p707 = pneg %p89
      $region38: #{meta_counts.22} parent=35 // pred_check_branch
        %709 = sbr.rel (%p707) target = $region40
      $region39: #{meta_counts.22} parent=35 // pred_region
        %p710 = scmp.lt.s32.totalorder %s14, 1
        %s711 = scalar_select %p710, %s14, 1
        %s712 = smul.addr %s711, 48
        %s713 = smul.addr %s712, 8
        %s714 = scalar_lea.vmem %s2, %s713
      $region40: #{meta_counts.22} parent=35 // pred_fallthru
        _
    $region36: #{meta_counts.22} parent=5 // pred_fallthru
      _
  $region6: #{meta_counts.22} parent=0 // loop_footer
    %s12 = sadd.s32 1, %s8
  $region7: #{meta_counts.22} parent=0 // loop_footer_branch
    %7 = sbr.rel target = $region3
  $region8: #{meta_counts.22} parent=0 // loop_exit
    _

// kernel: meta_counts.23
$region0: #{meta_counts.23}
  #allocation0 [shape = 'u32[]', space=smem, size = 0x4, offset = 0x4, fixed_abs, tag = 'smem constant byte address 0x4 - core index']
  #allocation1 [shape = 'u32[144,128]{1,0:T(1,128)}', space=vmem, size = 0x12000, scoped, tag = 'internal scratch']
  %s0 = inlined_call_operand.vmem [shape: bf16[2,128,128], index: 0, kind: input, shape index: {}]
  %s1 = inlined_call_operand.vmem [shape: bf16[2,128,128], index: 1, kind: input, shape index: {}]
  %s2 = inlined_call_operand.vmem [shape: f32[2,128,128], index: 2, kind: output, shape index: {}]
  %s3 = sld [smem:[#allocation0]]
  $region41: #{meta_counts.23} parent=0
    _
  %s5 = ssub.s32 1, %s3
  %s6 = scalar_select 0, %s5, %s3
  loop: start=0, step=1, limit=4
  $region2: #{meta_counts.23} parent=0 // loop_pre_header
    _
  $region3: #{meta_counts.23} parent=0 // loop_header
    %s8 = sphi 0, %s12
    %p9 = scmp.ge.s32.totalorder %s8, 4
    %s18 = sphi 0, %s20
    %s21 = sphi 0, %s18
    %s22 = sphi 0, %s21
    %s38 = sphi 0, %s22
    %s44 = sphi 0, %s46
    %s47 = sphi 0, %s44
    %s48 = sphi 0, %s47
    %s64 = sphi 0, %s48
    %s70 = sphi 0, %s72
    %s73 = sphi 0, %s70
    %s74 = sphi 0, %s73
    %s90 = sphi 0, %s74
  $region4: #{meta_counts.23} parent=0 // loop_header_branch
    %11 = sbr.rel (%p9) target = $region8
  $region5: #{meta_counts.23} parent=0 // loop_body
    %s13 = ssub.s32 %s8, 1
    %s14 = ssub.s32 %s8, 2
    %s15 = sadd.s32 %s8, 1
    %s16 = ssub.s32 %s8, %s15
    %p17 = scmp.eq.s32.totalorder %s16, 0
    %s19 = sadd.s32 %s18, 1
    %s20 = scalar_select %p17, %s18, %s19
    %p23 = pneg %p17
    %p24 = scmp.eq.s32.totalorder %s8, 1
    %p25 = por %p23, %p24
    %p26 = scmp.ne.s32.totalorder %s18, %s21
    %p27 = scmp.eq.s32.totalorder %s8, 0
    %p28 = por %p26, %p27
    %p29 = scmp.ne.s32.totalorder %s18, %s21
    %p30 = scmp.eq.s32.totalorder %s13, 1
    %p31 = por %p29, %p30
    %p32 = scmp.ne.s32.totalorder %s21, %s22
    %p33 = scmp.eq.s32.totalorder %s13, 0
    %p34 = por %p32, %p33
    %p35 = scmp.ne.s32.totalorder %s21, %s22
    %p36 = scmp.eq.s32.totalorder %s14, 1
    %p37 = por %p35, %p36
    %p39 = scmp.ne.s32.totalorder %s22, %s38
    %p40 = scmp.eq.s32.totalorder %s14, 0
    %p41 = por %p39, %p40
    %s42 = ssub.s32 %s8, %s15
    %p43 = scmp.eq.s32.totalorder %s42, 0
    %s45 = sadd.s32 %s44, 1
    %s46 = scalar_select %p43, %s44, %s45
    %p49 = pneg %p43
    %p50 = scmp.eq.s32.totalorder %s8, 1
    %p51 = por %p49, %p50
    %p52 = scmp.ne.s32.totalorder %s44, %s47
    %p53 = scmp.eq.s32.totalorder %s8, 0
    %p54 = por %p52, %p53
    %p55 = scmp.ne.s32.totalorder %s44, %s47
    %p56 = scmp.eq.s32.totalorder %s13, 1
    %p57 = por %p55, %p56
    %p58 = scmp.ne.s32.totalorder %s47, %s48
    %p59 = scmp.eq.s32.totalorder %s13, 0
    %p60 = por %p58, %p59
    %p61 = scmp.ne.s32.totalorder %s47, %s48
    %p62 = scmp.eq.s32.totalorder %s14, 1
    %p63 = por %p61, %p62
    %p65 = scmp.ne.s32.totalorder %s48, %s64
    %p66 = scmp.eq.s32.totalorder %s14, 0
    %p67 = por %p65, %p66
    %s68 = ssub.s32 %s8, %s15
    %p69 = scmp.eq.s32.totalorder %s68, 0
    %s71 = sadd.s32 %s70, 1
    %s72 = scalar_select %p69, %s70, %s71
    %p75 = pneg %p69
    %p76 = scmp.eq.s32.totalorder %s8, 1
    %p77 = por %p75, %p76
    %p78 = scmp.ne.s32.totalorder %s70, %s73
    %p79 = scmp.eq.s32.totalorder %s8, 0
    %p80 = por %p78, %p79
    %p81 = scmp.ne.s32.totalorder %s70, %s73
    %p82 = scmp.eq.s32.totalorder %s13, 1
    %p83 = por %p81, %p82
    %p84 = scmp.ne.s32.totalorder %s73, %s74
    %p85 = scmp.eq.s32.totalorder %s13, 0
    %p86 = por %p84, %p85
    %p87 = scmp.ne.s32.totalorder %s73, %s74
    %p88 = scmp.eq.s32.totalorder %s14, 1
    %p89 = por %p87, %p88
    %p91 = scmp.ne.s32.totalorder %s74, %s90
    %p92 = scmp.eq.s32.totalorder %s14, 0
    %p93 = por %p91, %p92
    %p94 = scmp.le.s32.totalorder 1, %s8
    %p95 = scmp.lt.s32.totalorder %s8, 3
    %p96 = pnand %p94, %p95
    %p97 = pneg %p96
    // Predicated region
    $region9: #{meta_counts.23} parent=5 // pred_check
      _
    $region10: #{meta_counts.23} parent=5 // pred_check_branch
      %99 = sbr.rel (%p96) target = $region12
    $region11: #{meta_counts.23} parent=5 // pred_region
      %s100 = ssub.s32 %s8, 1
    $region12: #{meta_counts.23} parent=5 // pred_fallthru
      _
    %p101 = scmp.lt.s32.totalorder %s8, 2
    // Predicated region
    $region13: #{meta_counts.23} parent=5 // pred_check
      %p102 = pneg %p101
    $region14: #{meta_counts.23} parent=5 // pred_check_branch
      %104 = sbr.rel (%p102) target = $region16
    $region15: #{meta_counts.23} parent=5 // pred_region
      // Predicated region
      $region17: #{meta_counts.23} parent=15 // pred_check
        %p105 = pneg %p28
      $region18: #{meta_counts.23} parent=15 // pred_check_branch
        %107 = sbr.rel (%p105) target = $region20
      $region19: #{meta_counts.23} parent=15 // pred_region
        %p108 = scmp.lt.s32.totalorder %s8, 1
        %s109 = scalar_select %p108, %s8, 1
        %s110 = smul.addr %s109, 16
        %s111 = smul.addr %s110, 4
        %s112 = scalar_lea.vmem %s0, %s111
      $region20: #{meta_counts.23} parent=15 // pred_fallthru
        _
      // Predicated region
      $region21: #{meta_counts.23} parent=15 // pred_check
        %p113 = pneg %p54
      $region22: #{meta_counts.23} parent=15 // pred_check_branch
        %115 = sbr.rel (%p113) target = $region24
      $region23: #{meta_counts.23} parent=15 // pred_region
        %p116 = scmp.lt.s32.totalorder %s8, 1
        %s117 = scalar_select %p116, %s8, 1
        %s118 = smul.addr %s117, 16
        %s119 = smul.addr %s118, 4
        %s120 = scalar_lea.vmem %s1, %s119
      $region24: #{meta_counts.23} parent=15 // pred_fallthru
        _
    $region16: #{meta_counts.23} parent=5 // pred_fallthru
      _
    %p121 = scmp.le.s32.totalorder 1, %s8
    %p122 = scmp.lt.s32.totalorder %s8, 3
    %p123 = pnand %p121, %p122
    %p124 = pneg %p123
    // Predicated region
    $region25: #{meta_counts.23} parent=5 // pred_check
      _
    $region26: #{meta_counts.23} parent=5 // pred_check_branch
      %126 = sbr.rel (%p123) target = $region28
    $region27: #{meta_counts.23} parent=5 // pred_region
      %s127 = ssub.s32 %s8, 1
      %p128 = scmp.lt.s32.totalorder %s13, 1
      %s129 = scalar_select %p128, %s13, 1
      %s130 = smul.addr %s129, 16
      %s131 = smul.addr %s130, 4
      %s132 = scalar_lea.vmem %s0, %s131
      %p133 = pneg %p34
      %p134 = pneg %p31
      %p135 = scmp.lt.s32.totalorder %s13, 1
      %s136 = scalar_select %p135, %s13, 1
      %s137 = smul.addr %s136, 16
      %s138 = smul.addr %s137, 4
      %s139 = scalar_lea.vmem %s1, %s138
      %p140 = pneg %p60
      %p141 = pneg %p57
      %p142 = pneg %p86
      %p143 = pneg %p83
      %p144 = scmp.lt.s32.totalorder %s13, 1
      %s145 = scalar_select %p144, %s13, 1
      %s146 = smul.addr %s145, 16
      %s147 = smul.addr %s146, 8
      %s148 = scalar_lea.vmem %s2, %s147
      %p149 = scmp.lt.s32.totalorder %s13, 1
      %s150 = scalar_select %p149, %s13, 1
      %s151 = smul.addr %s150, 16
      %s152 = smul.addr %s151, 4
      %s153 = scalar_lea.vmem %s0, %s152
      %p154 = scmp.lt.s32.totalorder %s13, 1
      %s155 = scalar_select %p154, %s13, 1
      %s156 = smul.addr %s155, 16
      %s157 = smul.addr %s156, 4
      %s158 = scalar_lea.vmem %s1, %s157
      %p159 = scmp.lt.s32.totalorder %s13, 1
      %s160 = scalar_select %p159, %s13, 1
      %s161 = smul.addr %s160, 16
      %s162 = smul.addr %s161, 8
      %s163 = scalar_lea.vmem %s2, %s162
      %v165 = vld [vmem:[%s153] sm:$0xf]
      %v166 = vld [vmem:[%s153 + $0x4] sm:$0xf]
      %v167 = vld [vmem:[%s153 + $0x8] sm:$0xf]
      %v168 = vld [vmem:[%s153 + $0xc] sm:$0xf]
      %v169 = vld [vmem:[%s153 + $0x10] sm:$0xf]
      %v170 = vld [vmem:[%s153 + $0x14] sm:$0xf]
      %v171 = vld [vmem:[%s153 + $0x18] sm:$0xf]
      %v172 = vld [vmem:[%s153 + $0x1c] sm:$0xf]
      %v173 = vld [vmem:[%s153 + $0x20] sm:$0xf]
      %v174 = vld [vmem:[%s153 + $0x24] sm:$0xf]
      %v175 = vld [vmem:[%s153 + $0x28] sm:$0xf]
      %v176 = vld [vmem:[%s153 + $0x2c] sm:$0xf]
      %v177 = vld [vmem:[%s153 + $0x30] sm:$0xf]
      %v178 = vld [vmem:[%s153 + $0x34] sm:$0xf]
      %v179 = vld [vmem:[%s153 + $0x38] sm:$0xf]
      %v180 = vld [vmem:[%s153 + $0x3c] sm:$0xf]
      %v181 = vld [vmem:[%s158] sm:$0xf]
      %v182 = vld [vmem:[%s158 + $0x4] sm:$0xf]
      %v183 = vld [vmem:[%s158 + $0x8] sm:$0xf]
      %v184 = vld [vmem:[%s158 + $0xc] sm:$0xf]
      %v185 = vld [vmem:[%s158 + $0x10] sm:$0xf]
      %v186 = vld [vmem:[%s158 + $0x14] sm:$0xf]
      %v187 = vld [vmem:[%s158 + $0x18] sm:$0xf]
      %v188 = vld [vmem:[%s158 + $0x1c] sm:$0xf]
      %v189 = vld [vmem:[%s158 + $0x20] sm:$0xf]
      %v190 = vld [vmem:[%s158 + $0x24] sm:$0xf]
      %v191 = vld [vmem:[%s158 + $0x28] sm:$0xf]
      %v192 = vld [vmem:[%s158 + $0x2c] sm:$0xf]
      %v193 = vld [vmem:[%s158 + $0x30] sm:$0xf]
      %v194 = vld [vmem:[%s158 + $0x34] sm:$0xf]
      %v195 = vld [vmem:[%s158 + $0x38] sm:$0xf]
      %v196 = vld [vmem:[%s158 + $0x3c] sm:$0xf]
      %v213 = vunpack.c.l.b16 %v165
      %v214 = vunpack.c.l.b16 %v166
      %v215 = vunpack.c.l.b16 %v167
      %v216 = vunpack.c.l.b16 %v168
      %v217 = vunpack.c.l.b16 %v169
      %v218 = vunpack.c.l.b16 %v170
      %v219 = vunpack.c.l.b16 %v171
      %v220 = vunpack.c.l.b16 %v172
      %v221 = vunpack.c.l.b16 %v173
      %v222 = vunpack.c.l.b16 %v174
      %v223 = vunpack.c.l.b16 %v175
      %v224 = vunpack.c.l.b16 %v176
      %v225 = vunpack.c.l.b16 %v177
      %v226 = vunpack.c.l.b16 %v178
      %v227 = vunpack.c.l.b16 %v179
      %v228 = vunpack.c.l.b16 %v180
      %v229 = vpack.c.b16 %v214, %v213
      %v230 = vpack.c.b16 %v216, %v215
      %v231 = vpack.c.b16 %v218, %v217
      %v232 = vpack.c.b16 %v220, %v219
      %v233 = vpack.c.b16 %v222, %v221
      %v234 = vpack.c.b16 %v224, %v223
      %v235 = vpack.c.b16 %v226, %v225
      %v236 = vpack.c.b16 %v228, %v227
      %v261 = vunpack.c.l.b16 %v181
      %v262 = vunpack.c.l.b16 %v182
      %v263 = vunpack.c.l.b16 %v183
      %v264 = vunpack.c.l.b16 %v184
      %v265 = vunpack.c.l.b16 %v185
      %v266 = vunpack.c.l.b16 %v186
      %v267 = vunpack.c.l.b16 %v187
      %v268 = vunpack.c.l.b16 %v188
      %v269 = vunpack.c.l.b16 %v189
      %v270 = vunpack.c.l.b16 %v190
      %v271 = vunpack.c.l.b16 %v191
      %v272 = vunpack.c.l.b16 %v192
      %v273 = vunpack.c.l.b16 %v193
      %v274 = vunpack.c.l.b16 %v194
      %v275 = vunpack.c.l.b16 %v195
      %v276 = vunpack.c.l.b16 %v196
      %v277 = vpack.c.b16 %v262, %v261
      %v278 = vpack.c.b16 %v264, %v263
      %v279 = vpack.c.b16 %v266, %v265
      %v280 = vpack.c.b16 %v268, %v267
      %v281 = vpack.c.b16 %v270, %v269
      %v282 = vpack.c.b16 %v272, %v271
      %v283 = vpack.c.b16 %v274, %v273
      %v284 = vpack.c.b16 %v276, %v275
      %293 = vmatprep.subr.bf16.mxu0 0
      %294 = vmatpush1.bf16.msra.mxu0 %v277
      %295 = vmatprep.subr.bf16.mxu0 0
      %296 = vmatpush1.bf16.msra.mxu0 %v278
      %297 = vmatprep.subr.bf16.mxu0 0
      %298 = vmatpush1.bf16.msra.mxu0 %v279
      %299 = vmatprep.subr.bf16.mxu0 0
      %300 = vmatpush1.bf16.msra.mxu0 %v280
      %301 = vmatprep.subr.bf16.mxu0 0
      %302 = vmatpush1.bf16.msra.mxu0 %v281
      %303 = vmatprep.subr.bf16.mxu0 0
      %304 = vmatpush1.bf16.msra.mxu0 %v282
      %305 = vmatprep.subr.bf16.mxu0 0
      %306 = vmatpush1.bf16.msra.mxu0 %v283
      %307 = vmatprep.subr.bf16.mxu0 0
      %308 = vmatpush1.bf16.msra.mxu0 %v284
      %309 = vmatprep.subr.bf16.mxu0 0
      %310 = vmatpush1.bf16.msra.mxu0 0
      %311 = vmatprep.subr.bf16.mxu0 0
      %312 = vmatpush1.bf16.msra.mxu0 0
      %313 = vmatprep.subr.bf16.mxu0 0
      %314 = vmatpush1.bf16.msra.mxu0 0
      %315 = vmatprep.subr.bf16.mxu0 0
      %316 = vmatpush1.bf16.msra.mxu0 0
      %317 = vmatprep.subr.bf16.mxu0 0
      %318 = vmatpush1.bf16.msra.mxu0 0
      %319 = vmatprep.subr.bf16.mxu0 0
      %320 = vmatpush1.bf16.msra.mxu0 0
      %321 = vmatprep.subr.bf16.mxu0 0
      %322 = vmatpush1.bf16.msra.mxu0 0
      %323 = vmatprep.subr.bf16.mxu0 0
      %324 = vmatpush1.bf16.msra.mxu0 0
      %325 = vmatprep.mubr.bf16.mxu0 0
      %326 = vmatmul.mubr.bf16.gmra.mrb[0].mxu0 %v229
      %v327 = vpop.f32.mrb[0].mxu0
      %v328 = vadd.f32 0.0, %v327
      %v329 = vpop.f32.mrb[0].mxu0
      %v330 = vpop.f32.mrb[0].mxu0
      %v331 = vadd.f32 0.0, %v330
      %v332 = vpop.f32.mrb[0].mxu0
      %333 = vmatprep.mubr.bf16.mxu0 0
      %334 = vmatmul.mubr.bf16.gmra.mrb[0].mxu0 %v230
      %v335 = vpop.f32.mrb[0].mxu0
      %v336 = vadd.f32 0.0, %v335
      %v337 = vpop.f32.mrb[0].mxu0
      %v338 = vpop.f32.mrb[0].mxu0
      %v339 = vadd.f32 0.0, %v338
      %v340 = vpop.f32.mrb[0].mxu0
      %341 = vmatprep.mubr.bf16.mxu0 0
      %342 = vmatmul.mubr.bf16.gmra.mrb[0].mxu0 %v231
      %v343 = vpop.f32.mrb[0].mxu0
      %v344 = vadd.f32 0.0, %v343
      %v345 = vpop.f32.mrb[0].mxu0
      %v346 = vpop.f32.mrb[0].mxu0
      %v347 = vadd.f32 0.0, %v346
      %v348 = vpop.f32.mrb[0].mxu0
      %349 = vmatprep.mubr.bf16.mxu0 0
      %350 = vmatmul.mubr.bf16.gmra.mrb[0].mxu0 %v232
      %v351 = vpop.f32.mrb[0].mxu0
      %v352 = vadd.f32 0.0, %v351
      %v353 = vpop.f32.mrb[0].mxu0
      %v354 = vpop.f32.mrb[0].mxu0
      %v355 = vadd.f32 0.0, %v354
      %v356 = vpop.f32.mrb[0].mxu0
      %357 = vmatprep.mubr.bf16.mxu0 0
      %358 = vmatmul.mubr.bf16.gmra.mrb[0].mxu0 %v233
      %v359 = vpop.f32.mrb[0].mxu0
      %v360 = vadd.f32 0.0, %v359
      %v361 = vpop.f32.mrb[0].mxu0
      %v362 = vpop.f32.mrb[0].mxu0
      %v363 = vadd.f32 0.0, %v362
      %v364 = vpop.f32.mrb[0].mxu0
      %365 = vmatprep.mubr.bf16.mxu0 0
      %366 = vmatmul.mubr.bf16.gmra.mrb[0].mxu0 %v234
      %v367 = vpop.f32.mrb[0].mxu0
      %v368 = vadd.f32 0.0, %v367
      %v369 = vpop.f32.mrb[0].mxu0
      %v370 = vpop.f32.mrb[0].mxu0
      %v371 = vadd.f32 0.0, %v370
      %v372 = vpop.f32.mrb[0].mxu0
      %373 = vmatprep.mubr.bf16.mxu0 0
      %374 = vmatmul.mubr.bf16.gmra.mrb[0].mxu0 %v235
      %v375 = vpop.f32.mrb[0].mxu0
      %v376 = vadd.f32 0.0, %v375
      %v377 = vpop.f32.mrb[0].mxu0
      %v378 = vpop.f32.mrb[0].mxu0
      %v379 = vadd.f32 0.0, %v378
      %v380 = vpop.f32.mrb[0].mxu0
      %381 = vmatprep.mubr.bf16.mxu0 0
      %382 = vmatmul.mubr.bf16.gmra.mrb[0].mxu0 %v236
      %v383 = vpop.f32.mrb[0].mxu0
      %v384 = vadd.f32 0.0, %v383
      %v385 = vpop.f32.mrb[0].mxu0
      %v386 = vpop.f32.mrb[0].mxu0
      %v387 = vadd.f32 0.0, %v386
      %v388 = vpop.f32.mrb[0].mxu0
      %389 = vdwg.mxu0
      %390 = vst [vmem:[%s163] sm:$0xff] %v328
      %391 = vst [vmem:[%s163 + $0x8] sm:$0xff] %v331
      %392 = vst [vmem:[%s163 + $0x10] sm:$0xff] %v336
      %393 = vst [vmem:[%s163 + $0x18] sm:$0xff] %v339
      %394 = vst [vmem:[%s163 + $0x20] sm:$0xff] %v344
      %395 = vst [vmem:[%s163 + $0x28] sm:$0xff] %v347
      %396 = vst [vmem:[%s163 + $0x30] sm:$0xff] %v352
      %397 = vst [vmem:[%s163 + $0x38] sm:$0xff] %v355
      %398 = vst [vmem:[%s163 + $0x40] sm:$0xff] %v360
      %399 = vst [vmem:[%s163 + $0x48] sm:$0xff] %v363
      %400 = vst [vmem:[%s163 + $0x50] sm:$0xff] %v368
      %401 = vst [vmem:[%s163 + $0x58] sm:$0xff] %v371
      %402 = vst [vmem:[%s163 + $0x60] sm:$0xff] %v376
      %403 = vst [vmem:[%s163 + $0x68] sm:$0xff] %v379
      %404 = vst [vmem:[%s163 + $0x70] sm:$0xff] %v384
      %405 = vst [vmem:[%s163 + $0x78] sm:$0xff] %v387
      %p406 = scmp.lt.s32.totalorder %s13, 1
      %s407 = scalar_select %p406, %s13, 1
      %s408 = smul.addr %s407, 16
      %s409 = smul.addr %s408, 8
      %s410 = scalar_lea.vmem %s2, %s409
      // Predicated region
      $region29: #{meta_counts.23} parent=27 // pred_check
        %p411 = pneg %p83
      $region30: #{meta_counts.23} parent=27 // pred_check_branch
        %413 = sbr.rel (%p411) target = $region32
      $region31: #{meta_counts.23} parent=27 // pred_region
        _
      $region32: #{meta_counts.23} parent=27 // pred_fallthru
        _
    $region28: #{meta_counts.23} parent=5 // pred_fallthru
      _
    %p414 = scmp.le.s32.totalorder 2, %s8
    // Predicated region
    $region33: #{meta_counts.23} parent=5 // pred_check
      %p415 = pneg %p414
    $region34: #{meta_counts.23} parent=5 // pred_check_branch
      %417 = sbr.rel (%p415) target = $region36
    $region35: #{meta_counts.23} parent=5 // pred_region
      %s418 = ssub.s32 %s8, 2
      // Predicated region
      $region37: #{meta_counts.23} parent=35 // pred_check
        %p419 = pneg %p89
      $region38: #{meta_counts.23} parent=35 // pred_check_branch
        %421 = sbr.rel (%p419) target = $region40
      $region39: #{meta_counts.23} parent=35 // pred_region
        %p422 = scmp.lt.s32.totalorder %s14, 1
        %s423 = scalar_select %p422, %s14, 1
        %s424 = smul.addr %s423, 16
        %s425 = smul.addr %s424, 8
        %s426 = scalar_lea.vmem %s2, %s425
      $region40: #{meta_counts.23} parent=35 // pred_fallthru
        _
    $region36: #{meta_counts.23} parent=5 // pred_fallthru
      _
  $region6: #{meta_counts.23} parent=0 // loop_footer
    %s12 = sadd.s32 1, %s8
  $region7: #{meta_counts.23} parent=0 // loop_footer_branch
    %7 = sbr.rel target = $region3
  $region8: #{meta_counts.23} parent=0 // loop_exit
    _

// kernel: meta_counts.25
$region0: #{meta_counts.25}
  #allocation0 [shape = 'u32[]', space=smem, size = 0x4, offset = 0x4, fixed_abs, tag = 'smem constant byte address 0x4 - core index']
  #allocation1 [shape = 'u32[144,128]{1,0:T(1,128)}', space=vmem, size = 0x12000, scoped, tag = 'internal scratch']
  %s0 = inlined_call_operand.vmem [shape: bf16[2,128,128], index: 0, kind: input, shape index: {}]
  %s1 = inlined_call_operand.vmem [shape: bf16[2,128,128], index: 1, kind: input, shape index: {}]
  %s2 = inlined_call_operand.vmem [shape: f32[2,128,128], index: 2, kind: output, shape index: {}]
  %s3 = sld [smem:[#allocation0]]
  $region41: #{meta_counts.25} parent=0
    _
  %s5 = ssub.s32 1, %s3
  %s6 = scalar_select 0, %s5, %s3
  loop: start=0, step=1, limit=4
  $region2: #{meta_counts.25} parent=0 // loop_pre_header
    _
  $region3: #{meta_counts.25} parent=0 // loop_header
    %s8 = sphi 0, %s12
    %p9 = scmp.ge.s32.totalorder %s8, 4
    %s18 = sphi 0, %s20
    %s21 = sphi 0, %s18
    %s22 = sphi 0, %s21
    %s38 = sphi 0, %s22
    %s44 = sphi 0, %s46
    %s47 = sphi 0, %s44
    %s48 = sphi 0, %s47
    %s64 = sphi 0, %s48
    %s70 = sphi 0, %s72
    %s73 = sphi 0, %s70
    %s74 = sphi 0, %s73
    %s90 = sphi 0, %s74
  $region4: #{meta_counts.25} parent=0 // loop_header_branch
    %11 = sbr.rel (%p9) target = $region8
  $region5: #{meta_counts.25} parent=0 // loop_body
    %s13 = ssub.s32 %s8, 1
    %s14 = ssub.s32 %s8, 2
    %s15 = sadd.s32 %s8, 1
    %s16 = ssub.s32 %s8, %s15
    %p17 = scmp.eq.s32.totalorder %s16, 0
    %s19 = sadd.s32 %s18, 1
    %s20 = scalar_select %p17, %s18, %s19
    %p23 = pneg %p17
    %p24 = scmp.eq.s32.totalorder %s8, 1
    %p25 = por %p23, %p24
    %p26 = scmp.ne.s32.totalorder %s18, %s21
    %p27 = scmp.eq.s32.totalorder %s8, 0
    %p28 = por %p26, %p27
    %p29 = scmp.ne.s32.totalorder %s18, %s21
    %p30 = scmp.eq.s32.totalorder %s13, 1
    %p31 = por %p29, %p30
    %p32 = scmp.ne.s32.totalorder %s21, %s22
    %p33 = scmp.eq.s32.totalorder %s13, 0
    %p34 = por %p32, %p33
    %p35 = scmp.ne.s32.totalorder %s21, %s22
    %p36 = scmp.eq.s32.totalorder %s14, 1
    %p37 = por %p35, %p36
    %p39 = scmp.ne.s32.totalorder %s22, %s38
    %p40 = scmp.eq.s32.totalorder %s14, 0
    %p41 = por %p39, %p40
    %s42 = ssub.s32 %s8, %s15
    %p43 = scmp.eq.s32.totalorder %s42, 0
    %s45 = sadd.s32 %s44, 1
    %s46 = scalar_select %p43, %s44, %s45
    %p49 = pneg %p43
    %p50 = scmp.eq.s32.totalorder %s8, 1
    %p51 = por %p49, %p50
    %p52 = scmp.ne.s32.totalorder %s44, %s47
    %p53 = scmp.eq.s32.totalorder %s8, 0
    %p54 = por %p52, %p53
    %p55 = scmp.ne.s32.totalorder %s44, %s47
    %p56 = scmp.eq.s32.totalorder %s13, 1
    %p57 = por %p55, %p56
    %p58 = scmp.ne.s32.totalorder %s47, %s48
    %p59 = scmp.eq.s32.totalorder %s13, 0
    %p60 = por %p58, %p59
    %p61 = scmp.ne.s32.totalorder %s47, %s48
    %p62 = scmp.eq.s32.totalorder %s14, 1
    %p63 = por %p61, %p62
    %p65 = scmp.ne.s32.totalorder %s48, %s64
    %p66 = scmp.eq.s32.totalorder %s14, 0
    %p67 = por %p65, %p66
    %s68 = ssub.s32 %s8, %s15
    %p69 = scmp.eq.s32.totalorder %s68, 0
    %s71 = sadd.s32 %s70, 1
    %s72 = scalar_select %p69, %s70, %s71
    %p75 = pneg %p69
    %p76 = scmp.eq.s32.totalorder %s8, 1
    %p77 = por %p75, %p76
    %p78 = scmp.ne.s32.totalorder %s70, %s73
    %p79 = scmp.eq.s32.totalorder %s8, 0
    %p80 = por %p78, %p79
    %p81 = scmp.ne.s32.totalorder %s70, %s73
    %p82 = scmp.eq.s32.totalorder %s13, 1
    %p83 = por %p81, %p82
    %p84 = scmp.ne.s32.totalorder %s73, %s74
    %p85 = scmp.eq.s32.totalorder %s13, 0
    %p86 = por %p84, %p85
    %p87 = scmp.ne.s32.totalorder %s73, %s74
    %p88 = scmp.eq.s32.totalorder %s14, 1
    %p89 = por %p87, %p88
    %p91 = scmp.ne.s32.totalorder %s74, %s90
    %p92 = scmp.eq.s32.totalorder %s14, 0
    %p93 = por %p91, %p92
    %p94 = scmp.le.s32.totalorder 1, %s8
    %p95 = scmp.lt.s32.totalorder %s8, 3
    %p96 = pnand %p94, %p95
    %p97 = pneg %p96
    // Predicated region
    $region9: #{meta_counts.25} parent=5 // pred_check
      _
    $region10: #{meta_counts.25} parent=5 // pred_check_branch
      %99 = sbr.rel (%p96) target = $region12
    $region11: #{meta_counts.25} parent=5 // pred_region
      %s100 = ssub.s32 %s8, 1
    $region12: #{meta_counts.25} parent=5 // pred_fallthru
      _
    %p101 = scmp.lt.s32.totalorder %s8, 2
    // Predicated region
    $region13: #{meta_counts.25} parent=5 // pred_check
      %p102 = pneg %p101
    $region14: #{meta_counts.25} parent=5 // pred_check_branch
      %104 = sbr.rel (%p102) target = $region16
    $region15: #{meta_counts.25} parent=5 // pred_region
      // Predicated region
      $region17: #{meta_counts.25} parent=15 // pred_check
        %p105 = pneg %p28
      $region18: #{meta_counts.25} parent=15 // pred_check_branch
        %107 = sbr.rel (%p105) target = $region20
      $region19: #{meta_counts.25} parent=15 // pred_region
        %p108 = scmp.lt.s32.totalorder %s8, 1
        %s109 = scalar_select %p108, %s8, 1
        %s110 = smul.addr %s109, 16
        %s111 = smul.addr %s110, 4
        %s112 = scalar_lea.vmem %s0, %s111
      $region20: #{meta_counts.25} parent=15 // pred_fallthru
        _
      // Predicated region
      $region21: #{meta_counts.25} parent=15 // pred_check
        %p113 = pneg %p54
      $region22: #{meta_counts.25} parent=15 // pred_check_branch
        %115 = sbr.rel (%p113) target = $region24
      $region23: #{meta_counts.25} parent=15 // pred_region
        %p116 = scmp.lt.s32.totalorder %s8, 1
        %s117 = scalar_select %p116, %s8, 1
        %s118 = smul.addr %s117, 16
        %s119 = smul.addr %s118, 4
        %s120 = scalar_lea.vmem %s1, %s119
      $region24: #{meta_counts.25} parent=15 // pred_fallthru
        _
    $region16: #{meta_counts.25} parent=5 // pred_fallthru
      _
    %p121 = scmp.le.s32.totalorder 1, %s8
    %p122 = scmp.lt.s32.totalorder %s8, 3
    %p123 = pnand %p121, %p122
    %p124 = pneg %p123
    // Predicated region
    $region25: #{meta_counts.25} parent=5 // pred_check
      _
    $region26: #{meta_counts.25} parent=5 // pred_check_branch
      %126 = sbr.rel (%p123) target = $region28
    $region27: #{meta_counts.25} parent=5 // pred_region
      %s127 = ssub.s32 %s8, 1
      %p128 = scmp.lt.s32.totalorder %s13, 1
      %s129 = scalar_select %p128, %s13, 1
      %s130 = smul.addr %s129, 16
      %s131 = smul.addr %s130, 4
      %s132 = scalar_lea.vmem %s0, %s131
      %p133 = pneg %p34
      %p134 = pneg %p31
      %p135 = scmp.lt.s32.totalorder %s13, 1
      %s136 = scalar_select %p135, %s13, 1
      %s137 = smul.addr %s136, 16
      %s138 = smul.addr %s137, 4
      %s139 = scalar_lea.vmem %s1, %s138
      %p140 = pneg %p60
      %p141 = pneg %p57
      %p142 = pneg %p86
      %p143 = pneg %p83
      %p144 = scmp.lt.s32.totalorder %s13, 1
      %s145 = scalar_select %p144, %s13, 1
      %s146 = smul.addr %s145, 16
      %s147 = smul.addr %s146, 8
      %s148 = scalar_lea.vmem %s2, %s147
      %p149 = scmp.lt.s32.totalorder %s13, 1
      %s150 = scalar_select %p149, %s13, 1
      %s151 = smul.addr %s150, 16
      %s152 = smul.addr %s151, 4
      %s153 = scalar_lea.vmem %s0, %s152
      %p154 = scmp.lt.s32.totalorder %s13, 1
      %s155 = scalar_select %p154, %s13, 1
      %s156 = smul.addr %s155, 16
      %s157 = smul.addr %s156, 4
      %s158 = scalar_lea.vmem %s1, %s157
      %p159 = scmp.lt.s32.totalorder %s13, 1
      %s160 = scalar_select %p159, %s13, 1
      %s161 = smul.addr %s160, 16
      %s162 = smul.addr %s161, 8
      %s163 = scalar_lea.vmem %s2, %s162
      %v165 = vld [vmem:[%s153] sm:$0xf]
      %v166 = vld [vmem:[%s153 + $0x4] sm:$0xf]
      %v167 = vld [vmem:[%s153 + $0x8] sm:$0xf]
      %v168 = vld [vmem:[%s153 + $0xc] sm:$0xf]
      %v169 = vld [vmem:[%s153 + $0x10] sm:$0xf]
      %v170 = vld [vmem:[%s153 + $0x14] sm:$0xf]
      %v171 = vld [vmem:[%s153 + $0x18] sm:$0xf]
      %v172 = vld [vmem:[%s153 + $0x1c] sm:$0xf]
      %v173 = vld [vmem:[%s153 + $0x20] sm:$0xf]
      %v174 = vld [vmem:[%s153 + $0x24] sm:$0xf]
      %v175 = vld [vmem:[%s153 + $0x28] sm:$0xf]
      %v176 = vld [vmem:[%s153 + $0x2c] sm:$0xf]
      %v177 = vld [vmem:[%s153 + $0x30] sm:$0xf]
      %v178 = vld [vmem:[%s153 + $0x34] sm:$0xf]
      %v179 = vld [vmem:[%s153 + $0x38] sm:$0xf]
      %v180 = vld [vmem:[%s153 + $0x3c] sm:$0xf]
      %v181 = vld [vmem:[%s158] sm:$0xf]
      %v182 = vld [vmem:[%s158 + $0x4] sm:$0xf]
      %v183 = vld [vmem:[%s158 + $0x8] sm:$0xf]
      %v184 = vld [vmem:[%s158 + $0xc] sm:$0xf]
      %v185 = vld [vmem:[%s158 + $0x10] sm:$0xf]
      %v186 = vld [vmem:[%s158 + $0x14] sm:$0xf]
      %v187 = vld [vmem:[%s158 + $0x18] sm:$0xf]
      %v188 = vld [vmem:[%s158 + $0x1c] sm:$0xf]
      %v189 = vld [vmem:[%s158 + $0x20] sm:$0xf]
      %v190 = vld [vmem:[%s158 + $0x24] sm:$0xf]
      %v191 = vld [vmem:[%s158 + $0x28] sm:$0xf]
      %v192 = vld [vmem:[%s158 + $0x2c] sm:$0xf]
      %v193 = vld [vmem:[%s158 + $0x30] sm:$0xf]
      %v194 = vld [vmem:[%s158 + $0x34] sm:$0xf]
      %v195 = vld [vmem:[%s158 + $0x38] sm:$0xf]
      %v196 = vld [vmem:[%s158 + $0x3c] sm:$0xf]
      %v213 = vunpack.c.l.b16 %v165
      %v214 = vunpack.c.l.b16 %v166
      %v215 = vunpack.c.l.b16 %v167
      %v216 = vunpack.c.l.b16 %v168
      %v217 = vunpack.c.l.b16 %v169
      %v218 = vunpack.c.l.b16 %v170
      %v219 = vunpack.c.l.b16 %v171
      %v220 = vunpack.c.l.b16 %v172
      %v221 = vunpack.c.l.b16 %v173
      %v222 = vunpack.c.l.b16 %v174
      %v223 = vunpack.c.l.b16 %v175
      %v224 = vunpack.c.l.b16 %v176
      %v225 = vunpack.c.l.b16 %v177
      %v226 = vunpack.c.l.b16 %v178
      %v227 = vunpack.c.l.b16 %v179
      %v228 = vunpack.c.l.b16 %v180
      %v229 = vpack.c.b16 %v214, %v213
      %v230 = vpack.c.b16 %v216, %v215
      %v231 = vpack.c.b16 %v218, %v217
      %v232 = vpack.c.b16 %v220, %v219
      %v233 = vpack.c.b16 %v222, %v221
      %v234 = vpack.c.b16 %v224, %v223
      %v235 = vpack.c.b16 %v226, %v225
      %v236 = vpack.c.b16 %v228, %v227
      %v261 = vunpack.c.l.b16 %v181
      %v262 = vunpack.c.l.b16 %v182
      %v263 = vunpack.c.l.b16 %v183
      %v264 = vunpack.c.l.b16 %v184
      %v265 = vunpack.c.l.b16 %v185
      %v266 = vunpack.c.l.b16 %v186
      %v267 = vunpack.c.l.b16 %v187
      %v268 = vunpack.c.l.b16 %v188
      %v269 = vunpack.c.l.b16 %v189
      %v270 = vunpack.c.l.b16 %v190
      %v271 = vunpack.c.l.b16 %v191
      %v272 = vunpack.c.l.b16 %v192
      %v273 = vunpack.c.l.b16 %v193
      %v274 = vunpack.c.l.b16 %v194
      %v275 = vunpack.c.l.b16 %v195
      %v276 = vunpack.c.l.b16 %v196
      %v277 = vpack.c.b16 %v262, %v261
      %v278 = vpack.c.b16 %v264, %v263
      %v279 = vpack.c.b16 %v266, %v265
      %v280 = vpack.c.b16 %v268, %v267
      %v281 = vpack.c.b16 %v270, %v269
      %v282 = vpack.c.b16 %v272, %v271
      %v283 = vpack.c.b16 %v274, %v273
      %v284 = vpack.c.b16 %v276, %v275
      %293 = vmatprep.subr.bf16.mxu0 0
      %294 = vmatpush1.bf16.xpose.msra.mxu0 %v277
      %295 = vmatprep.subr.bf16.mxu0 0
      %296 = vmatpush1.bf16.xpose.msra.mxu0 %v278
      %297 = vmatprep.subr.bf16.mxu0 0
      %298 = vmatpush1.bf16.xpose.msra.mxu0 %v279
      %299 = vmatprep.subr.bf16.mxu0 0
      %300 = vmatpush1.bf16.xpose.msra.mxu0 %v280
      %301 = vmatprep.subr.bf16.mxu0 0
      %302 = vmatpush1.bf16.xpose.msra.mxu0 %v281
      %303 = vmatprep.subr.bf16.mxu0 0
      %304 = vmatpush1.bf16.xpose.msra.mxu0 %v282
      %305 = vmatprep.subr.bf16.mxu0 0
      %306 = vmatpush1.bf16.xpose.msra.mxu0 %v283
      %307 = vmatprep.subr.bf16.mxu0 0
      %308 = vmatpush1.bf16.xpose.msra.mxu0 %v284
      %309 = vmatprep.subr.bf16.mxu0 0
      %310 = vmatpush1.bf16.xpose.msra.mxu0 0
      %311 = vmatprep.subr.bf16.mxu0 0
      %312 = vmatpush1.bf16.xpose.msra.mxu0 0
      %313 = vmatprep.subr.bf16.mxu0 0
      %314 = vmatpush1.bf16.xpose.msra.mxu0 0
      %315 = vmatprep.subr.bf16.mxu0 0
      %316 = vmatpush1.bf16.xpose.msra.mxu0 0
      %317 = vmatprep.subr.bf16.mxu0 0
      %318 = vmatpush1.bf16.xpose.msra.mxu0 0
      %319 = vmatprep.subr.bf16.mxu0 0
      %320 = vmatpush1.bf16.xpose.msra.mxu0 0
      %321 = vmatprep.subr.bf16.mxu0 0
      %322 = vmatpush1.bf16.xpose.msra.mxu0 0
      %323 = vmatprep.subr.bf16.mxu0 0
      %324 = vmatpush1.bf16.xpose.msra.mxu0 0
      %325 = vmatprep.mubr.bf16.mxu0 0
      %326 = vmatmul.mubr.bf16.gmra.mrb[0].mxu0 %v229
      %v327 = vpop.f32.mrb[0].mxu0
      %v328 = vadd.f32 0.0, %v327
      %v329 = vpop.f32.mrb[0].mxu0
      %v330 = vpop.f32.mrb[0].mxu0
      %v331 = vadd.f32 0.0, %v330
      %v332 = vpop.f32.mrb[0].mxu0
      %333 = vmatprep.mubr.bf16.mxu0 0
      %334 = vmatmul.mubr.bf16.gmra.mrb[0].mxu0 %v230
      %v335 = vpop.f32.mrb[0].mxu0
      %v336 = vadd.f32 0.0, %v335
      %v337 = vpop.f32.mrb[0].mxu0
      %v338 = vpop.f32.mrb[0].mxu0
      %v339 = vadd.f32 0.0, %v338
      %v340 = vpop.f32.mrb[0].mxu0
      %341 = vmatprep.mubr.bf16.mxu0 0
      %342 = vmatmul.mubr.bf16.gmra.mrb[0].mxu0 %v231
      %v343 = vpop.f32.mrb[0].mxu0
      %v344 = vadd.f32 0.0, %v343
      %v345 = vpop.f32.mrb[0].mxu0
      %v346 = vpop.f32.mrb[0].mxu0
      %v347 = vadd.f32 0.0, %v346
      %v348 = vpop.f32.mrb[0].mxu0
      %349 = vmatprep.mubr.bf16.mxu0 0
      %350 = vmatmul.mubr.bf16.gmra.mrb[0].mxu0 %v232
      %v351 = vpop.f32.mrb[0].mxu0
      %v352 = vadd.f32 0.0, %v351
      %v353 = vpop.f32.mrb[0].mxu0
      %v354 = vpop.f32.mrb[0].mxu0
      %v355 = vadd.f32 0.0, %v354
      %v356 = vpop.f32.mrb[0].mxu0
      %357 = vmatprep.mubr.bf16.mxu0 0
      %358 = vmatmul.mubr.bf16.gmra.mrb[0].mxu0 %v233
      %v359 = vpop.f32.mrb[0].mxu0
      %v360 = vadd.f32 0.0, %v359
      %v361 = vpop.f32.mrb[0].mxu0
      %v362 = vpop.f32.mrb[0].mxu0
      %v363 = vadd.f32 0.0, %v362
      %v364 = vpop.f32.mrb[0].mxu0
      %365 = vmatprep.mubr.bf16.mxu0 0
      %366 = vmatmul.mubr.bf16.gmra.mrb[0].mxu0 %v234
      %v367 = vpop.f32.mrb[0].mxu0
      %v368 = vadd.f32 0.0, %v367
      %v369 = vpop.f32.mrb[0].mxu0
      %v370 = vpop.f32.mrb[0].mxu0
      %v371 = vadd.f32 0.0, %v370
      %v372 = vpop.f32.mrb[0].mxu0
      %373 = vmatprep.mubr.bf16.mxu0 0
      %374 = vmatmul.mubr.bf16.gmra.mrb[0].mxu0 %v235
      %v375 = vpop.f32.mrb[0].mxu0
      %v376 = vadd.f32 0.0, %v375
      %v377 = vpop.f32.mrb[0].mxu0
      %v378 = vpop.f32.mrb[0].mxu0
      %v379 = vadd.f32 0.0, %v378
      %v380 = vpop.f32.mrb[0].mxu0
      %381 = vmatprep.mubr.bf16.mxu0 0
      %382 = vmatmul.mubr.bf16.gmra.mrb[0].mxu0 %v236
      %v383 = vpop.f32.mrb[0].mxu0
      %v384 = vadd.f32 0.0, %v383
      %v385 = vpop.f32.mrb[0].mxu0
      %v386 = vpop.f32.mrb[0].mxu0
      %v387 = vadd.f32 0.0, %v386
      %v388 = vpop.f32.mrb[0].mxu0
      %389 = vdwg.mxu0
      %390 = vst [vmem:[%s163] sm:$0xff] %v328
      %391 = vst [vmem:[%s163 + $0x8] sm:$0xff] %v331
      %392 = vst [vmem:[%s163 + $0x10] sm:$0xff] %v336
      %393 = vst [vmem:[%s163 + $0x18] sm:$0xff] %v339
      %394 = vst [vmem:[%s163 + $0x20] sm:$0xff] %v344
      %395 = vst [vmem:[%s163 + $0x28] sm:$0xff] %v347
      %396 = vst [vmem:[%s163 + $0x30] sm:$0xff] %v352
      %397 = vst [vmem:[%s163 + $0x38] sm:$0xff] %v355
      %398 = vst [vmem:[%s163 + $0x40] sm:$0xff] %v360
      %399 = vst [vmem:[%s163 + $0x48] sm:$0xff] %v363
      %400 = vst [vmem:[%s163 + $0x50] sm:$0xff] %v368
      %401 = vst [vmem:[%s163 + $0x58] sm:$0xff] %v371
      %402 = vst [vmem:[%s163 + $0x60] sm:$0xff] %v376
      %403 = vst [vmem:[%s163 + $0x68] sm:$0xff] %v379
      %404 = vst [vmem:[%s163 + $0x70] sm:$0xff] %v384
      %405 = vst [vmem:[%s163 + $0x78] sm:$0xff] %v387
      %p406 = scmp.lt.s32.totalorder %s13, 1
      %s407 = scalar_select %p406, %s13, 1
      %s408 = smul.addr %s407, 16
      %s409 = smul.addr %s408, 8
      %s410 = scalar_lea.vmem %s2, %s409
      // Predicated region
      $region29: #{meta_counts.25} parent=27 // pred_check
        %p411 = pneg %p83
      $region30: #{meta_counts.25} parent=27 // pred_check_branch
        %413 = sbr.rel (%p411) target = $region32
      $region31: #{meta_counts.25} parent=27 // pred_region
        _
      $region32: #{meta_counts.25} parent=27 // pred_fallthru
        _
    $region28: #{meta_counts.25} parent=5 // pred_fallthru
      _
    %p414 = scmp.le.s32.totalorder 2, %s8
    // Predicated region
    $region33: #{meta_counts.25} parent=5 // pred_check
      %p415 = pneg %p414
    $region34: #{meta_counts.25} parent=5 // pred_check_branch
      %417 = sbr.rel (%p415) target = $region36
    $region35: #{meta_counts.25} parent=5 // pred_region
      %s418 = ssub.s32 %s8, 2
      // Predicated region
      $region37: #{meta_counts.25} parent=35 // pred_check
        %p419 = pneg %p89
      $region38: #{meta_counts.25} parent=35 // pred_check_branch
        %421 = sbr.rel (%p419) target = $region40
      $region39: #{meta_counts.25} parent=35 // pred_region
        %p422 = scmp.lt.s32.totalorder %s14, 1
        %s423 = scalar_select %p422, %s14, 1
        %s424 = smul.addr %s423, 16
        %s425 = smul.addr %s424, 8
        %s426 = scalar_lea.vmem %s2, %s425
      $region40: #{meta_counts.25} parent=35 // pred_fallthru
        _
    $region36: #{meta_counts.25} parent=5 // pred_fallthru
      _
  $region6: #{meta_counts.25} parent=0 // loop_footer
    %s12 = sadd.s32 1, %s8
  $region7: #{meta_counts.25} parent=0 // loop_footer_branch
    %7 = sbr.rel target = $region3
  $region8: #{meta_counts.25} parent=0 // loop_exit
    _

// kernel: jvp__.15
$region0: #{jvp__.15}
  #allocation0 [shape = 'u32[]', space=smem, size = 0x4, offset = 0x4, fixed_abs, tag = 'smem constant byte address 0x4 - core index']
  #allocation1 [shape = 'u32[144,128]{1,0:T(1,128)}', space=vmem, size = 0x12000, scoped, tag = 'internal scratch']
  %s0 = inlined_call_operand.vmem [shape: bf16[2,896,128], index: 0, kind: input, shape index: {}]
  %s1 = inlined_call_operand.vmem [shape: bf16[2,128,128], index: 1, kind: input, shape index: {}]
  %s2 = inlined_call_operand.vmem [shape: f32[2,896,128], index: 2, kind: output, shape index: {}]
  %s3 = sld [smem:[#allocation0]]
  $region41: #{jvp__.15} parent=0
    _
  %s5 = ssub.s32 1, %s3
  %s6 = scalar_select 0, %s5, %s3
  loop: start=0, step=1, limit=4
  $region2: #{jvp__.15} parent=0 // loop_pre_header
    _
  $region3: #{jvp__.15} parent=0 // loop_header
    %s8 = sphi 0, %s12
    %p9 = scmp.ge.s32.totalorder %s8, 4
    %s18 = sphi 0, %s20
    %s21 = sphi 0, %s18
    %s22 = sphi 0, %s21
    %s38 = sphi 0, %s22
    %s44 = sphi 0, %s46
    %s47 = sphi 0, %s44
    %s48 = sphi 0, %s47
    %s64 = sphi 0, %s48
    %s70 = sphi 0, %s72
    %s73 = sphi 0, %s70
    %s74 = sphi 0, %s73
    %s90 = sphi 0, %s74
  $region4: #{jvp__.15} parent=0 // loop_header_branch
    %11 = sbr.rel (%p9) target = $region8
  $region5: #{jvp__.15} parent=0 // loop_body
    %s13 = ssub.s32 %s8, 1
    %s14 = ssub.s32 %s8, 2
    %s15 = sadd.s32 %s8, 1
    %s16 = ssub.s32 %s8, %s15
    %p17 = scmp.eq.s32.totalorder %s16, 0
    %s19 = sadd.s32 %s18, 1
    %s20 = scalar_select %p17, %s18, %s19
    %p23 = pneg %p17
    %p24 = scmp.eq.s32.totalorder %s8, 1
    %p25 = por %p23, %p24
    %p26 = scmp.ne.s32.totalorder %s18, %s21
    %p27 = scmp.eq.s32.totalorder %s8, 0
    %p28 = por %p26, %p27
    %p29 = scmp.ne.s32.totalorder %s18, %s21
    %p30 = scmp.eq.s32.totalorder %s13, 1
    %p31 = por %p29, %p30
    %p32 = scmp.ne.s32.totalorder %s21, %s22
    %p33 = scmp.eq.s32.totalorder %s13, 0
    %p34 = por %p32, %p33
    %p35 = scmp.ne.s32.totalorder %s21, %s22
    %p36 = scmp.eq.s32.totalorder %s14, 1
    %p37 = por %p35, %p36
    %p39 = scmp.ne.s32.totalorder %s22, %s38
    %p40 = scmp.eq.s32.totalorder %s14, 0
    %p41 = por %p39, %p40
    %s42 = ssub.s32 %s8, %s15
    %p43 = scmp.eq.s32.totalorder %s42, 0
    %s45 = sadd.s32 %s44, 1
    %s46 = scalar_select %p43, %s44, %s45
    %p49 = pneg %p43
    %p50 = scmp.eq.s32.totalorder %s8, 1
    %p51 = por %p49, %p50
    %p52 = scmp.ne.s32.totalorder %s44, %s47
    %p53 = scmp.eq.s32.totalorder %s8, 0
    %p54 = por %p52, %p53
    %p55 = scmp.ne.s32.totalorder %s44, %s47
    %p56 = scmp.eq.s32.totalorder %s13, 1
    %p57 = por %p55, %p56
    %p58 = scmp.ne.s32.totalorder %s47, %s48
    %p59 = scmp.eq.s32.totalorder %s13, 0
    %p60 = por %p58, %p59
    %p61 = scmp.ne.s32.totalorder %s47, %s48
    %p62 = scmp.eq.s32.totalorder %s14, 1
    %p63 = por %p61, %p62
    %p65 = scmp.ne.s32.totalorder %s48, %s64
    %p66 = scmp.eq.s32.totalorder %s14, 0
    %p67 = por %p65, %p66
    %s68 = ssub.s32 %s8, %s15
    %p69 = scmp.eq.s32.totalorder %s68, 0
    %s71 = sadd.s32 %s70, 1
    %s72 = scalar_select %p69, %s70, %s71
    %p75 = pneg %p69
    %p76 = scmp.eq.s32.totalorder %s8, 1
    %p77 = por %p75, %p76
    %p78 = scmp.ne.s32.totalorder %s70, %s73
    %p79 = scmp.eq.s32.totalorder %s8, 0
    %p80 = por %p78, %p79
    %p81 = scmp.ne.s32.totalorder %s70, %s73
    %p82 = scmp.eq.s32.totalorder %s13, 1
    %p83 = por %p81, %p82
    %p84 = scmp.ne.s32.totalorder %s73, %s74
    %p85 = scmp.eq.s32.totalorder %s13, 0
    %p86 = por %p84, %p85
    %p87 = scmp.ne.s32.totalorder %s73, %s74
    %p88 = scmp.eq.s32.totalorder %s14, 1
    %p89 = por %p87, %p88
    %p91 = scmp.ne.s32.totalorder %s74, %s90
    %p92 = scmp.eq.s32.totalorder %s14, 0
    %p93 = por %p91, %p92
    %p94 = scmp.le.s32.totalorder 1, %s8
    %p95 = scmp.lt.s32.totalorder %s8, 3
    %p96 = pnand %p94, %p95
    %p97 = pneg %p96
    // Predicated region
    $region9: #{jvp__.15} parent=5 // pred_check
      _
    $region10: #{jvp__.15} parent=5 // pred_check_branch
      %99 = sbr.rel (%p96) target = $region12
    $region11: #{jvp__.15} parent=5 // pred_region
      %s100 = ssub.s32 %s8, 1
    $region12: #{jvp__.15} parent=5 // pred_fallthru
      _
    %p101 = scmp.lt.s32.totalorder %s8, 2
    // Predicated region
    $region13: #{jvp__.15} parent=5 // pred_check
      %p102 = pneg %p101
    $region14: #{jvp__.15} parent=5 // pred_check_branch
      %104 = sbr.rel (%p102) target = $region16
    $region15: #{jvp__.15} parent=5 // pred_region
      // Predicated region
      $region17: #{jvp__.15} parent=15 // pred_check
        %p105 = pneg %p28
      $region18: #{jvp__.15} parent=15 // pred_check_branch
        %107 = sbr.rel (%p105) target = $region20
      $region19: #{jvp__.15} parent=15 // pred_region
        %p108 = scmp.lt.s32.totalorder %s8, 1
        %s109 = scalar_select %p108, %s8, 1
        %s110 = smul.addr %s109, 112
        %s111 = smul.addr %s110, 4
        %s112 = scalar_lea.vmem %s0, %s111
      $region20: #{jvp__.15} parent=15 // pred_fallthru
        _
      // Predicated region
      $region21: #{jvp__.15} parent=15 // pred_check
        %p113 = pneg %p54
      $region22: #{jvp__.15} parent=15 // pred_check_branch
        %115 = sbr.rel (%p113) target = $region24
      $region23: #{jvp__.15} parent=15 // pred_region
        %p116 = scmp.lt.s32.totalorder %s8, 1
        %s117 = scalar_select %p116, %s8, 1
        %s118 = smul.addr %s117, 16
        %s119 = smul.addr %s118, 4
        %s120 = scalar_lea.vmem %s1, %s119
      $region24: #{jvp__.15} parent=15 // pred_fallthru
        _
    $region16: #{jvp__.15} parent=5 // pred_fallthru
      _
    %p121 = scmp.le.s32.totalorder 1, %s8
    %p122 = scmp.lt.s32.totalorder %s8, 3
    %p123 = pnand %p121, %p122
    %p124 = pneg %p123
    // Predicated region
    $region25: #{jvp__.15} parent=5 // pred_check
      _
    $region26: #{jvp__.15} parent=5 // pred_check_branch
      %126 = sbr.rel (%p123) target = $region28
    $region27: #{jvp__.15} parent=5 // pred_region
      %s127 = ssub.s32 %s8, 1
      %p128 = scmp.lt.s32.totalorder %s13, 1
      %s129 = scalar_select %p128, %s13, 1
      %s130 = smul.addr %s129, 112
      %s131 = smul.addr %s130, 4
      %s132 = scalar_lea.vmem %s0, %s131
      %p133 = pneg %p34
      %p134 = pneg %p31
      %p135 = scmp.lt.s32.totalorder %s13, 1
      %s136 = scalar_select %p135, %s13, 1
      %s137 = smul.addr %s136, 16
      %s138 = smul.addr %s137, 4
      %s139 = scalar_lea.vmem %s1, %s138
      %p140 = pneg %p60
      %p141 = pneg %p57
      %p142 = pneg %p86
      %p143 = pneg %p83
      %p144 = scmp.lt.s32.totalorder %s13, 1
      %s145 = scalar_select %p144, %s13, 1
      %s146 = smul.addr %s145, 112
      %s147 = smul.addr %s146, 8
      %s148 = scalar_lea.vmem %s2, %s147
      %p149 = scmp.lt.s32.totalorder %s13, 1
      %s150 = scalar_select %p149, %s13, 1
      %s151 = smul.addr %s150, 112
      %s152 = smul.addr %s151, 4
      %s153 = scalar_lea.vmem %s0, %s152
      %p154 = scmp.lt.s32.totalorder %s13, 1
      %s155 = scalar_select %p154, %s13, 1
      %s156 = smul.addr %s155, 16
      %s157 = smul.addr %s156, 4
      %s158 = scalar_lea.vmem %s1, %s157
      %p159 = scmp.lt.s32.totalorder %s13, 1
      %s160 = scalar_select %p159, %s13, 1
      %s161 = smul.addr %s160, 112
      %s162 = smul.addr %s161, 8
      %s163 = scalar_lea.vmem %s2, %s162
      %v165 = vld [vmem:[%s153] sm:$0xf]
      %v166 = vld [vmem:[%s153 + $0x4] sm:$0xf]
      %v167 = vld [vmem:[%s153 + $0x8] sm:$0xf]
      %v168 = vld [vmem:[%s153 + $0xc] sm:$0xf]
      %v169 = vld [vmem:[%s153 + $0x10] sm:$0xf]
      %v170 = vld [vmem:[%s153 + $0x14] sm:$0xf]
      %v171 = vld [vmem:[%s153 + $0x18] sm:$0xf]
      %v172 = vld [vmem:[%s153 + $0x1c] sm:$0xf]
      %v173 = vld [vmem:[%s153 + $0x20] sm:$0xf]
      %v174 = vld [vmem:[%s153 + $0x24] sm:$0xf]
      %v175 = vld [vmem:[%s153 + $0x28] sm:$0xf]
      %v176 = vld [vmem:[%s153 + $0x2c] sm:$0xf]
      %v177 = vld [vmem:[%s153 + $0x30] sm:$0xf]
      %v178 = vld [vmem:[%s153 + $0x34] sm:$0xf]
      %v179 = vld [vmem:[%s153 + $0x38] sm:$0xf]
      %v180 = vld [vmem:[%s153 + $0x3c] sm:$0xf]
      %v181 = vld [vmem:[%s153 + $0x40] sm:$0xf]
      %v182 = vld [vmem:[%s153 + $0x44] sm:$0xf]
      %v183 = vld [vmem:[%s153 + $0x48] sm:$0xf]
      %v184 = vld [vmem:[%s153 + $0x4c] sm:$0xf]
      %v185 = vld [vmem:[%s153 + $0x50] sm:$0xf]
      %v186 = vld [vmem:[%s153 + $0x54] sm:$0xf]
      %v187 = vld [vmem:[%s153 + $0x58] sm:$0xf]
      %v188 = vld [vmem:[%s153 + $0x5c] sm:$0xf]
      %v189 = vld [vmem:[%s153 + $0x60] sm:$0xf]
      %v190 = vld [vmem:[%s153 + $0x64] sm:$0xf]
      %v191 = vld [vmem:[%s153 + $0x68] sm:$0xf]
      %v192 = vld [vmem:[%s153 + $0x6c] sm:$0xf]
      %v193 = vld [vmem:[%s153 + $0x70] sm:$0xf]
      %v194 = vld [vmem:[%s153 + $0x74] sm:$0xf]
      %v195 = vld [vmem:[%s153 + $0x78] sm:$0xf]
      %v196 = vld [vmem:[%s153 + $0x7c] sm:$0xf]
      %v197 = vld [vmem:[%s153 + $0x80] sm:$0xf]
      %v198 = vld [vmem:[%s153 + $0x84] sm:$0xf]
      %v199 = vld [vmem:[%s153 + $0x88] sm:$0xf]
      %v200 = vld [vmem:[%s153 + $0x8c] sm:$0xf]
      %v201 = vld [vmem:[%s153 + $0x90] sm:$0xf]
      %v202 = vld [vmem:[%s153 + $0x94] sm:$0xf]
      %v203 = vld [vmem:[%s153 + $0x98] sm:$0xf]
      %v204 = vld [vmem:[%s153 + $0x9c] sm:$0xf]
      %v205 = vld [vmem:[%s153 + $0xa0] sm:$0xf]
      %v206 = vld [vmem:[%s153 + $0xa4] sm:$0xf]
      %v207 = vld [vmem:[%s153 + $0xa8] sm:$0xf]
      %v208 = vld [vmem:[%s153 + $0xac] sm:$0xf]
      %v209 = vld [vmem:[%s153 + $0xb0] sm:$0xf]
      %v210 = vld [vmem:[%s153 + $0xb4] sm:$0xf]
      %v211 = vld [vmem:[%s153 + $0xb8] sm:$0xf]
      %v212 = vld [vmem:[%s153 + $0xbc] sm:$0xf]
      %v213 = vld [vmem:[%s153 + $0xc0] sm:$0xf]
      %v214 = vld [vmem:[%s153 + $0xc4] sm:$0xf]
      %v215 = vld [vmem:[%s153 + $0xc8] sm:$0xf]
      %v216 = vld [vmem:[%s153 + $0xcc] sm:$0xf]
      %v217 = vld [vmem:[%s153 + $0xd0] sm:$0xf]
      %v218 = vld [vmem:[%s153 + $0xd4] sm:$0xf]
      %v219 = vld [vmem:[%s153 + $0xd8] sm:$0xf]
      %v220 = vld [vmem:[%s153 + $0xdc] sm:$0xf]
      %v221 = vld [vmem:[%s153 + $0xe0] sm:$0xf]
      %v222 = vld [vmem:[%s153 + $0xe4] sm:$0xf]
      %v223 = vld [vmem:[%s153 + $0xe8] sm:$0xf]
      %v224 = vld [vmem:[%s153 + $0xec] sm:$0xf]
      %v225 = vld [vmem:[%s153 + $0xf0] sm:$0xf]
      %v226 = vld [vmem:[%s153 + $0xf4] sm:$0xf]
      %v227 = vld [vmem:[%s153 + $0xf8] sm:$0xf]
      %v228 = vld [vmem:[%s153 + $0xfc] sm:$0xf]
      %v229 = vld [vmem:[%s153 + $0x100] sm:$0xf]
      %v230 = vld [vmem:[%s153 + $0x104] sm:$0xf]
      %v231 = vld [vmem:[%s153 + $0x108] sm:$0xf]
      %v232 = vld [vmem:[%s153 + $0x10c] sm:$0xf]
      %v233 = vld [vmem:[%s153 + $0x110] sm:$0xf]
      %v234 = vld [vmem:[%s153 + $0x114] sm:$0xf]
      %v235 = vld [vmem:[%s153 + $0x118] sm:$0xf]
      %v236 = vld [vmem:[%s153 + $0x11c] sm:$0xf]
      %v237 = vld [vmem:[%s153 + $0x120] sm:$0xf]
      %v238 = vld [vmem:[%s153 + $0x124] sm:$0xf]
      %v239 = vld [vmem:[%s153 + $0x128] sm:$0xf]
      %v240 = vld [vmem:[%s153 + $0x12c] sm:$0xf]
      %v241 = vld [vmem:[%s153 + $0x130] sm:$0xf]
      %v242 = vld [vmem:[%s153 + $0x134] sm:$0xf]
      %v243 = vld [vmem:[%s153 + $0x138] sm:$0xf]
      %v244 = vld [vmem:[%s153 + $0x13c] sm:$0xf]
      %v245 = vld [vmem:[%s153 + $0x140] sm:$0xf]
      %v246 = vld [vmem:[%s153 + $0x144] sm:$0xf]
      %v247 = vld [vmem:[%s153 + $0x148] sm:$0xf]
      %v248 = vld [vmem:[%s153 + $0x14c] sm:$0xf]
      %v249 = vld [vmem:[%s153 + $0x150] sm:$0xf]
      %v250 = vld [vmem:[%s153 + $0x154] sm:$0xf]
      %v251 = vld [vmem:[%s153 + $0x158] sm:$0xf]
      %v252 = vld [vmem:[%s153 + $0x15c] sm:$0xf]
      %v253 = vld [vmem:[%s153 + $0x160] sm:$0xf]
      %v254 = vld [vmem:[%s153 + $0x164] sm:$0xf]
      %v255 = vld [vmem:[%s153 + $0x168] sm:$0xf]
      %v256 = vld [vmem:[%s153 + $0x16c] sm:$0xf]
      %v257 = vld [vmem:[%s153 + $0x170] sm:$0xf]
      %v258 = vld [vmem:[%s153 + $0x174] sm:$0xf]
      %v259 = vld [vmem:[%s153 + $0x178] sm:$0xf]
      %v260 = vld [vmem:[%s153 + $0x17c] sm:$0xf]
      %v261 = vld [vmem:[%s153 + $0x180] sm:$0xf]
      %v262 = vld [vmem:[%s153 + $0x184] sm:$0xf]
      %v263 = vld [vmem:[%s153 + $0x188] sm:$0xf]
      %v264 = vld [vmem:[%s153 + $0x18c] sm:$0xf]
      %v265 = vld [vmem:[%s153 + $0x190] sm:$0xf]
      %v266 = vld [vmem:[%s153 + $0x194] sm:$0xf]
      %v267 = vld [vmem:[%s153 + $0x198] sm:$0xf]
      %v268 = vld [vmem:[%s153 + $0x19c] sm:$0xf]
      %v269 = vld [vmem:[%s153 + $0x1a0] sm:$0xf]
      %v270 = vld [vmem:[%s153 + $0x1a4] sm:$0xf]
      %v271 = vld [vmem:[%s153 + $0x1a8] sm:$0xf]
      %v272 = vld [vmem:[%s153 + $0x1ac] sm:$0xf]
      %v273 = vld [vmem:[%s153 + $0x1b0] sm:$0xf]
      %v274 = vld [vmem:[%s153 + $0x1b4] sm:$0xf]
      %v275 = vld [vmem:[%s153 + $0x1b8] sm:$0xf]
      %v276 = vld [vmem:[%s153 + $0x1bc] sm:$0xf]
      %v277 = vld [vmem:[%s158] sm:$0xf]
      %v278 = vld [vmem:[%s158 + $0x4] sm:$0xf]
      %v279 = vld [vmem:[%s158 + $0x8] sm:$0xf]
      %v280 = vld [vmem:[%s158 + $0xc] sm:$0xf]
      %v281 = vld [vmem:[%s158 + $0x10] sm:$0xf]
      %v282 = vld [vmem:[%s158 + $0x14] sm:$0xf]
      %v283 = vld [vmem:[%s158 + $0x18] sm:$0xf]
      %v284 = vld [vmem:[%s158 + $0x1c] sm:$0xf]
      %v285 = vld [vmem:[%s158 + $0x20] sm:$0xf]
      %v286 = vld [vmem:[%s158 + $0x24] sm:$0xf]
      %v287 = vld [vmem:[%s158 + $0x28] sm:$0xf]
      %v288 = vld [vmem:[%s158 + $0x2c] sm:$0xf]
      %v289 = vld [vmem:[%s158 + $0x30] sm:$0xf]
      %v290 = vld [vmem:[%s158 + $0x34] sm:$0xf]
      %v291 = vld [vmem:[%s158 + $0x38] sm:$0xf]
      %v292 = vld [vmem:[%s158 + $0x3c] sm:$0xf]
      %v405 = vunpack.c.l.b16 %v165
      %v406 = vunpack.c.l.b16 %v166
      %v407 = vunpack.c.l.b16 %v167
      %v408 = vunpack.c.l.b16 %v168
      %v409 = vunpack.c.l.b16 %v169
      %v410 = vunpack.c.l.b16 %v170
      %v411 = vunpack.c.l.b16 %v171
      %v412 = vunpack.c.l.b16 %v172
      %v413 = vunpack.c.l.b16 %v173
      %v414 = vunpack.c.l.b16 %v174
      %v415 = vunpack.c.l.b16 %v175
      %v416 = vunpack.c.l.b16 %v176
      %v417 = vunpack.c.l.b16 %v177
      %v418 = vunpack.c.l.b16 %v178
      %v419 = vunpack.c.l.b16 %v179
      %v420 = vunpack.c.l.b16 %v180
      %v421 = vunpack.c.l.b16 %v181
      %v422 = vunpack.c.l.b16 %v182
      %v423 = vunpack.c.l.b16 %v183
      %v424 = vunpack.c.l.b16 %v184
      %v425 = vunpack.c.l.b16 %v185
      %v426 = vunpack.c.l.b16 %v186
      %v427 = vunpack.c.l.b16 %v187
      %v428 = vunpack.c.l.b16 %v188
      %v429 = vunpack.c.l.b16 %v189
      %v430 = vunpack.c.l.b16 %v190
      %v431 = vunpack.c.l.b16 %v191
      %v432 = vunpack.c.l.b16 %v192
      %v433 = vunpack.c.l.b16 %v193
      %v434 = vunpack.c.l.b16 %v194
      %v435 = vunpack.c.l.b16 %v195
      %v436 = vunpack.c.l.b16 %v196
      %v437 = vunpack.c.l.b16 %v197
      %v438 = vunpack.c.l.b16 %v198
      %v439 = vunpack.c.l.b16 %v199
      %v440 = vunpack.c.l.b16 %v200
      %v441 = vunpack.c.l.b16 %v201
      %v442 = vunpack.c.l.b16 %v202
      %v443 = vunpack.c.l.b16 %v203
      %v444 = vunpack.c.l.b16 %v204
      %v445 = vunpack.c.l.b16 %v205
      %v446 = vunpack.c.l.b16 %v206
      %v447 = vunpack.c.l.b16 %v207
      %v448 = vunpack.c.l.b16 %v208
      %v449 = vunpack.c.l.b16 %v209
      %v450 = vunpack.c.l.b16 %v210
      %v451 = vunpack.c.l.b16 %v211
      %v452 = vunpack.c.l.b16 %v212
      %v453 = vunpack.c.l.b16 %v213
      %v454 = vunpack.c.l.b16 %v214
      %v455 = vunpack.c.l.b16 %v215
      %v456 = vunpack.c.l.b16 %v216
      %v457 = vunpack.c.l.b16 %v217
      %v458 = vunpack.c.l.b16 %v218
      %v459 = vunpack.c.l.b16 %v219
      %v460 = vunpack.c.l.b16 %v220
      %v461 = vunpack.c.l.b16 %v221
      %v462 = vunpack.c.l.b16 %v222
      %v463 = vunpack.c.l.b16 %v223
      %v464 = vunpack.c.l.b16 %v224
      %v465 = vunpack.c.l.b16 %v225
      %v466 = vunpack.c.l.b16 %v226
      %v467 = vunpack.c.l.b16 %v227
      %v468 = vunpack.c.l.b16 %v228
      %v469 = vunpack.c.l.b16 %v229
      %v470 = vunpack.c.l.b16 %v230
      %v471 = vunpack.c.l.b16 %v231
      %v472 = vunpack.c.l.b16 %v232
      %v473 = vunpack.c.l.b16 %v233
      %v474 = vunpack.c.l.b16 %v234
      %v475 = vunpack.c.l.b16 %v235
      %v476 = vunpack.c.l.b16 %v236
      %v477 = vunpack.c.l.b16 %v237
      %v478 = vunpack.c.l.b16 %v238
      %v479 = vunpack.c.l.b16 %v239
      %v480 = vunpack.c.l.b16 %v240
      %v481 = vunpack.c.l.b16 %v241
      %v482 = vunpack.c.l.b16 %v242
      %v483 = vunpack.c.l.b16 %v243
      %v484 = vunpack.c.l.b16 %v244
      %v485 = vunpack.c.l.b16 %v245
      %v486 = vunpack.c.l.b16 %v246
      %v487 = vunpack.c.l.b16 %v247
      %v488 = vunpack.c.l.b16 %v248
      %v489 = vunpack.c.l.b16 %v249
      %v490 = vunpack.c.l.b16 %v250
      %v491 = vunpack.c.l.b16 %v251
      %v492 = vunpack.c.l.b16 %v252
      %v493 = vunpack.c.l.b16 %v253
      %v494 = vunpack.c.l.b16 %v254
      %v495 = vunpack.c.l.b16 %v255
      %v496 = vunpack.c.l.b16 %v256
      %v497 = vunpack.c.l.b16 %v257
      %v498 = vunpack.c.l.b16 %v258
      %v499 = vunpack.c.l.b16 %v259
      %v500 = vunpack.c.l.b16 %v260
      %v501 = vunpack.c.l.b16 %v261
      %v502 = vunpack.c.l.b16 %v262
      %v503 = vunpack.c.l.b16 %v263
      %v504 = vunpack.c.l.b16 %v264
      %v505 = vunpack.c.l.b16 %v265
      %v506 = vunpack.c.l.b16 %v266
      %v507 = vunpack.c.l.b16 %v267
      %v508 = vunpack.c.l.b16 %v268
      %v509 = vunpack.c.l.b16 %v269
      %v510 = vunpack.c.l.b16 %v270
      %v511 = vunpack.c.l.b16 %v271
      %v512 = vunpack.c.l.b16 %v272
      %v513 = vunpack.c.l.b16 %v273
      %v514 = vunpack.c.l.b16 %v274
      %v515 = vunpack.c.l.b16 %v275
      %v516 = vunpack.c.l.b16 %v276
      %v517 = vpack.c.b16 %v406, %v405
      %v518 = vpack.c.b16 %v408, %v407
      %v519 = vpack.c.b16 %v410, %v409
      %v520 = vpack.c.b16 %v412, %v411
      %v521 = vpack.c.b16 %v414, %v413
      %v522 = vpack.c.b16 %v416, %v415
      %v523 = vpack.c.b16 %v418, %v417
      %v524 = vpack.c.b16 %v420, %v419
      %v525 = vpack.c.b16 %v422, %v421
      %v526 = vpack.c.b16 %v424, %v423
      %v527 = vpack.c.b16 %v426, %v425
      %v528 = vpack.c.b16 %v428, %v427
      %v529 = vpack.c.b16 %v430, %v429
      %v530 = vpack.c.b16 %v432, %v431
      %v531 = vpack.c.b16 %v434, %v433
      %v532 = vpack.c.b16 %v436, %v435
      %v533 = vpack.c.b16 %v438, %v437
      %v534 = vpack.c.b16 %v440, %v439
      %v535 = vpack.c.b16 %v442, %v441
      %v536 = vpack.c.b16 %v444, %v443
      %v537 = vpack.c.b16 %v446, %v445
      %v538 = vpack.c.b16 %v448, %v447
      %v539 = vpack.c.b16 %v450, %v449
      %v540 = vpack.c.b16 %v452, %v451
      %v541 = vpack.c.b16 %v454, %v453
      %v542 = vpack.c.b16 %v456, %v455
      %v543 = vpack.c.b16 %v458, %v457
      %v544 = vpack.c.b16 %v460, %v459
      %v545 = vpack.c.b16 %v462, %v461
      %v546 = vpack.c.b16 %v464, %v463
      %v547 = vpack.c.b16 %v466, %v465
      %v548 = vpack.c.b16 %v468, %v467
      %v549 = vpack.c.b16 %v470, %v469
      %v550 = vpack.c.b16 %v472, %v471
      %v551 = vpack.c.b16 %v474, %v473
      %v552 = vpack.c.b16 %v476, %v475
      %v553 = vpack.c.b16 %v478, %v477
      %v554 = vpack.c.b16 %v480, %v479
      %v555 = vpack.c.b16 %v482, %v481
      %v556 = vpack.c.b16 %v484, %v483
      %v557 = vpack.c.b16 %v486, %v485
      %v558 = vpack.c.b16 %v488, %v487
      %v559 = vpack.c.b16 %v490, %v489
      %v560 = vpack.c.b16 %v492, %v491
      %v561 = vpack.c.b16 %v494, %v493
      %v562 = vpack.c.b16 %v496, %v495
      %v563 = vpack.c.b16 %v498, %v497
      %v564 = vpack.c.b16 %v500, %v499
      %v565 = vpack.c.b16 %v502, %v501
      %v566 = vpack.c.b16 %v504, %v503
      %v567 = vpack.c.b16 %v506, %v505
      %v568 = vpack.c.b16 %v508, %v507
      %v569 = vpack.c.b16 %v510, %v509
      %v570 = vpack.c.b16 %v512, %v511
      %v571 = vpack.c.b16 %v514, %v513
      %v572 = vpack.c.b16 %v516, %v515
      %v645 = vunpack.c.l.b16 %v277
      %v646 = vunpack.c.l.b16 %v278
      %v647 = vunpack.c.l.b16 %v279
      %v648 = vunpack.c.l.b16 %v280
      %v649 = vunpack.c.l.b16 %v281
      %v650 = vunpack.c.l.b16 %v282
      %v651 = vunpack.c.l.b16 %v283
      %v652 = vunpack.c.l.b16 %v284
      %v653 = vunpack.c.l.b16 %v285
      %v654 = vunpack.c.l.b16 %v286
      %v655 = vunpack.c.l.b16 %v287
      %v656 = vunpack.c.l.b16 %v288
      %v657 = vunpack.c.l.b16 %v289
      %v658 = vunpack.c.l.b16 %v290
      %v659 = vunpack.c.l.b16 %v291
      %v660 = vunpack.c.l.b16 %v292
      %v661 = vpack.c.b16 %v646, %v645
      %v662 = vpack.c.b16 %v648, %v647
      %v663 = vpack.c.b16 %v650, %v649
      %v664 = vpack.c.b16 %v652, %v651
      %v665 = vpack.c.b16 %v654, %v653
      %v666 = vpack.c.b16 %v656, %v655
      %v667 = vpack.c.b16 %v658, %v657
      %v668 = vpack.c.b16 %v660, %v659
      %677 = vmatprep.subr.bf16.mxu0 0
      %678 = vmatpush1.bf16.msra.mxu0 %v661
      %679 = vmatprep.subr.bf16.mxu0 0
      %680 = vmatpush1.bf16.msra.mxu0 %v662
      %681 = vmatprep.subr.bf16.mxu0 0
      %682 = vmatpush1.bf16.msra.mxu0 %v663
      %683 = vmatprep.subr.bf16.mxu0 0
      %684 = vmatpush1.bf16.msra.mxu0 %v664
      %685 = vmatprep.subr.bf16.mxu0 0
      %686 = vmatpush1.bf16.msra.mxu0 %v665
      %687 = vmatprep.subr.bf16.mxu0 0
      %688 = vmatpush1.bf16.msra.mxu0 %v666
      %689 = vmatprep.subr.bf16.mxu0 0
      %690 = vmatpush1.bf16.msra.mxu0 %v667
      %691 = vmatprep.subr.bf16.mxu0 0
      %692 = vmatpush1.bf16.msra.mxu0 %v668
      %693 = vmatprep.subr.bf16.mxu0 0
      %694 = vmatpush1.bf16.msra.mxu0 0
      %695 = vmatprep.subr.bf16.mxu0 0
      %696 = vmatpush1.bf16.msra.mxu0 0
      %697 = vmatprep.subr.bf16.mxu0 0
      %698 = vmatpush1.bf16.msra.mxu0 0
      %699 = vmatprep.subr.bf16.mxu0 0
      %700 = vmatpush1.bf16.msra.mxu0 0
      %701 = vmatprep.subr.bf16.mxu0 0
      %702 = vmatpush1.bf16.msra.mxu0 0
      %703 = vmatprep.subr.bf16.mxu0 0
      %704 = vmatpush1.bf16.msra.mxu0 0
      %705 = vmatprep.subr.bf16.mxu0 0
      %706 = vmatpush1.bf16.msra.mxu0 0
      %707 = vmatprep.subr.bf16.mxu0 0
      %708 = vmatpush1.bf16.msra.mxu0 0
      %709 = vmatprep.mubr.bf16.mxu0 0
      %710 = vmatmul.mubr.bf16.gmra.mrb[0].mxu0 %v517
      %v711 = vpop.f32.mrb[0].mxu0
      %v712 = vadd.f32 0.0, %v711
      %v713 = vpop.f32.mrb[0].mxu0
      %v714 = vpop.f32.mrb[0].mxu0
      %v715 = vadd.f32 0.0, %v714
      %v716 = vpop.f32.mrb[0].mxu0
      %717 = vmatprep.mubr.bf16.mxu0 0
      %718 = vmatmul.mubr.bf16.gmra.mrb[0].mxu0 %v518
      %v719 = vpop.f32.mrb[0].mxu0
      %v720 = vadd.f32 0.0, %v719
      %v721 = vpop.f32.mrb[0].mxu0
      %v722 = vpop.f32.mrb[0].mxu0
      %v723 = vadd.f32 0.0, %v722
      %v724 = vpop.f32.mrb[0].mxu0
      %725 = vmatprep.mubr.bf16.mxu0 0
      %726 = vmatmul.mubr.bf16.gmra.mrb[0].mxu0 %v519
      %v727 = vpop.f32.mrb[0].mxu0
      %v728 = vadd.f32 0.0, %v727
      %v729 = vpop.f32.mrb[0].mxu0
      %v730 = vpop.f32.mrb[0].mxu0
      %v731 = vadd.f32 0.0, %v730
      %v732 = vpop.f32.mrb[0].mxu0
      %733 = vmatprep.mubr.bf16.mxu0 0
      %734 = vmatmul.mubr.bf16.gmra.mrb[0].mxu0 %v520
      %v735 = vpop.f32.mrb[0].mxu0
      %v736 = vadd.f32 0.0, %v735
      %v737 = vpop.f32.mrb[0].mxu0
      %v738 = vpop.f32.mrb[0].mxu0
      %v739 = vadd.f32 0.0, %v738
      %v740 = vpop.f32.mrb[0].mxu0
      %741 = vmatprep.mubr.bf16.mxu0 0
      %742 = vmatmul.mubr.bf16.gmra.mrb[0].mxu0 %v521
      %v743 = vpop.f32.mrb[0].mxu0
      %v744 = vadd.f32 0.0, %v743
      %v745 = vpop.f32.mrb[0].mxu0
      %v746 = vpop.f32.mrb[0].mxu0
      %v747 = vadd.f32 0.0, %v746
      %v748 = vpop.f32.mrb[0].mxu0
      %749 = vmatprep.mubr.bf16.mxu0 0
      %750 = vmatmul.mubr.bf16.gmra.mrb[0].mxu0 %v522
      %v751 = vpop.f32.mrb[0].mxu0
      %v752 = vadd.f32 0.0, %v751
      %v753 = vpop.f32.mrb[0].mxu0
      %v754 = vpop.f32.mrb[0].mxu0
      %v755 = vadd.f32 0.0, %v754
      %v756 = vpop.f32.mrb[0].mxu0
      %757 = vmatprep.mubr.bf16.mxu0 0
      %758 = vmatmul.mubr.bf16.gmra.mrb[0].mxu0 %v523
      %v759 = vpop.f32.mrb[0].mxu0
      %v760 = vadd.f32 0.0, %v759
      %v761 = vpop.f32.mrb[0].mxu0
      %v762 = vpop.f32.mrb[0].mxu0
      %v763 = vadd.f32 0.0, %v762
      %v764 = vpop.f32.mrb[0].mxu0
      %765 = vmatprep.mubr.bf16.mxu0 0
      %766 = vmatmul.mubr.bf16.gmra.mrb[0].mxu0 %v524
      %v767 = vpop.f32.mrb[0].mxu0
      %v768 = vadd.f32 0.0, %v767
      %v769 = vpop.f32.mrb[0].mxu0
      %v770 = vpop.f32.mrb[0].mxu0
      %v771 = vadd.f32 0.0, %v770
      %v772 = vpop.f32.mrb[0].mxu0
      %773 = vmatprep.mubr.bf16.mxu0 0
      %774 = vmatmul.mubr.bf16.gmra.mrb[0].mxu0 %v525
      %v775 = vpop.f32.mrb[0].mxu0
      %v776 = vadd.f32 0.0, %v775
      %v777 = vpop.f32.mrb[0].mxu0
      %v778 = vpop.f32.mrb[0].mxu0
      %v779 = vadd.f32 0.0, %v778
      %v780 = vpop.f32.mrb[0].mxu0
      %781 = vmatprep.mubr.bf16.mxu0 0
      %782 = vmatmul.mubr.bf16.gmra.mrb[0].mxu0 %v526
      %v783 = vpop.f32.mrb[0].mxu0
      %v784 = vadd.f32 0.0, %v783
      %v785 = vpop.f32.mrb[0].mxu0
      %v786 = vpop.f32.mrb[0].mxu0
      %v787 = vadd.f32 0.0, %v786
      %v788 = vpop.f32.mrb[0].mxu0
      %789 = vmatprep.mubr.bf16.mxu0 0
      %790 = vmatmul.mubr.bf16.gmra.mrb[0].mxu0 %v527
      %v791 = vpop.f32.mrb[0].mxu0
      %v792 = vadd.f32 0.0, %v791
      %v793 = vpop.f32.mrb[0].mxu0
      %v794 = vpop.f32.mrb[0].mxu0
      %v795 = vadd.f32 0.0, %v794
      %v796 = vpop.f32.mrb[0].mxu0
      %797 = vmatprep.mubr.bf16.mxu0 0
      %798 = vmatmul.mubr.bf16.gmra.mrb[0].mxu0 %v528
      %v799 = vpop.f32.mrb[0].mxu0
      %v800 = vadd.f32 0.0, %v799
      %v801 = vpop.f32.mrb[0].mxu0
      %v802 = vpop.f32.mrb[0].mxu0
      %v803 = vadd.f32 0.0, %v802
      %v804 = vpop.f32.mrb[0].mxu0
      %805 = vmatprep.mubr.bf16.mxu0 0
      %806 = vmatmul.mubr.bf16.gmra.mrb[0].mxu0 %v529
      %v807 = vpop.f32.mrb[0].mxu0
      %v808 = vadd.f32 0.0, %v807
      %v809 = vpop.f32.mrb[0].mxu0
      %v810 = vpop.f32.mrb[0].mxu0
      %v811 = vadd.f32 0.0, %v810
      %v812 = vpop.f32.mrb[0].mxu0
      %813 = vmatprep.mubr.bf16.mxu0 0
      %814 = vmatmul.mubr.bf16.gmra.mrb[0].mxu0 %v530
      %v815 = vpop.f32.mrb[0].mxu0
      %v816 = vadd.f32 0.0, %v815
      %v817 = vpop.f32.mrb[0].mxu0
      %v818 = vpop.f32.mrb[0].mxu0
      %v819 = vadd.f32 0.0, %v818
      %v820 = vpop.f32.mrb[0].mxu0
      %821 = vmatprep.mubr.bf16.mxu0 0
      %822 = vmatmul.mubr.bf16.gmra.mrb[0].mxu0 %v531
      %v823 = vpop.f32.mrb[0].mxu0
      %v824 = vadd.f32 0.0, %v823
      %v825 = vpop.f32.mrb[0].mxu0
      %v826 = vpop.f32.mrb[0].mxu0
      %v827 = vadd.f32 0.0, %v826
      %v828 = vpop.f32.mrb[0].mxu0
      %829 = vmatprep.mubr.bf16.mxu0 0
      %830 = vmatmul.mubr.bf16.gmra.mrb[0].mxu0 %v532
      %v831 = vpop.f32.mrb[0].mxu0
      %v832 = vadd.f32 0.0, %v831
      %v833 = vpop.f32.mrb[0].mxu0
      %v834 = vpop.f32.mrb[0].mxu0
      %v835 = vadd.f32 0.0, %v834
      %v836 = vpop.f32.mrb[0].mxu0
      %837 = vmatprep.mubr.bf16.mxu0 0
      %838 = vmatmul.mubr.bf16.gmra.mrb[0].mxu0 %v533
      %v839 = vpop.f32.mrb[0].mxu0
      %v840 = vadd.f32 0.0, %v839
      %v841 = vpop.f32.mrb[0].mxu0
      %v842 = vpop.f32.mrb[0].mxu0
      %v843 = vadd.f32 0.0, %v842
      %v844 = vpop.f32.mrb[0].mxu0
      %845 = vmatprep.mubr.bf16.mxu0 0
      %846 = vmatmul.mubr.bf16.gmra.mrb[0].mxu0 %v534
      %v847 = vpop.f32.mrb[0].mxu0
      %v848 = vadd.f32 0.0, %v847
      %v849 = vpop.f32.mrb[0].mxu0
      %v850 = vpop.f32.mrb[0].mxu0
      %v851 = vadd.f32 0.0, %v850
      %v852 = vpop.f32.mrb[0].mxu0
      %853 = vmatprep.mubr.bf16.mxu0 0
      %854 = vmatmul.mubr.bf16.gmra.mrb[0].mxu0 %v535
      %v855 = vpop.f32.mrb[0].mxu0
      %v856 = vadd.f32 0.0, %v855
      %v857 = vpop.f32.mrb[0].mxu0
      %v858 = vpop.f32.mrb[0].mxu0
      %v859 = vadd.f32 0.0, %v858
      %v860 = vpop.f32.mrb[0].mxu0
      %861 = vmatprep.mubr.bf16.mxu0 0
      %862 = vmatmul.mubr.bf16.gmra.mrb[0].mxu0 %v536
      %v863 = vpop.f32.mrb[0].mxu0
      %v864 = vadd.f32 0.0, %v863
      %v865 = vpop.f32.mrb[0].mxu0
      %v866 = vpop.f32.mrb[0].mxu0
      %v867 = vadd.f32 0.0, %v866
      %v868 = vpop.f32.mrb[0].mxu0
      %869 = vmatprep.mubr.bf16.mxu0 0
      %870 = vmatmul.mubr.bf16.gmra.mrb[0].mxu0 %v537
      %v871 = vpop.f32.mrb[0].mxu0
      %v872 = vadd.f32 0.0, %v871
      %v873 = vpop.f32.mrb[0].mxu0
      %v874 = vpop.f32.mrb[0].mxu0
      %v875 = vadd.f32 0.0, %v874
      %v876 = vpop.f32.mrb[0].mxu0
      %877 = vmatprep.mubr.bf16.mxu0 0
      %878 = vmatmul.mubr.bf16.gmra.mrb[0].mxu0 %v538
      %v879 = vpop.f32.mrb[0].mxu0
      %v880 = vadd.f32 0.0, %v879
      %v881 = vpop.f32.mrb[0].mxu0
      %v882 = vpop.f32.mrb[0].mxu0
      %v883 = vadd.f32 0.0, %v882
      %v884 = vpop.f32.mrb[0].mxu0
      %885 = vmatprep.mubr.bf16.mxu0 0
      %886 = vmatmul.mubr.bf16.gmra.mrb[0].mxu0 %v539
      %v887 = vpop.f32.mrb[0].mxu0
      %v888 = vadd.f32 0.0, %v887
      %v889 = vpop.f32.mrb[0].mxu0
      %v890 = vpop.f32.mrb[0].mxu0
      %v891 = vadd.f32 0.0, %v890
      %v892 = vpop.f32.mrb[0].mxu0
      %893 = vmatprep.mubr.bf16.mxu0 0
      %894 = vmatmul.mubr.bf16.gmra.mrb[0].mxu0 %v540
      %v895 = vpop.f32.mrb[0].mxu0
      %v896 = vadd.f32 0.0, %v895
      %v897 = vpop.f32.mrb[0].mxu0
      %v898 = vpop.f32.mrb[0].mxu0
      %v899 = vadd.f32 0.0, %v898
      %v900 = vpop.f32.mrb[0].mxu0
      %901 = vmatprep.mubr.bf16.mxu0 0
      %902 = vmatmul.mubr.bf16.gmra.mrb[0].mxu0 %v541
      %v903 = vpop.f32.mrb[0].mxu0
      %v904 = vadd.f32 0.0, %v903
      %v905 = vpop.f32.mrb[0].mxu0
      %v906 = vpop.f32.mrb[0].mxu0
      %v907 = vadd.f32 0.0, %v906
      %v908 = vpop.f32.mrb[0].mxu0
      %909 = vmatprep.mubr.bf16.mxu0 0
      %910 = vmatmul.mubr.bf16.gmra.mrb[0].mxu0 %v542
      %v911 = vpop.f32.mrb[0].mxu0
      %v912 = vadd.f32 0.0, %v911
      %v913 = vpop.f32.mrb[0].mxu0
      %v914 = vpop.f32.mrb[0].mxu0
      %v915 = vadd.f32 0.0, %v914
      %v916 = vpop.f32.mrb[0].mxu0
      %917 = vmatprep.mubr.bf16.mxu0 0
      %918 = vmatmul.mubr.bf16.gmra.mrb[0].mxu0 %v543
      %v919 = vpop.f32.mrb[0].mxu0
      %v920 = vadd.f32 0.0, %v919
      %v921 = vpop.f32.mrb[0].mxu0
      %v922 = vpop.f32.mrb[0].mxu0
      %v923 = vadd.f32 0.0, %v922
      %v924 = vpop.f32.mrb[0].mxu0
      %925 = vmatprep.mubr.bf16.mxu0 0
      %926 = vmatmul.mubr.bf16.gmra.mrb[0].mxu0 %v544
      %v927 = vpop.f32.mrb[0].mxu0
      %v928 = vadd.f32 0.0, %v927
      %v929 = vpop.f32.mrb[0].mxu0
      %v930 = vpop.f32.mrb[0].mxu0
      %v931 = vadd.f32 0.0, %v930
      %v932 = vpop.f32.mrb[0].mxu0
      %933 = vmatprep.mubr.bf16.mxu0 0
      %934 = vmatmul.mubr.bf16.gmra.mrb[0].mxu0 %v545
      %v935 = vpop.f32.mrb[0].mxu0
      %v936 = vadd.f32 0.0, %v935
      %v937 = vpop.f32.mrb[0].mxu0
      %v938 = vpop.f32.mrb[0].mxu0
      %v939 = vadd.f32 0.0, %v938
      %v940 = vpop.f32.mrb[0].mxu0
      %941 = vmatprep.mubr.bf16.mxu0 0
      %942 = vmatmul.mubr.bf16.gmra.mrb[0].mxu0 %v546
      %v943 = vpop.f32.mrb[0].mxu0
      %v944 = vadd.f32 0.0, %v943
      %v945 = vpop.f32.mrb[0].mxu0
      %v946 = vpop.f32.mrb[0].mxu0
      %v947 = vadd.f32 0.0, %v946
      %v948 = vpop.f32.mrb[0].mxu0
      %949 = vmatprep.mubr.bf16.mxu0 0
      %950 = vmatmul.mubr.bf16.gmra.mrb[0].mxu0 %v547
      %v951 = vpop.f32.mrb[0].mxu0
      %v952 = vadd.f32 0.0, %v951
      %v953 = vpop.f32.mrb[0].mxu0
      %v954 = vpop.f32.mrb[0].mxu0
      %v955 = vadd.f32 0.0, %v954
      %v956 = vpop.f32.mrb[0].mxu0
      %957 = vmatprep.mubr.bf16.mxu0 0
      %958 = vmatmul.mubr.bf16.gmra.mrb[0].mxu0 %v548
      %v959 = vpop.f32.mrb[0].mxu0
      %v960 = vadd.f32 0.0, %v959
      %v961 = vpop.f32.mrb[0].mxu0
      %v962 = vpop.f32.mrb[0].mxu0
      %v963 = vadd.f32 0.0, %v962
      %v964 = vpop.f32.mrb[0].mxu0
      %965 = vmatprep.mubr.bf16.mxu0 0
      %966 = vmatmul.mubr.bf16.gmra.mrb[0].mxu0 %v549
      %v967 = vpop.f32.mrb[0].mxu0
      %v968 = vadd.f32 0.0, %v967
      %v969 = vpop.f32.mrb[0].mxu0
      %v970 = vpop.f32.mrb[0].mxu0
      %v971 = vadd.f32 0.0, %v970
      %v972 = vpop.f32.mrb[0].mxu0
      %973 = vmatprep.mubr.bf16.mxu0 0
      %974 = vmatmul.mubr.bf16.gmra.mrb[0].mxu0 %v550
      %v975 = vpop.f32.mrb[0].mxu0
      %v976 = vadd.f32 0.0, %v975
      %v977 = vpop.f32.mrb[0].mxu0
      %v978 = vpop.f32.mrb[0].mxu0
      %v979 = vadd.f32 0.0, %v978
      %v980 = vpop.f32.mrb[0].mxu0
      %981 = vmatprep.mubr.bf16.mxu0 0
      %982 = vmatmul.mubr.bf16.gmra.mrb[0].mxu0 %v551
      %v983 = vpop.f32.mrb[0].mxu0
      %v984 = vadd.f32 0.0, %v983
      %v985 = vpop.f32.mrb[0].mxu0
      %v986 = vpop.f32.mrb[0].mxu0
      %v987 = vadd.f32 0.0, %v986
      %v988 = vpop.f32.mrb[0].mxu0
      %989 = vmatprep.mubr.bf16.mxu0 0
      %990 = vmatmul.mubr.bf16.gmra.mrb[0].mxu0 %v552
      %v991 = vpop.f32.mrb[0].mxu0
      %v992 = vadd.f32 0.0, %v991
      %v993 = vpop.f32.mrb[0].mxu0
      %v994 = vpop.f32.mrb[0].mxu0
      %v995 = vadd.f32 0.0, %v994
      %v996 = vpop.f32.mrb[0].mxu0
      %997 = vmatprep.mubr.bf16.mxu0 0
      %998 = vmatmul.mubr.bf16.gmra.mrb[0].mxu0 %v553
      %v999 = vpop.f32.mrb[0].mxu0
      %v1000 = vadd.f32 0.0, %v999
      %v1001 = vpop.f32.mrb[0].mxu0
      %v1002 = vpop.f32.mrb[0].mxu0
      %v1003 = vadd.f32 0.0, %v1002
      %v1004 = vpop.f32.mrb[0].mxu0
      %1005 = vmatprep.mubr.bf16.mxu0 0
      %1006 = vmatmul.mubr.bf16.gmra.mrb[0].mxu0 %v554
      %v1007 = vpop.f32.mrb[0].mxu0
      %v1008 = vadd.f32 0.0, %v1007
      %v1009 = vpop.f32.mrb[0].mxu0
      %v1010 = vpop.f32.mrb[0].mxu0
      %v1011 = vadd.f32 0.0, %v1010
      %v1012 = vpop.f32.mrb[0].mxu0
      %1013 = vmatprep.mubr.bf16.mxu0 0
      %1014 = vmatmul.mubr.bf16.gmra.mrb[0].mxu0 %v555
      %v1015 = vpop.f32.mrb[0].mxu0
      %v1016 = vadd.f32 0.0, %v1015
      %v1017 = vpop.f32.mrb[0].mxu0
      %v1018 = vpop.f32.mrb[0].mxu0
      %v1019 = vadd.f32 0.0, %v1018
      %v1020 = vpop.f32.mrb[0].mxu0
      %1021 = vmatprep.mubr.bf16.mxu0 0
      %1022 = vmatmul.mubr.bf16.gmra.mrb[0].mxu0 %v556
      %v1023 = vpop.f32.mrb[0].mxu0
      %v1024 = vadd.f32 0.0, %v1023
      %v1025 = vpop.f32.mrb[0].mxu0
      %v1026 = vpop.f32.mrb[0].mxu0
      %v1027 = vadd.f32 0.0, %v1026
      %v1028 = vpop.f32.mrb[0].mxu0
      %1029 = vmatprep.mubr.bf16.mxu0 0
      %1030 = vmatmul.mubr.bf16.gmra.mrb[0].mxu0 %v557
      %v1031 = vpop.f32.mrb[0].mxu0
      %v1032 = vadd.f32 0.0, %v1031
      %v1033 = vpop.f32.mrb[0].mxu0
      %v1034 = vpop.f32.mrb[0].mxu0
      %v1035 = vadd.f32 0.0, %v1034
      %v1036 = vpop.f32.mrb[0].mxu0
      %1037 = vmatprep.mubr.bf16.mxu0 0
      %1038 = vmatmul.mubr.bf16.gmra.mrb[0].mxu0 %v558
      %v1039 = vpop.f32.mrb[0].mxu0
      %v1040 = vadd.f32 0.0, %v1039
      %v1041 = vpop.f32.mrb[0].mxu0
      %v1042 = vpop.f32.mrb[0].mxu0
      %v1043 = vadd.f32 0.0, %v1042
      %v1044 = vpop.f32.mrb[0].mxu0
      %1045 = vmatprep.mubr.bf16.mxu0 0
      %1046 = vmatmul.mubr.bf16.gmra.mrb[0].mxu0 %v559
      %v1047 = vpop.f32.mrb[0].mxu0
      %v1048 = vadd.f32 0.0, %v1047
      %v1049 = vpop.f32.mrb[0].mxu0
      %v1050 = vpop.f32.mrb[0].mxu0
      %v1051 = vadd.f32 0.0, %v1050
      %v1052 = vpop.f32.mrb[0].mxu0
      %1053 = vmatprep.mubr.bf16.mxu0 0
      %1054 = vmatmul.mubr.bf16.gmra.mrb[0].mxu0 %v560
      %v1055 = vpop.f32.mrb[0].mxu0
      %v1056 = vadd.f32 0.0, %v1055
      %v1057 = vpop.f32.mrb[0].mxu0
      %v1058 = vpop.f32.mrb[0].mxu0
      %v1059 = vadd.f32 0.0, %v1058
      %v1060 = vpop.f32.mrb[0].mxu0
      %1061 = vmatprep.mubr.bf16.mxu0 0
      %1062 = vmatmul.mubr.bf16.gmra.mrb[0].mxu0 %v561
      %v1063 = vpop.f32.mrb[0].mxu0
      %v1064 = vadd.f32 0.0, %v1063
      %v1065 = vpop.f32.mrb[0].mxu0
      %v1066 = vpop.f32.mrb[0].mxu0
      %v1067 = vadd.f32 0.0, %v1066
      %v1068 = vpop.f32.mrb[0].mxu0
      %1069 = vmatprep.mubr.bf16.mxu0 0
      %1070 = vmatmul.mubr.bf16.gmra.mrb[0].mxu0 %v562
      %v1071 = vpop.f32.mrb[0].mxu0
      %v1072 = vadd.f32 0.0, %v1071
      %v1073 = vpop.f32.mrb[0].mxu0
      %v1074 = vpop.f32.mrb[0].mxu0
      %v1075 = vadd.f32 0.0, %v1074
      %v1076 = vpop.f32.mrb[0].mxu0
      %1077 = vmatprep.mubr.bf16.mxu0 0
      %1078 = vmatmul.mubr.bf16.gmra.mrb[0].mxu0 %v563
      %v1079 = vpop.f32.mrb[0].mxu0
      %v1080 = vadd.f32 0.0, %v1079
      %v1081 = vpop.f32.mrb[0].mxu0
      %v1082 = vpop.f32.mrb[0].mxu0
      %v1083 = vadd.f32 0.0, %v1082
      %v1084 = vpop.f32.mrb[0].mxu0
      %1085 = vmatprep.mubr.bf16.mxu0 0
      %1086 = vmatmul.mubr.bf16.gmra.mrb[0].mxu0 %v564
      %v1087 = vpop.f32.mrb[0].mxu0
      %v1088 = vadd.f32 0.0, %v1087
      %v1089 = vpop.f32.mrb[0].mxu0
      %v1090 = vpop.f32.mrb[0].mxu0
      %v1091 = vadd.f32 0.0, %v1090
      %v1092 = vpop.f32.mrb[0].mxu0
      %1093 = vmatprep.mubr.bf16.mxu0 0
      %1094 = vmatmul.mubr.bf16.gmra.mrb[0].mxu0 %v565
      %v1095 = vpop.f32.mrb[0].mxu0
      %v1096 = vadd.f32 0.0, %v1095
      %v1097 = vpop.f32.mrb[0].mxu0
      %v1098 = vpop.f32.mrb[0].mxu0
      %v1099 = vadd.f32 0.0, %v1098
      %v1100 = vpop.f32.mrb[0].mxu0
      %1101 = vmatprep.mubr.bf16.mxu0 0
      %1102 = vmatmul.mubr.bf16.gmra.mrb[0].mxu0 %v566
      %v1103 = vpop.f32.mrb[0].mxu0
      %v1104 = vadd.f32 0.0, %v1103
      %v1105 = vpop.f32.mrb[0].mxu0
      %v1106 = vpop.f32.mrb[0].mxu0
      %v1107 = vadd.f32 0.0, %v1106
      %v1108 = vpop.f32.mrb[0].mxu0
      %1109 = vmatprep.mubr.bf16.mxu0 0
      %1110 = vmatmul.mubr.bf16.gmra.mrb[0].mxu0 %v567
      %v1111 = vpop.f32.mrb[0].mxu0
      %v1112 = vadd.f32 0.0, %v1111
      %v1113 = vpop.f32.mrb[0].mxu0
      %v1114 = vpop.f32.mrb[0].mxu0
      %v1115 = vadd.f32 0.0, %v1114
      %v1116 = vpop.f32.mrb[0].mxu0
      %1117 = vmatprep.mubr.bf16.mxu0 0
      %1118 = vmatmul.mubr.bf16.gmra.mrb[0].mxu0 %v568
      %v1119 = vpop.f32.mrb[0].mxu0
      %v1120 = vadd.f32 0.0, %v1119
      %v1121 = vpop.f32.mrb[0].mxu0
      %v1122 = vpop.f32.mrb[0].mxu0
      %v1123 = vadd.f32 0.0, %v1122
      %v1124 = vpop.f32.mrb[0].mxu0
      %1125 = vmatprep.mubr.bf16.mxu0 0
      %1126 = vmatmul.mubr.bf16.gmra.mrb[0].mxu0 %v569
      %v1127 = vpop.f32.mrb[0].mxu0
      %v1128 = vadd.f32 0.0, %v1127
      %v1129 = vpop.f32.mrb[0].mxu0
      %v1130 = vpop.f32.mrb[0].mxu0
      %v1131 = vadd.f32 0.0, %v1130
      %v1132 = vpop.f32.mrb[0].mxu0
      %1133 = vmatprep.mubr.bf16.mxu0 0
      %1134 = vmatmul.mubr.bf16.gmra.mrb[0].mxu0 %v570
      %v1135 = vpop.f32.mrb[0].mxu0
      %v1136 = vadd.f32 0.0, %v1135
      %v1137 = vpop.f32.mrb[0].mxu0
      %v1138 = vpop.f32.mrb[0].mxu0
      %v1139 = vadd.f32 0.0, %v1138
      %v1140 = vpop.f32.mrb[0].mxu0
      %1141 = vmatprep.mubr.bf16.mxu0 0
      %1142 = vmatmul.mubr.bf16.gmra.mrb[0].mxu0 %v571
      %v1143 = vpop.f32.mrb[0].mxu0
      %v1144 = vadd.f32 0.0, %v1143
      %v1145 = vpop.f32.mrb[0].mxu0
      %v1146 = vpop.f32.mrb[0].mxu0
      %v1147 = vadd.f32 0.0, %v1146
      %v1148 = vpop.f32.mrb[0].mxu0
      %1149 = vmatprep.mubr.bf16.mxu0 0
      %1150 = vmatmul.mubr.bf16.gmra.mrb[0].mxu0 %v572
      %v1151 = vpop.f32.mrb[0].mxu0
      %v1152 = vadd.f32 0.0, %v1151
      %v1153 = vpop.f32.mrb[0].mxu0
      %v1154 = vpop.f32.mrb[0].mxu0
      %v1155 = vadd.f32 0.0, %v1154
      %v1156 = vpop.f32.mrb[0].mxu0
      %1157 = vdwg.mxu0
      %1158 = vst [vmem:[%s163] sm:$0xff] %v712
      %1159 = vst [vmem:[%s163 + $0x8] sm:$0xff] %v715
      %1160 = vst [vmem:[%s163 + $0x10] sm:$0xff] %v720
      %1161 = vst [vmem:[%s163 + $0x18] sm:$0xff] %v723
      %1162 = vst [vmem:[%s163 + $0x20] sm:$0xff] %v728
      %1163 = vst [vmem:[%s163 + $0x28] sm:$0xff] %v731
      %1164 = vst [vmem:[%s163 + $0x30] sm:$0xff] %v736
      %1165 = vst [vmem:[%s163 + $0x38] sm:$0xff] %v739
      %1166 = vst [vmem:[%s163 + $0x40] sm:$0xff] %v744
      %1167 = vst [vmem:[%s163 + $0x48] sm:$0xff] %v747
      %1168 = vst [vmem:[%s163 + $0x50] sm:$0xff] %v752
      %1169 = vst [vmem:[%s163 + $0x58] sm:$0xff] %v755
      %1170 = vst [vmem:[%s163 + $0x60] sm:$0xff] %v760
      %1171 = vst [vmem:[%s163 + $0x68] sm:$0xff] %v763
      %1172 = vst [vmem:[%s163 + $0x70] sm:$0xff] %v768
      %1173 = vst [vmem:[%s163 + $0x78] sm:$0xff] %v771
      %1174 = vst [vmem:[%s163 + $0x80] sm:$0xff] %v776
      %1175 = vst [vmem:[%s163 + $0x88] sm:$0xff] %v779
      %1176 = vst [vmem:[%s163 + $0x90] sm:$0xff] %v784
      %1177 = vst [vmem:[%s163 + $0x98] sm:$0xff] %v787
      %1178 = vst [vmem:[%s163 + $0xa0] sm:$0xff] %v792
      %1179 = vst [vmem:[%s163 + $0xa8] sm:$0xff] %v795
      %1180 = vst [vmem:[%s163 + $0xb0] sm:$0xff] %v800
      %1181 = vst [vmem:[%s163 + $0xb8] sm:$0xff] %v803
      %1182 = vst [vmem:[%s163 + $0xc0] sm:$0xff] %v808
      %1183 = vst [vmem:[%s163 + $0xc8] sm:$0xff] %v811
      %1184 = vst [vmem:[%s163 + $0xd0] sm:$0xff] %v816
      %1185 = vst [vmem:[%s163 + $0xd8] sm:$0xff] %v819
      %1186 = vst [vmem:[%s163 + $0xe0] sm:$0xff] %v824
      %1187 = vst [vmem:[%s163 + $0xe8] sm:$0xff] %v827
      %1188 = vst [vmem:[%s163 + $0xf0] sm:$0xff] %v832
      %1189 = vst [vmem:[%s163 + $0xf8] sm:$0xff] %v835
      %1190 = vst [vmem:[%s163 + $0x100] sm:$0xff] %v840
      %1191 = vst [vmem:[%s163 + $0x108] sm:$0xff] %v843
      %1192 = vst [vmem:[%s163 + $0x110] sm:$0xff] %v848
      %1193 = vst [vmem:[%s163 + $0x118] sm:$0xff] %v851
      %1194 = vst [vmem:[%s163 + $0x120] sm:$0xff] %v856
      %1195 = vst [vmem:[%s163 + $0x128] sm:$0xff] %v859
      %1196 = vst [vmem:[%s163 + $0x130] sm:$0xff] %v864
      %1197 = vst [vmem:[%s163 + $0x138] sm:$0xff] %v867
      %1198 = vst [vmem:[%s163 + $0x140] sm:$0xff] %v872
      %1199 = vst [vmem:[%s163 + $0x148] sm:$0xff] %v875
      %1200 = vst [vmem:[%s163 + $0x150] sm:$0xff] %v880
      %1201 = vst [vmem:[%s163 + $0x158] sm:$0xff] %v883
      %1202 = vst [vmem:[%s163 + $0x160] sm:$0xff] %v888
      %1203 = vst [vmem:[%s163 + $0x168] sm:$0xff] %v891
      %1204 = vst [vmem:[%s163 + $0x170] sm:$0xff] %v896
      %1205 = vst [vmem:[%s163 + $0x178] sm:$0xff] %v899
      %1206 = vst [vmem:[%s163 + $0x180] sm:$0xff] %v904
      %1207 = vst [vmem:[%s163 + $0x188] sm:$0xff] %v907
      %1208 = vst [vmem:[%s163 + $0x190] sm:$0xff] %v912
      %1209 = vst [vmem:[%s163 + $0x198] sm:$0xff] %v915
      %1210 = vst [vmem:[%s163 + $0x1a0] sm:$0xff] %v920
      %1211 = vst [vmem:[%s163 + $0x1a8] sm:$0xff] %v923
      %1212 = vst [vmem:[%s163 + $0x1b0] sm:$0xff] %v928
      %1213 = vst [vmem:[%s163 + $0x1b8] sm:$0xff] %v931
      %1214 = vst [vmem:[%s163 + $0x1c0] sm:$0xff] %v936
      %1215 = vst [vmem:[%s163 + $0x1c8] sm:$0xff] %v939
      %1216 = vst [vmem:[%s163 + $0x1d0] sm:$0xff] %v944
      %1217 = vst [vmem:[%s163 + $0x1d8] sm:$0xff] %v947
      %1218 = vst [vmem:[%s163 + $0x1e0] sm:$0xff] %v952
      %1219 = vst [vmem:[%s163 + $0x1e8] sm:$0xff] %v955
      %1220 = vst [vmem:[%s163 + $0x1f0] sm:$0xff] %v960
      %1221 = vst [vmem:[%s163 + $0x1f8] sm:$0xff] %v963
      %1222 = vst [vmem:[%s163 + $0x200] sm:$0xff] %v968
      %1223 = vst [vmem:[%s163 + $0x208] sm:$0xff] %v971
      %1224 = vst [vmem:[%s163 + $0x210] sm:$0xff] %v976
      %1225 = vst [vmem:[%s163 + $0x218] sm:$0xff] %v979
      %1226 = vst [vmem:[%s163 + $0x220] sm:$0xff] %v984
      %1227 = vst [vmem:[%s163 + $0x228] sm:$0xff] %v987
      %1228 = vst [vmem:[%s163 + $0x230] sm:$0xff] %v992
      %1229 = vst [vmem:[%s163 + $0x238] sm:$0xff] %v995
      %1230 = vst [vmem:[%s163 + $0x240] sm:$0xff] %v1000
      %1231 = vst [vmem:[%s163 + $0x248] sm:$0xff] %v1003
      %1232 = vst [vmem:[%s163 + $0x250] sm:$0xff] %v1008
      %1233 = vst [vmem:[%s163 + $0x258] sm:$0xff] %v1011
      %1234 = vst [vmem:[%s163 + $0x260] sm:$0xff] %v1016
      %1235 = vst [vmem:[%s163 + $0x268] sm:$0xff] %v1019
      %1236 = vst [vmem:[%s163 + $0x270] sm:$0xff] %v1024
      %1237 = vst [vmem:[%s163 + $0x278] sm:$0xff] %v1027
      %1238 = vst [vmem:[%s163 + $0x280] sm:$0xff] %v1032
      %1239 = vst [vmem:[%s163 + $0x288] sm:$0xff] %v1035
      %1240 = vst [vmem:[%s163 + $0x290] sm:$0xff] %v1040
      %1241 = vst [vmem:[%s163 + $0x298] sm:$0xff] %v1043
      %1242 = vst [vmem:[%s163 + $0x2a0] sm:$0xff] %v1048
      %1243 = vst [vmem:[%s163 + $0x2a8] sm:$0xff] %v1051
      %1244 = vst [vmem:[%s163 + $0x2b0] sm:$0xff] %v1056
      %1245 = vst [vmem:[%s163 + $0x2b8] sm:$0xff] %v1059
      %1246 = vst [vmem:[%s163 + $0x2c0] sm:$0xff] %v1064
      %1247 = vst [vmem:[%s163 + $0x2c8] sm:$0xff] %v1067
      %1248 = vst [vmem:[%s163 + $0x2d0] sm:$0xff] %v1072
      %1249 = vst [vmem:[%s163 + $0x2d8] sm:$0xff] %v1075
      %1250 = vst [vmem:[%s163 + $0x2e0] sm:$0xff] %v1080
      %1251 = vst [vmem:[%s163 + $0x2e8] sm:$0xff] %v1083
      %1252 = vst [vmem:[%s163 + $0x2f0] sm:$0xff] %v1088
      %1253 = vst [vmem:[%s163 + $0x2f8] sm:$0xff] %v1091
      %1254 = vst [vmem:[%s163 + $0x300] sm:$0xff] %v1096
      %1255 = vst [vmem:[%s163 + $0x308] sm:$0xff] %v1099
      %1256 = vst [vmem:[%s163 + $0x310] sm:$0xff] %v1104
      %1257 = vst [vmem:[%s163 + $0x318] sm:$0xff] %v1107
      %1258 = vst [vmem:[%s163 + $0x320] sm:$0xff] %v1112
      %1259 = vst [vmem:[%s163 + $0x328] sm:$0xff] %v1115
      %1260 = vst [vmem:[%s163 + $0x330] sm:$0xff] %v1120
      %1261 = vst [vmem:[%s163 + $0x338] sm:$0xff] %v1123
      %1262 = vst [vmem:[%s163 + $0x340] sm:$0xff] %v1128
      %1263 = vst [vmem:[%s163 + $0x348] sm:$0xff] %v1131
      %1264 = vst [vmem:[%s163 + $0x350] sm:$0xff] %v1136
      %1265 = vst [vmem:[%s163 + $0x358] sm:$0xff] %v1139
      %1266 = vst [vmem:[%s163 + $0x360] sm:$0xff] %v1144
      %1267 = vst [vmem:[%s163 + $0x368] sm:$0xff] %v1147
      %1268 = vst [vmem:[%s163 + $0x370] sm:$0xff] %v1152
      %1269 = vst [vmem:[%s163 + $0x378] sm:$0xff] %v1155
      %p1270 = scmp.lt.s32.totalorder %s13, 1
      %s1271 = scalar_select %p1270, %s13, 1
      %s1272 = smul.addr %s1271, 112
      %s1273 = smul.addr %s1272, 8
      %s1274 = scalar_lea.vmem %s2, %s1273
      // Predicated region
      $region29: #{jvp__.15} parent=27 // pred_check
        %p1275 = pneg %p83
      $region30: #{jvp__.15} parent=27 // pred_check_branch
        %1277 = sbr.rel (%p1275) target = $region32
      $region31: #{jvp__.15} parent=27 // pred_region
        _
      $region32: #{jvp__.15} parent=27 // pred_fallthru
        _
    $region28: #{jvp__.15} parent=5 // pred_fallthru
      _
    %p1278 = scmp.le.s32.totalorder 2, %s8
    // Predicated region
    $region33: #{jvp__.15} parent=5 // pred_check
      %p1279 = pneg %p1278
    $region34: #{jvp__.15} parent=5 // pred_check_branch
      %1281 = sbr.rel (%p1279) target = $region36
    $region35: #{jvp__.15} parent=5 // pred_region
      %s1282 = ssub.s32 %s8, 2
      // Predicated region
      $region37: #{jvp__.15} parent=35 // pred_check
        %p1283 = pneg %p89
      $region38: #{jvp__.15} parent=35 // pred_check_branch
        %1285 = sbr.rel (%p1283) target = $region40
      $region39: #{jvp__.15} parent=35 // pred_region
        %p1286 = scmp.lt.s32.totalorder %s14, 1
        %s1287 = scalar_select %p1286, %s14, 1
        %s1288 = smul.addr %s1287, 112
        %s1289 = smul.addr %s1288, 8
        %s1290 = scalar_lea.vmem %s2, %s1289
      $region40: #{jvp__.15} parent=35 // pred_fallthru
        _
    $region36: #{jvp__.15} parent=5 // pred_fallthru
      _
  $region6: #{jvp__.15} parent=0 // loop_footer
    %s12 = sadd.s32 1, %s8
  $region7: #{jvp__.15} parent=0 // loop_footer_branch
    %7 = sbr.rel target = $region3
  $region8: #{jvp__.15} parent=0 // loop_exit
    _

// kernel: jvp__.16
$region0: #{jvp__.16}
  #allocation0 [shape = 'u32[]', space=smem, size = 0x4, offset = 0x4, fixed_abs, tag = 'smem constant byte address 0x4 - core index']
  #allocation1 [shape = 'u32[144,128]{1,0:T(1,128)}', space=vmem, size = 0x12000, scoped, tag = 'internal scratch']
  %s0 = inlined_call_operand.vmem [shape: bf16[2,256,128], index: 0, kind: input, shape index: {}]
  %s1 = inlined_call_operand.vmem [shape: bf16[2,128,128], index: 1, kind: input, shape index: {}]
  %s2 = inlined_call_operand.vmem [shape: f32[2,256,128], index: 2, kind: output, shape index: {}]
  %s3 = sld [smem:[#allocation0]]
  $region41: #{jvp__.16} parent=0
    _
  %s5 = ssub.s32 1, %s3
  %s6 = scalar_select 0, %s5, %s3
  loop: start=0, step=1, limit=4
  $region2: #{jvp__.16} parent=0 // loop_pre_header
    _
  $region3: #{jvp__.16} parent=0 // loop_header
    %s8 = sphi 0, %s12
    %p9 = scmp.ge.s32.totalorder %s8, 4
    %s18 = sphi 0, %s20
    %s21 = sphi 0, %s18
    %s22 = sphi 0, %s21
    %s38 = sphi 0, %s22
    %s44 = sphi 0, %s46
    %s47 = sphi 0, %s44
    %s48 = sphi 0, %s47
    %s64 = sphi 0, %s48
    %s70 = sphi 0, %s72
    %s73 = sphi 0, %s70
    %s74 = sphi 0, %s73
    %s90 = sphi 0, %s74
  $region4: #{jvp__.16} parent=0 // loop_header_branch
    %11 = sbr.rel (%p9) target = $region8
  $region5: #{jvp__.16} parent=0 // loop_body
    %s13 = ssub.s32 %s8, 1
    %s14 = ssub.s32 %s8, 2
    %s15 = sadd.s32 %s8, 1
    %s16 = ssub.s32 %s8, %s15
    %p17 = scmp.eq.s32.totalorder %s16, 0
    %s19 = sadd.s32 %s18, 1
    %s20 = scalar_select %p17, %s18, %s19
    %p23 = pneg %p17
    %p24 = scmp.eq.s32.totalorder %s8, 1
    %p25 = por %p23, %p24
    %p26 = scmp.ne.s32.totalorder %s18, %s21
    %p27 = scmp.eq.s32.totalorder %s8, 0
    %p28 = por %p26, %p27
    %p29 = scmp.ne.s32.totalorder %s18, %s21
    %p30 = scmp.eq.s32.totalorder %s13, 1
    %p31 = por %p29, %p30
    %p32 = scmp.ne.s32.totalorder %s21, %s22
    %p33 = scmp.eq.s32.totalorder %s13, 0
    %p34 = por %p32, %p33
    %p35 = scmp.ne.s32.totalorder %s21, %s22
    %p36 = scmp.eq.s32.totalorder %s14, 1
    %p37 = por %p35, %p36
    %p39 = scmp.ne.s32.totalorder %s22, %s38
    %p40 = scmp.eq.s32.totalorder %s14, 0
    %p41 = por %p39, %p40
    %s42 = ssub.s32 %s8, %s15
    %p43 = scmp.eq.s32.totalorder %s42, 0
    %s45 = sadd.s32 %s44, 1
    %s46 = scalar_select %p43, %s44, %s45
    %p49 = pneg %p43
    %p50 = scmp.eq.s32.totalorder %s8, 1
    %p51 = por %p49, %p50
    %p52 = scmp.ne.s32.totalorder %s44, %s47
    %p53 = scmp.eq.s32.totalorder %s8, 0
    %p54 = por %p52, %p53
    %p55 = scmp.ne.s32.totalorder %s44, %s47
    %p56 = scmp.eq.s32.totalorder %s13, 1
    %p57 = por %p55, %p56
    %p58 = scmp.ne.s32.totalorder %s47, %s48
    %p59 = scmp.eq.s32.totalorder %s13, 0
    %p60 = por %p58, %p59
    %p61 = scmp.ne.s32.totalorder %s47, %s48
    %p62 = scmp.eq.s32.totalorder %s14, 1
    %p63 = por %p61, %p62
    %p65 = scmp.ne.s32.totalorder %s48, %s64
    %p66 = scmp.eq.s32.totalorder %s14, 0
    %p67 = por %p65, %p66
    %s68 = ssub.s32 %s8, %s15
    %p69 = scmp.eq.s32.totalorder %s68, 0
    %s71 = sadd.s32 %s70, 1
    %s72 = scalar_select %p69, %s70, %s71
    %p75 = pneg %p69
    %p76 = scmp.eq.s32.totalorder %s8, 1
    %p77 = por %p75, %p76
    %p78 = scmp.ne.s32.totalorder %s70, %s73
    %p79 = scmp.eq.s32.totalorder %s8, 0
    %p80 = por %p78, %p79
    %p81 = scmp.ne.s32.totalorder %s70, %s73
    %p82 = scmp.eq.s32.totalorder %s13, 1
    %p83 = por %p81, %p82
    %p84 = scmp.ne.s32.totalorder %s73, %s74
    %p85 = scmp.eq.s32.totalorder %s13, 0
    %p86 = por %p84, %p85
    %p87 = scmp.ne.s32.totalorder %s73, %s74
    %p88 = scmp.eq.s32.totalorder %s14, 1
    %p89 = por %p87, %p88
    %p91 = scmp.ne.s32.totalorder %s74, %s90
    %p92 = scmp.eq.s32.totalorder %s14, 0
    %p93 = por %p91, %p92
    %p94 = scmp.le.s32.totalorder 1, %s8
    %p95 = scmp.lt.s32.totalorder %s8, 3
    %p96 = pnand %p94, %p95
    %p97 = pneg %p96
    // Predicated region
    $region9: #{jvp__.16} parent=5 // pred_check
      _
    $region10: #{jvp__.16} parent=5 // pred_check_branch
      %99 = sbr.rel (%p96) target = $region12
    $region11: #{jvp__.16} parent=5 // pred_region
      %s100 = ssub.s32 %s8, 1
    $region12: #{jvp__.16} parent=5 // pred_fallthru
      _
    %p101 = scmp.lt.s32.totalorder %s8, 2
    // Predicated region
    $region13: #{jvp__.16} parent=5 // pred_check
      %p102 = pneg %p101
    $region14: #{jvp__.16} parent=5 // pred_check_branch
      %104 = sbr.rel (%p102) target = $region16
    $region15: #{jvp__.16} parent=5 // pred_region
      // Predicated region
      $region17: #{jvp__.16} parent=15 // pred_check
        %p105 = pneg %p28
      $region18: #{jvp__.16} parent=15 // pred_check_branch
        %107 = sbr.rel (%p105) target = $region20
      $region19: #{jvp__.16} parent=15 // pred_region
        %p108 = scmp.lt.s32.totalorder %s8, 1
        %s109 = scalar_select %p108, %s8, 1
        %s110 = smul.addr %s109, 32
        %s111 = smul.addr %s110, 4
        %s112 = scalar_lea.vmem %s0, %s111
      $region20: #{jvp__.16} parent=15 // pred_fallthru
        _
      // Predicated region
      $region21: #{jvp__.16} parent=15 // pred_check
        %p113 = pneg %p54
      $region22: #{jvp__.16} parent=15 // pred_check_branch
        %115 = sbr.rel (%p113) target = $region24
      $region23: #{jvp__.16} parent=15 // pred_region
        %p116 = scmp.lt.s32.totalorder %s8, 1
        %s117 = scalar_select %p116, %s8, 1
        %s118 = smul.addr %s117, 16
        %s119 = smul.addr %s118, 4
        %s120 = scalar_lea.vmem %s1, %s119
      $region24: #{jvp__.16} parent=15 // pred_fallthru
        _
    $region16: #{jvp__.16} parent=5 // pred_fallthru
      _
    %p121 = scmp.le.s32.totalorder 1, %s8
    %p122 = scmp.lt.s32.totalorder %s8, 3
    %p123 = pnand %p121, %p122
    %p124 = pneg %p123
    // Predicated region
    $region25: #{jvp__.16} parent=5 // pred_check
      _
    $region26: #{jvp__.16} parent=5 // pred_check_branch
      %126 = sbr.rel (%p123) target = $region28
    $region27: #{jvp__.16} parent=5 // pred_region
      %s127 = ssub.s32 %s8, 1
      %p128 = scmp.lt.s32.totalorder %s13, 1
      %s129 = scalar_select %p128, %s13, 1
      %s130 = smul.addr %s129, 32
      %s131 = smul.addr %s130, 4
      %s132 = scalar_lea.vmem %s0, %s131
      %p133 = pneg %p34
      %p134 = pneg %p31
      %p135 = scmp.lt.s32.totalorder %s13, 1
      %s136 = scalar_select %p135, %s13, 1
      %s137 = smul.addr %s136, 16
      %s138 = smul.addr %s137, 4
      %s139 = scalar_lea.vmem %s1, %s138
      %p140 = pneg %p60
      %p141 = pneg %p57
      %p142 = pneg %p86
      %p143 = pneg %p83
      %p144 = scmp.lt.s32.totalorder %s13, 1
      %s145 = scalar_select %p144, %s13, 1
      %s146 = smul.addr %s145, 32
      %s147 = smul.addr %s146, 8
      %s148 = scalar_lea.vmem %s2, %s147
      %p149 = scmp.lt.s32.totalorder %s13, 1
      %s150 = scalar_select %p149, %s13, 1
      %s151 = smul.addr %s150, 32
      %s152 = smul.addr %s151, 4
      %s153 = scalar_lea.vmem %s0, %s152
      %p154 = scmp.lt.s32.totalorder %s13, 1
      %s155 = scalar_select %p154, %s13, 1
      %s156 = smul.addr %s155, 16
      %s157 = smul.addr %s156, 4
      %s158 = scalar_lea.vmem %s1, %s157
      %p159 = scmp.lt.s32.totalorder %s13, 1
      %s160 = scalar_select %p159, %s13, 1
      %s161 = smul.addr %s160, 32
      %s162 = smul.addr %s161, 8
      %s163 = scalar_lea.vmem %s2, %s162
      %v165 = vld [vmem:[%s153] sm:$0xf]
      %v166 = vld [vmem:[%s153 + $0x4] sm:$0xf]
      %v167 = vld [vmem:[%s153 + $0x8] sm:$0xf]
      %v168 = vld [vmem:[%s153 + $0xc] sm:$0xf]
      %v169 = vld [vmem:[%s153 + $0x10] sm:$0xf]
      %v170 = vld [vmem:[%s153 + $0x14] sm:$0xf]
      %v171 = vld [vmem:[%s153 + $0x18] sm:$0xf]
      %v172 = vld [vmem:[%s153 + $0x1c] sm:$0xf]
      %v173 = vld [vmem:[%s153 + $0x20] sm:$0xf]
      %v174 = vld [vmem:[%s153 + $0x24] sm:$0xf]
      %v175 = vld [vmem:[%s153 + $0x28] sm:$0xf]
      %v176 = vld [vmem:[%s153 + $0x2c] sm:$0xf]
      %v177 = vld [vmem:[%s153 + $0x30] sm:$0xf]
      %v178 = vld [vmem:[%s153 + $0x34] sm:$0xf]
      %v179 = vld [vmem:[%s153 + $0x38] sm:$0xf]
      %v180 = vld [vmem:[%s153 + $0x3c] sm:$0xf]
      %v181 = vld [vmem:[%s153 + $0x40] sm:$0xf]
      %v182 = vld [vmem:[%s153 + $0x44] sm:$0xf]
      %v183 = vld [vmem:[%s153 + $0x48] sm:$0xf]
      %v184 = vld [vmem:[%s153 + $0x4c] sm:$0xf]
      %v185 = vld [vmem:[%s153 + $0x50] sm:$0xf]
      %v186 = vld [vmem:[%s153 + $0x54] sm:$0xf]
      %v187 = vld [vmem:[%s153 + $0x58] sm:$0xf]
      %v188 = vld [vmem:[%s153 + $0x5c] sm:$0xf]
      %v189 = vld [vmem:[%s153 + $0x60] sm:$0xf]
      %v190 = vld [vmem:[%s153 + $0x64] sm:$0xf]
      %v191 = vld [vmem:[%s153 + $0x68] sm:$0xf]
      %v192 = vld [vmem:[%s153 + $0x6c] sm:$0xf]
      %v193 = vld [vmem:[%s153 + $0x70] sm:$0xf]
      %v194 = vld [vmem:[%s153 + $0x74] sm:$0xf]
      %v195 = vld [vmem:[%s153 + $0x78] sm:$0xf]
      %v196 = vld [vmem:[%s153 + $0x7c] sm:$0xf]
      %v197 = vld [vmem:[%s158] sm:$0xf]
      %v198 = vld [vmem:[%s158 + $0x4] sm:$0xf]
      %v199 = vld [vmem:[%s158 + $0x8] sm:$0xf]
      %v200 = vld [vmem:[%s158 + $0xc] sm:$0xf]
      %v201 = vld [vmem:[%s158 + $0x10] sm:$0xf]
      %v202 = vld [vmem:[%s158 + $0x14] sm:$0xf]
      %v203 = vld [vmem:[%s158 + $0x18] sm:$0xf]
      %v204 = vld [vmem:[%s158 + $0x1c] sm:$0xf]
      %v205 = vld [vmem:[%s158 + $0x20] sm:$0xf]
      %v206 = vld [vmem:[%s158 + $0x24] sm:$0xf]
      %v207 = vld [vmem:[%s158 + $0x28] sm:$0xf]
      %v208 = vld [vmem:[%s158 + $0x2c] sm:$0xf]
      %v209 = vld [vmem:[%s158 + $0x30] sm:$0xf]
      %v210 = vld [vmem:[%s158 + $0x34] sm:$0xf]
      %v211 = vld [vmem:[%s158 + $0x38] sm:$0xf]
      %v212 = vld [vmem:[%s158 + $0x3c] sm:$0xf]
      %v245 = vunpack.c.l.b16 %v165
      %v246 = vunpack.c.l.b16 %v166
      %v247 = vunpack.c.l.b16 %v167
      %v248 = vunpack.c.l.b16 %v168
      %v249 = vunpack.c.l.b16 %v169
      %v250 = vunpack.c.l.b16 %v170
      %v251 = vunpack.c.l.b16 %v171
      %v252 = vunpack.c.l.b16 %v172
      %v253 = vunpack.c.l.b16 %v173
      %v254 = vunpack.c.l.b16 %v174
      %v255 = vunpack.c.l.b16 %v175
      %v256 = vunpack.c.l.b16 %v176
      %v257 = vunpack.c.l.b16 %v177
      %v258 = vunpack.c.l.b16 %v178
      %v259 = vunpack.c.l.b16 %v179
      %v260 = vunpack.c.l.b16 %v180
      %v261 = vunpack.c.l.b16 %v181
      %v262 = vunpack.c.l.b16 %v182
      %v263 = vunpack.c.l.b16 %v183
      %v264 = vunpack.c.l.b16 %v184
      %v265 = vunpack.c.l.b16 %v185
      %v266 = vunpack.c.l.b16 %v186
      %v267 = vunpack.c.l.b16 %v187
      %v268 = vunpack.c.l.b16 %v188
      %v269 = vunpack.c.l.b16 %v189
      %v270 = vunpack.c.l.b16 %v190
      %v271 = vunpack.c.l.b16 %v191
      %v272 = vunpack.c.l.b16 %v192
      %v273 = vunpack.c.l.b16 %v193
      %v274 = vunpack.c.l.b16 %v194
      %v275 = vunpack.c.l.b16 %v195
      %v276 = vunpack.c.l.b16 %v196
      %v277 = vpack.c.b16 %v246, %v245
      %v278 = vpack.c.b16 %v248, %v247
      %v279 = vpack.c.b16 %v250, %v249
      %v280 = vpack.c.b16 %v252, %v251
      %v281 = vpack.c.b16 %v254, %v253
      %v282 = vpack.c.b16 %v256, %v255
      %v283 = vpack.c.b16 %v258, %v257
      %v284 = vpack.c.b16 %v260, %v259
      %v285 = vpack.c.b16 %v262, %v261
      %v286 = vpack.c.b16 %v264, %v263
      %v287 = vpack.c.b16 %v266, %v265
      %v288 = vpack.c.b16 %v268, %v267
      %v289 = vpack.c.b16 %v270, %v269
      %v290 = vpack.c.b16 %v272, %v271
      %v291 = vpack.c.b16 %v274, %v273
      %v292 = vpack.c.b16 %v276, %v275
      %v325 = vunpack.c.l.b16 %v197
      %v326 = vunpack.c.l.b16 %v198
      %v327 = vunpack.c.l.b16 %v199
      %v328 = vunpack.c.l.b16 %v200
      %v329 = vunpack.c.l.b16 %v201
      %v330 = vunpack.c.l.b16 %v202
      %v331 = vunpack.c.l.b16 %v203
      %v332 = vunpack.c.l.b16 %v204
      %v333 = vunpack.c.l.b16 %v205
      %v334 = vunpack.c.l.b16 %v206
      %v335 = vunpack.c.l.b16 %v207
      %v336 = vunpack.c.l.b16 %v208
      %v337 = vunpack.c.l.b16 %v209
      %v338 = vunpack.c.l.b16 %v210
      %v339 = vunpack.c.l.b16 %v211
      %v340 = vunpack.c.l.b16 %v212
      %v341 = vpack.c.b16 %v326, %v325
      %v342 = vpack.c.b16 %v328, %v327
      %v343 = vpack.c.b16 %v330, %v329
      %v344 = vpack.c.b16 %v332, %v331
      %v345 = vpack.c.b16 %v334, %v333
      %v346 = vpack.c.b16 %v336, %v335
      %v347 = vpack.c.b16 %v338, %v337
      %v348 = vpack.c.b16 %v340, %v339
      %357 = vmatprep.subr.bf16.mxu0 0
      %358 = vmatpush1.bf16.msra.mxu0 %v341
      %359 = vmatprep.subr.bf16.mxu0 0
      %360 = vmatpush1.bf16.msra.mxu0 %v342
      %361 = vmatprep.subr.bf16.mxu0 0
      %362 = vmatpush1.bf16.msra.mxu0 %v343
      %363 = vmatprep.subr.bf16.mxu0 0
      %364 = vmatpush1.bf16.msra.mxu0 %v344
      %365 = vmatprep.subr.bf16.mxu0 0
      %366 = vmatpush1.bf16.msra.mxu0 %v345
      %367 = vmatprep.subr.bf16.mxu0 0
      %368 = vmatpush1.bf16.msra.mxu0 %v346
      %369 = vmatprep.subr.bf16.mxu0 0
      %370 = vmatpush1.bf16.msra.mxu0 %v347
      %371 = vmatprep.subr.bf16.mxu0 0
      %372 = vmatpush1.bf16.msra.mxu0 %v348
      %373 = vmatprep.subr.bf16.mxu0 0
      %374 = vmatpush1.bf16.msra.mxu0 0
      %375 = vmatprep.subr.bf16.mxu0 0
      %376 = vmatpush1.bf16.msra.mxu0 0
      %377 = vmatprep.subr.bf16.mxu0 0
      %378 = vmatpush1.bf16.msra.mxu0 0
      %379 = vmatprep.subr.bf16.mxu0 0
      %380 = vmatpush1.bf16.msra.mxu0 0
      %381 = vmatprep.subr.bf16.mxu0 0
      %382 = vmatpush1.bf16.msra.mxu0 0
      %383 = vmatprep.subr.bf16.mxu0 0
      %384 = vmatpush1.bf16.msra.mxu0 0
      %385 = vmatprep.subr.bf16.mxu0 0
      %386 = vmatpush1.bf16.msra.mxu0 0
      %387 = vmatprep.subr.bf16.mxu0 0
      %388 = vmatpush1.bf16.msra.mxu0 0
      %389 = vmatprep.mubr.bf16.mxu0 0
      %390 = vmatmul.mubr.bf16.gmra.mrb[0].mxu0 %v277
      %v391 = vpop.f32.mrb[0].mxu0
      %v392 = vadd.f32 0.0, %v391
      %v393 = vpop.f32.mrb[0].mxu0
      %v394 = vpop.f32.mrb[0].mxu0
      %v395 = vadd.f32 0.0, %v394
      %v396 = vpop.f32.mrb[0].mxu0
      %397 = vmatprep.mubr.bf16.mxu0 0
      %398 = vmatmul.mubr.bf16.gmra.mrb[0].mxu0 %v278
      %v399 = vpop.f32.mrb[0].mxu0
      %v400 = vadd.f32 0.0, %v399
      %v401 = vpop.f32.mrb[0].mxu0
      %v402 = vpop.f32.mrb[0].mxu0
      %v403 = vadd.f32 0.0, %v402
      %v404 = vpop.f32.mrb[0].mxu0
      %405 = vmatprep.mubr.bf16.mxu0 0
      %406 = vmatmul.mubr.bf16.gmra.mrb[0].mxu0 %v279
      %v407 = vpop.f32.mrb[0].mxu0
      %v408 = vadd.f32 0.0, %v407
      %v409 = vpop.f32.mrb[0].mxu0
      %v410 = vpop.f32.mrb[0].mxu0
      %v411 = vadd.f32 0.0, %v410
      %v412 = vpop.f32.mrb[0].mxu0
      %413 = vmatprep.mubr.bf16.mxu0 0
      %414 = vmatmul.mubr.bf16.gmra.mrb[0].mxu0 %v280
      %v415 = vpop.f32.mrb[0].mxu0
      %v416 = vadd.f32 0.0, %v415
      %v417 = vpop.f32.mrb[0].mxu0
      %v418 = vpop.f32.mrb[0].mxu0
      %v419 = vadd.f32 0.0, %v418
      %v420 = vpop.f32.mrb[0].mxu0
      %421 = vmatprep.mubr.bf16.mxu0 0
      %422 = vmatmul.mubr.bf16.gmra.mrb[0].mxu0 %v281
      %v423 = vpop.f32.mrb[0].mxu0
      %v424 = vadd.f32 0.0, %v423
      %v425 = vpop.f32.mrb[0].mxu0
      %v426 = vpop.f32.mrb[0].mxu0
      %v427 = vadd.f32 0.0, %v426
      %v428 = vpop.f32.mrb[0].mxu0
      %429 = vmatprep.mubr.bf16.mxu0 0
      %430 = vmatmul.mubr.bf16.gmra.mrb[0].mxu0 %v282
      %v431 = vpop.f32.mrb[0].mxu0
      %v432 = vadd.f32 0.0, %v431
      %v433 = vpop.f32.mrb[0].mxu0
      %v434 = vpop.f32.mrb[0].mxu0
      %v435 = vadd.f32 0.0, %v434
      %v436 = vpop.f32.mrb[0].mxu0
      %437 = vmatprep.mubr.bf16.mxu0 0
      %438 = vmatmul.mubr.bf16.gmra.mrb[0].mxu0 %v283
      %v439 = vpop.f32.mrb[0].mxu0
      %v440 = vadd.f32 0.0, %v439
      %v441 = vpop.f32.mrb[0].mxu0
      %v442 = vpop.f32.mrb[0].mxu0
      %v443 = vadd.f32 0.0, %v442
      %v444 = vpop.f32.mrb[0].mxu0
      %445 = vmatprep.mubr.bf16.mxu0 0
      %446 = vmatmul.mubr.bf16.gmra.mrb[0].mxu0 %v284
      %v447 = vpop.f32.mrb[0].mxu0
      %v448 = vadd.f32 0.0, %v447
      %v449 = vpop.f32.mrb[0].mxu0
      %v450 = vpop.f32.mrb[0].mxu0
      %v451 = vadd.f32 0.0, %v450
      %v452 = vpop.f32.mrb[0].mxu0
      %453 = vmatprep.mubr.bf16.mxu0 0
      %454 = vmatmul.mubr.bf16.gmra.mrb[0].mxu0 %v285
      %v455 = vpop.f32.mrb[0].mxu0
      %v456 = vadd.f32 0.0, %v455
      %v457 = vpop.f32.mrb[0].mxu0
      %v458 = vpop.f32.mrb[0].mxu0
      %v459 = vadd.f32 0.0, %v458
      %v460 = vpop.f32.mrb[0].mxu0
      %461 = vmatprep.mubr.bf16.mxu0 0
      %462 = vmatmul.mubr.bf16.gmra.mrb[0].mxu0 %v286
      %v463 = vpop.f32.mrb[0].mxu0
      %v464 = vadd.f32 0.0, %v463
      %v465 = vpop.f32.mrb[0].mxu0
      %v466 = vpop.f32.mrb[0].mxu0
      %v467 = vadd.f32 0.0, %v466
      %v468 = vpop.f32.mrb[0].mxu0
      %469 = vmatprep.mubr.bf16.mxu0 0
      %470 = vmatmul.mubr.bf16.gmra.mrb[0].mxu0 %v287
      %v471 = vpop.f32.mrb[0].mxu0
      %v472 = vadd.f32 0.0, %v471
      %v473 = vpop.f32.mrb[0].mxu0
      %v474 = vpop.f32.mrb[0].mxu0
      %v475 = vadd.f32 0.0, %v474
      %v476 = vpop.f32.mrb[0].mxu0
      %477 = vmatprep.mubr.bf16.mxu0 0
      %478 = vmatmul.mubr.bf16.gmra.mrb[0].mxu0 %v288
      %v479 = vpop.f32.mrb[0].mxu0
      %v480 = vadd.f32 0.0, %v479
      %v481 = vpop.f32.mrb[0].mxu0
      %v482 = vpop.f32.mrb[0].mxu0
      %v483 = vadd.f32 0.0, %v482
      %v484 = vpop.f32.mrb[0].mxu0
      %485 = vmatprep.mubr.bf16.mxu0 0
      %486 = vmatmul.mubr.bf16.gmra.mrb[0].mxu0 %v289
      %v487 = vpop.f32.mrb[0].mxu0
      %v488 = vadd.f32 0.0, %v487
      %v489 = vpop.f32.mrb[0].mxu0
      %v490 = vpop.f32.mrb[0].mxu0
      %v491 = vadd.f32 0.0, %v490
      %v492 = vpop.f32.mrb[0].mxu0
      %493 = vmatprep.mubr.bf16.mxu0 0
      %494 = vmatmul.mubr.bf16.gmra.mrb[0].mxu0 %v290
      %v495 = vpop.f32.mrb[0].mxu0
      %v496 = vadd.f32 0.0, %v495
      %v497 = vpop.f32.mrb[0].mxu0
      %v498 = vpop.f32.mrb[0].mxu0
      %v499 = vadd.f32 0.0, %v498
      %v500 = vpop.f32.mrb[0].mxu0
      %501 = vmatprep.mubr.bf16.mxu0 0
      %502 = vmatmul.mubr.bf16.gmra.mrb[0].mxu0 %v291
      %v503 = vpop.f32.mrb[0].mxu0
      %v504 = vadd.f32 0.0, %v503
      %v505 = vpop.f32.mrb[0].mxu0
      %v506 = vpop.f32.mrb[0].mxu0
      %v507 = vadd.f32 0.0, %v506
      %v508 = vpop.f32.mrb[0].mxu0
      %509 = vmatprep.mubr.bf16.mxu0 0
      %510 = vmatmul.mubr.bf16.gmra.mrb[0].mxu0 %v292
      %v511 = vpop.f32.mrb[0].mxu0
      %v512 = vadd.f32 0.0, %v511
      %v513 = vpop.f32.mrb[0].mxu0
      %v514 = vpop.f32.mrb[0].mxu0
      %v515 = vadd.f32 0.0, %v514
      %v516 = vpop.f32.mrb[0].mxu0
      %517 = vdwg.mxu0
      %518 = vst [vmem:[%s163] sm:$0xff] %v392
      %519 = vst [vmem:[%s163 + $0x8] sm:$0xff] %v395
      %520 = vst [vmem:[%s163 + $0x10] sm:$0xff] %v400
      %521 = vst [vmem:[%s163 + $0x18] sm:$0xff] %v403
      %522 = vst [vmem:[%s163 + $0x20] sm:$0xff] %v408
      %523 = vst [vmem:[%s163 + $0x28] sm:$0xff] %v411
      %524 = vst [vmem:[%s163 + $0x30] sm:$0xff] %v416
      %525 = vst [vmem:[%s163 + $0x38] sm:$0xff] %v419
      %526 = vst [vmem:[%s163 + $0x40] sm:$0xff] %v424
      %527 = vst [vmem:[%s163 + $0x48] sm:$0xff] %v427
      %528 = vst [vmem:[%s163 + $0x50] sm:$0xff] %v432
      %529 = vst [vmem:[%s163 + $0x58] sm:$0xff] %v435
      %530 = vst [vmem:[%s163 + $0x60] sm:$0xff] %v440
      %531 = vst [vmem:[%s163 + $0x68] sm:$0xff] %v443
      %532 = vst [vmem:[%s163 + $0x70] sm:$0xff] %v448
      %533 = vst [vmem:[%s163 + $0x78] sm:$0xff] %v451
      %534 = vst [vmem:[%s163 + $0x80] sm:$0xff] %v456
      %535 = vst [vmem:[%s163 + $0x88] sm:$0xff] %v459
      %536 = vst [vmem:[%s163 + $0x90] sm:$0xff] %v464
      %537 = vst [vmem:[%s163 + $0x98] sm:$0xff] %v467
      %538 = vst [vmem:[%s163 + $0xa0] sm:$0xff] %v472
      %539 = vst [vmem:[%s163 + $0xa8] sm:$0xff] %v475
      %540 = vst [vmem:[%s163 + $0xb0] sm:$0xff] %v480
      %541 = vst [vmem:[%s163 + $0xb8] sm:$0xff] %v483
      %542 = vst [vmem:[%s163 + $0xc0] sm:$0xff] %v488
      %543 = vst [vmem:[%s163 + $0xc8] sm:$0xff] %v491
      %544 = vst [vmem:[%s163 + $0xd0] sm:$0xff] %v496
      %545 = vst [vmem:[%s163 + $0xd8] sm:$0xff] %v499
      %546 = vst [vmem:[%s163 + $0xe0] sm:$0xff] %v504
      %547 = vst [vmem:[%s163 + $0xe8] sm:$0xff] %v507
      %548 = vst [vmem:[%s163 + $0xf0] sm:$0xff] %v512
      %549 = vst [vmem:[%s163 + $0xf8] sm:$0xff] %v515
      %p550 = scmp.lt.s32.totalorder %s13, 1
      %s551 = scalar_select %p550, %s13, 1
      %s552 = smul.addr %s551, 32
      %s553 = smul.addr %s552, 8
      %s554 = scalar_lea.vmem %s2, %s553
      // Predicated region
      $region29: #{jvp__.16} parent=27 // pred_check
        %p555 = pneg %p83
      $region30: #{jvp__.16} parent=27 // pred_check_branch
        %557 = sbr.rel (%p555) target = $region32
      $region31: #{jvp__.16} parent=27 // pred_region
        _
      $region32: #{jvp__.16} parent=27 // pred_fallthru
        _
    $region28: #{jvp__.16} parent=5 // pred_fallthru
      _
    %p558 = scmp.le.s32.totalorder 2, %s8
    // Predicated region
    $region33: #{jvp__.16} parent=5 // pred_check
      %p559 = pneg %p558
    $region34: #{jvp__.16} parent=5 // pred_check_branch
      %561 = sbr.rel (%p559) target = $region36
    $region35: #{jvp__.16} parent=5 // pred_region
      %s562 = ssub.s32 %s8, 2
      // Predicated region
      $region37: #{jvp__.16} parent=35 // pred_check
        %p563 = pneg %p89
      $region38: #{jvp__.16} parent=35 // pred_check_branch
        %565 = sbr.rel (%p563) target = $region40
      $region39: #{jvp__.16} parent=35 // pred_region
        %p566 = scmp.lt.s32.totalorder %s14, 1
        %s567 = scalar_select %p566, %s14, 1
        %s568 = smul.addr %s567, 32
        %s569 = smul.addr %s568, 8
        %s570 = scalar_lea.vmem %s2, %s569
      $region40: #{jvp__.16} parent=35 // pred_fallthru
        _
    $region36: #{jvp__.16} parent=5 // pred_fallthru
      _
  $region6: #{jvp__.16} parent=0 // loop_footer
    %s12 = sadd.s32 1, %s8
  $region7: #{jvp__.16} parent=0 // loop_footer_branch
    %7 = sbr.rel target = $region3
  $region8: #{jvp__.16} parent=0 // loop_exit
    _

// kernel: meta_counts.41
$region0: #{meta_counts.41}
  #allocation0 [shape = 'u32[]', space=smem, size = 0x4, offset = 0x4, fixed_abs, tag = 'smem constant byte address 0x4 - core index']
  #allocation1 [shape = 'u32[144,128]{1,0:T(1,128)}', space=vmem, size = 0x12000, scoped, tag = 'internal scratch']
  %s0 = inlined_call_operand.vmem [shape: f32[96,128], index: 0, kind: input, shape index: {}]
  %s1 = inlined_call_operand.vmem [shape: s32[96,1], index: 1, kind: input, shape index: {}]
  %s2 = inlined_call_operand.hbm [shape: s32[4], index: 2, kind: output, shape index: {}]
  %s3 = sld [smem:[#allocation0]]
  $region18: #{meta_counts.41} parent=0
    _
  %s5 = ssub.s32 1, %s3
  %s6 = scalar_select 0, %s5, %s3
  $region1: #{meta_counts.41} parent=0
    #allocation2 [shape = 'u8[512]{0}', space=smem, size = 0x200, scoped, tag = 'output window, operand 0, single buffered']
    #allocation3 [shape = 's32[1]{0}', space=sflag, size = 0x4, scoped, tag = 'scoped memory for meta_counts.41']
    %7 = vsyncpa [#allocation3], 0
    // Predicated region
    $region2: #{meta_counts.41} parent=1 // pred_check
      _
    $region3: #{meta_counts.41} parent=1 // pred_check_branch
      %9 = sbr.rel (0) target = $region5
    $region4: #{meta_counts.41} parent=1 // pred_region
      _
    $region5: #{meta_counts.41} parent=1 // pred_fallthru
      _
    // Predicated region
    $region6: #{meta_counts.41} parent=1 // pred_check
      _
    $region7: #{meta_counts.41} parent=1 // pred_check_branch
      %11 = sbr.rel (0) target = $region9
    $region8: #{meta_counts.41} parent=1 // pred_region
      _
    $region9: #{meta_counts.41} parent=1 // pred_fallthru
      _
    %v12 = vld [vmem:[%s0] sm:$0xff]
    %v13 = vld [vmem:[%s0 + $0x8] sm:$0xff]
    %v14 = vld [vmem:[%s0 + $0x10] sm:$0xff]
    %v15 = vld [vmem:[%s0 + $0x18] sm:$0xff]
    %v16 = vld [vmem:[%s0 + $0x20] sm:$0xff]
    %v17 = vld [vmem:[%s0 + $0x28] sm:$0xff]
    %v18 = vld [vmem:[%s0 + $0x30] sm:$0xff]
    %v19 = vld [vmem:[%s0 + $0x38] sm:$0xff]
    %v20 = vld [vmem:[%s0 + $0x40] sm:$0xff]
    %v21 = vld [vmem:[%s0 + $0x48] sm:$0xff]
    %v22 = vld [vmem:[%s0 + $0x50] sm:$0xff]
    %v23 = vld [vmem:[%s0 + $0x58] sm:$0xff]
    %v24 = vld [vmem:[%s1] sm:$0xff]
    %v25 = vld [vmem:[%s1 + $0x8] sm:$0xff]
    %v26 = vld [vmem:[%s1 + $0x10] sm:$0xff]
    %v27 = vld [vmem:[%s1 + $0x18] sm:$0xff]
    %v28 = vld [vmem:[%s1 + $0x20] sm:$0xff]
    %v29 = vld [vmem:[%s1 + $0x28] sm:$0xff]
    %v30 = vld [vmem:[%s1 + $0x30] sm:$0xff]
    %v31 = vld [vmem:[%s1 + $0x38] sm:$0xff]
    %v32 = vld [vmem:[%s1 + $0x40] sm:$0xff]
    %v33 = vld [vmem:[%s1 + $0x48] sm:$0xff]
    %v34 = vld [vmem:[%s1 + $0x50] sm:$0xff]
    %v35 = vld [vmem:[%s1 + $0x58] sm:$0xff]
    %v36 = vlaneseq
    %v37 = vand.u32 %v36, 127
    %38 = vmax.xlane.f32.xlu0 %v12
    %v39 = vpop.xlane.xlu0 %38
    %40 = vmax.xlane.f32.xlu0 %v13
    %v41 = vpop.xlane.xlu0 %40
    %42 = vmax.xlane.f32.xlu0 %v14
    %v43 = vpop.xlane.xlu0 %42
    %44 = vmax.xlane.f32.xlu0 %v15
    %v45 = vpop.xlane.xlu0 %44
    %46 = vmax.xlane.f32.xlu0 %v16
    %v47 = vpop.xlane.xlu0 %46
    %48 = vmax.xlane.f32.xlu0 %v17
    %v49 = vpop.xlane.xlu0 %48
    %50 = vmax.xlane.f32.xlu0 %v18
    %v51 = vpop.xlane.xlu0 %50
    %52 = vmax.xlane.f32.xlu0 %v19
    %v53 = vpop.xlane.xlu0 %52
    %54 = vmax.xlane.f32.xlu0 %v20
    %v55 = vpop.xlane.xlu0 %54
    %56 = vmax.xlane.f32.xlu0 %v21
    %v57 = vpop.xlane.xlu0 %56
    %58 = vmax.xlane.f32.xlu0 %v22
    %v59 = vpop.xlane.xlu0 %58
    %60 = vmax.xlane.f32.xlu0 %v23
    %v61 = vpop.xlane.xlu0 %60
    %vm62 = vcmp.eq.f32.partialorder %v12, %v39
    %vm63 = vcmp.eq.f32.partialorder %v13, %v41
    %vm64 = vcmp.eq.f32.partialorder %v14, %v43
    %vm65 = vcmp.eq.f32.partialorder %v15, %v45
    %vm66 = vcmp.eq.f32.partialorder %v16, %v47
    %vm67 = vcmp.eq.f32.partialorder %v17, %v49
    %vm68 = vcmp.eq.f32.partialorder %v18, %v51
    %vm69 = vcmp.eq.f32.partialorder %v19, %v53
    %vm70 = vcmp.eq.f32.partialorder %v20, %v55
    %vm71 = vcmp.eq.f32.partialorder %v21, %v57
    %vm72 = vcmp.eq.f32.partialorder %v22, %v59
    %vm73 = vcmp.eq.f32.partialorder %v23, %v61
    %v74 = vsel %vm62, %v37, 128
    %v75 = vsel %vm63, %v37, 128
    %v76 = vsel %vm64, %v37, 128
    %v77 = vsel %vm65, %v37, 128
    %v78 = vsel %vm66, %v37, 128
    %v79 = vsel %vm67, %v37, 128
    %v80 = vsel %vm68, %v37, 128
    %v81 = vsel %vm69, %v37, 128
    %v82 = vsel %vm70, %v37, 128
    %v83 = vsel %vm71, %v37, 128
    %v84 = vsel %vm72, %v37, 128
    %v85 = vsel %vm73, %v37, 128
    %v86 = vand.u32 %v74, 65535
    %v87 = vshra.s32 %v74, 16
    %v88 = vcvt.s32.f32 %v86
    %v89 = vcvt.s32.f32 %v87
    %90 = vmin.xlane.f32.xlu0 %v89
    %v91 = vpop.xlane.xlu0 %90
    %vm92 = vcmp.eq.f32.partialorder %v89, %v91
    %v93 = vsel %vm92, %v88, inf
    %94 = vmin.xlane.f32.xlu0 %v93
    %v95 = vpop.xlane.xlu0 %94
    %v96 = vcvt.f32.s32 %v95
    %v97 = vcvt.f32.s32 %v91
    %v98 = vshll.u32 %v97, 16
    %v99 = vadd.s32 %v98, %v96
    %v100 = vand.u32 %v75, 65535
    %v101 = vshra.s32 %v75, 16
    %v102 = vcvt.s32.f32 %v100
    %v103 = vcvt.s32.f32 %v101
    %104 = vmin.xlane.f32.xlu0 %v103
    %v105 = vpop.xlane.xlu0 %104
    %vm106 = vcmp.eq.f32.partialorder %v103, %v105
    %v107 = vsel %vm106, %v102, inf
    %108 = vmin.xlane.f32.xlu0 %v107
    %v109 = vpop.xlane.xlu0 %108
    %v110 = vcvt.f32.s32 %v109
    %v111 = vcvt.f32.s32 %v105
    %v112 = vshll.u32 %v111, 16
    %v113 = vadd.s32 %v112, %v110
    %v114 = vand.u32 %v76, 65535
    %v115 = vshra.s32 %v76, 16
    %v116 = vcvt.s32.f32 %v114
    %v117 = vcvt.s32.f32 %v115
    %118 = vmin.xlane.f32.xlu0 %v117
    %v119 = vpop.xlane.xlu0 %118
    %vm120 = vcmp.eq.f32.partialorder %v117, %v119
    %v121 = vsel %vm120, %v116, inf
    %122 = vmin.xlane.f32.xlu0 %v121
    %v123 = vpop.xlane.xlu0 %122
    %v124 = vcvt.f32.s32 %v123
    %v125 = vcvt.f32.s32 %v119
    %v126 = vshll.u32 %v125, 16
    %v127 = vadd.s32 %v126, %v124
    %v128 = vand.u32 %v77, 65535
    %v129 = vshra.s32 %v77, 16
    %v130 = vcvt.s32.f32 %v128
    %v131 = vcvt.s32.f32 %v129
    %132 = vmin.xlane.f32.xlu0 %v131
    %v133 = vpop.xlane.xlu0 %132
    %vm134 = vcmp.eq.f32.partialorder %v131, %v133
    %v135 = vsel %vm134, %v130, inf
    %136 = vmin.xlane.f32.xlu0 %v135
    %v137 = vpop.xlane.xlu0 %136
    %v138 = vcvt.f32.s32 %v137
    %v139 = vcvt.f32.s32 %v133
    %v140 = vshll.u32 %v139, 16
    %v141 = vadd.s32 %v140, %v138
    %v142 = vand.u32 %v78, 65535
    %v143 = vshra.s32 %v78, 16
    %v144 = vcvt.s32.f32 %v142
    %v145 = vcvt.s32.f32 %v143
    %146 = vmin.xlane.f32.xlu0 %v145
    %v147 = vpop.xlane.xlu0 %146
    %vm148 = vcmp.eq.f32.partialorder %v145, %v147
    %v149 = vsel %vm148, %v144, inf
    %150 = vmin.xlane.f32.xlu0 %v149
    %v151 = vpop.xlane.xlu0 %150
    %v152 = vcvt.f32.s32 %v151
    %v153 = vcvt.f32.s32 %v147
    %v154 = vshll.u32 %v153, 16
    %v155 = vadd.s32 %v154, %v152
    %v156 = vand.u32 %v79, 65535
    %v157 = vshra.s32 %v79, 16
    %v158 = vcvt.s32.f32 %v156
    %v159 = vcvt.s32.f32 %v157
    %160 = vmin.xlane.f32.xlu0 %v159
    %v161 = vpop.xlane.xlu0 %160
    %vm162 = vcmp.eq.f32.partialorder %v159, %v161
    %v163 = vsel %vm162, %v158, inf
    %164 = vmin.xlane.f32.xlu0 %v163
    %v165 = vpop.xlane.xlu0 %164
    %v166 = vcvt.f32.s32 %v165
    %v167 = vcvt.f32.s32 %v161
    %v168 = vshll.u32 %v167, 16
    %v169 = vadd.s32 %v168, %v166
    %v170 = vand.u32 %v80, 65535
    %v171 = vshra.s32 %v80, 16
    %v172 = vcvt.s32.f32 %v170
    %v173 = vcvt.s32.f32 %v171
    %174 = vmin.xlane.f32.xlu0 %v173
    %v175 = vpop.xlane.xlu0 %174
    %vm176 = vcmp.eq.f32.partialorder %v173, %v175
    %v177 = vsel %vm176, %v172, inf
    %178 = vmin.xlane.f32.xlu0 %v177
    %v179 = vpop.xlane.xlu0 %178
    %v180 = vcvt.f32.s32 %v179
    %v181 = vcvt.f32.s32 %v175
    %v182 = vshll.u32 %v181, 16
    %v183 = vadd.s32 %v182, %v180
    %v184 = vand.u32 %v81, 65535
    %v185 = vshra.s32 %v81, 16
    %v186 = vcvt.s32.f32 %v184
    %v187 = vcvt.s32.f32 %v185
    %188 = vmin.xlane.f32.xlu0 %v187
    %v189 = vpop.xlane.xlu0 %188
    %vm190 = vcmp.eq.f32.partialorder %v187, %v189
    %v191 = vsel %vm190, %v186, inf
    %192 = vmin.xlane.f32.xlu0 %v191
    %v193 = vpop.xlane.xlu0 %192
    %v194 = vcvt.f32.s32 %v193
    %v195 = vcvt.f32.s32 %v189
    %v196 = vshll.u32 %v195, 16
    %v197 = vadd.s32 %v196, %v194
    %v198 = vand.u32 %v82, 65535
    %v199 = vshra.s32 %v82, 16
    %v200 = vcvt.s32.f32 %v198
    %v201 = vcvt.s32.f32 %v199
    %202 = vmin.xlane.f32.xlu0 %v201
    %v203 = vpop.xlane.xlu0 %202
    %vm204 = vcmp.eq.f32.partialorder %v201, %v203
    %v205 = vsel %vm204, %v200, inf
    %206 = vmin.xlane.f32.xlu0 %v205
    %v207 = vpop.xlane.xlu0 %206
    %v208 = vcvt.f32.s32 %v207
    %v209 = vcvt.f32.s32 %v203
    %v210 = vshll.u32 %v209, 16
    %v211 = vadd.s32 %v210, %v208
    %v212 = vand.u32 %v83, 65535
    %v213 = vshra.s32 %v83, 16
    %v214 = vcvt.s32.f32 %v212
    %v215 = vcvt.s32.f32 %v213
    %216 = vmin.xlane.f32.xlu0 %v215
    %v217 = vpop.xlane.xlu0 %216
    %vm218 = vcmp.eq.f32.partialorder %v215, %v217
    %v219 = vsel %vm218, %v214, inf
    %220 = vmin.xlane.f32.xlu0 %v219
    %v221 = vpop.xlane.xlu0 %220
    %v222 = vcvt.f32.s32 %v221
    %v223 = vcvt.f32.s32 %v217
    %v224 = vshll.u32 %v223, 16
    %v225 = vadd.s32 %v224, %v222
    %v226 = vand.u32 %v84, 65535
    %v227 = vshra.s32 %v84, 16
    %v228 = vcvt.s32.f32 %v226
    %v229 = vcvt.s32.f32 %v227
    %230 = vmin.xlane.f32.xlu0 %v229
    %v231 = vpop.xlane.xlu0 %230
    %vm232 = vcmp.eq.f32.partialorder %v229, %v231
    %v233 = vsel %vm232, %v228, inf
    %234 = vmin.xlane.f32.xlu0 %v233
    %v235 = vpop.xlane.xlu0 %234
    %v236 = vcvt.f32.s32 %v235
    %v237 = vcvt.f32.s32 %v231
    %v238 = vshll.u32 %v237, 16
    %v239 = vadd.s32 %v238, %v236
    %v240 = vand.u32 %v85, 65535
    %v241 = vshra.s32 %v85, 16
    %v242 = vcvt.s32.f32 %v240
    %v243 = vcvt.s32.f32 %v241
    %244 = vmin.xlane.f32.xlu0 %v243
    %v245 = vpop.xlane.xlu0 %244
    %vm246 = vcmp.eq.f32.partialorder %v243, %v245
    %v247 = vsel %vm246, %v242, inf
    %248 = vmin.xlane.f32.xlu0 %v247
    %v249 = vpop.xlane.xlu0 %248
    %v250 = vcvt.f32.s32 %v249
    %v251 = vcvt.f32.s32 %v245
    %v252 = vshll.u32 %v251, 16
    %v253 = vadd.s32 %v252, %v250
    %vm254 = vcmp.eq.s32.totalorder %v99, %v24
    %vm255 = vcmp.eq.s32.totalorder %v113, %v25
    %vm256 = vcmp.eq.s32.totalorder %v127, %v26
    %vm257 = vcmp.eq.s32.totalorder %v141, %v27
    %vm258 = vcmp.eq.s32.totalorder %v155, %v28
    %vm259 = vcmp.eq.s32.totalorder %v169, %v29
    %vm260 = vcmp.eq.s32.totalorder %v183, %v30
    %vm261 = vcmp.eq.s32.totalorder %v197, %v31
    %vm262 = vcmp.eq.s32.totalorder %v211, %v32
    %vm263 = vcmp.eq.s32.totalorder %v225, %v33
    %vm264 = vcmp.eq.s32.totalorder %v239, %v34
    %vm265 = vcmp.eq.s32.totalorder %v253, %v35
    %v266 = vsel %vm254, 1, 0
    %v267 = vsel %vm255, 1, 0
    %v268 = vsel %vm256, 1, 0
    %v269 = vsel %vm257, 1, 0
    %v270 = vsel %vm258, 1, 0
    %v271 = vsel %vm259, 1, 0
    %v272 = vsel %vm260, 1, 0
    %v273 = vsel %vm261, 1, 0
    %v274 = vsel %vm262, 1, 0
    %v275 = vsel %vm263, 1, 0
    %v276 = vsel %vm264, 1, 0
    %v277 = vsel %vm265, 1, 0
    %vm278 = vcmask 7168
    %v279 = vsel %vm278, %v266, 0
    %v280 = vsel %vm278, %v267, 0
    %v281 = vsel %vm278, %v268, 0
    %v282 = vadd.s32 %v279, %v280
    %v283 = vadd.s32 %v282, %v281
    %v284 = vand.u32 %v283, 65535
    %v285 = vshrl.u32 %v283, 16
    %v286 = vcvt.s32.f32 %v284
    %v287 = vcvt.s32.f32 %v285
    %288 = vadd.xlane.f32.xlu0 %v286
    %v289 = vpop.xlane.xlu0 %288
    %290 = vadd.xlane.f32.xlu0 %v287
    %v291 = vpop.xlane.xlu0 %290
    %v292 = vcvt.f32.s32 %v289
    %v293 = vcvt.f32.s32 %v291
    %v294 = vshll.u32 %v293, 16
    %v295 = vadd.s32 %v294, %v292
    %v296 = vrot.slane %v295, 4
    %v297 = vadd.s32 %v295, %v296
    %v298 = vrot.slane %v297, 2
    %v299 = vadd.s32 %v297, %v298
    %v300 = vrot.slane %v299, 1
    %v301 = vadd.s32 %v299, %v300
    %s302 = vtos %v301
    %s303 = scalar_lea.smem [#allocation2], 0
    %304 = sst [smem:[%s303]] %s302
    %v305 = vsel %vm278, %v269, 0
    %v306 = vsel %vm278, %v270, 0
    %v307 = vsel %vm278, %v271, 0
    %v308 = vadd.s32 %v305, %v306
    %v309 = vadd.s32 %v308, %v307
    %v310 = vand.u32 %v309, 65535
    %v311 = vshrl.u32 %v309, 16
    %v312 = vcvt.s32.f32 %v310
    %v313 = vcvt.s32.f32 %v311
    %314 = vadd.xlane.f32.xlu0 %v312
    %v315 = vpop.xlane.xlu0 %314
    %316 = vadd.xlane.f32.xlu0 %v313
    %v317 = vpop.xlane.xlu0 %316
    %v318 = vcvt.f32.s32 %v315
    %v319 = vcvt.f32.s32 %v317
    %v320 = vshll.u32 %v319, 16
    %v321 = vadd.s32 %v320, %v318
    %v322 = vrot.slane %v321, 4
    %v323 = vadd.s32 %v321, %v322
    %v324 = vrot.slane %v323, 2
    %v325 = vadd.s32 %v323, %v324
    %v326 = vrot.slane %v325, 1
    %v327 = vadd.s32 %v325, %v326
    %s328 = vtos %v327
    %s329 = scalar_lea.smem [#allocation2], 1
    %330 = sst [smem:[%s329]] %s328
    %v331 = vsel %vm278, %v272, 0
    %v332 = vsel %vm278, %v273, 0
    %v333 = vsel %vm278, %v274, 0
    %v334 = vadd.s32 %v331, %v332
    %v335 = vadd.s32 %v334, %v333
    %v336 = vand.u32 %v335, 65535
    %v337 = vshrl.u32 %v335, 16
    %v338 = vcvt.s32.f32 %v336
    %v339 = vcvt.s32.f32 %v337
    %340 = vadd.xlane.f32.xlu0 %v338
    %v341 = vpop.xlane.xlu0 %340
    %342 = vadd.xlane.f32.xlu0 %v339
    %v343 = vpop.xlane.xlu0 %342
    %v344 = vcvt.f32.s32 %v341
    %v345 = vcvt.f32.s32 %v343
    %v346 = vshll.u32 %v345, 16
    %v347 = vadd.s32 %v346, %v344
    %v348 = vrot.slane %v347, 4
    %v349 = vadd.s32 %v347, %v348
    %v350 = vrot.slane %v349, 2
    %v351 = vadd.s32 %v349, %v350
    %v352 = vrot.slane %v351, 1
    %v353 = vadd.s32 %v351, %v352
    %s354 = vtos %v353
    %s355 = scalar_lea.smem [#allocation2], 2
    %356 = sst [smem:[%s355]] %s354
    %v357 = vsel %vm278, %v275, 0
    %v358 = vsel %vm278, %v276, 0
    %v359 = vsel %vm278, %v277, 0
    %v360 = vadd.s32 %v357, %v358
    %v361 = vadd.s32 %v360, %v359
    %v362 = vand.u32 %v361, 65535
    %v363 = vshrl.u32 %v361, 16
    %v364 = vcvt.s32.f32 %v362
    %v365 = vcvt.s32.f32 %v363
    %366 = vadd.xlane.f32.xlu0 %v364
    %v367 = vpop.xlane.xlu0 %366
    %368 = vadd.xlane.f32.xlu0 %v365
    %v369 = vpop.xlane.xlu0 %368
    %v370 = vcvt.f32.s32 %v367
    %v371 = vcvt.f32.s32 %v369
    %v372 = vshll.u32 %v371, 16
    %v373 = vadd.s32 %v372, %v370
    %v374 = vrot.slane %v373, 4
    %v375 = vadd.s32 %v373, %v374
    %v376 = vrot.slane %v375, 2
    %v377 = vadd.s32 %v375, %v376
    %v378 = vrot.slane %v377, 1
    %v379 = vadd.s32 %v377, %v378
    %s380 = vtos %v379
    %s381 = scalar_lea.smem [#allocation2], 3
    %382 = sst [smem:[%s381]] %s380
    // Predicated region
    $region10: #{meta_counts.41} parent=1 // pred_check
      _
    $region11: #{meta_counts.41} parent=1 // pred_check_branch
      %384 = sbr.rel (0) target = $region13
    $region12: #{meta_counts.41} parent=1 // pred_region
      %s386 = ssub.s32 16, 16
      %387 = vsyncadd [#allocation3], %s386
      %390 = dma.smem_to_hbm [#allocation2], 16, %s2, [#allocation3]
    $region13: #{meta_counts.41} parent=1 // pred_fallthru
      _
    // Predicated region
    $region14: #{meta_counts.41} parent=1 // pred_check
      _
    $region15: #{meta_counts.41} parent=1 // pred_check_branch
      %392 = sbr.rel (0) target = $region17
    $region16: #{meta_counts.41} parent=1 // pred_region
      %393 = dma.done [#allocation3], 16
    $region17: #{meta_counts.41} parent=1 // pred_fallthru
      _
    %394 = sfence
    %395 = vsyncpa [#allocation3], 1

</llo_original>
